<compile_context>
chip_gen: v7x
topology: tpu7x:2x2x1
jax: 0.10.0
libtpu: 0.0.40
codegen_flags: <defaults>
</compile_context>

<pallas_src>
import functools

import jax
import jax.numpy as jnp
import numpy as np
from jax import lax
from jax.experimental import pallas as pl
from jax.experimental.pallas import tpu as pltpu


def _round_up(x, m):
    return ((x + m - 1) // m) * m


# ----------------------------------------------------------------------------
# Fused Pallas kernel: encoder stack -> decoder stack -> output projection.
# ----------------------------------------------------------------------------
def _seq2seq_kernel(src_ref, tgt_ref,
                    ewih_ref, ewhh_ref, eb_ref,
                    dwih_ref, dwhh_ref, db_ref,
                    fcw_ref, fcb_ref,
                    out_ref,
                    buf0, buf1, gx_buf, state_buf,
                    *, T_src, T_tgt, n_layers, B_p, P):
    bufs = (buf0, buf1)
    unroll_src = True if T_src <= 32 else 4
    unroll_tgt = True if T_tgt <= 32 else 4

    def run_layer(load_x, T, unroll, wih, whh, b, h0, c0, out_buf):
        # --- Phase 1: hoisted input projection for the whole sequence ---------------
        # One big bf16 MXU matmul, f32 accumulate; bias (f32) added outside the MXU.
        x2d = load_x(T).astype(jnp.bfloat16)                            # (T*B_p, P)
        gx = jnp.dot(x2d, wih, preferred_element_type=jnp.float32) + b
        gx_buf[pl.ds(0, T * B_p), :] = gx                               # (T*B_p, 4P) f32

        # --- Phase 2: serial recurrence; only h @ W_hh per step ---------------------
        def step(t, carry):
            h, c = carry
            r = pl.multiple_of(t * B_p, B_p)
            gates = gx_buf[pl.ds(r, B_p), :] + jnp.dot(
                h.astype(jnp.bfloat16), whh,
                preferred_element_type=jnp.float32)                     # (B_p, 4P) f32
            # Gate layout (reordered in the wrapper): [ i | f | o | g ]
            sig = jax.nn.sigmoid(gates[:, : 3 * P])                     # one wide EUP op
            i = sig[:, 0 * P:1 * P]
            f = sig[:, 1 * P:2 * P]
            o = sig[:, 2 * P:3 * P]
            g = jnp.tanh(gates[:, 3 * P:4 * P])
            c_new = f * c + i * g
            h_new = o * jnp.tanh(c_new)
            out_buf[pl.ds(r, B_p), :] = h_new
            return (h_new, c_new)

        return lax.fori_loop(0, T, step, (h0, c0), unroll=unroll)

    zeros = jnp.zeros((B_p, P), jnp.float32)

    # ------------------------------ encoder -------------------------------
    for l in range(n_layers):
        if l == 0:
            load_x = lambda T: src_ref[...]
        else:
            prev = bufs[(l - 1) % 2]
            load_x = lambda T, prev=prev: prev[pl.ds(0, T * B_p), :]
        hN, cN = run_layer(load_x, T_src, unroll_src,
                           ewih_ref[l], ewhh_ref[l], eb_ref[l],
                           zeros, zeros, bufs[l % 2])
        # Spill encoder finals to VMEM so they aren't live across the decoder region.
        state_buf[2 * l, :, :] = hN
        state_buf[2 * l + 1, :, :] = cN

    # ------------------------------ decoder -------------------------------
    for l in range(n_layers):
        if l == 0:
            load_x = lambda T: tgt_ref[...]
        else:
            prev = bufs[(l - 1) % 2]
            load_x = lambda T, prev=prev: prev[pl.ds(0, T * B_p), :]
        h0 = state_buf[2 * l, :, :]
        c0 = state_buf[2 * l + 1, :, :]
        run_layer(load_x, T_tgt, unroll_tgt,
                  dwih_ref[l], dwhh_ref[l], db_ref[l],
                  h0, c0, bufs[l % 2])

    # --------------------- fused, lane-dense fc_out -----------------------
    y2d = bufs[(n_layers - 1) % 2][pl.ds(0, T_tgt * B_p), :].astype(jnp.bfloat16)
    out_ref[...] = (jnp.dot(y2d, fcw_ref[...], preferred_element_type=jnp.float32)
                    + fcb_ref[...]).astype(out_ref.dtype)


# ----------------------------------------------------------------------------
# Parameters (forward-pass only; eval semantics).
# ----------------------------------------------------------------------------
def init_params(key, input_dim, output_dim, embed_dim, hidden_dim, n_layers):
    params = {}
    k_es, k_et, key = jax.random.split(key, 3)
    params["embedding_src"] = jax.random.normal(k_es, (input_dim, embed_dim), jnp.float32)
    params["embedding_tgt"] = jax.random.normal(k_et, (output_dim, embed_dim), jnp.float32)

    bound = 1.0 / np.sqrt(hidden_dim)

    def lstm_stack(key, in_dim):
        layers = []
        for l in range(n_layers):
            d_in = in_dim if l == 0 else hidden_dim
            k1, k2, k3, k4, key = jax.random.split(key, 5)
            w_ih = jax.random.uniform(k1, (d_in, 4 * hidden_dim), jnp.float32, -bound, bound)
            w_hh = jax.random.uniform(k2, (hidden_dim, 4 * hidden_dim), jnp.float32, -bound, bound)
            b_ih = jax.random.uniform(k3, (1, 4 * hidden_dim), jnp.float32, -bound, bound)
            b_hh = jax.random.uniform(k4, (1, 4 * hidden_dim), jnp.float32, -bound, bound)
            layers.append((w_ih, w_hh, b_ih + b_hh))   # PyTorch applies b_ih + b_hh
        return layers, key

    params["encoder"], key = lstm_stack(key, embed_dim)
    params["decoder"], key = lstm_stack(key, embed_dim)

    k1, k2 = jax.random.split(key)
    params["fc_w"] = jax.random.uniform(k1, (hidden_dim, output_dim), jnp.float32, -bound, bound)
    params["fc_b"] = jax.random.uniform(k2, (1, output_dim), jnp.float32, -bound, bound)
    return params


# ----------------------------------------------------------------------------
# Wrapper: embedding gather, (8,128) padding, single fused pallas_call.
# ----------------------------------------------------------------------------
def lstm_seq2seq_forward(params, src, tgt, *, embed_dim, hidden_dim, output_dim, n_layers):
    B, T_src = src.shape
    _, T_tgt = tgt.shape
    H = hidden_dim
    B_p = _round_up(B, 8)                                   # sublane-aligned batch
    P = _round_up(max(embed_dim, hidden_dim), 128)          # shared lane width (x / h / gate block)
    O_p = _round_up(output_dim, 128)                        # lane-dense fc_out

    # ---- embeddings (plain-JAX gather glue), time-major padded 2-D slabs ----
    src_emb = jnp.take(params["embedding_src"], src, axis=0)   # (B, Ts, E)
    tgt_emb = jnp.take(params["embedding_tgt"], tgt, axis=0)   # (B, Tt, E)

    def to_slab(emb, T):
        x = jnp.transpose(emb, (1, 0, 2))                       # (T, B, E)
        x = jnp.pad(x, ((0, 0), (0, B_p - B), (0, P - emb.shape[-1])))
        return x.reshape(T * B_p, P)

    src_x = to_slab(src_emb, T_src)
    tgt_x = to_slab(tgt_emb, T_tgt)

    # ---- pad parameters to aligned tiles; gate blocks padded individually so the
    #      padded hidden lanes stay exactly zero through the recurrence.
    #      Gate order reordered (i,f,g,o) -> (i,f,o,g) for one wide sigmoid in-kernel. ----
    GATE_ORDER = (0, 1, 3, 2)

    def pad_gate_cols(w):
        blocks = [jnp.pad(w[:, k * H:(k + 1) * H], ((0, 0), (0, P - H)))
                  for k in GATE_ORDER]
        return jnp.concatenate(blocks, axis=1)                  # (rows, 4P)

    def pad_stack(layers):
        wihs, whhs, bs = [], [], []
        for (w_ih, w_hh, b) in layers:
            wihs.append(jnp.pad(pad_gate_cols(w_ih),
                                ((0, P - w_ih.shape[0]), (0, 0))).astype(jnp.bfloat16))
            whhs.append(jnp.pad(pad_gate_cols(w_hh),
                                ((0, P - H), (0, 0))).astype(jnp.bfloat16))
            bs.append(pad_gate_cols(b))                         # (1, 4P) f32
        return jnp.stack(wihs), jnp.stack(whhs), jnp.stack(bs)

    ewih, ewhh, eb = pad_stack(params["encoder"])
    dwih, dwhh, db = pad_stack(params["decoder"])

    fcw = jnp.pad(params["fc_w"], ((0, P - H), (0, O_p - output_dim))).astype(jnp.bfloat16)
    fcb = jnp.pad(params["fc_b"], ((0, 0), (0, O_p - output_dim)))   # f32

    T_max = max(T_src, T_tgt)
    kernel = functools.partial(_seq2seq_kernel, T_src=T_src, T_tgt=T_tgt,
                               n_layers=n_layers, B_p=B_p, P=P)

    # ---- explicit VMEM budget + cost estimate ----
    scratch_bytes = (2 * T_max * B_p * P * 4        # ping/pong hidden slabs (f32)
                     + T_max * B_p * 4 * P * 4      # hoisted gate slab (f32)
                     + 2 * n_layers * B_p * P * 4)  # encoder finals (f32)
    args = (src_x, tgt_x, ewih, ewhh, eb, dwih, dwhh, db, fcw, fcb)
    io_bytes = sum(int(a.size) * a.dtype.itemsize for a in args) + T_tgt * B_p * O_p * 4
    footprint = scratch_bytes + io_bytes
    vmem_limit = int(min(100 * 2**20, max(32 * 2**20, 2 * footprint)))

    flops = 0
    for T in (T_src, T_tgt):
        flops += n_layers * 2 * (2 * T * B_p * P * 4 * P)       # input proj + recurrence
    flops += 2 * T_tgt * B_p * P * O_p                          # fc_out
    transcendentals = 5 * B_p * P * n_layers * (T_src + T_tgt)  # 3 sigmoid + 2 tanh / step
    cost = pl.CostEstimate(flops=int(flops),
                           transcendentals=int(transcendentals),
                           bytes_accessed=int(io_bytes))

    out = pl.pallas_call(
        kernel,
        out_shape=jax.ShapeDtypeStruct((T_tgt * B_p, O_p), jnp.float32),
        scratch_shapes=[
            pltpu.VMEM((T_max * B_p, P), jnp.float32),       # layer output slab (ping)
            pltpu.VMEM((T_max * B_p, P), jnp.float32),       # layer output slab (pong)
            pltpu.VMEM((T_max * B_p, 4 * P), jnp.float32),   # hoisted X @ W_ih gate slab
            pltpu.VMEM((2 * n_layers, B_p, P), jnp.float32), # encoder final (h, c) spill
        ],
        compiler_params=pltpu.CompilerParams(vmem_limit_bytes=vmem_limit),
        cost_estimate=cost,
    )(*args)

    out = out.reshape(T_tgt, B_p, O_p)
    out = jnp.transpose(out, (1, 0, 2))[:B, :, :output_dim]    # (B, T_tgt, output_dim)
    return out


# ----------------------------------------------------------------------------
# Pure-JAX f32 reference (for correctness checking).
# ----------------------------------------------------------------------------
def _lstm_layer_ref(x, h0, c0, w_ih, w_hh, b):
    H = h0.shape[-1]

    def step(carry, xt):
        h, c = carry
        gates = xt @ w_ih + h @ w_hh + b[0]
        i = jax.nn.sigmoid(gates[:, 0 * H:1 * H])
        f = jax.nn.sigmoid(gates[:, 1 * H:2 * H])
        g = jnp.tanh(gates[:, 2 * H:3 * H])
        o = jax.nn.sigmoid(gates[:, 3 * H:4 * H])
        c = f * c + i * g
        h = o * jnp.tanh(c)
        return (h, c), h

    (hN, cN), ys = jax.lax.scan(step, (h0, c0), x)
    return ys, hN, cN


def forward_ref(params, src, tgt, hidden_dim, n_layers):
    B = src.shape[0]
    src_emb = jnp.take(params["embedding_src"], src, axis=0)
    tgt_emb = jnp.take(params["embedding_tgt"], tgt, axis=0)
    zeros = jnp.zeros((B, hidden_dim), jnp.float32)

    inp = jnp.transpose(src_emb, (1, 0, 2))
    finals = []
    for (w_ih, w_hh, b) in params["encoder"]:
        inp, hN, cN = _lstm_layer_ref(inp, zeros, zeros, w_ih, w_hh, b)
        finals.append((hN, cN))

    inp = jnp.transpose(tgt_emb, (1, 0, 2))
    for (w_ih, w_hh, b), (h0, c0) in zip(params["decoder"], finals):
        inp, _, _ = _lstm_layer_ref(inp, h0, c0, w_ih, w_hh, b)

    dec_out = jnp.transpose(inp, (1, 0, 2))
    return dec_out @ params["fc_w"] + params["fc_b"][0]


# ----------------------------------------------------------------------------
if __name__ == "__main__":
    B = 2
    T_SRC = 8
    T_TGT = 6
    INPUT_DIM = 37     # src vocab
    OUTPUT_DIM = 41    # tgt vocab
    EMBED_DIM = 32
    HIDDEN_DIM = 32
    N_LAYERS = 2
    DROPOUT = 0.1      # unused (eval semantics)

    key = jax.random.PRNGKey(0)
    k_params, k_src, k_tgt = jax.random.split(key, 3)
    params = init_params(k_params, INPUT_DIM, OUTPUT_DIM, EMBED_DIM, HIDDEN_DIM, N_LAYERS)

    src = jax.random.randint(k_src, (B, T_SRC), 0, INPUT_DIM, dtype=jnp.int32)
    tgt = jax.random.randint(k_tgt, (B, T_TGT), 0, OUTPUT_DIM, dtype=jnp.int32)

    fwd = functools.partial(lstm_seq2seq_forward,
                            embed_dim=EMBED_DIM, hidden_dim=HIDDEN_DIM,
                            output_dim=OUTPUT_DIM, n_layers=N_LAYERS)
    out = jax.jit(fwd)(params, src, tgt)
    out = jax.block_until_ready(out)

    ref = forward_ref(params, src, tgt, HIDDEN_DIM, N_LAYERS)
    assert out.shape == (B, T_TGT, OUTPUT_DIM), out.shape
    err = float(jnp.max(jnp.abs(out - ref)))
    # bf16 MXU operands (weights + activation casts) vs f32 reference.
    assert np.allclose(np.asarray(out), np.asarray(ref), atol=2e-2, rtol=2e-2), (
        f"mismatch vs reference (max abs err {err})")

    print("KERNEL_OK")
</pallas_src>

<mosaic_0001>
module attributes {stable_mosaic.version = 11 : i64} {
  func.func @_seq2seq_kernel(%arg0: memref<64x128xf32, #tpu.memory_space<vmem>>, %arg1: memref<48x128xf32, #tpu.memory_space<vmem>>, %arg2: memref<2x128x512xbf16, #tpu.memory_space<vmem>>, %arg3: memref<2x128x512xbf16, #tpu.memory_space<vmem>>, %arg4: memref<2x1x512xf32, #tpu.memory_space<vmem>>, %arg5: memref<2x128x512xbf16, #tpu.memory_space<vmem>>, %arg6: memref<2x128x512xbf16, #tpu.memory_space<vmem>>, %arg7: memref<2x1x512xf32, #tpu.memory_space<vmem>>, %arg8: memref<128x128xbf16, #tpu.memory_space<vmem>>, %arg9: memref<1x128xf32, #tpu.memory_space<vmem>>, %arg10: memref<48x128xf32, #tpu.memory_space<vmem>>, %arg11: memref<64x128xf32, #tpu.memory_space<vmem>>, %arg12: memref<64x128xf32, #tpu.memory_space<vmem>>, %arg13: memref<64x512xf32, #tpu.memory_space<vmem>>, %arg14: memref<4x8x128xf32, #tpu.memory_space<vmem>>) attributes {dimension_semantics = [], scalar_prefetch = 0 : i64, scratch_operands = 4 : i64, tpu.core_type = #tpu.core_type<tc>} {
    %cst = arith.constant 0.000000e+00 : f32
    %0 = vector.broadcast %cst : f32 to vector<8x128xf32>
    %c0 = arith.constant 0 : index
    %c0_0 = arith.constant 0 : index
    %c0_1 = arith.constant 0 : index
    %1 = vector.load %arg2[%c0, %c0_0, %c0_1] : memref<2x128x512xbf16, #tpu.memory_space<vmem>>, vector<1x128x512xbf16>
    %2 = vector.shape_cast %1 : vector<1x128x512xbf16> to vector<128x512xbf16>
    %c0_2 = arith.constant 0 : index
    %c0_3 = arith.constant 0 : index
    %c0_4 = arith.constant 0 : index
    %3 = vector.load %arg3[%c0_2, %c0_3, %c0_4] : memref<2x128x512xbf16, #tpu.memory_space<vmem>>, vector<1x128x512xbf16>
    %4 = vector.shape_cast %3 : vector<1x128x512xbf16> to vector<128x512xbf16>
    %c0_5 = arith.constant 0 : index
    %c0_6 = arith.constant 0 : index
    %c0_7 = arith.constant 0 : index
    %5 = vector.load %arg4[%c0_5, %c0_6, %c0_7] : memref<2x1x512xf32, #tpu.memory_space<vmem>>, vector<1x1x512xf32>
    %6 = vector.shape_cast %5 : vector<1x1x512xf32> to vector<1x512xf32>
    %c0_8 = arith.constant 0 : index
    %c0_9 = arith.constant 0 : index
    %7 = vector.load %arg0[%c0_8, %c0_9] : memref<64x128xf32, #tpu.memory_space<vmem>>, vector<64x128xf32>
    %8 = arith.truncf %7 : vector<64x128xf32> to vector<64x128xbf16>
    %cst_10 = arith.constant dense<0.000000e+00> : vector<64x512xf32>
    %9 = tpu.matmul %8, %2, %cst_10 {dimension_numbers = #tpu.dot_dimension_numbers<[1], [0], [0], [1], [0, 0, 1, 1], [], []>} : vector<64x128xbf16>, vector<128x512xbf16>, vector<64x512xf32> -> vector<64x512xf32>
    %10 = vector.broadcast %6 : vector<1x512xf32> to vector<64x512xf32>
    %11 = arith.addf %9, %10 : vector<64x512xf32>
    %c0_11 = arith.constant 0 : index
    %c0_12 = arith.constant 0 : index
    %12 = vector.load %arg13[%c0_11, %c0_12] : memref<64x512xf32, #tpu.memory_space<vmem>>, vector<64x512xf32>
    tpu.vector_store %arg13[%c0_11, %c0_12], %11 {strides = array<i32>} : memref<64x512xf32, #tpu.memory_space<vmem>>, vector<64x512xf32>,
    %c0_i32 = arith.constant 0 : i32
    %c8_i32 = arith.constant 8 : i32
    %13 = arith.muli %c0_i32, %c8_i32 : i32
    %14 = tpu.assume_multiple %13, 8 : i32
    %15 = arith.index_cast %14 : i32 to index
    %c0_13 = arith.constant 0 : index
    %16 = vector.load %arg13[%15, %c0_13] : memref<64x512xf32, #tpu.memory_space<vmem>>, vector<8x512xf32>
    %17 = arith.truncf %0 : vector<8x128xf32> to vector<8x128xbf16>
    %cst_14 = arith.constant dense<0.000000e+00> : vector<8x512xf32>
    %18 = tpu.matmul %17, %4, %cst_14 {dimension_numbers = #tpu.dot_dimension_numbers<[1], [0], [0], [1], [0, 0, 1, 1], [], []>} : vector<8x128xbf16>, vector<128x512xbf16>, vector<8x512xf32> -> vector<8x512xf32>
    %19 = arith.addf %16, %18 : vector<8x512xf32>
    %20 = vector.extract_strided_slice %19 {offsets = [0, 0], sizes = [8, 384], strides = [1, 1]} : vector<8x512xf32> to vector<8x384xf32>
    %21 = arith.negf %20 : vector<8x384xf32>
    %22 = math.exp %21 : vector<8x384xf32>
    %cst_15 = arith.constant 1.000000e+00 : f32
    %23 = vector.broadcast %cst_15 : f32 to vector<8x384xf32>
    %24 = arith.addf %23, %22 : vector<8x384xf32>
    %25 = arith.divf %23, %24 : vector<8x384xf32>
    %26 = vector.extract_strided_slice %25 {offsets = [0, 0], sizes = [8, 128], strides = [1, 1]} : vector<8x384xf32> to vector<8x128xf32>
    %27 = vector.extract_strided_slice %25 {offsets = [0, 128], sizes = [8, 128], strides = [1, 1]} : vector<8x384xf32> to vector<8x128xf32>
    %28 = vector.extract_strided_slice %25 {offsets = [0, 256], sizes = [8, 128], strides = [1, 1]} : vector<8x384xf32> to vector<8x128xf32>
    %29 = vector.extract_strided_slice %19 {offsets = [0, 384], sizes = [8, 128], strides = [1, 1]} : vector<8x512xf32> to vector<8x128xf32>
    %30 = math.tanh %29 : vector<8x128xf32>
    %31 = arith.mulf %27, %0 : vector<8x128xf32>
    %32 = arith.mulf %26, %30 : vector<8x128xf32>
    %33 = arith.addf %31, %32 : vector<8x128xf32>
    %34 = math.tanh %33 : vector<8x128xf32>
    %35 = arith.mulf %28, %34 : vector<8x128xf32>
    %36 = arith.index_cast %14 : i32 to index
    %c0_16 = arith.constant 0 : index
    %37 = vector.load %arg11[%36, %c0_16] : memref<64x128xf32, #tpu.memory_space<vmem>>, vector<8x128xf32>
    tpu.vector_store %arg11[%36, %c0_16], %35 {strides = array<i32>} : memref<64x128xf32, #tpu.memory_space<vmem>>, vector<8x128xf32>,
    %c1_i32 = arith.constant 1 : i32
    %c8_i32_17 = arith.constant 8 : i32
    %38 = arith.muli %c1_i32, %c8_i32_17 : i32
    %39 = tpu.assume_multiple %38, 8 : i32
    %40 = arith.index_cast %39 : i32 to index
    %c0_18 = arith.constant 0 : index
    %41 = vector.load %arg13[%40, %c0_18] : memref<64x512xf32, #tpu.memory_space<vmem>>, vector<8x512xf32>
    %42 = arith.truncf %35 : vector<8x128xf32> to vector<8x128xbf16>
    %cst_19 = arith.constant dense<0.000000e+00> : vector<8x512xf32>
    %43 = tpu.matmul %42, %4, %cst_19 {dimension_numbers = #tpu.dot_dimension_numbers<[1], [0], [0], [1], [0, 0, 1, 1], [], []>} : vector<8x128xbf16>, vector<128x512xbf16>, vector<8x512xf32> -> vector<8x512xf32>
    %44 = arith.addf %41, %43 : vector<8x512xf32>
    %45 = vector.extract_strided_slice %44 {offsets = [0, 0], sizes = [8, 384], strides = [1, 1]} : vector<8x512xf32> to vector<8x384xf32>
    %46 = arith.negf %45 : vector<8x384xf32>
    %47 = math.exp %46 : vector<8x384xf32>
    %cst_20 = arith.constant 1.000000e+00 : f32
    %48 = vector.broadcast %cst_20 : f32 to vector<8x384xf32>
    %49 = arith.addf %48, %47 : vector<8x384xf32>
    %50 = arith.divf %48, %49 : vector<8x384xf32>
    %51 = vector.extract_strided_slice %50 {offsets = [0, 0], sizes = [8, 128], strides = [1, 1]} : vector<8x384xf32> to vector<8x128xf32>
    %52 = vector.extract_strided_slice %50 {offsets = [0, 128], sizes = [8, 128], strides = [1, 1]} : vector<8x384xf32> to vector<8x128xf32>
    %53 = vector.extract_strided_slice %50 {offsets = [0, 256], sizes = [8, 128], strides = [1, 1]} : vector<8x384xf32> to vector<8x128xf32>
    %54 = vector.extract_strided_slice %44 {offsets = [0, 384], sizes = [8, 128], strides = [1, 1]} : vector<8x512xf32> to vector<8x128xf32>
    %55 = math.tanh %54 : vector<8x128xf32>
    %56 = arith.mulf %52, %33 : vector<8x128xf32>
    %57 = arith.mulf %51, %55 : vector<8x128xf32>
    %58 = arith.addf %56, %57 : vector<8x128xf32>
    %59 = math.tanh %58 : vector<8x128xf32>
    %60 = arith.mulf %53, %59 : vector<8x128xf32>
    %61 = arith.index_cast %39 : i32 to index
    %c0_21 = arith.constant 0 : index
    %62 = vector.load %arg11[%61, %c0_21] : memref<64x128xf32, #tpu.memory_space<vmem>>, vector<8x128xf32>
    tpu.vector_store %arg11[%61, %c0_21], %60 {strides = array<i32>} : memref<64x128xf32, #tpu.memory_space<vmem>>, vector<8x128xf32>,
    %c2_i32 = arith.constant 2 : i32
    %c8_i32_22 = arith.constant 8 : i32
    %63 = arith.muli %c2_i32, %c8_i32_22 : i32
    %64 = tpu.assume_multiple %63, 8 : i32
    %65 = arith.index_cast %64 : i32 to index
    %c0_23 = arith.constant 0 : index
    %66 = vector.load %arg13[%65, %c0_23] : memref<64x512xf32, #tpu.memory_space<vmem>>, vector<8x512xf32>
    %67 = arith.truncf %60 : vector<8x128xf32> to vector<8x128xbf16>
    %cst_24 = arith.constant dense<0.000000e+00> : vector<8x512xf32>
    %68 = tpu.matmul %67, %4, %cst_24 {dimension_numbers = #tpu.dot_dimension_numbers<[1], [0], [0], [1], [0, 0, 1, 1], [], []>} : vector<8x128xbf16>, vector<128x512xbf16>, vector<8x512xf32> -> vector<8x512xf32>
    %69 = arith.addf %66, %68 : vector<8x512xf32>
    %70 = vector.extract_strided_slice %69 {offsets = [0, 0], sizes = [8, 384], strides = [1, 1]} : vector<8x512xf32> to vector<8x384xf32>
    %71 = arith.negf %70 : vector<8x384xf32>
    %72 = math.exp %71 : vector<8x384xf32>
    %cst_25 = arith.constant 1.000000e+00 : f32
    %73 = vector.broadcast %cst_25 : f32 to vector<8x384xf32>
    %74 = arith.addf %73, %72 : vector<8x384xf32>
    %75 = arith.divf %73, %74 : vector<8x384xf32>
    %76 = vector.extract_strided_slice %75 {offsets = [0, 0], sizes = [8, 128], strides = [1, 1]} : vector<8x384xf32> to vector<8x128xf32>
    %77 = vector.extract_strided_slice %75 {offsets = [0, 128], sizes = [8, 128], strides = [1, 1]} : vector<8x384xf32> to vector<8x128xf32>
    %78 = vector.extract_strided_slice %75 {offsets = [0, 256], sizes = [8, 128], strides = [1, 1]} : vector<8x384xf32> to vector<8x128xf32>
    %79 = vector.extract_strided_slice %69 {offsets = [0, 384], sizes = [8, 128], strides = [1, 1]} : vector<8x512xf32> to vector<8x128xf32>
    %80 = math.tanh %79 : vector<8x128xf32>
    %81 = arith.mulf %77, %58 : vector<8x128xf32>
    %82 = arith.mulf %76, %80 : vector<8x128xf32>
    %83 = arith.addf %81, %82 : vector<8x128xf32>
    %84 = math.tanh %83 : vector<8x128xf32>
    %85 = arith.mulf %78, %84 : vector<8x128xf32>
    %86 = arith.index_cast %64 : i32 to index
    %c0_26 = arith.constant 0 : index
    %87 = vector.load %arg11[%86, %c0_26] : memref<64x128xf32, #tpu.memory_space<vmem>>, vector<8x128xf32>
    tpu.vector_store %arg11[%86, %c0_26], %85 {strides = array<i32>} : memref<64x128xf32, #tpu.memory_space<vmem>>, vector<8x128xf32>,
    %c3_i32 = arith.constant 3 : i32
    %c8_i32_27 = arith.constant 8 : i32
    %88 = arith.muli %c3_i32, %c8_i32_27 : i32
    %89 = tpu.assume_multiple %88, 8 : i32
    %90 = arith.index_cast %89 : i32 to index
    %c0_28 = arith.constant 0 : index
    %91 = vector.load %arg13[%90, %c0_28] : memref<64x512xf32, #tpu.memory_space<vmem>>, vector<8x512xf32>
    %92 = arith.truncf %85 : vector<8x128xf32> to vector<8x128xbf16>
    %cst_29 = arith.constant dense<0.000000e+00> : vector<8x512xf32>
    %93 = tpu.matmul %92, %4, %cst_29 {dimension_numbers = #tpu.dot_dimension_numbers<[1], [0], [0], [1], [0, 0, 1, 1], [], []>} : vector<8x128xbf16>, vector<128x512xbf16>, vector<8x512xf32> -> vector<8x512xf32>
    %94 = arith.addf %91, %93 : vector<8x512xf32>
    %95 = vector.extract_strided_slice %94 {offsets = [0, 0], sizes = [8, 384], strides = [1, 1]} : vector<8x512xf32> to vector<8x384xf32>
    %96 = arith.negf %95 : vector<8x384xf32>
    %97 = math.exp %96 : vector<8x384xf32>
    %cst_30 = arith.constant 1.000000e+00 : f32
    %98 = vector.broadcast %cst_30 : f32 to vector<8x384xf32>
    %99 = arith.addf %98, %97 : vector<8x384xf32>
    %100 = arith.divf %98, %99 : vector<8x384xf32>
    %101 = vector.extract_strided_slice %100 {offsets = [0, 0], sizes = [8, 128], strides = [1, 1]} : vector<8x384xf32> to vector<8x128xf32>
    %102 = vector.extract_strided_slice %100 {offsets = [0, 128], sizes = [8, 128], strides = [1, 1]} : vector<8x384xf32> to vector<8x128xf32>
    %103 = vector.extract_strided_slice %100 {offsets = [0, 256], sizes = [8, 128], strides = [1, 1]} : vector<8x384xf32> to vector<8x128xf32>
    %104 = vector.extract_strided_slice %94 {offsets = [0, 384], sizes = [8, 128], strides = [1, 1]} : vector<8x512xf32> to vector<8x128xf32>
    %105 = math.tanh %104 : vector<8x128xf32>
    %106 = arith.mulf %102, %83 : vector<8x128xf32>
    %107 = arith.mulf %101, %105 : vector<8x128xf32>
    %108 = arith.addf %106, %107 : vector<8x128xf32>
    %109 = math.tanh %108 : vector<8x128xf32>
    %110 = arith.mulf %103, %109 : vector<8x128xf32>
    %111 = arith.index_cast %89 : i32 to index
    %c0_31 = arith.constant 0 : index
    %112 = vector.load %arg11[%111, %c0_31] : memref<64x128xf32, #tpu.memory_space<vmem>>, vector<8x128xf32>
    tpu.vector_store %arg11[%111, %c0_31], %110 {strides = array<i32>} : memref<64x128xf32, #tpu.memory_space<vmem>>, vector<8x128xf32>,
    %c4_i32 = arith.constant 4 : i32
    %c8_i32_32 = arith.constant 8 : i32
    %113 = arith.muli %c4_i32, %c8_i32_32 : i32
    %114 = tpu.assume_multiple %113, 8 : i32
    %115 = arith.index_cast %114 : i32 to index
    %c0_33 = arith.constant 0 : index
    %116 = vector.load %arg13[%115, %c0_33] : memref<64x512xf32, #tpu.memory_space<vmem>>, vector<8x512xf32>
    %117 = arith.truncf %110 : vector<8x128xf32> to vector<8x128xbf16>
    %cst_34 = arith.constant dense<0.000000e+00> : vector<8x512xf32>
    %118 = tpu.matmul %117, %4, %cst_34 {dimension_numbers = #tpu.dot_dimension_numbers<[1], [0], [0], [1], [0, 0, 1, 1], [], []>} : vector<8x128xbf16>, vector<128x512xbf16>, vector<8x512xf32> -> vector<8x512xf32>
    %119 = arith.addf %116, %118 : vector<8x512xf32>
    %120 = vector.extract_strided_slice %119 {offsets = [0, 0], sizes = [8, 384], strides = [1, 1]} : vector<8x512xf32> to vector<8x384xf32>
    %121 = arith.negf %120 : vector<8x384xf32>
    %122 = math.exp %121 : vector<8x384xf32>
    %cst_35 = arith.constant 1.000000e+00 : f32
    %123 = vector.broadcast %cst_35 : f32 to vector<8x384xf32>
    %124 = arith.addf %123, %122 : vector<8x384xf32>
    %125 = arith.divf %123, %124 : vector<8x384xf32>
    %126 = vector.extract_strided_slice %125 {offsets = [0, 0], sizes = [8, 128], strides = [1, 1]} : vector<8x384xf32> to vector<8x128xf32>
    %127 = vector.extract_strided_slice %125 {offsets = [0, 128], sizes = [8, 128], strides = [1, 1]} : vector<8x384xf32> to vector<8x128xf32>
    %128 = vector.extract_strided_slice %125 {offsets = [0, 256], sizes = [8, 128], strides = [1, 1]} : vector<8x384xf32> to vector<8x128xf32>
    %129 = vector.extract_strided_slice %119 {offsets = [0, 384], sizes = [8, 128], strides = [1, 1]} : vector<8x512xf32> to vector<8x128xf32>
    %130 = math.tanh %129 : vector<8x128xf32>
    %131 = arith.mulf %127, %108 : vector<8x128xf32>
    %132 = arith.mulf %126, %130 : vector<8x128xf32>
    %133 = arith.addf %131, %132 : vector<8x128xf32>
    %134 = math.tanh %133 : vector<8x128xf32>
    %135 = arith.mulf %128, %134 : vector<8x128xf32>
    %136 = arith.index_cast %114 : i32 to index
    %c0_36 = arith.constant 0 : index
    %137 = vector.load %arg11[%136, %c0_36] : memref<64x128xf32, #tpu.memory_space<vmem>>, vector<8x128xf32>
    tpu.vector_store %arg11[%136, %c0_36], %135 {strides = array<i32>} : memref<64x128xf32, #tpu.memory_space<vmem>>, vector<8x128xf32>,
    %c5_i32 = arith.constant 5 : i32
    %c8_i32_37 = arith.constant 8 : i32
    %138 = arith.muli %c5_i32, %c8_i32_37 : i32
    %139 = tpu.assume_multiple %138, 8 : i32
    %140 = arith.index_cast %139 : i32 to index
    %c0_38 = arith.constant 0 : index
    %141 = vector.load %arg13[%140, %c0_38] : memref<64x512xf32, #tpu.memory_space<vmem>>, vector<8x512xf32>
    %142 = arith.truncf %135 : vector<8x128xf32> to vector<8x128xbf16>
    %cst_39 = arith.constant dense<0.000000e+00> : vector<8x512xf32>
    %143 = tpu.matmul %142, %4, %cst_39 {dimension_numbers = #tpu.dot_dimension_numbers<[1], [0], [0], [1], [0, 0, 1, 1], [], []>} : vector<8x128xbf16>, vector<128x512xbf16>, vector<8x512xf32> -> vector<8x512xf32>
    %144 = arith.addf %141, %143 : vector<8x512xf32>
    %145 = vector.extract_strided_slice %144 {offsets = [0, 0], sizes = [8, 384], strides = [1, 1]} : vector<8x512xf32> to vector<8x384xf32>
    %146 = arith.negf %145 : vector<8x384xf32>
    %147 = math.exp %146 : vector<8x384xf32>
    %cst_40 = arith.constant 1.000000e+00 : f32
    %148 = vector.broadcast %cst_40 : f32 to vector<8x384xf32>
    %149 = arith.addf %148, %147 : vector<8x384xf32>
    %150 = arith.divf %148, %149 : vector<8x384xf32>
    %151 = vector.extract_strided_slice %150 {offsets = [0, 0], sizes = [8, 128], strides = [1, 1]} : vector<8x384xf32> to vector<8x128xf32>
    %152 = vector.extract_strided_slice %150 {offsets = [0, 128], sizes = [8, 128], strides = [1, 1]} : vector<8x384xf32> to vector<8x128xf32>
    %153 = vector.extract_strided_slice %150 {offsets = [0, 256], sizes = [8, 128], strides = [1, 1]} : vector<8x384xf32> to vector<8x128xf32>
    %154 = vector.extract_strided_slice %144 {offsets = [0, 384], sizes = [8, 128], strides = [1, 1]} : vector<8x512xf32> to vector<8x128xf32>
    %155 = math.tanh %154 : vector<8x128xf32>
    %156 = arith.mulf %152, %133 : vector<8x128xf32>
    %157 = arith.mulf %151, %155 : vector<8x128xf32>
    %158 = arith.addf %156, %157 : vector<8x128xf32>
    %159 = math.tanh %158 : vector<8x128xf32>
    %160 = arith.mulf %153, %159 : vector<8x128xf32>
    %161 = arith.index_cast %139 : i32 to index
    %c0_41 = arith.constant 0 : index
    %162 = vector.load %arg11[%161, %c0_41] : memref<64x128xf32, #tpu.memory_space<vmem>>, vector<8x128xf32>
    tpu.vector_store %arg11[%161, %c0_41], %160 {strides = array<i32>} : memref<64x128xf32, #tpu.memory_space<vmem>>, vector<8x128xf32>,
    %c6_i32 = arith.constant 6 : i32
    %c8_i32_42 = arith.constant 8 : i32
    %163 = arith.muli %c6_i32, %c8_i32_42 : i32
    %164 = tpu.assume_multiple %163, 8 : i32
    %165 = arith.index_cast %164 : i32 to index
    %c0_43 = arith.constant 0 : index
    %166 = vector.load %arg13[%165, %c0_43] : memref<64x512xf32, #tpu.memory_space<vmem>>, vector<8x512xf32>
    %167 = arith.truncf %160 : vector<8x128xf32> to vector<8x128xbf16>
    %cst_44 = arith.constant dense<0.000000e+00> : vector<8x512xf32>
    %168 = tpu.matmul %167, %4, %cst_44 {dimension_numbers = #tpu.dot_dimension_numbers<[1], [0], [0], [1], [0, 0, 1, 1], [], []>} : vector<8x128xbf16>, vector<128x512xbf16>, vector<8x512xf32> -> vector<8x512xf32>
    %169 = arith.addf %166, %168 : vector<8x512xf32>
    %170 = vector.extract_strided_slice %169 {offsets = [0, 0], sizes = [8, 384], strides = [1, 1]} : vector<8x512xf32> to vector<8x384xf32>
    %171 = arith.negf %170 : vector<8x384xf32>
    %172 = math.exp %171 : vector<8x384xf32>
    %cst_45 = arith.constant 1.000000e+00 : f32
    %173 = vector.broadcast %cst_45 : f32 to vector<8x384xf32>
    %174 = arith.addf %173, %172 : vector<8x384xf32>
    %175 = arith.divf %173, %174 : vector<8x384xf32>
    %176 = vector.extract_strided_slice %175 {offsets = [0, 0], sizes = [8, 128], strides = [1, 1]} : vector<8x384xf32> to vector<8x128xf32>
    %177 = vector.extract_strided_slice %175 {offsets = [0, 128], sizes = [8, 128], strides = [1, 1]} : vector<8x384xf32> to vector<8x128xf32>
    %178 = vector.extract_strided_slice %175 {offsets = [0, 256], sizes = [8, 128], strides = [1, 1]} : vector<8x384xf32> to vector<8x128xf32>
    %179 = vector.extract_strided_slice %169 {offsets = [0, 384], sizes = [8, 128], strides = [1, 1]} : vector<8x512xf32> to vector<8x128xf32>
    %180 = math.tanh %179 : vector<8x128xf32>
    %181 = arith.mulf %177, %158 : vector<8x128xf32>
    %182 = arith.mulf %176, %180 : vector<8x128xf32>
    %183 = arith.addf %181, %182 : vector<8x128xf32>
    %184 = math.tanh %183 : vector<8x128xf32>
    %185 = arith.mulf %178, %184 : vector<8x128xf32>
    %186 = arith.index_cast %164 : i32 to index
    %c0_46 = arith.constant 0 : index
    %187 = vector.load %arg11[%186, %c0_46] : memref<64x128xf32, #tpu.memory_space<vmem>>, vector<8x128xf32>
    tpu.vector_store %arg11[%186, %c0_46], %185 {strides = array<i32>} : memref<64x128xf32, #tpu.memory_space<vmem>>, vector<8x128xf32>,
    %c7_i32 = arith.constant 7 : i32
    %c8_i32_47 = arith.constant 8 : i32
    %188 = arith.muli %c7_i32, %c8_i32_47 : i32
    %189 = tpu.assume_multiple %188, 8 : i32
    %190 = arith.index_cast %189 : i32 to index
    %c0_48 = arith.constant 0 : index
    %191 = vector.load %arg13[%190, %c0_48] : memref<64x512xf32, #tpu.memory_space<vmem>>, vector<8x512xf32>
    %192 = arith.truncf %185 : vector<8x128xf32> to vector<8x128xbf16>
    %cst_49 = arith.constant dense<0.000000e+00> : vector<8x512xf32>
    %193 = tpu.matmul %192, %4, %cst_49 {dimension_numbers = #tpu.dot_dimension_numbers<[1], [0], [0], [1], [0, 0, 1, 1], [], []>} : vector<8x128xbf16>, vector<128x512xbf16>, vector<8x512xf32> -> vector<8x512xf32>
    %194 = arith.addf %191, %193 : vector<8x512xf32>
    %195 = vector.extract_strided_slice %194 {offsets = [0, 0], sizes = [8, 384], strides = [1, 1]} : vector<8x512xf32> to vector<8x384xf32>
    %196 = arith.negf %195 : vector<8x384xf32>
    %197 = math.exp %196 : vector<8x384xf32>
    %cst_50 = arith.constant 1.000000e+00 : f32
    %198 = vector.broadcast %cst_50 : f32 to vector<8x384xf32>
    %199 = arith.addf %198, %197 : vector<8x384xf32>
    %200 = arith.divf %198, %199 : vector<8x384xf32>
    %201 = vector.extract_strided_slice %200 {offsets = [0, 0], sizes = [8, 128], strides = [1, 1]} : vector<8x384xf32> to vector<8x128xf32>
    %202 = vector.extract_strided_slice %200 {offsets = [0, 128], sizes = [8, 128], strides = [1, 1]} : vector<8x384xf32> to vector<8x128xf32>
    %203 = vector.extract_strided_slice %200 {offsets = [0, 256], sizes = [8, 128], strides = [1, 1]} : vector<8x384xf32> to vector<8x128xf32>
    %204 = vector.extract_strided_slice %194 {offsets = [0, 384], sizes = [8, 128], strides = [1, 1]} : vector<8x512xf32> to vector<8x128xf32>
    %205 = math.tanh %204 : vector<8x128xf32>
    %206 = arith.mulf %202, %183 : vector<8x128xf32>
    %207 = arith.mulf %201, %205 : vector<8x128xf32>
    %208 = arith.addf %206, %207 : vector<8x128xf32>
    %209 = math.tanh %208 : vector<8x128xf32>
    %210 = arith.mulf %203, %209 : vector<8x128xf32>
    %211 = arith.index_cast %189 : i32 to index
    %c0_51 = arith.constant 0 : index
    %212 = vector.load %arg11[%211, %c0_51] : memref<64x128xf32, #tpu.memory_space<vmem>>, vector<8x128xf32>
    tpu.vector_store %arg11[%211, %c0_51], %210 {strides = array<i32>} : memref<64x128xf32, #tpu.memory_space<vmem>>, vector<8x128xf32>,
    %c8_i32_52 = arith.constant 8 : i32
    %c0_53 = arith.constant 0 : index
    %c0_54 = arith.constant 0 : index
    %c0_55 = arith.constant 0 : index
    %213 = vector.load %arg14[%c0_53, %c0_54, %c0_55] : memref<4x8x128xf32, #tpu.memory_space<vmem>>, vector<1x8x128xf32>
    %214 = vector.shape_cast %213 : vector<1x8x128xf32> to vector<8x128xf32>
    %215 = vector.shape_cast %210 : vector<8x128xf32> to vector<1x8x128xf32>
    tpu.vector_store %arg14[%c0_53, %c0_54, %c0_55], %215 {strides = array<i32>} : memref<4x8x128xf32, #tpu.memory_space<vmem>>, vector<1x8x128xf32>,
    %c1 = arith.constant 1 : index
    %c0_56 = arith.constant 0 : index
    %c0_57 = arith.constant 0 : index
    %216 = vector.load %arg14[%c1, %c0_56, %c0_57] : memref<4x8x128xf32, #tpu.memory_space<vmem>>, vector<1x8x128xf32>
    %217 = vector.shape_cast %216 : vector<1x8x128xf32> to vector<8x128xf32>
    %218 = vector.shape_cast %208 : vector<8x128xf32> to vector<1x8x128xf32>
    tpu.vector_store %arg14[%c1, %c0_56, %c0_57], %218 {strides = array<i32>} : memref<4x8x128xf32, #tpu.memory_space<vmem>>, vector<1x8x128xf32>,
    %c1_58 = arith.constant 1 : index
    %c0_59 = arith.constant 0 : index
    %c0_60 = arith.constant 0 : index
    %219 = vector.load %arg2[%c1_58, %c0_59, %c0_60] : memref<2x128x512xbf16, #tpu.memory_space<vmem>>, vector<1x128x512xbf16>
    %220 = vector.shape_cast %219 : vector<1x128x512xbf16> to vector<128x512xbf16>
    %c1_61 = arith.constant 1 : index
    %c0_62 = arith.constant 0 : index
    %c0_63 = arith.constant 0 : index
    %221 = vector.load %arg3[%c1_61, %c0_62, %c0_63] : memref<2x128x512xbf16, #tpu.memory_space<vmem>>, vector<1x128x512xbf16>
    %222 = vector.shape_cast %221 : vector<1x128x512xbf16> to vector<128x512xbf16>
    %c1_64 = arith.constant 1 : index
    %c0_65 = arith.constant 0 : index
    %c0_66 = arith.constant 0 : index
    %223 = vector.load %arg4[%c1_64, %c0_65, %c0_66] : memref<2x1x512xf32, #tpu.memory_space<vmem>>, vector<1x1x512xf32>
    %224 = vector.shape_cast %223 : vector<1x1x512xf32> to vector<1x512xf32>
    %c0_67 = arith.constant 0 : index
    %c0_68 = arith.constant 0 : index
    %225 = vector.load %arg11[%c0_67, %c0_68] : memref<64x128xf32, #tpu.memory_space<vmem>>, vector<64x128xf32>
    %226 = arith.truncf %225 : vector<64x128xf32> to vector<64x128xbf16>
    %cst_69 = arith.constant dense<0.000000e+00> : vector<64x512xf32>
    %227 = tpu.matmul %226, %220, %cst_69 {dimension_numbers = #tpu.dot_dimension_numbers<[1], [0], [0], [1], [0, 0, 1, 1], [], []>} : vector<64x128xbf16>, vector<128x512xbf16>, vector<64x512xf32> -> vector<64x512xf32>
    %228 = vector.broadcast %224 : vector<1x512xf32> to vector<64x512xf32>
    %229 = arith.addf %227, %228 : vector<64x512xf32>
    %c0_70 = arith.constant 0 : index
    %c0_71 = arith.constant 0 : index
    %230 = vector.load %arg13[%c0_70, %c0_71] : memref<64x512xf32, #tpu.memory_space<vmem>>, vector<64x512xf32>
    tpu.vector_store %arg13[%c0_70, %c0_71], %229 {strides = array<i32>} : memref<64x512xf32, #tpu.memory_space<vmem>>, vector<64x512xf32>,
    %c0_i32_72 = arith.constant 0 : i32
    %c8_i32_73 = arith.constant 8 : i32
    %231 = arith.muli %c0_i32_72, %c8_i32_73 : i32
    %232 = tpu.assume_multiple %231, 8 : i32
    %233 = arith.index_cast %232 : i32 to index
    %c0_74 = arith.constant 0 : index
    %234 = vector.load %arg13[%233, %c0_74] : memref<64x512xf32, #tpu.memory_space<vmem>>, vector<8x512xf32>
    %235 = arith.truncf %0 : vector<8x128xf32> to vector<8x128xbf16>
    %cst_75 = arith.constant dense<0.000000e+00> : vector<8x512xf32>
    %236 = tpu.matmul %235, %222, %cst_75 {dimension_numbers = #tpu.dot_dimension_numbers<[1], [0], [0], [1], [0, 0, 1, 1], [], []>} : vector<8x128xbf16>, vector<128x512xbf16>, vector<8x512xf32> -> vector<8x512xf32>
    %237 = arith.addf %234, %236 : vector<8x512xf32>
    %238 = vector.extract_strided_slice %237 {offsets = [0, 0], sizes = [8, 384], strides = [1, 1]} : vector<8x512xf32> to vector<8x384xf32>
    %239 = arith.negf %238 : vector<8x384xf32>
    %240 = math.exp %239 : vector<8x384xf32>
    %cst_76 = arith.constant 1.000000e+00 : f32
    %241 = vector.broadcast %cst_76 : f32 to vector<8x384xf32>
    %242 = arith.addf %241, %240 : vector<8x384xf32>
    %243 = arith.divf %241, %242 : vector<8x384xf32>
    %244 = vector.extract_strided_slice %243 {offsets = [0, 0], sizes = [8, 128], strides = [1, 1]} : vector<8x384xf32> to vector<8x128xf32>
    %245 = vector.extract_strided_slice %243 {offsets = [0, 128], sizes = [8, 128], strides = [1, 1]} : vector<8x384xf32> to vector<8x128xf32>
    %246 = vector.extract_strided_slice %243 {offsets = [0, 256], sizes = [8, 128], strides = [1, 1]} : vector<8x384xf32> to vector<8x128xf32>
    %247 = vector.extract_strided_slice %237 {offsets = [0, 384], sizes = [8, 128], strides = [1, 1]} : vector<8x512xf32> to vector<8x128xf32>
    %248 = math.tanh %247 : vector<8x128xf32>
    %249 = arith.mulf %245, %0 : vector<8x128xf32>
    %250 = arith.mulf %244, %248 : vector<8x128xf32>
    %251 = arith.addf %249, %250 : vector<8x128xf32>
    %252 = math.tanh %251 : vector<8x128xf32>
    %253 = arith.mulf %246, %252 : vector<8x128xf32>
    %254 = arith.index_cast %232 : i32 to index
    %c0_77 = arith.constant 0 : index
    %255 = vector.load %arg12[%254, %c0_77] : memref<64x128xf32, #tpu.memory_space<vmem>>, vector<8x128xf32>
    tpu.vector_store %arg12[%254, %c0_77], %253 {strides = array<i32>} : memref<64x128xf32, #tpu.memory_space<vmem>>, vector<8x128xf32>,
    %c1_i32_78 = arith.constant 1 : i32
    %c8_i32_79 = arith.constant 8 : i32
    %256 = arith.muli %c1_i32_78, %c8_i32_79 : i32
    %257 = tpu.assume_multiple %256, 8 : i32
    %258 = arith.index_cast %257 : i32 to index
    %c0_80 = arith.constant 0 : index
    %259 = vector.load %arg13[%258, %c0_80] : memref<64x512xf32, #tpu.memory_space<vmem>>, vector<8x512xf32>
    %260 = arith.truncf %253 : vector<8x128xf32> to vector<8x128xbf16>
    %cst_81 = arith.constant dense<0.000000e+00> : vector<8x512xf32>
    %261 = tpu.matmul %260, %222, %cst_81 {dimension_numbers = #tpu.dot_dimension_numbers<[1], [0], [0], [1], [0, 0, 1, 1], [], []>} : vector<8x128xbf16>, vector<128x512xbf16>, vector<8x512xf32> -> vector<8x512xf32>
    %262 = arith.addf %259, %261 : vector<8x512xf32>
    %263 = vector.extract_strided_slice %262 {offsets = [0, 0], sizes = [8, 384], strides = [1, 1]} : vector<8x512xf32> to vector<8x384xf32>
    %264 = arith.negf %263 : vector<8x384xf32>
    %265 = math.exp %264 : vector<8x384xf32>
    %cst_82 = arith.constant 1.000000e+00 : f32
    %266 = vector.broadcast %cst_82 : f32 to vector<8x384xf32>
    %267 = arith.addf %266, %265 : vector<8x384xf32>
    %268 = arith.divf %266, %267 : vector<8x384xf32>
    %269 = vector.extract_strided_slice %268 {offsets = [0, 0], sizes = [8, 128], strides = [1, 1]} : vector<8x384xf32> to vector<8x128xf32>
    %270 = vector.extract_strided_slice %268 {offsets = [0, 128], sizes = [8, 128], strides = [1, 1]} : vector<8x384xf32> to vector<8x128xf32>
    %271 = vector.extract_strided_slice %268 {offsets = [0, 256], sizes = [8, 128], strides = [1, 1]} : vector<8x384xf32> to vector<8x128xf32>
    %272 = vector.extract_strided_slice %262 {offsets = [0, 384], sizes = [8, 128], strides = [1, 1]} : vector<8x512xf32> to vector<8x128xf32>
    %273 = math.tanh %272 : vector<8x128xf32>
    %274 = arith.mulf %270, %251 : vector<8x128xf32>
    %275 = arith.mulf %269, %273 : vector<8x128xf32>
    %276 = arith.addf %274, %275 : vector<8x128xf32>
    %277 = math.tanh %276 : vector<8x128xf32>
    %278 = arith.mulf %271, %277 : vector<8x128xf32>
    %279 = arith.index_cast %257 : i32 to index
    %c0_83 = arith.constant 0 : index
    %280 = vector.load %arg12[%279, %c0_83] : memref<64x128xf32, #tpu.memory_space<vmem>>, vector<8x128xf32>
    tpu.vector_store %arg12[%279, %c0_83], %278 {strides = array<i32>} : memref<64x128xf32, #tpu.memory_space<vmem>>, vector<8x128xf32>,
    %c2_i32_84 = arith.constant 2 : i32
    %c8_i32_85 = arith.constant 8 : i32
    %281 = arith.muli %c2_i32_84, %c8_i32_85 : i32
    %282 = tpu.assume_multiple %281, 8 : i32
    %283 = arith.index_cast %282 : i32 to index
    %c0_86 = arith.constant 0 : index
    %284 = vector.load %arg13[%283, %c0_86] : memref<64x512xf32, #tpu.memory_space<vmem>>, vector<8x512xf32>
    %285 = arith.truncf %278 : vector<8x128xf32> to vector<8x128xbf16>
    %cst_87 = arith.constant dense<0.000000e+00> : vector<8x512xf32>
    %286 = tpu.matmul %285, %222, %cst_87 {dimension_numbers = #tpu.dot_dimension_numbers<[1], [0], [0], [1], [0, 0, 1, 1], [], []>} : vector<8x128xbf16>, vector<128x512xbf16>, vector<8x512xf32> -> vector<8x512xf32>
    %287 = arith.addf %284, %286 : vector<8x512xf32>
    %288 = vector.extract_strided_slice %287 {offsets = [0, 0], sizes = [8, 384], strides = [1, 1]} : vector<8x512xf32> to vector<8x384xf32>
    %289 = arith.negf %288 : vector<8x384xf32>
    %290 = math.exp %289 : vector<8x384xf32>
    %cst_88 = arith.constant 1.000000e+00 : f32
    %291 = vector.broadcast %cst_88 : f32 to vector<8x384xf32>
    %292 = arith.addf %291, %290 : vector<8x384xf32>
    %293 = arith.divf %291, %292 : vector<8x384xf32>
    %294 = vector.extract_strided_slice %293 {offsets = [0, 0], sizes = [8, 128], strides = [1, 1]} : vector<8x384xf32> to vector<8x128xf32>
    %295 = vector.extract_strided_slice %293 {offsets = [0, 128], sizes = [8, 128], strides = [1, 1]} : vector<8x384xf32> to vector<8x128xf32>
    %296 = vector.extract_strided_slice %293 {offsets = [0, 256], sizes = [8, 128], strides = [1, 1]} : vector<8x384xf32> to vector<8x128xf32>
    %297 = vector.extract_strided_slice %287 {offsets = [0, 384], sizes = [8, 128], strides = [1, 1]} : vector<8x512xf32> to vector<8x128xf32>
    %298 = math.tanh %297 : vector<8x128xf32>
    %299 = arith.mulf %295, %276 : vector<8x128xf32>
    %300 = arith.mulf %294, %298 : vector<8x128xf32>
    %301 = arith.addf %299, %300 : vector<8x128xf32>
    %302 = math.tanh %301 : vector<8x128xf32>
    %303 = arith.mulf %296, %302 : vector<8x128xf32>
    %304 = arith.index_cast %282 : i32 to index
    %c0_89 = arith.constant 0 : index
    %305 = vector.load %arg12[%304, %c0_89] : memref<64x128xf32, #tpu.memory_space<vmem>>, vector<8x128xf32>
    tpu.vector_store %arg12[%304, %c0_89], %303 {strides = array<i32>} : memref<64x128xf32, #tpu.memory_space<vmem>>, vector<8x128xf32>,
    %c3_i32_90 = arith.constant 3 : i32
    %c8_i32_91 = arith.constant 8 : i32
    %306 = arith.muli %c3_i32_90, %c8_i32_91 : i32
    %307 = tpu.assume_multiple %306, 8 : i32
    %308 = arith.index_cast %307 : i32 to index
    %c0_92 = arith.constant 0 : index
    %309 = vector.load %arg13[%308, %c0_92] : memref<64x512xf32, #tpu.memory_space<vmem>>, vector<8x512xf32>
    %310 = arith.truncf %303 : vector<8x128xf32> to vector<8x128xbf16>
    %cst_93 = arith.constant dense<0.000000e+00> : vector<8x512xf32>
    %311 = tpu.matmul %310, %222, %cst_93 {dimension_numbers = #tpu.dot_dimension_numbers<[1], [0], [0], [1], [0, 0, 1, 1], [], []>} : vector<8x128xbf16>, vector<128x512xbf16>, vector<8x512xf32> -> vector<8x512xf32>
    %312 = arith.addf %309, %311 : vector<8x512xf32>
    %313 = vector.extract_strided_slice %312 {offsets = [0, 0], sizes = [8, 384], strides = [1, 1]} : vector<8x512xf32> to vector<8x384xf32>
    %314 = arith.negf %313 : vector<8x384xf32>
    %315 = math.exp %314 : vector<8x384xf32>
    %cst_94 = arith.constant 1.000000e+00 : f32
    %316 = vector.broadcast %cst_94 : f32 to vector<8x384xf32>
    %317 = arith.addf %316, %315 : vector<8x384xf32>
    %318 = arith.divf %316, %317 : vector<8x384xf32>
    %319 = vector.extract_strided_slice %318 {offsets = [0, 0], sizes = [8, 128], strides = [1, 1]} : vector<8x384xf32> to vector<8x128xf32>
    %320 = vector.extract_strided_slice %318 {offsets = [0, 128], sizes = [8, 128], strides = [1, 1]} : vector<8x384xf32> to vector<8x128xf32>
    %321 = vector.extract_strided_slice %318 {offsets = [0, 256], sizes = [8, 128], strides = [1, 1]} : vector<8x384xf32> to vector<8x128xf32>
    %322 = vector.extract_strided_slice %312 {offsets = [0, 384], sizes = [8, 128], strides = [1, 1]} : vector<8x512xf32> to vector<8x128xf32>
    %323 = math.tanh %322 : vector<8x128xf32>
    %324 = arith.mulf %320, %301 : vector<8x128xf32>
    %325 = arith.mulf %319, %323 : vector<8x128xf32>
    %326 = arith.addf %324, %325 : vector<8x128xf32>
    %327 = math.tanh %326 : vector<8x128xf32>
    %328 = arith.mulf %321, %327 : vector<8x128xf32>
    %329 = arith.index_cast %307 : i32 to index
    %c0_95 = arith.constant 0 : index
    %330 = vector.load %arg12[%329, %c0_95] : memref<64x128xf32, #tpu.memory_space<vmem>>, vector<8x128xf32>
    tpu.vector_store %arg12[%329, %c0_95], %328 {strides = array<i32>} : memref<64x128xf32, #tpu.memory_space<vmem>>, vector<8x128xf32>,
    %c4_i32_96 = arith.constant 4 : i32
    %c8_i32_97 = arith.constant 8 : i32
    %331 = arith.muli %c4_i32_96, %c8_i32_97 : i32
    %332 = tpu.assume_multiple %331, 8 : i32
    %333 = arith.index_cast %332 : i32 to index
    %c0_98 = arith.constant 0 : index
    %334 = vector.load %arg13[%333, %c0_98] : memref<64x512xf32, #tpu.memory_space<vmem>>, vector<8x512xf32>
    %335 = arith.truncf %328 : vector<8x128xf32> to vector<8x128xbf16>
    %cst_99 = arith.constant dense<0.000000e+00> : vector<8x512xf32>
    %336 = tpu.matmul %335, %222, %cst_99 {dimension_numbers = #tpu.dot_dimension_numbers<[1], [0], [0], [1], [0, 0, 1, 1], [], []>} : vector<8x128xbf16>, vector<128x512xbf16>, vector<8x512xf32> -> vector<8x512xf32>
    %337 = arith.addf %334, %336 : vector<8x512xf32>
    %338 = vector.extract_strided_slice %337 {offsets = [0, 0], sizes = [8, 384], strides = [1, 1]} : vector<8x512xf32> to vector<8x384xf32>
    %339 = arith.negf %338 : vector<8x384xf32>
    %340 = math.exp %339 : vector<8x384xf32>
    %cst_100 = arith.constant 1.000000e+00 : f32
    %341 = vector.broadcast %cst_100 : f32 to vector<8x384xf32>
    %342 = arith.addf %341, %340 : vector<8x384xf32>
    %343 = arith.divf %341, %342 : vector<8x384xf32>
    %344 = vector.extract_strided_slice %343 {offsets = [0, 0], sizes = [8, 128], strides = [1, 1]} : vector<8x384xf32> to vector<8x128xf32>
    %345 = vector.extract_strided_slice %343 {offsets = [0, 128], sizes = [8, 128], strides = [1, 1]} : vector<8x384xf32> to vector<8x128xf32>
    %346 = vector.extract_strided_slice %343 {offsets = [0, 256], sizes = [8, 128], strides = [1, 1]} : vector<8x384xf32> to vector<8x128xf32>
    %347 = vector.extract_strided_slice %337 {offsets = [0, 384], sizes = [8, 128], strides = [1, 1]} : vector<8x512xf32> to vector<8x128xf32>
    %348 = math.tanh %347 : vector<8x128xf32>
    %349 = arith.mulf %345, %326 : vector<8x128xf32>
    %350 = arith.mulf %344, %348 : vector<8x128xf32>
    %351 = arith.addf %349, %350 : vector<8x128xf32>
    %352 = math.tanh %351 : vector<8x128xf32>
    %353 = arith.mulf %346, %352 : vector<8x128xf32>
    %354 = arith.index_cast %332 : i32 to index
    %c0_101 = arith.constant 0 : index
    %355 = vector.load %arg12[%354, %c0_101] : memref<64x128xf32, #tpu.memory_space<vmem>>, vector<8x128xf32>
    tpu.vector_store %arg12[%354, %c0_101], %353 {strides = array<i32>} : memref<64x128xf32, #tpu.memory_space<vmem>>, vector<8x128xf32>,
    %c5_i32_102 = arith.constant 5 : i32
    %c8_i32_103 = arith.constant 8 : i32
    %356 = arith.muli %c5_i32_102, %c8_i32_103 : i32
    %357 = tpu.assume_multiple %356, 8 : i32
    %358 = arith.index_cast %357 : i32 to index
    %c0_104 = arith.constant 0 : index
    %359 = vector.load %arg13[%358, %c0_104] : memref<64x512xf32, #tpu.memory_space<vmem>>, vector<8x512xf32>
    %360 = arith.truncf %353 : vector<8x128xf32> to vector<8x128xbf16>
    %cst_105 = arith.constant dense<0.000000e+00> : vector<8x512xf32>
    %361 = tpu.matmul %360, %222, %cst_105 {dimension_numbers = #tpu.dot_dimension_numbers<[1], [0], [0], [1], [0, 0, 1, 1], [], []>} : vector<8x128xbf16>, vector<128x512xbf16>, vector<8x512xf32> -> vector<8x512xf32>
    %362 = arith.addf %359, %361 : vector<8x512xf32>
    %363 = vector.extract_strided_slice %362 {offsets = [0, 0], sizes = [8, 384], strides = [1, 1]} : vector<8x512xf32> to vector<8x384xf32>
    %364 = arith.negf %363 : vector<8x384xf32>
    %365 = math.exp %364 : vector<8x384xf32>
    %cst_106 = arith.constant 1.000000e+00 : f32
    %366 = vector.broadcast %cst_106 : f32 to vector<8x384xf32>
    %367 = arith.addf %366, %365 : vector<8x384xf32>
    %368 = arith.divf %366, %367 : vector<8x384xf32>
    %369 = vector.extract_strided_slice %368 {offsets = [0, 0], sizes = [8, 128], strides = [1, 1]} : vector<8x384xf32> to vector<8x128xf32>
    %370 = vector.extract_strided_slice %368 {offsets = [0, 128], sizes = [8, 128], strides = [1, 1]} : vector<8x384xf32> to vector<8x128xf32>
    %371 = vector.extract_strided_slice %368 {offsets = [0, 256], sizes = [8, 128], strides = [1, 1]} : vector<8x384xf32> to vector<8x128xf32>
    %372 = vector.extract_strided_slice %362 {offsets = [0, 384], sizes = [8, 128], strides = [1, 1]} : vector<8x512xf32> to vector<8x128xf32>
    %373 = math.tanh %372 : vector<8x128xf32>
    %374 = arith.mulf %370, %351 : vector<8x128xf32>
    %375 = arith.mulf %369, %373 : vector<8x128xf32>
    %376 = arith.addf %374, %375 : vector<8x128xf32>
    %377 = math.tanh %376 : vector<8x128xf32>
    %378 = arith.mulf %371, %377 : vector<8x128xf32>
    %379 = arith.index_cast %357 : i32 to index
    %c0_107 = arith.constant 0 : index
    %380 = vector.load %arg12[%379, %c0_107] : memref<64x128xf32, #tpu.memory_space<vmem>>, vector<8x128xf32>
    tpu.vector_store %arg12[%379, %c0_107], %378 {strides = array<i32>} : memref<64x128xf32, #tpu.memory_space<vmem>>, vector<8x128xf32>,
    %c6_i32_108 = arith.constant 6 : i32
    %c8_i32_109 = arith.constant 8 : i32
    %381 = arith.muli %c6_i32_108, %c8_i32_109 : i32
    %382 = tpu.assume_multiple %381, 8 : i32
    %383 = arith.index_cast %382 : i32 to index
    %c0_110 = arith.constant 0 : index
    %384 = vector.load %arg13[%383, %c0_110] : memref<64x512xf32, #tpu.memory_space<vmem>>, vector<8x512xf32>
    %385 = arith.truncf %378 : vector<8x128xf32> to vector<8x128xbf16>
    %cst_111 = arith.constant dense<0.000000e+00> : vector<8x512xf32>
    %386 = tpu.matmul %385, %222, %cst_111 {dimension_numbers = #tpu.dot_dimension_numbers<[1], [0], [0], [1], [0, 0, 1, 1], [], []>} : vector<8x128xbf16>, vector<128x512xbf16>, vector<8x512xf32> -> vector<8x512xf32>
    %387 = arith.addf %384, %386 : vector<8x512xf32>
    %388 = vector.extract_strided_slice %387 {offsets = [0, 0], sizes = [8, 384], strides = [1, 1]} : vector<8x512xf32> to vector<8x384xf32>
    %389 = arith.negf %388 : vector<8x384xf32>
    %390 = math.exp %389 : vector<8x384xf32>
    %cst_112 = arith.constant 1.000000e+00 : f32
    %391 = vector.broadcast %cst_112 : f32 to vector<8x384xf32>
    %392 = arith.addf %391, %390 : vector<8x384xf32>
    %393 = arith.divf %391, %392 : vector<8x384xf32>
    %394 = vector.extract_strided_slice %393 {offsets = [0, 0], sizes = [8, 128], strides = [1, 1]} : vector<8x384xf32> to vector<8x128xf32>
    %395 = vector.extract_strided_slice %393 {offsets = [0, 128], sizes = [8, 128], strides = [1, 1]} : vector<8x384xf32> to vector<8x128xf32>
    %396 = vector.extract_strided_slice %393 {offsets = [0, 256], sizes = [8, 128], strides = [1, 1]} : vector<8x384xf32> to vector<8x128xf32>
    %397 = vector.extract_strided_slice %387 {offsets = [0, 384], sizes = [8, 128], strides = [1, 1]} : vector<8x512xf32> to vector<8x128xf32>
    %398 = math.tanh %397 : vector<8x128xf32>
    %399 = arith.mulf %395, %376 : vector<8x128xf32>
    %400 = arith.mulf %394, %398 : vector<8x128xf32>
    %401 = arith.addf %399, %400 : vector<8x128xf32>
    %402 = math.tanh %401 : vector<8x128xf32>
    %403 = arith.mulf %396, %402 : vector<8x128xf32>
    %404 = arith.index_cast %382 : i32 to index
    %c0_113 = arith.constant 0 : index
    %405 = vector.load %arg12[%404, %c0_113] : memref<64x128xf32, #tpu.memory_space<vmem>>, vector<8x128xf32>
    tpu.vector_store %arg12[%404, %c0_113], %403 {strides = array<i32>} : memref<64x128xf32, #tpu.memory_space<vmem>>, vector<8x128xf32>,
    %c7_i32_114 = arith.constant 7 : i32
    %c8_i32_115 = arith.constant 8 : i32
    %406 = arith.muli %c7_i32_114, %c8_i32_115 : i32
    %407 = tpu.assume_multiple %406, 8 : i32
    %408 = arith.index_cast %407 : i32 to index
    %c0_116 = arith.constant 0 : index
    %409 = vector.load %arg13[%408, %c0_116] : memref<64x512xf32, #tpu.memory_space<vmem>>, vector<8x512xf32>
    %410 = arith.truncf %403 : vector<8x128xf32> to vector<8x128xbf16>
    %cst_117 = arith.constant dense<0.000000e+00> : vector<8x512xf32>
    %411 = tpu.matmul %410, %222, %cst_117 {dimension_numbers = #tpu.dot_dimension_numbers<[1], [0], [0], [1], [0, 0, 1, 1], [], []>} : vector<8x128xbf16>, vector<128x512xbf16>, vector<8x512xf32> -> vector<8x512xf32>
    %412 = arith.addf %409, %411 : vector<8x512xf32>
    %413 = vector.extract_strided_slice %412 {offsets = [0, 0], sizes = [8, 384], strides = [1, 1]} : vector<8x512xf32> to vector<8x384xf32>
    %414 = arith.negf %413 : vector<8x384xf32>
    %415 = math.exp %414 : vector<8x384xf32>
    %cst_118 = arith.constant 1.000000e+00 : f32
    %416 = vector.broadcast %cst_118 : f32 to vector<8x384xf32>
    %417 = arith.addf %416, %415 : vector<8x384xf32>
    %418 = arith.divf %416, %417 : vector<8x384xf32>
    %419 = vector.extract_strided_slice %418 {offsets = [0, 0], sizes = [8, 128], strides = [1, 1]} : vector<8x384xf32> to vector<8x128xf32>
    %420 = vector.extract_strided_slice %418 {offsets = [0, 128], sizes = [8, 128], strides = [1, 1]} : vector<8x384xf32> to vector<8x128xf32>
    %421 = vector.extract_strided_slice %418 {offsets = [0, 256], sizes = [8, 128], strides = [1, 1]} : vector<8x384xf32> to vector<8x128xf32>
    %422 = vector.extract_strided_slice %412 {offsets = [0, 384], sizes = [8, 128], strides = [1, 1]} : vector<8x512xf32> to vector<8x128xf32>
    %423 = math.tanh %422 : vector<8x128xf32>
    %424 = arith.mulf %420, %401 : vector<8x128xf32>
    %425 = arith.mulf %419, %423 : vector<8x128xf32>
    %426 = arith.addf %424, %425 : vector<8x128xf32>
    %427 = math.tanh %426 : vector<8x128xf32>
    %428 = arith.mulf %421, %427 : vector<8x128xf32>
    %429 = arith.index_cast %407 : i32 to index
    %c0_119 = arith.constant 0 : index
    %430 = vector.load %arg12[%429, %c0_119] : memref<64x128xf32, #tpu.memory_space<vmem>>, vector<8x128xf32>
    tpu.vector_store %arg12[%429, %c0_119], %428 {strides = array<i32>} : memref<64x128xf32, #tpu.memory_space<vmem>>, vector<8x128xf32>,
    %c8_i32_120 = arith.constant 8 : i32
    %c2 = arith.constant 2 : index
    %c0_121 = arith.constant 0 : index
    %c0_122 = arith.constant 0 : index
    %431 = vector.load %arg14[%c2, %c0_121, %c0_122] : memref<4x8x128xf32, #tpu.memory_space<vmem>>, vector<1x8x128xf32>
    %432 = vector.shape_cast %431 : vector<1x8x128xf32> to vector<8x128xf32>
    %433 = vector.shape_cast %428 : vector<8x128xf32> to vector<1x8x128xf32>
    tpu.vector_store %arg14[%c2, %c0_121, %c0_122], %433 {strides = array<i32>} : memref<4x8x128xf32, #tpu.memory_space<vmem>>, vector<1x8x128xf32>,
    %c3 = arith.constant 3 : index
    %c0_123 = arith.constant 0 : index
    %c0_124 = arith.constant 0 : index
    %434 = vector.load %arg14[%c3, %c0_123, %c0_124] : memref<4x8x128xf32, #tpu.memory_space<vmem>>, vector<1x8x128xf32>
    %435 = vector.shape_cast %434 : vector<1x8x128xf32> to vector<8x128xf32>
    %436 = vector.shape_cast %426 : vector<8x128xf32> to vector<1x8x128xf32>
    tpu.vector_store %arg14[%c3, %c0_123, %c0_124], %436 {strides = array<i32>} : memref<4x8x128xf32, #tpu.memory_space<vmem>>, vector<1x8x128xf32>,
    %c0_125 = arith.constant 0 : index
    %c0_126 = arith.constant 0 : index
    %c0_127 = arith.constant 0 : index
    %437 = vector.load %arg14[%c0_125, %c0_126, %c0_127] : memref<4x8x128xf32, #tpu.memory_space<vmem>>, vector<1x8x128xf32>
    %438 = vector.shape_cast %437 : vector<1x8x128xf32> to vector<8x128xf32>
    %c1_128 = arith.constant 1 : index
    %c0_129 = arith.constant 0 : index
    %c0_130 = arith.constant 0 : index
    %439 = vector.load %arg14[%c1_128, %c0_129, %c0_130] : memref<4x8x128xf32, #tpu.memory_space<vmem>>, vector<1x8x128xf32>
    %440 = vector.shape_cast %439 : vector<1x8x128xf32> to vector<8x128xf32>
    %c0_131 = arith.constant 0 : index
    %c0_132 = arith.constant 0 : index
    %c0_133 = arith.constant 0 : index
    %441 = vector.load %arg5[%c0_131, %c0_132, %c0_133] : memref<2x128x512xbf16, #tpu.memory_space<vmem>>, vector<1x128x512xbf16>
    %442 = vector.shape_cast %441 : vector<1x128x512xbf16> to vector<128x512xbf16>
    %c0_134 = arith.constant 0 : index
    %c0_135 = arith.constant 0 : index
    %c0_136 = arith.constant 0 : index
    %443 = vector.load %arg6[%c0_134, %c0_135, %c0_136] : memref<2x128x512xbf16, #tpu.memory_space<vmem>>, vector<1x128x512xbf16>
    %444 = vector.shape_cast %443 : vector<1x128x512xbf16> to vector<128x512xbf16>
    %c0_137 = arith.constant 0 : index
    %c0_138 = arith.constant 0 : index
    %c0_139 = arith.constant 0 : index
    %445 = vector.load %arg7[%c0_137, %c0_138, %c0_139] : memref<2x1x512xf32, #tpu.memory_space<vmem>>, vector<1x1x512xf32>
    %446 = vector.shape_cast %445 : vector<1x1x512xf32> to vector<1x512xf32>
    %c0_140 = arith.constant 0 : index
    %c0_141 = arith.constant 0 : index
    %447 = vector.load %arg1[%c0_140, %c0_141] : memref<48x128xf32, #tpu.memory_space<vmem>>, vector<48x128xf32>
    %448 = arith.truncf %447 : vector<48x128xf32> to vector<48x128xbf16>
    %cst_142 = arith.constant dense<0.000000e+00> : vector<48x512xf32>
    %449 = tpu.matmul %448, %442, %cst_142 {dimension_numbers = #tpu.dot_dimension_numbers<[1], [0], [0], [1], [0, 0, 1, 1], [], []>} : vector<48x128xbf16>, vector<128x512xbf16>, vector<48x512xf32> -> vector<48x512xf32>
    %450 = vector.broadcast %446 : vector<1x512xf32> to vector<48x512xf32>
    %451 = arith.addf %449, %450 : vector<48x512xf32>
    %c0_143 = arith.constant 0 : index
    %c0_144 = arith.constant 0 : index
    %452 = vector.load %arg13[%c0_143, %c0_144] : memref<64x512xf32, #tpu.memory_space<vmem>>, vector<48x512xf32>
    tpu.vector_store %arg13[%c0_143, %c0_144], %451 {strides = array<i32>} : memref<64x512xf32, #tpu.memory_space<vmem>>, vector<48x512xf32>,
    %c0_i32_145 = arith.constant 0 : i32
    %c8_i32_146 = arith.constant 8 : i32
    %453 = arith.muli %c0_i32_145, %c8_i32_146 : i32
    %454 = tpu.assume_multiple %453, 8 : i32
    %455 = arith.index_cast %454 : i32 to index
    %c0_147 = arith.constant 0 : index
    %456 = vector.load %arg13[%455, %c0_147] : memref<64x512xf32, #tpu.memory_space<vmem>>, vector<8x512xf32>
    %457 = arith.truncf %438 : vector<8x128xf32> to vector<8x128xbf16>
    %cst_148 = arith.constant dense<0.000000e+00> : vector<8x512xf32>
    %458 = tpu.matmul %457, %444, %cst_148 {dimension_numbers = #tpu.dot_dimension_numbers<[1], [0], [0], [1], [0, 0, 1, 1], [], []>} : vector<8x128xbf16>, vector<128x512xbf16>, vector<8x512xf32> -> vector<8x512xf32>
    %459 = arith.addf %456, %458 : vector<8x512xf32>
    %460 = vector.extract_strided_slice %459 {offsets = [0, 0], sizes = [8, 384], strides = [1, 1]} : vector<8x512xf32> to vector<8x384xf32>
    %461 = arith.negf %460 : vector<8x384xf32>
    %462 = math.exp %461 : vector<8x384xf32>
    %cst_149 = arith.constant 1.000000e+00 : f32
    %463 = vector.broadcast %cst_149 : f32 to vector<8x384xf32>
    %464 = arith.addf %463, %462 : vector<8x384xf32>
    %465 = arith.divf %463, %464 : vector<8x384xf32>
    %466 = vector.extract_strided_slice %465 {offsets = [0, 0], sizes = [8, 128], strides = [1, 1]} : vector<8x384xf32> to vector<8x128xf32>
    %467 = vector.extract_strided_slice %465 {offsets = [0, 128], sizes = [8, 128], strides = [1, 1]} : vector<8x384xf32> to vector<8x128xf32>
    %468 = vector.extract_strided_slice %465 {offsets = [0, 256], sizes = [8, 128], strides = [1, 1]} : vector<8x384xf32> to vector<8x128xf32>
    %469 = vector.extract_strided_slice %459 {offsets = [0, 384], sizes = [8, 128], strides = [1, 1]} : vector<8x512xf32> to vector<8x128xf32>
    %470 = math.tanh %469 : vector<8x128xf32>
    %471 = arith.mulf %467, %440 : vector<8x128xf32>
    %472 = arith.mulf %466, %470 : vector<8x128xf32>
    %473 = arith.addf %471, %472 : vector<8x128xf32>
    %474 = math.tanh %473 : vector<8x128xf32>
    %475 = arith.mulf %468, %474 : vector<8x128xf32>
    %476 = arith.index_cast %454 : i32 to index
    %c0_150 = arith.constant 0 : index
    %477 = vector.load %arg11[%476, %c0_150] : memref<64x128xf32, #tpu.memory_space<vmem>>, vector<8x128xf32>
    tpu.vector_store %arg11[%476, %c0_150], %475 {strides = array<i32>} : memref<64x128xf32, #tpu.memory_space<vmem>>, vector<8x128xf32>,
    %c1_i32_151 = arith.constant 1 : i32
    %c8_i32_152 = arith.constant 8 : i32
    %478 = arith.muli %c1_i32_151, %c8_i32_152 : i32
    %479 = tpu.assume_multiple %478, 8 : i32
    %480 = arith.index_cast %479 : i32 to index
    %c0_153 = arith.constant 0 : index
    %481 = vector.load %arg13[%480, %c0_153] : memref<64x512xf32, #tpu.memory_space<vmem>>, vector<8x512xf32>
    %482 = arith.truncf %475 : vector<8x128xf32> to vector<8x128xbf16>
    %cst_154 = arith.constant dense<0.000000e+00> : vector<8x512xf32>
    %483 = tpu.matmul %482, %444, %cst_154 {dimension_numbers = #tpu.dot_dimension_numbers<[1], [0], [0], [1], [0, 0, 1, 1], [], []>} : vector<8x128xbf16>, vector<128x512xbf16>, vector<8x512xf32> -> vector<8x512xf32>
    %484 = arith.addf %481, %483 : vector<8x512xf32>
    %485 = vector.extract_strided_slice %484 {offsets = [0, 0], sizes = [8, 384], strides = [1, 1]} : vector<8x512xf32> to vector<8x384xf32>
    %486 = arith.negf %485 : vector<8x384xf32>
    %487 = math.exp %486 : vector<8x384xf32>
    %cst_155 = arith.constant 1.000000e+00 : f32
    %488 = vector.broadcast %cst_155 : f32 to vector<8x384xf32>
    %489 = arith.addf %488, %487 : vector<8x384xf32>
    %490 = arith.divf %488, %489 : vector<8x384xf32>
    %491 = vector.extract_strided_slice %490 {offsets = [0, 0], sizes = [8, 128], strides = [1, 1]} : vector<8x384xf32> to vector<8x128xf32>
    %492 = vector.extract_strided_slice %490 {offsets = [0, 128], sizes = [8, 128], strides = [1, 1]} : vector<8x384xf32> to vector<8x128xf32>
    %493 = vector.extract_strided_slice %490 {offsets = [0, 256], sizes = [8, 128], strides = [1, 1]} : vector<8x384xf32> to vector<8x128xf32>
    %494 = vector.extract_strided_slice %484 {offsets = [0, 384], sizes = [8, 128], strides = [1, 1]} : vector<8x512xf32> to vector<8x128xf32>
    %495 = math.tanh %494 : vector<8x128xf32>
    %496 = arith.mulf %492, %473 : vector<8x128xf32>
    %497 = arith.mulf %491, %495 : vector<8x128xf32>
    %498 = arith.addf %496, %497 : vector<8x128xf32>
    %499 = math.tanh %498 : vector<8x128xf32>
    %500 = arith.mulf %493, %499 : vector<8x128xf32>
    %501 = arith.index_cast %479 : i32 to index
    %c0_156 = arith.constant 0 : index
    %502 = vector.load %arg11[%501, %c0_156] : memref<64x128xf32, #tpu.memory_space<vmem>>, vector<8x128xf32>
    tpu.vector_store %arg11[%501, %c0_156], %500 {strides = array<i32>} : memref<64x128xf32, #tpu.memory_space<vmem>>, vector<8x128xf32>,
    %c2_i32_157 = arith.constant 2 : i32
    %c8_i32_158 = arith.constant 8 : i32
    %503 = arith.muli %c2_i32_157, %c8_i32_158 : i32
    %504 = tpu.assume_multiple %503, 8 : i32
    %505 = arith.index_cast %504 : i32 to index
    %c0_159 = arith.constant 0 : index
    %506 = vector.load %arg13[%505, %c0_159] : memref<64x512xf32, #tpu.memory_space<vmem>>, vector<8x512xf32>
    %507 = arith.truncf %500 : vector<8x128xf32> to vector<8x128xbf16>
    %cst_160 = arith.constant dense<0.000000e+00> : vector<8x512xf32>
    %508 = tpu.matmul %507, %444, %cst_160 {dimension_numbers = #tpu.dot_dimension_numbers<[1], [0], [0], [1], [0, 0, 1, 1], [], []>} : vector<8x128xbf16>, vector<128x512xbf16>, vector<8x512xf32> -> vector<8x512xf32>
    %509 = arith.addf %506, %508 : vector<8x512xf32>
    %510 = vector.extract_strided_slice %509 {offsets = [0, 0], sizes = [8, 384], strides = [1, 1]} : vector<8x512xf32> to vector<8x384xf32>
    %511 = arith.negf %510 : vector<8x384xf32>
    %512 = math.exp %511 : vector<8x384xf32>
    %cst_161 = arith.constant 1.000000e+00 : f32
    %513 = vector.broadcast %cst_161 : f32 to vector<8x384xf32>
    %514 = arith.addf %513, %512 : vector<8x384xf32>
    %515 = arith.divf %513, %514 : vector<8x384xf32>
    %516 = vector.extract_strided_slice %515 {offsets = [0, 0], sizes = [8, 128], strides = [1, 1]} : vector<8x384xf32> to vector<8x128xf32>
    %517 = vector.extract_strided_slice %515 {offsets = [0, 128], sizes = [8, 128], strides = [1, 1]} : vector<8x384xf32> to vector<8x128xf32>
    %518 = vector.extract_strided_slice %515 {offsets = [0, 256], sizes = [8, 128], strides = [1, 1]} : vector<8x384xf32> to vector<8x128xf32>
    %519 = vector.extract_strided_slice %509 {offsets = [0, 384], sizes = [8, 128], strides = [1, 1]} : vector<8x512xf32> to vector<8x128xf32>
    %520 = math.tanh %519 : vector<8x128xf32>
    %521 = arith.mulf %517, %498 : vector<8x128xf32>
    %522 = arith.mulf %516, %520 : vector<8x128xf32>
    %523 = arith.addf %521, %522 : vector<8x128xf32>
    %524 = math.tanh %523 : vector<8x128xf32>
    %525 = arith.mulf %518, %524 : vector<8x128xf32>
    %526 = arith.index_cast %504 : i32 to index
    %c0_162 = arith.constant 0 : index
    %527 = vector.load %arg11[%526, %c0_162] : memref<64x128xf32, #tpu.memory_space<vmem>>, vector<8x128xf32>
    tpu.vector_store %arg11[%526, %c0_162], %525 {strides = array<i32>} : memref<64x128xf32, #tpu.memory_space<vmem>>, vector<8x128xf32>,
    %c3_i32_163 = arith.constant 3 : i32
    %c8_i32_164 = arith.constant 8 : i32
    %528 = arith.muli %c3_i32_163, %c8_i32_164 : i32
    %529 = tpu.assume_multiple %528, 8 : i32
    %530 = arith.index_cast %529 : i32 to index
    %c0_165 = arith.constant 0 : index
    %531 = vector.load %arg13[%530, %c0_165] : memref<64x512xf32, #tpu.memory_space<vmem>>, vector<8x512xf32>
    %532 = arith.truncf %525 : vector<8x128xf32> to vector<8x128xbf16>
    %cst_166 = arith.constant dense<0.000000e+00> : vector<8x512xf32>
    %533 = tpu.matmul %532, %444, %cst_166 {dimension_numbers = #tpu.dot_dimension_numbers<[1], [0], [0], [1], [0, 0, 1, 1], [], []>} : vector<8x128xbf16>, vector<128x512xbf16>, vector<8x512xf32> -> vector<8x512xf32>
    %534 = arith.addf %531, %533 : vector<8x512xf32>
    %535 = vector.extract_strided_slice %534 {offsets = [0, 0], sizes = [8, 384], strides = [1, 1]} : vector<8x512xf32> to vector<8x384xf32>
    %536 = arith.negf %535 : vector<8x384xf32>
    %537 = math.exp %536 : vector<8x384xf32>
    %cst_167 = arith.constant 1.000000e+00 : f32
    %538 = vector.broadcast %cst_167 : f32 to vector<8x384xf32>
    %539 = arith.addf %538, %537 : vector<8x384xf32>
    %540 = arith.divf %538, %539 : vector<8x384xf32>
    %541 = vector.extract_strided_slice %540 {offsets = [0, 0], sizes = [8, 128], strides = [1, 1]} : vector<8x384xf32> to vector<8x128xf32>
    %542 = vector.extract_strided_slice %540 {offsets = [0, 128], sizes = [8, 128], strides = [1, 1]} : vector<8x384xf32> to vector<8x128xf32>
    %543 = vector.extract_strided_slice %540 {offsets = [0, 256], sizes = [8, 128], strides = [1, 1]} : vector<8x384xf32> to vector<8x128xf32>
    %544 = vector.extract_strided_slice %534 {offsets = [0, 384], sizes = [8, 128], strides = [1, 1]} : vector<8x512xf32> to vector<8x128xf32>
    %545 = math.tanh %544 : vector<8x128xf32>
    %546 = arith.mulf %542, %523 : vector<8x128xf32>
    %547 = arith.mulf %541, %545 : vector<8x128xf32>
    %548 = arith.addf %546, %547 : vector<8x128xf32>
    %549 = math.tanh %548 : vector<8x128xf32>
    %550 = arith.mulf %543, %549 : vector<8x128xf32>
    %551 = arith.index_cast %529 : i32 to index
    %c0_168 = arith.constant 0 : index
    %552 = vector.load %arg11[%551, %c0_168] : memref<64x128xf32, #tpu.memory_space<vmem>>, vector<8x128xf32>
    tpu.vector_store %arg11[%551, %c0_168], %550 {strides = array<i32>} : memref<64x128xf32, #tpu.memory_space<vmem>>, vector<8x128xf32>,
    %c4_i32_169 = arith.constant 4 : i32
    %c8_i32_170 = arith.constant 8 : i32
    %553 = arith.muli %c4_i32_169, %c8_i32_170 : i32
    %554 = tpu.assume_multiple %553, 8 : i32
    %555 = arith.index_cast %554 : i32 to index
    %c0_171 = arith.constant 0 : index
    %556 = vector.load %arg13[%555, %c0_171] : memref<64x512xf32, #tpu.memory_space<vmem>>, vector<8x512xf32>
    %557 = arith.truncf %550 : vector<8x128xf32> to vector<8x128xbf16>
    %cst_172 = arith.constant dense<0.000000e+00> : vector<8x512xf32>
    %558 = tpu.matmul %557, %444, %cst_172 {dimension_numbers = #tpu.dot_dimension_numbers<[1], [0], [0], [1], [0, 0, 1, 1], [], []>} : vector<8x128xbf16>, vector<128x512xbf16>, vector<8x512xf32> -> vector<8x512xf32>
    %559 = arith.addf %556, %558 : vector<8x512xf32>
    %560 = vector.extract_strided_slice %559 {offsets = [0, 0], sizes = [8, 384], strides = [1, 1]} : vector<8x512xf32> to vector<8x384xf32>
    %561 = arith.negf %560 : vector<8x384xf32>
    %562 = math.exp %561 : vector<8x384xf32>
    %cst_173 = arith.constant 1.000000e+00 : f32
    %563 = vector.broadcast %cst_173 : f32 to vector<8x384xf32>
    %564 = arith.addf %563, %562 : vector<8x384xf32>
    %565 = arith.divf %563, %564 : vector<8x384xf32>
    %566 = vector.extract_strided_slice %565 {offsets = [0, 0], sizes = [8, 128], strides = [1, 1]} : vector<8x384xf32> to vector<8x128xf32>
    %567 = vector.extract_strided_slice %565 {offsets = [0, 128], sizes = [8, 128], strides = [1, 1]} : vector<8x384xf32> to vector<8x128xf32>
    %568 = vector.extract_strided_slice %565 {offsets = [0, 256], sizes = [8, 128], strides = [1, 1]} : vector<8x384xf32> to vector<8x128xf32>
    %569 = vector.extract_strided_slice %559 {offsets = [0, 384], sizes = [8, 128], strides = [1, 1]} : vector<8x512xf32> to vector<8x128xf32>
    %570 = math.tanh %569 : vector<8x128xf32>
    %571 = arith.mulf %567, %548 : vector<8x128xf32>
    %572 = arith.mulf %566, %570 : vector<8x128xf32>
    %573 = arith.addf %571, %572 : vector<8x128xf32>
    %574 = math.tanh %573 : vector<8x128xf32>
    %575 = arith.mulf %568, %574 : vector<8x128xf32>
    %576 = arith.index_cast %554 : i32 to index
    %c0_174 = arith.constant 0 : index
    %577 = vector.load %arg11[%576, %c0_174] : memref<64x128xf32, #tpu.memory_space<vmem>>, vector<8x128xf32>
    tpu.vector_store %arg11[%576, %c0_174], %575 {strides = array<i32>} : memref<64x128xf32, #tpu.memory_space<vmem>>, vector<8x128xf32>,
    %c5_i32_175 = arith.constant 5 : i32
    %c8_i32_176 = arith.constant 8 : i32
    %578 = arith.muli %c5_i32_175, %c8_i32_176 : i32
    %579 = tpu.assume_multiple %578, 8 : i32
    %580 = arith.index_cast %579 : i32 to index
    %c0_177 = arith.constant 0 : index
    %581 = vector.load %arg13[%580, %c0_177] : memref<64x512xf32, #tpu.memory_space<vmem>>, vector<8x512xf32>
    %582 = arith.truncf %575 : vector<8x128xf32> to vector<8x128xbf16>
    %cst_178 = arith.constant dense<0.000000e+00> : vector<8x512xf32>
    %583 = tpu.matmul %582, %444, %cst_178 {dimension_numbers = #tpu.dot_dimension_numbers<[1], [0], [0], [1], [0, 0, 1, 1], [], []>} : vector<8x128xbf16>, vector<128x512xbf16>, vector<8x512xf32> -> vector<8x512xf32>
    %584 = arith.addf %581, %583 : vector<8x512xf32>
    %585 = vector.extract_strided_slice %584 {offsets = [0, 0], sizes = [8, 384], strides = [1, 1]} : vector<8x512xf32> to vector<8x384xf32>
    %586 = arith.negf %585 : vector<8x384xf32>
    %587 = math.exp %586 : vector<8x384xf32>
    %cst_179 = arith.constant 1.000000e+00 : f32
    %588 = vector.broadcast %cst_179 : f32 to vector<8x384xf32>
    %589 = arith.addf %588, %587 : vector<8x384xf32>
    %590 = arith.divf %588, %589 : vector<8x384xf32>
    %591 = vector.extract_strided_slice %590 {offsets = [0, 0], sizes = [8, 128], strides = [1, 1]} : vector<8x384xf32> to vector<8x128xf32>
    %592 = vector.extract_strided_slice %590 {offsets = [0, 128], sizes = [8, 128], strides = [1, 1]} : vector<8x384xf32> to vector<8x128xf32>
    %593 = vector.extract_strided_slice %590 {offsets = [0, 256], sizes = [8, 128], strides = [1, 1]} : vector<8x384xf32> to vector<8x128xf32>
    %594 = vector.extract_strided_slice %584 {offsets = [0, 384], sizes = [8, 128], strides = [1, 1]} : vector<8x512xf32> to vector<8x128xf32>
    %595 = math.tanh %594 : vector<8x128xf32>
    %596 = arith.mulf %592, %573 : vector<8x128xf32>
    %597 = arith.mulf %591, %595 : vector<8x128xf32>
    %598 = arith.addf %596, %597 : vector<8x128xf32>
    %599 = math.tanh %598 : vector<8x128xf32>
    %600 = arith.mulf %593, %599 : vector<8x128xf32>
    %601 = arith.index_cast %579 : i32 to index
    %c0_180 = arith.constant 0 : index
    %602 = vector.load %arg11[%601, %c0_180] : memref<64x128xf32, #tpu.memory_space<vmem>>, vector<8x128xf32>
    tpu.vector_store %arg11[%601, %c0_180], %600 {strides = array<i32>} : memref<64x128xf32, #tpu.memory_space<vmem>>, vector<8x128xf32>,
    %c6_i32_181 = arith.constant 6 : i32
    %c2_182 = arith.constant 2 : index
    %c0_183 = arith.constant 0 : index
    %c0_184 = arith.constant 0 : index
    %603 = vector.load %arg14[%c2_182, %c0_183, %c0_184] : memref<4x8x128xf32, #tpu.memory_space<vmem>>, vector<1x8x128xf32>
    %604 = vector.shape_cast %603 : vector<1x8x128xf32> to vector<8x128xf32>
    %c3_185 = arith.constant 3 : index
    %c0_186 = arith.constant 0 : index
    %c0_187 = arith.constant 0 : index
    %605 = vector.load %arg14[%c3_185, %c0_186, %c0_187] : memref<4x8x128xf32, #tpu.memory_space<vmem>>, vector<1x8x128xf32>
    %606 = vector.shape_cast %605 : vector<1x8x128xf32> to vector<8x128xf32>
    %c1_188 = arith.constant 1 : index
    %c0_189 = arith.constant 0 : index
    %c0_190 = arith.constant 0 : index
    %607 = vector.load %arg5[%c1_188, %c0_189, %c0_190] : memref<2x128x512xbf16, #tpu.memory_space<vmem>>, vector<1x128x512xbf16>
    %608 = vector.shape_cast %607 : vector<1x128x512xbf16> to vector<128x512xbf16>
    %c1_191 = arith.constant 1 : index
    %c0_192 = arith.constant 0 : index
    %c0_193 = arith.constant 0 : index
    %609 = vector.load %arg6[%c1_191, %c0_192, %c0_193] : memref<2x128x512xbf16, #tpu.memory_space<vmem>>, vector<1x128x512xbf16>
    %610 = vector.shape_cast %609 : vector<1x128x512xbf16> to vector<128x512xbf16>
    %c1_194 = arith.constant 1 : index
    %c0_195 = arith.constant 0 : index
    %c0_196 = arith.constant 0 : index
    %611 = vector.load %arg7[%c1_194, %c0_195, %c0_196] : memref<2x1x512xf32, #tpu.memory_space<vmem>>, vector<1x1x512xf32>
    %612 = vector.shape_cast %611 : vector<1x1x512xf32> to vector<1x512xf32>
    %c0_197 = arith.constant 0 : index
    %c0_198 = arith.constant 0 : index
    %613 = vector.load %arg11[%c0_197, %c0_198] : memref<64x128xf32, #tpu.memory_space<vmem>>, vector<48x128xf32>
    %614 = arith.truncf %613 : vector<48x128xf32> to vector<48x128xbf16>
    %cst_199 = arith.constant dense<0.000000e+00> : vector<48x512xf32>
    %615 = tpu.matmul %614, %608, %cst_199 {dimension_numbers = #tpu.dot_dimension_numbers<[1], [0], [0], [1], [0, 0, 1, 1], [], []>} : vector<48x128xbf16>, vector<128x512xbf16>, vector<48x512xf32> -> vector<48x512xf32>
    %616 = vector.broadcast %612 : vector<1x512xf32> to vector<48x512xf32>
    %617 = arith.addf %615, %616 : vector<48x512xf32>
    %c0_200 = arith.constant 0 : index
    %c0_201 = arith.constant 0 : index
    %618 = vector.load %arg13[%c0_200, %c0_201] : memref<64x512xf32, #tpu.memory_space<vmem>>, vector<48x512xf32>
    tpu.vector_store %arg13[%c0_200, %c0_201], %617 {strides = array<i32>} : memref<64x512xf32, #tpu.memory_space<vmem>>, vector<48x512xf32>,
    %c0_i32_202 = arith.constant 0 : i32
    %c8_i32_203 = arith.constant 8 : i32
    %619 = arith.muli %c0_i32_202, %c8_i32_203 : i32
    %620 = tpu.assume_multiple %619, 8 : i32
    %621 = arith.index_cast %620 : i32 to index
    %c0_204 = arith.constant 0 : index
    %622 = vector.load %arg13[%621, %c0_204] : memref<64x512xf32, #tpu.memory_space<vmem>>, vector<8x512xf32>
    %623 = arith.truncf %604 : vector<8x128xf32> to vector<8x128xbf16>
    %cst_205 = arith.constant dense<0.000000e+00> : vector<8x512xf32>
    %624 = tpu.matmul %623, %610, %cst_205 {dimension_numbers = #tpu.dot_dimension_numbers<[1], [0], [0], [1], [0, 0, 1, 1], [], []>} : vector<8x128xbf16>, vector<128x512xbf16>, vector<8x512xf32> -> vector<8x512xf32>
    %625 = arith.addf %622, %624 : vector<8x512xf32>
    %626 = vector.extract_strided_slice %625 {offsets = [0, 0], sizes = [8, 384], strides = [1, 1]} : vector<8x512xf32> to vector<8x384xf32>
    %627 = arith.negf %626 : vector<8x384xf32>
    %628 = math.exp %627 : vector<8x384xf32>
    %cst_206 = arith.constant 1.000000e+00 : f32
    %629 = vector.broadcast %cst_206 : f32 to vector<8x384xf32>
    %630 = arith.addf %629, %628 : vector<8x384xf32>
    %631 = arith.divf %629, %630 : vector<8x384xf32>
    %632 = vector.extract_strided_slice %631 {offsets = [0, 0], sizes = [8, 128], strides = [1, 1]} : vector<8x384xf32> to vector<8x128xf32>
    %633 = vector.extract_strided_slice %631 {offsets = [0, 128], sizes = [8, 128], strides = [1, 1]} : vector<8x384xf32> to vector<8x128xf32>
    %634 = vector.extract_strided_slice %631 {offsets = [0, 256], sizes = [8, 128], strides = [1, 1]} : vector<8x384xf32> to vector<8x128xf32>
    %635 = vector.extract_strided_slice %625 {offsets = [0, 384], sizes = [8, 128], strides = [1, 1]} : vector<8x512xf32> to vector<8x128xf32>
    %636 = math.tanh %635 : vector<8x128xf32>
    %637 = arith.mulf %633, %606 : vector<8x128xf32>
    %638 = arith.mulf %632, %636 : vector<8x128xf32>
    %639 = arith.addf %637, %638 : vector<8x128xf32>
    %640 = math.tanh %639 : vector<8x128xf32>
    %641 = arith.mulf %634, %640 : vector<8x128xf32>
    %642 = arith.index_cast %620 : i32 to index
    %c0_207 = arith.constant 0 : index
    %643 = vector.load %arg12[%642, %c0_207] : memref<64x128xf32, #tpu.memory_space<vmem>>, vector<8x128xf32>
    tpu.vector_store %arg12[%642, %c0_207], %641 {strides = array<i32>} : memref<64x128xf32, #tpu.memory_space<vmem>>, vector<8x128xf32>,
    %c1_i32_208 = arith.constant 1 : i32
    %c8_i32_209 = arith.constant 8 : i32
    %644 = arith.muli %c1_i32_208, %c8_i32_209 : i32
    %645 = tpu.assume_multiple %644, 8 : i32
    %646 = arith.index_cast %645 : i32 to index
    %c0_210 = arith.constant 0 : index
    %647 = vector.load %arg13[%646, %c0_210] : memref<64x512xf32, #tpu.memory_space<vmem>>, vector<8x512xf32>
    %648 = arith.truncf %641 : vector<8x128xf32> to vector<8x128xbf16>
    %cst_211 = arith.constant dense<0.000000e+00> : vector<8x512xf32>
    %649 = tpu.matmul %648, %610, %cst_211 {dimension_numbers = #tpu.dot_dimension_numbers<[1], [0], [0], [1], [0, 0, 1, 1], [], []>} : vector<8x128xbf16>, vector<128x512xbf16>, vector<8x512xf32> -> vector<8x512xf32>
    %650 = arith.addf %647, %649 : vector<8x512xf32>
    %651 = vector.extract_strided_slice %650 {offsets = [0, 0], sizes = [8, 384], strides = [1, 1]} : vector<8x512xf32> to vector<8x384xf32>
    %652 = arith.negf %651 : vector<8x384xf32>
    %653 = math.exp %652 : vector<8x384xf32>
    %cst_212 = arith.constant 1.000000e+00 : f32
    %654 = vector.broadcast %cst_212 : f32 to vector<8x384xf32>
    %655 = arith.addf %654, %653 : vector<8x384xf32>
    %656 = arith.divf %654, %655 : vector<8x384xf32>
    %657 = vector.extract_strided_slice %656 {offsets = [0, 0], sizes = [8, 128], strides = [1, 1]} : vector<8x384xf32> to vector<8x128xf32>
    %658 = vector.extract_strided_slice %656 {offsets = [0, 128], sizes = [8, 128], strides = [1, 1]} : vector<8x384xf32> to vector<8x128xf32>
    %659 = vector.extract_strided_slice %656 {offsets = [0, 256], sizes = [8, 128], strides = [1, 1]} : vector<8x384xf32> to vector<8x128xf32>
    %660 = vector.extract_strided_slice %650 {offsets = [0, 384], sizes = [8, 128], strides = [1, 1]} : vector<8x512xf32> to vector<8x128xf32>
    %661 = math.tanh %660 : vector<8x128xf32>
    %662 = arith.mulf %658, %639 : vector<8x128xf32>
    %663 = arith.mulf %657, %661 : vector<8x128xf32>
    %664 = arith.addf %662, %663 : vector<8x128xf32>
    %665 = math.tanh %664 : vector<8x128xf32>
    %666 = arith.mulf %659, %665 : vector<8x128xf32>
    %667 = arith.index_cast %645 : i32 to index
    %c0_213 = arith.constant 0 : index
    %668 = vector.load %arg12[%667, %c0_213] : memref<64x128xf32, #tpu.memory_space<vmem>>, vector<8x128xf32>
    tpu.vector_store %arg12[%667, %c0_213], %666 {strides = array<i32>} : memref<64x128xf32, #tpu.memory_space<vmem>>, vector<8x128xf32>,
    %c2_i32_214 = arith.constant 2 : i32
    %c8_i32_215 = arith.constant 8 : i32
    %669 = arith.muli %c2_i32_214, %c8_i32_215 : i32
    %670 = tpu.assume_multiple %669, 8 : i32
    %671 = arith.index_cast %670 : i32 to index
    %c0_216 = arith.constant 0 : index
    %672 = vector.load %arg13[%671, %c0_216] : memref<64x512xf32, #tpu.memory_space<vmem>>, vector<8x512xf32>
    %673 = arith.truncf %666 : vector<8x128xf32> to vector<8x128xbf16>
    %cst_217 = arith.constant dense<0.000000e+00> : vector<8x512xf32>
    %674 = tpu.matmul %673, %610, %cst_217 {dimension_numbers = #tpu.dot_dimension_numbers<[1], [0], [0], [1], [0, 0, 1, 1], [], []>} : vector<8x128xbf16>, vector<128x512xbf16>, vector<8x512xf32> -> vector<8x512xf32>
    %675 = arith.addf %672, %674 : vector<8x512xf32>
    %676 = vector.extract_strided_slice %675 {offsets = [0, 0], sizes = [8, 384], strides = [1, 1]} : vector<8x512xf32> to vector<8x384xf32>
    %677 = arith.negf %676 : vector<8x384xf32>
    %678 = math.exp %677 : vector<8x384xf32>
    %cst_218 = arith.constant 1.000000e+00 : f32
    %679 = vector.broadcast %cst_218 : f32 to vector<8x384xf32>
    %680 = arith.addf %679, %678 : vector<8x384xf32>
    %681 = arith.divf %679, %680 : vector<8x384xf32>
    %682 = vector.extract_strided_slice %681 {offsets = [0, 0], sizes = [8, 128], strides = [1, 1]} : vector<8x384xf32> to vector<8x128xf32>
    %683 = vector.extract_strided_slice %681 {offsets = [0, 128], sizes = [8, 128], strides = [1, 1]} : vector<8x384xf32> to vector<8x128xf32>
    %684 = vector.extract_strided_slice %681 {offsets = [0, 256], sizes = [8, 128], strides = [1, 1]} : vector<8x384xf32> to vector<8x128xf32>
    %685 = vector.extract_strided_slice %675 {offsets = [0, 384], sizes = [8, 128], strides = [1, 1]} : vector<8x512xf32> to vector<8x128xf32>
    %686 = math.tanh %685 : vector<8x128xf32>
    %687 = arith.mulf %683, %664 : vector<8x128xf32>
    %688 = arith.mulf %682, %686 : vector<8x128xf32>
    %689 = arith.addf %687, %688 : vector<8x128xf32>
    %690 = math.tanh %689 : vector<8x128xf32>
    %691 = arith.mulf %684, %690 : vector<8x128xf32>
    %692 = arith.index_cast %670 : i32 to index
    %c0_219 = arith.constant 0 : index
    %693 = vector.load %arg12[%692, %c0_219] : memref<64x128xf32, #tpu.memory_space<vmem>>, vector<8x128xf32>
    tpu.vector_store %arg12[%692, %c0_219], %691 {strides = array<i32>} : memref<64x128xf32, #tpu.memory_space<vmem>>, vector<8x128xf32>,
    %c3_i32_220 = arith.constant 3 : i32
    %c8_i32_221 = arith.constant 8 : i32
    %694 = arith.muli %c3_i32_220, %c8_i32_221 : i32
    %695 = tpu.assume_multiple %694, 8 : i32
    %696 = arith.index_cast %695 : i32 to index
    %c0_222 = arith.constant 0 : index
    %697 = vector.load %arg13[%696, %c0_222] : memref<64x512xf32, #tpu.memory_space<vmem>>, vector<8x512xf32>
    %698 = arith.truncf %691 : vector<8x128xf32> to vector<8x128xbf16>
    %cst_223 = arith.constant dense<0.000000e+00> : vector<8x512xf32>
    %699 = tpu.matmul %698, %610, %cst_223 {dimension_numbers = #tpu.dot_dimension_numbers<[1], [0], [0], [1], [0, 0, 1, 1], [], []>} : vector<8x128xbf16>, vector<128x512xbf16>, vector<8x512xf32> -> vector<8x512xf32>
    %700 = arith.addf %697, %699 : vector<8x512xf32>
    %701 = vector.extract_strided_slice %700 {offsets = [0, 0], sizes = [8, 384], strides = [1, 1]} : vector<8x512xf32> to vector<8x384xf32>
    %702 = arith.negf %701 : vector<8x384xf32>
    %703 = math.exp %702 : vector<8x384xf32>
    %cst_224 = arith.constant 1.000000e+00 : f32
    %704 = vector.broadcast %cst_224 : f32 to vector<8x384xf32>
    %705 = arith.addf %704, %703 : vector<8x384xf32>
    %706 = arith.divf %704, %705 : vector<8x384xf32>
    %707 = vector.extract_strided_slice %706 {offsets = [0, 0], sizes = [8, 128], strides = [1, 1]} : vector<8x384xf32> to vector<8x128xf32>
    %708 = vector.extract_strided_slice %706 {offsets = [0, 128], sizes = [8, 128], strides = [1, 1]} : vector<8x384xf32> to vector<8x128xf32>
    %709 = vector.extract_strided_slice %706 {offsets = [0, 256], sizes = [8, 128], strides = [1, 1]} : vector<8x384xf32> to vector<8x128xf32>
    %710 = vector.extract_strided_slice %700 {offsets = [0, 384], sizes = [8, 128], strides = [1, 1]} : vector<8x512xf32> to vector<8x128xf32>
    %711 = math.tanh %710 : vector<8x128xf32>
    %712 = arith.mulf %708, %689 : vector<8x128xf32>
    %713 = arith.mulf %707, %711 : vector<8x128xf32>
    %714 = arith.addf %712, %713 : vector<8x128xf32>
    %715 = math.tanh %714 : vector<8x128xf32>
    %716 = arith.mulf %709, %715 : vector<8x128xf32>
    %717 = arith.index_cast %695 : i32 to index
    %c0_225 = arith.constant 0 : index
    %718 = vector.load %arg12[%717, %c0_225] : memref<64x128xf32, #tpu.memory_space<vmem>>, vector<8x128xf32>
    tpu.vector_store %arg12[%717, %c0_225], %716 {strides = array<i32>} : memref<64x128xf32, #tpu.memory_space<vmem>>, vector<8x128xf32>,
    %c4_i32_226 = arith.constant 4 : i32
    %c8_i32_227 = arith.constant 8 : i32
    %719 = arith.muli %c4_i32_226, %c8_i32_227 : i32
    %720 = tpu.assume_multiple %719, 8 : i32
    %721 = arith.index_cast %720 : i32 to index
    %c0_228 = arith.constant 0 : index
    %722 = vector.load %arg13[%721, %c0_228] : memref<64x512xf32, #tpu.memory_space<vmem>>, vector<8x512xf32>
    %723 = arith.truncf %716 : vector<8x128xf32> to vector<8x128xbf16>
    %cst_229 = arith.constant dense<0.000000e+00> : vector<8x512xf32>
    %724 = tpu.matmul %723, %610, %cst_229 {dimension_numbers = #tpu.dot_dimension_numbers<[1], [0], [0], [1], [0, 0, 1, 1], [], []>} : vector<8x128xbf16>, vector<128x512xbf16>, vector<8x512xf32> -> vector<8x512xf32>
    %725 = arith.addf %722, %724 : vector<8x512xf32>
    %726 = vector.extract_strided_slice %725 {offsets = [0, 0], sizes = [8, 384], strides = [1, 1]} : vector<8x512xf32> to vector<8x384xf32>
    %727 = arith.negf %726 : vector<8x384xf32>
    %728 = math.exp %727 : vector<8x384xf32>
    %cst_230 = arith.constant 1.000000e+00 : f32
    %729 = vector.broadcast %cst_230 : f32 to vector<8x384xf32>
    %730 = arith.addf %729, %728 : vector<8x384xf32>
    %731 = arith.divf %729, %730 : vector<8x384xf32>
    %732 = vector.extract_strided_slice %731 {offsets = [0, 0], sizes = [8, 128], strides = [1, 1]} : vector<8x384xf32> to vector<8x128xf32>
    %733 = vector.extract_strided_slice %731 {offsets = [0, 128], sizes = [8, 128], strides = [1, 1]} : vector<8x384xf32> to vector<8x128xf32>
    %734 = vector.extract_strided_slice %731 {offsets = [0, 256], sizes = [8, 128], strides = [1, 1]} : vector<8x384xf32> to vector<8x128xf32>
    %735 = vector.extract_strided_slice %725 {offsets = [0, 384], sizes = [8, 128], strides = [1, 1]} : vector<8x512xf32> to vector<8x128xf32>
    %736 = math.tanh %735 : vector<8x128xf32>
    %737 = arith.mulf %733, %714 : vector<8x128xf32>
    %738 = arith.mulf %732, %736 : vector<8x128xf32>
    %739 = arith.addf %737, %738 : vector<8x128xf32>
    %740 = math.tanh %739 : vector<8x128xf32>
    %741 = arith.mulf %734, %740 : vector<8x128xf32>
    %742 = arith.index_cast %720 : i32 to index
    %c0_231 = arith.constant 0 : index
    %743 = vector.load %arg12[%742, %c0_231] : memref<64x128xf32, #tpu.memory_space<vmem>>, vector<8x128xf32>
    tpu.vector_store %arg12[%742, %c0_231], %741 {strides = array<i32>} : memref<64x128xf32, #tpu.memory_space<vmem>>, vector<8x128xf32>,
    %c5_i32_232 = arith.constant 5 : i32
    %c8_i32_233 = arith.constant 8 : i32
    %744 = arith.muli %c5_i32_232, %c8_i32_233 : i32
    %745 = tpu.assume_multiple %744, 8 : i32
    %746 = arith.index_cast %745 : i32 to index
    %c0_234 = arith.constant 0 : index
    %747 = vector.load %arg13[%746, %c0_234] : memref<64x512xf32, #tpu.memory_space<vmem>>, vector<8x512xf32>
    %748 = arith.truncf %741 : vector<8x128xf32> to vector<8x128xbf16>
    %cst_235 = arith.constant dense<0.000000e+00> : vector<8x512xf32>
    %749 = tpu.matmul %748, %610, %cst_235 {dimension_numbers = #tpu.dot_dimension_numbers<[1], [0], [0], [1], [0, 0, 1, 1], [], []>} : vector<8x128xbf16>, vector<128x512xbf16>, vector<8x512xf32> -> vector<8x512xf32>
    %750 = arith.addf %747, %749 : vector<8x512xf32>
    %751 = vector.extract_strided_slice %750 {offsets = [0, 0], sizes = [8, 384], strides = [1, 1]} : vector<8x512xf32> to vector<8x384xf32>
    %752 = arith.negf %751 : vector<8x384xf32>
    %753 = math.exp %752 : vector<8x384xf32>
    %cst_236 = arith.constant 1.000000e+00 : f32
    %754 = vector.broadcast %cst_236 : f32 to vector<8x384xf32>
    %755 = arith.addf %754, %753 : vector<8x384xf32>
    %756 = arith.divf %754, %755 : vector<8x384xf32>
    %757 = vector.extract_strided_slice %756 {offsets = [0, 0], sizes = [8, 128], strides = [1, 1]} : vector<8x384xf32> to vector<8x128xf32>
    %758 = vector.extract_strided_slice %756 {offsets = [0, 128], sizes = [8, 128], strides = [1, 1]} : vector<8x384xf32> to vector<8x128xf32>
    %759 = vector.extract_strided_slice %756 {offsets = [0, 256], sizes = [8, 128], strides = [1, 1]} : vector<8x384xf32> to vector<8x128xf32>
    %760 = vector.extract_strided_slice %750 {offsets = [0, 384], sizes = [8, 128], strides = [1, 1]} : vector<8x512xf32> to vector<8x128xf32>
    %761 = math.tanh %760 : vector<8x128xf32>
    %762 = arith.mulf %758, %739 : vector<8x128xf32>
    %763 = arith.mulf %757, %761 : vector<8x128xf32>
    %764 = arith.addf %762, %763 : vector<8x128xf32>
    %765 = math.tanh %764 : vector<8x128xf32>
    %766 = arith.mulf %759, %765 : vector<8x128xf32>
    %767 = arith.index_cast %745 : i32 to index
    %c0_237 = arith.constant 0 : index
    %768 = vector.load %arg12[%767, %c0_237] : memref<64x128xf32, #tpu.memory_space<vmem>>, vector<8x128xf32>
    tpu.vector_store %arg12[%767, %c0_237], %766 {strides = array<i32>} : memref<64x128xf32, #tpu.memory_space<vmem>>, vector<8x128xf32>,
    %c6_i32_238 = arith.constant 6 : i32
    %c0_239 = arith.constant 0 : index
    %c0_240 = arith.constant 0 : index
    %769 = vector.load %arg12[%c0_239, %c0_240] : memref<64x128xf32, #tpu.memory_space<vmem>>, vector<48x128xf32>
    %770 = arith.truncf %769 : vector<48x128xf32> to vector<48x128xbf16>
    %c0_241 = arith.constant 0 : index
    %c0_242 = arith.constant 0 : index
    %771 = vector.load %arg8[%c0_241, %c0_242] : memref<128x128xbf16, #tpu.memory_space<vmem>>, vector<128x128xbf16>
    %cst_243 = arith.constant dense<0.000000e+00> : vector<48x128xf32>
    %772 = tpu.matmul %770, %771, %cst_243 {dimension_numbers = #tpu.dot_dimension_numbers<[1], [0], [0], [1], [0, 0, 1, 1], [], []>} : vector<48x128xbf16>, vector<128x128xbf16>, vector<48x128xf32> -> vector<48x128xf32>
    %c0_244 = arith.constant 0 : index
    %c0_245 = arith.constant 0 : index
    %773 = vector.load %arg9[%c0_244, %c0_245] : memref<1x128xf32, #tpu.memory_space<vmem>>, vector<1x128xf32>
    %774 = vector.broadcast %773 : vector<1x128xf32> to vector<48x128xf32>
    %775 = arith.addf %772, %774 : vector<48x128xf32>
    %c0_246 = arith.constant 0 : index
    %c0_247 = arith.constant 0 : index
    %776 = vector.load %arg10[%c0_246, %c0_247] : memref<48x128xf32, #tpu.memory_space<vmem>>, vector<48x128xf32>
    tpu.vector_store %arg10[%c0_246, %c0_247], %775 {strides = array<i32>} : memref<48x128xf32, #tpu.memory_space<vmem>>, vector<48x128xf32>,
    return
  }
}

</mosaic_0001>

<llo_original>
// kernel: lstm_seq2seq_forward.1
$region0: #{lstm_seq2seq_forward.1}
  #allocation0 [shape = 'u32[]', space=smem, size = 0x4, offset = 0x4, fixed_abs, tag = 'smem constant byte address 0x4 - core index']
  #allocation1 [shape = 'u32[144,128]{1,0:T(1,128)}', space=vmem, size = 0x12000, scoped, tag = 'internal scratch']
  #allocation2 [shape = 'f32[64,128]{1,0:T(8,128)}', space=vmem, size = 0x8000, scoped, tag = 'scratch operand']
  #allocation3 [shape = 'f32[64,128]{1,0:T(8,128)}', space=vmem, size = 0x8000, scoped, tag = 'scratch operand']
  #allocation4 [shape = 'f32[64,512]{1,0:T(8,128)}', space=vmem, size = 0x20000, scoped, tag = 'scratch operand']
  #allocation5 [shape = 'f32[4,8,128]{2,1,0:T(8,128)}', space=vmem, size = 0x4000, scoped, tag = 'scratch operand']
  %s0 = inlined_call_operand.vmem [shape: f32[64,128], index: 0, kind: input, shape index: {}]
  %s1 = inlined_call_operand.vmem [shape: f32[48,128], index: 1, kind: input, shape index: {}]
  %s2 = inlined_call_operand.vmem [shape: bf16[2,128,512], index: 2, kind: input, shape index: {}]
  %s3 = inlined_call_operand.vmem [shape: bf16[2,128,512], index: 3, kind: input, shape index: {}]
  %s4 = inlined_call_operand.vmem [shape: f32[2,1,512], index: 4, kind: input, shape index: {}]
  %s5 = inlined_call_operand.vmem [shape: bf16[2,128,512], index: 5, kind: input, shape index: {}]
  %s6 = inlined_call_operand.vmem [shape: bf16[2,128,512], index: 6, kind: input, shape index: {}]
  %s7 = inlined_call_operand.vmem [shape: f32[2,1,512], index: 7, kind: input, shape index: {}]
  %s8 = inlined_call_operand.vmem [shape: bf16[128,128], index: 8, kind: input, shape index: {}]
  %s9 = inlined_call_operand.vmem [shape: f32[1,128], index: 9, kind: input, shape index: {}]
  %s10 = inlined_call_operand.vmem [shape: f32[48,128], index: 10, kind: output, shape index: {}]
  %s11 = sld [smem:[#allocation0]]
  $region50: #{lstm_seq2seq_forward.1} parent=0
    _
  %s13 = ssub.s32 1, %s11
  %s14 = scalar_select 0, %s13, %s11
  // Predicated region
  $region2: #{lstm_seq2seq_forward.1} parent=0 // pred_check
    _
  $region3: #{lstm_seq2seq_forward.1} parent=0 // pred_check_branch
    %16 = sbr.rel (0) target = $region5
  $region4: #{lstm_seq2seq_forward.1} parent=0 // pred_region
    _
  $region5: #{lstm_seq2seq_forward.1} parent=0 // pred_fallthru
    _
  // Predicated region
  $region6: #{lstm_seq2seq_forward.1} parent=0 // pred_check
    _
  $region7: #{lstm_seq2seq_forward.1} parent=0 // pred_check_branch
    %18 = sbr.rel (0) target = $region9
  $region8: #{lstm_seq2seq_forward.1} parent=0 // pred_region
    _
  $region9: #{lstm_seq2seq_forward.1} parent=0 // pred_fallthru
    _
  // Predicated region
  $region10: #{lstm_seq2seq_forward.1} parent=0 // pred_check
    _
  $region11: #{lstm_seq2seq_forward.1} parent=0 // pred_check_branch
    %20 = sbr.rel (0) target = $region13
  $region12: #{lstm_seq2seq_forward.1} parent=0 // pred_region
    _
  $region13: #{lstm_seq2seq_forward.1} parent=0 // pred_fallthru
    _
  // Predicated region
  $region14: #{lstm_seq2seq_forward.1} parent=0 // pred_check
    _
  $region15: #{lstm_seq2seq_forward.1} parent=0 // pred_check_branch
    %22 = sbr.rel (0) target = $region17
  $region16: #{lstm_seq2seq_forward.1} parent=0 // pred_region
    _
  $region17: #{lstm_seq2seq_forward.1} parent=0 // pred_fallthru
    _
  // Predicated region
  $region18: #{lstm_seq2seq_forward.1} parent=0 // pred_check
    _
  $region19: #{lstm_seq2seq_forward.1} parent=0 // pred_check_branch
    %24 = sbr.rel (0) target = $region21
  $region20: #{lstm_seq2seq_forward.1} parent=0 // pred_region
    _
  $region21: #{lstm_seq2seq_forward.1} parent=0 // pred_fallthru
    _
  // Predicated region
  $region22: #{lstm_seq2seq_forward.1} parent=0 // pred_check
    _
  $region23: #{lstm_seq2seq_forward.1} parent=0 // pred_check_branch
    %26 = sbr.rel (0) target = $region25
  $region24: #{lstm_seq2seq_forward.1} parent=0 // pred_region
    _
  $region25: #{lstm_seq2seq_forward.1} parent=0 // pred_fallthru
    _
  // Predicated region
  $region26: #{lstm_seq2seq_forward.1} parent=0 // pred_check
    _
  $region27: #{lstm_seq2seq_forward.1} parent=0 // pred_check_branch
    %28 = sbr.rel (0) target = $region29
  $region28: #{lstm_seq2seq_forward.1} parent=0 // pred_region
    _
  $region29: #{lstm_seq2seq_forward.1} parent=0 // pred_fallthru
    _
  // Predicated region
  $region30: #{lstm_seq2seq_forward.1} parent=0 // pred_check
    _
  $region31: #{lstm_seq2seq_forward.1} parent=0 // pred_check_branch
    %30 = sbr.rel (0) target = $region33
  $region32: #{lstm_seq2seq_forward.1} parent=0 // pred_region
    _
  $region33: #{lstm_seq2seq_forward.1} parent=0 // pred_fallthru
    _
  // Predicated region
  $region34: #{lstm_seq2seq_forward.1} parent=0 // pred_check
    _
  $region35: #{lstm_seq2seq_forward.1} parent=0 // pred_check_branch
    %32 = sbr.rel (0) target = $region37
  $region36: #{lstm_seq2seq_forward.1} parent=0 // pred_region
    _
  $region37: #{lstm_seq2seq_forward.1} parent=0 // pred_fallthru
    _
  // Predicated region
  $region38: #{lstm_seq2seq_forward.1} parent=0 // pred_check
    _
  $region39: #{lstm_seq2seq_forward.1} parent=0 // pred_check_branch
    %34 = sbr.rel (0) target = $region41
  $region40: #{lstm_seq2seq_forward.1} parent=0 // pred_region
    _
  $region41: #{lstm_seq2seq_forward.1} parent=0 // pred_fallthru
    _
  %v36 = vld [vmem:[%s2] sm:$0xff]
  %v37 = vld [vmem:[%s2 + $0x8] sm:$0xff]
  %v38 = vld [vmem:[%s2 + $0x10] sm:$0xff]
  %v39 = vld [vmem:[%s2 + $0x18] sm:$0xff]
  %v40 = vld [vmem:[%s2 + $0x20] sm:$0xff]
  %v41 = vld [vmem:[%s2 + $0x28] sm:$0xff]
  %v42 = vld [vmem:[%s2 + $0x30] sm:$0xff]
  %v43 = vld [vmem:[%s2 + $0x38] sm:$0xff]
  %v44 = vld [vmem:[%s2 + $0x40] sm:$0xff]
  %v45 = vld [vmem:[%s2 + $0x48] sm:$0xff]
  %v46 = vld [vmem:[%s2 + $0x50] sm:$0xff]
  %v47 = vld [vmem:[%s2 + $0x58] sm:$0xff]
  %v48 = vld [vmem:[%s2 + $0x60] sm:$0xff]
  %v49 = vld [vmem:[%s2 + $0x68] sm:$0xff]
  %v50 = vld [vmem:[%s2 + $0x70] sm:$0xff]
  %v51 = vld [vmem:[%s2 + $0x78] sm:$0xff]
  %v52 = vld [vmem:[%s2 + $0x80] sm:$0xff]
  %v53 = vld [vmem:[%s2 + $0x88] sm:$0xff]
  %v54 = vld [vmem:[%s2 + $0x90] sm:$0xff]
  %v55 = vld [vmem:[%s2 + $0x98] sm:$0xff]
  %v56 = vld [vmem:[%s2 + $0xa0] sm:$0xff]
  %v57 = vld [vmem:[%s2 + $0xa8] sm:$0xff]
  %v58 = vld [vmem:[%s2 + $0xb0] sm:$0xff]
  %v59 = vld [vmem:[%s2 + $0xb8] sm:$0xff]
  %v60 = vld [vmem:[%s2 + $0xc0] sm:$0xff]
  %v61 = vld [vmem:[%s2 + $0xc8] sm:$0xff]
  %v62 = vld [vmem:[%s2 + $0xd0] sm:$0xff]
  %v63 = vld [vmem:[%s2 + $0xd8] sm:$0xff]
  %v64 = vld [vmem:[%s2 + $0xe0] sm:$0xff]
  %v65 = vld [vmem:[%s2 + $0xe8] sm:$0xff]
  %v66 = vld [vmem:[%s2 + $0xf0] sm:$0xff]
  %v67 = vld [vmem:[%s2 + $0xf8] sm:$0xff]
  %v68 = vld [vmem:[%s3] sm:$0xff]
  %v69 = vld [vmem:[%s3 + $0x8] sm:$0xff]
  %v70 = vld [vmem:[%s3 + $0x10] sm:$0xff]
  %v71 = vld [vmem:[%s3 + $0x18] sm:$0xff]
  %v72 = vld [vmem:[%s3 + $0x20] sm:$0xff]
  %v73 = vld [vmem:[%s3 + $0x28] sm:$0xff]
  %v74 = vld [vmem:[%s3 + $0x30] sm:$0xff]
  %v75 = vld [vmem:[%s3 + $0x38] sm:$0xff]
  %v76 = vld [vmem:[%s3 + $0x40] sm:$0xff]
  %v77 = vld [vmem:[%s3 + $0x48] sm:$0xff]
  %v78 = vld [vmem:[%s3 + $0x50] sm:$0xff]
  %v79 = vld [vmem:[%s3 + $0x58] sm:$0xff]
  %v80 = vld [vmem:[%s3 + $0x60] sm:$0xff]
  %v81 = vld [vmem:[%s3 + $0x68] sm:$0xff]
  %v82 = vld [vmem:[%s3 + $0x70] sm:$0xff]
  %v83 = vld [vmem:[%s3 + $0x78] sm:$0xff]
  %v84 = vld [vmem:[%s3 + $0x80] sm:$0xff]
  %v85 = vld [vmem:[%s3 + $0x88] sm:$0xff]
  %v86 = vld [vmem:[%s3 + $0x90] sm:$0xff]
  %v87 = vld [vmem:[%s3 + $0x98] sm:$0xff]
  %v88 = vld [vmem:[%s3 + $0xa0] sm:$0xff]
  %v89 = vld [vmem:[%s3 + $0xa8] sm:$0xff]
  %v90 = vld [vmem:[%s3 + $0xb0] sm:$0xff]
  %v91 = vld [vmem:[%s3 + $0xb8] sm:$0xff]
  %v92 = vld [vmem:[%s3 + $0xc0] sm:$0xff]
  %v93 = vld [vmem:[%s3 + $0xc8] sm:$0xff]
  %v94 = vld [vmem:[%s3 + $0xd0] sm:$0xff]
  %v95 = vld [vmem:[%s3 + $0xd8] sm:$0xff]
  %v96 = vld [vmem:[%s3 + $0xe0] sm:$0xff]
  %v97 = vld [vmem:[%s3 + $0xe8] sm:$0xff]
  %v98 = vld [vmem:[%s3 + $0xf0] sm:$0xff]
  %v99 = vld [vmem:[%s3 + $0xf8] sm:$0xff]
  %v100 = vld [vmem:[%s4] sm:$0xf]
  %v101 = vld [vmem:[%s0] sm:$0xff]
  %v102 = vld [vmem:[%s0 + $0x8] sm:$0xff]
  %v103 = vld [vmem:[%s0 + $0x10] sm:$0xff]
  %v104 = vld [vmem:[%s0 + $0x18] sm:$0xff]
  %v105 = vld [vmem:[%s0 + $0x20] sm:$0xff]
  %v106 = vld [vmem:[%s0 + $0x28] sm:$0xff]
  %v107 = vld [vmem:[%s0 + $0x30] sm:$0xff]
  %v108 = vld [vmem:[%s0 + $0x38] sm:$0xff]
  %v109 = vpack.c.bf16 %v102, %v101
  %v110 = vpack.c.bf16 %v104, %v103
  %v111 = vpack.c.bf16 %v106, %v105
  %v112 = vpack.c.bf16 %v108, %v107
  %v114 = vlaneseq
  %v115 = vshrl.u32 %v114, 7
  %v116 = vsub.s32 0, %v115
  %v117 = vrot.slane %v100, %v116
  %v118 = vlaneseq
  %v119 = vshrl.u32 %v118, 7
  %v120 = vsub.s32 1, %v119
  %v121 = vrot.slane %v100, %v120
  %v122 = vlaneseq
  %v123 = vshrl.u32 %v122, 7
  %v124 = vsub.s32 2, %v123
  %v125 = vrot.slane %v100, %v124
  %v126 = vlaneseq
  %v127 = vshrl.u32 %v126, 7
  %v128 = vsub.s32 3, %v127
  %v129 = vrot.slane %v100, %v128
  %v166 = vunpack.c.l.b16 %v36
  %v167 = vunpack.c.h.b16 %v36
  %v168 = vunpack.c.l.b16 %v37
  %v169 = vunpack.c.h.b16 %v37
  %v170 = vunpack.c.l.b16 %v38
  %v171 = vunpack.c.h.b16 %v38
  %v172 = vunpack.c.l.b16 %v39
  %v173 = vunpack.c.h.b16 %v39
  %v174 = vunpack.c.l.b16 %v40
  %v175 = vunpack.c.h.b16 %v40
  %v176 = vunpack.c.l.b16 %v41
  %v177 = vunpack.c.h.b16 %v41
  %v178 = vunpack.c.l.b16 %v42
  %v179 = vunpack.c.h.b16 %v42
  %v180 = vunpack.c.l.b16 %v43
  %v181 = vunpack.c.h.b16 %v43
  %v182 = vunpack.c.l.b16 %v44
  %v183 = vunpack.c.h.b16 %v44
  %v184 = vunpack.c.l.b16 %v45
  %v185 = vunpack.c.h.b16 %v45
  %v186 = vunpack.c.l.b16 %v46
  %v187 = vunpack.c.h.b16 %v46
  %v188 = vunpack.c.l.b16 %v47
  %v189 = vunpack.c.h.b16 %v47
  %v190 = vunpack.c.l.b16 %v48
  %v191 = vunpack.c.h.b16 %v48
  %v192 = vunpack.c.l.b16 %v49
  %v193 = vunpack.c.h.b16 %v49
  %v194 = vunpack.c.l.b16 %v50
  %v195 = vunpack.c.h.b16 %v50
  %v196 = vunpack.c.l.b16 %v51
  %v197 = vunpack.c.h.b16 %v51
  %v198 = vunpack.c.l.b16 %v52
  %v199 = vunpack.c.h.b16 %v52
  %v200 = vunpack.c.l.b16 %v53
  %v201 = vunpack.c.h.b16 %v53
  %v202 = vunpack.c.l.b16 %v54
  %v203 = vunpack.c.h.b16 %v54
  %v204 = vunpack.c.l.b16 %v55
  %v205 = vunpack.c.h.b16 %v55
  %v206 = vunpack.c.l.b16 %v56
  %v207 = vunpack.c.h.b16 %v56
  %v208 = vunpack.c.l.b16 %v57
  %v209 = vunpack.c.h.b16 %v57
  %v210 = vunpack.c.l.b16 %v58
  %v211 = vunpack.c.h.b16 %v58
  %v212 = vunpack.c.l.b16 %v59
  %v213 = vunpack.c.h.b16 %v59
  %v214 = vunpack.c.l.b16 %v60
  %v215 = vunpack.c.h.b16 %v60
  %v216 = vunpack.c.l.b16 %v61
  %v217 = vunpack.c.h.b16 %v61
  %v218 = vunpack.c.l.b16 %v62
  %v219 = vunpack.c.h.b16 %v62
  %v220 = vunpack.c.l.b16 %v63
  %v221 = vunpack.c.h.b16 %v63
  %v222 = vunpack.c.l.b16 %v64
  %v223 = vunpack.c.h.b16 %v64
  %v224 = vunpack.c.l.b16 %v65
  %v225 = vunpack.c.h.b16 %v65
  %v226 = vunpack.c.l.b16 %v66
  %v227 = vunpack.c.h.b16 %v66
  %v228 = vunpack.c.l.b16 %v67
  %v229 = vunpack.c.h.b16 %v67
  %v230 = vpack.c.b16 %v170, %v166
  %v231 = vpack.c.b16 %v171, %v167
  %v232 = vpack.c.b16 %v172, %v168
  %v233 = vpack.c.b16 %v173, %v169
  %v234 = vpack.c.b16 %v178, %v174
  %v235 = vpack.c.b16 %v179, %v175
  %v236 = vpack.c.b16 %v180, %v176
  %v237 = vpack.c.b16 %v181, %v177
  %v238 = vpack.c.b16 %v186, %v182
  %v239 = vpack.c.b16 %v187, %v183
  %v240 = vpack.c.b16 %v188, %v184
  %v241 = vpack.c.b16 %v189, %v185
  %v242 = vpack.c.b16 %v194, %v190
  %v243 = vpack.c.b16 %v195, %v191
  %v244 = vpack.c.b16 %v196, %v192
  %v245 = vpack.c.b16 %v197, %v193
  %v246 = vpack.c.b16 %v202, %v198
  %v247 = vpack.c.b16 %v203, %v199
  %v248 = vpack.c.b16 %v204, %v200
  %v249 = vpack.c.b16 %v205, %v201
  %v250 = vpack.c.b16 %v210, %v206
  %v251 = vpack.c.b16 %v211, %v207
  %v252 = vpack.c.b16 %v212, %v208
  %v253 = vpack.c.b16 %v213, %v209
  %v254 = vpack.c.b16 %v218, %v214
  %v255 = vpack.c.b16 %v219, %v215
  %v256 = vpack.c.b16 %v220, %v216
  %v257 = vpack.c.b16 %v221, %v217
  %v258 = vpack.c.b16 %v226, %v222
  %v259 = vpack.c.b16 %v227, %v223
  %v260 = vpack.c.b16 %v228, %v224
  %v261 = vpack.c.b16 %v229, %v225
  %294 = vmatprep.subr.bf16.mxu0 %v231
  %295 = vmatpush1.bf16.msra.mxu0 %v230
  %296 = vmatprep.subr.bf16.mxu0 %v235
  %297 = vmatpush1.bf16.msra.mxu0 %v234
  %298 = vmatprep.subr.bf16.mxu0 %v239
  %299 = vmatpush1.bf16.msra.mxu0 %v238
  %300 = vmatprep.subr.bf16.mxu0 %v243
  %301 = vmatpush1.bf16.msra.mxu0 %v242
  %302 = vmatprep.subr.bf16.mxu0 %v247
  %303 = vmatpush1.bf16.msra.mxu0 %v246
  %304 = vmatprep.subr.bf16.mxu0 %v251
  %305 = vmatpush1.bf16.msra.mxu0 %v250
  %306 = vmatprep.subr.bf16.mxu0 %v255
  %307 = vmatpush1.bf16.msra.mxu0 %v254
  %308 = vmatprep.subr.bf16.mxu0 %v259
  %309 = vmatpush1.bf16.msra.mxu0 %v258
  %310 = vmatprep.subr.bf16.mxu0 0
  %311 = vmatpush1.bf16.msra.mxu0 0
  %312 = vmatprep.subr.bf16.mxu0 0
  %313 = vmatpush1.bf16.msra.mxu0 0
  %314 = vmatprep.subr.bf16.mxu0 0
  %315 = vmatpush1.bf16.msra.mxu0 0
  %316 = vmatprep.subr.bf16.mxu0 0
  %317 = vmatpush1.bf16.msra.mxu0 0
  %318 = vmatprep.subr.bf16.mxu0 0
  %319 = vmatpush1.bf16.msra.mxu0 0
  %320 = vmatprep.subr.bf16.mxu0 0
  %321 = vmatpush1.bf16.msra.mxu0 0
  %322 = vmatprep.subr.bf16.mxu0 0
  %323 = vmatpush1.bf16.msra.mxu0 0
  %324 = vmatprep.subr.bf16.mxu0 0
  %325 = vmatpush1.bf16.msra.mxu0 0
  %326 = vmatprep.mubr.bf16.mxu0 0
  %327 = vmatmul.mubr.bf16.gmra.mrb[0].mxu0 %v109
  %v328 = vpop.f32.mrb[0].mxu0
  %v329 = vadd.f32 %v117, %v328
  %v330 = vpop.f32.mrb[0].mxu0
  %v331 = vadd.f32 %v121, %v330
  %v332 = vpop.f32.mrb[0].mxu0
  %v333 = vadd.f32 %v117, %v332
  %v334 = vpop.f32.mrb[0].mxu0
  %v335 = vadd.f32 %v121, %v334
  %336 = vmatprep.mubr.bf16.mxu0 0
  %337 = vmatmul.mubr.bf16.gmra.mrb[0].mxu0 %v110
  %v338 = vpop.f32.mrb[0].mxu0
  %v339 = vadd.f32 %v117, %v338
  %v340 = vpop.f32.mrb[0].mxu0
  %v341 = vadd.f32 %v121, %v340
  %v342 = vpop.f32.mrb[0].mxu0
  %v343 = vadd.f32 %v117, %v342
  %v344 = vpop.f32.mrb[0].mxu0
  %v345 = vadd.f32 %v121, %v344
  %346 = vmatprep.mubr.bf16.mxu0 0
  %347 = vmatmul.mubr.bf16.gmra.mrb[0].mxu0 %v111
  %v348 = vpop.f32.mrb[0].mxu0
  %v349 = vadd.f32 %v117, %v348
  %v350 = vpop.f32.mrb[0].mxu0
  %v351 = vadd.f32 %v121, %v350
  %v352 = vpop.f32.mrb[0].mxu0
  %v353 = vadd.f32 %v117, %v352
  %v354 = vpop.f32.mrb[0].mxu0
  %v355 = vadd.f32 %v121, %v354
  %356 = vmatprep.mubr.bf16.mxu0 0
  %357 = vmatmul.mubr.bf16.gmra.mrb[0].mxu0 %v112
  %v358 = vpop.f32.mrb[0].mxu0
  %v359 = vadd.f32 %v117, %v358
  %v360 = vpop.f32.mrb[0].mxu0
  %v361 = vadd.f32 %v121, %v360
  %v362 = vpop.f32.mrb[0].mxu0
  %v363 = vadd.f32 %v117, %v362
  %v364 = vpop.f32.mrb[0].mxu0
  %v365 = vadd.f32 %v121, %v364
  %366 = vdwg.mxu0
  %367 = vmatprep.subr.bf16.mxu0 %v233
  %368 = vmatpush1.bf16.msra.mxu0 %v232
  %369 = vmatprep.subr.bf16.mxu0 %v237
  %370 = vmatpush1.bf16.msra.mxu0 %v236
  %371 = vmatprep.subr.bf16.mxu0 %v241
  %372 = vmatpush1.bf16.msra.mxu0 %v240
  %373 = vmatprep.subr.bf16.mxu0 %v245
  %374 = vmatpush1.bf16.msra.mxu0 %v244
  %375 = vmatprep.subr.bf16.mxu0 %v249
  %376 = vmatpush1.bf16.msra.mxu0 %v248
  %377 = vmatprep.subr.bf16.mxu0 %v253
  %378 = vmatpush1.bf16.msra.mxu0 %v252
  %379 = vmatprep.subr.bf16.mxu0 %v257
  %380 = vmatpush1.bf16.msra.mxu0 %v256
  %381 = vmatprep.subr.bf16.mxu0 %v261
  %382 = vmatpush1.bf16.msra.mxu0 %v260
  %383 = vmatprep.subr.bf16.mxu0 0
  %384 = vmatpush1.bf16.msra.mxu0 0
  %385 = vmatprep.subr.bf16.mxu0 0
  %386 = vmatpush1.bf16.msra.mxu0 0
  %387 = vmatprep.subr.bf16.mxu0 0
  %388 = vmatpush1.bf16.msra.mxu0 0
  %389 = vmatprep.subr.bf16.mxu0 0
  %390 = vmatpush1.bf16.msra.mxu0 0
  %391 = vmatprep.subr.bf16.mxu0 0
  %392 = vmatpush1.bf16.msra.mxu0 0
  %393 = vmatprep.subr.bf16.mxu0 0
  %394 = vmatpush1.bf16.msra.mxu0 0
  %395 = vmatprep.subr.bf16.mxu0 0
  %396 = vmatpush1.bf16.msra.mxu0 0
  %397 = vmatprep.subr.bf16.mxu0 0
  %398 = vmatpush1.bf16.msra.mxu0 0
  %399 = vmatprep.mubr.bf16.mxu0 0
  %400 = vmatmul.mubr.bf16.gmra.mrb[0].mxu0 %v109
  %v401 = vpop.f32.mrb[0].mxu0
  %v402 = vadd.f32 %v125, %v401
  %v403 = vpop.f32.mrb[0].mxu0
  %v404 = vadd.f32 %v129, %v403
  %v405 = vpop.f32.mrb[0].mxu0
  %v406 = vadd.f32 %v125, %v405
  %v407 = vpop.f32.mrb[0].mxu0
  %v408 = vadd.f32 %v129, %v407
  %409 = vmatprep.mubr.bf16.mxu0 0
  %410 = vmatmul.mubr.bf16.gmra.mrb[0].mxu0 %v110
  %v411 = vpop.f32.mrb[0].mxu0
  %v412 = vadd.f32 %v125, %v411
  %v413 = vpop.f32.mrb[0].mxu0
  %v414 = vadd.f32 %v129, %v413
  %v415 = vpop.f32.mrb[0].mxu0
  %v416 = vadd.f32 %v125, %v415
  %v417 = vpop.f32.mrb[0].mxu0
  %v418 = vadd.f32 %v129, %v417
  %419 = vmatprep.mubr.bf16.mxu0 0
  %420 = vmatmul.mubr.bf16.gmra.mrb[0].mxu0 %v111
  %v421 = vpop.f32.mrb[0].mxu0
  %v422 = vadd.f32 %v125, %v421
  %v423 = vpop.f32.mrb[0].mxu0
  %v424 = vadd.f32 %v129, %v423
  %v425 = vpop.f32.mrb[0].mxu0
  %v426 = vadd.f32 %v125, %v425
  %v427 = vpop.f32.mrb[0].mxu0
  %v428 = vadd.f32 %v129, %v427
  %429 = vmatprep.mubr.bf16.mxu0 0
  %430 = vmatmul.mubr.bf16.gmra.mrb[0].mxu0 %v112
  %v431 = vpop.f32.mrb[0].mxu0
  %v432 = vadd.f32 %v125, %v431
  %v433 = vpop.f32.mrb[0].mxu0
  %v434 = vadd.f32 %v129, %v433
  %v435 = vpop.f32.mrb[0].mxu0
  %v436 = vadd.f32 %v125, %v435
  %v437 = vpop.f32.mrb[0].mxu0
  %v438 = vadd.f32 %v129, %v437
  %439 = vdwg.mxu0
  %440 = vst [vmem:[#allocation4] sm:$0xff] %v329
  %441 = vst [vmem:[#allocation4 + $0x8] sm:$0xff] %v331
  %442 = vst [vmem:[#allocation4 + $0x10] sm:$0xff] %v402
  %443 = vst [vmem:[#allocation4 + $0x18] sm:$0xff] %v404
  %444 = vst [vmem:[#allocation4 + $0x20] sm:$0xff] %v333
  %445 = vst [vmem:[#allocation4 + $0x28] sm:$0xff] %v335
  %446 = vst [vmem:[#allocation4 + $0x30] sm:$0xff] %v406
  %447 = vst [vmem:[#allocation4 + $0x38] sm:$0xff] %v408
  %448 = vst [vmem:[#allocation4 + $0x40] sm:$0xff] %v339
  %449 = vst [vmem:[#allocation4 + $0x48] sm:$0xff] %v341
  %450 = vst [vmem:[#allocation4 + $0x50] sm:$0xff] %v412
  %451 = vst [vmem:[#allocation4 + $0x58] sm:$0xff] %v414
  %452 = vst [vmem:[#allocation4 + $0x60] sm:$0xff] %v343
  %453 = vst [vmem:[#allocation4 + $0x68] sm:$0xff] %v345
  %454 = vst [vmem:[#allocation4 + $0x70] sm:$0xff] %v416
  %455 = vst [vmem:[#allocation4 + $0x78] sm:$0xff] %v418
  %456 = vst [vmem:[#allocation4 + $0x80] sm:$0xff] %v349
  %457 = vst [vmem:[#allocation4 + $0x88] sm:$0xff] %v351
  %458 = vst [vmem:[#allocation4 + $0x90] sm:$0xff] %v422
  %459 = vst [vmem:[#allocation4 + $0x98] sm:$0xff] %v424
  %460 = vst [vmem:[#allocation4 + $0xa0] sm:$0xff] %v353
  %461 = vst [vmem:[#allocation4 + $0xa8] sm:$0xff] %v355
  %462 = vst [vmem:[#allocation4 + $0xb0] sm:$0xff] %v426
  %463 = vst [vmem:[#allocation4 + $0xb8] sm:$0xff] %v428
  %464 = vst [vmem:[#allocation4 + $0xc0] sm:$0xff] %v359
  %465 = vst [vmem:[#allocation4 + $0xc8] sm:$0xff] %v361
  %466 = vst [vmem:[#allocation4 + $0xd0] sm:$0xff] %v432
  %467 = vst [vmem:[#allocation4 + $0xd8] sm:$0xff] %v434
  %468 = vst [vmem:[#allocation4 + $0xe0] sm:$0xff] %v363
  %469 = vst [vmem:[#allocation4 + $0xe8] sm:$0xff] %v365
  %470 = vst [vmem:[#allocation4 + $0xf0] sm:$0xff] %v436
  %471 = vst [vmem:[#allocation4 + $0xf8] sm:$0xff] %v438
  %s472 = smul.u32 0, 4
  %s473 = smul.addr %s472, 8
  %s474 = scalar_lea.vmem [#allocation4], %s473
  %v475 = vld [vmem:[%s474] sm:$0xff]
  %v476 = vld [vmem:[%s474 + $0x8] sm:$0xff]
  %v477 = vld [vmem:[%s474 + $0x10] sm:$0xff]
  %v478 = vld [vmem:[%s474 + $0x18] sm:$0xff]
  %v511 = vunpack.c.l.b16 %v68
  %v512 = vunpack.c.h.b16 %v68
  %v513 = vunpack.c.l.b16 %v69
  %v514 = vunpack.c.h.b16 %v69
  %v515 = vunpack.c.l.b16 %v70
  %v516 = vunpack.c.h.b16 %v70
  %v517 = vunpack.c.l.b16 %v71
  %v518 = vunpack.c.h.b16 %v71
  %v519 = vunpack.c.l.b16 %v72
  %v520 = vunpack.c.h.b16 %v72
  %v521 = vunpack.c.l.b16 %v73
  %v522 = vunpack.c.h.b16 %v73
  %v523 = vunpack.c.l.b16 %v74
  %v524 = vunpack.c.h.b16 %v74
  %v525 = vunpack.c.l.b16 %v75
  %v526 = vunpack.c.h.b16 %v75
  %v527 = vunpack.c.l.b16 %v76
  %v528 = vunpack.c.h.b16 %v76
  %v529 = vunpack.c.l.b16 %v77
  %v530 = vunpack.c.h.b16 %v77
  %v531 = vunpack.c.l.b16 %v78
  %v532 = vunpack.c.h.b16 %v78
  %v533 = vunpack.c.l.b16 %v79
  %v534 = vunpack.c.h.b16 %v79
  %v535 = vunpack.c.l.b16 %v80
  %v536 = vunpack.c.h.b16 %v80
  %v537 = vunpack.c.l.b16 %v81
  %v538 = vunpack.c.h.b16 %v81
  %v539 = vunpack.c.l.b16 %v82
  %v540 = vunpack.c.h.b16 %v82
  %v541 = vunpack.c.l.b16 %v83
  %v542 = vunpack.c.h.b16 %v83
  %v543 = vunpack.c.l.b16 %v84
  %v544 = vunpack.c.h.b16 %v84
  %v545 = vunpack.c.l.b16 %v85
  %v546 = vunpack.c.h.b16 %v85
  %v547 = vunpack.c.l.b16 %v86
  %v548 = vunpack.c.h.b16 %v86
  %v549 = vunpack.c.l.b16 %v87
  %v550 = vunpack.c.h.b16 %v87
  %v551 = vunpack.c.l.b16 %v88
  %v552 = vunpack.c.h.b16 %v88
  %v553 = vunpack.c.l.b16 %v89
  %v554 = vunpack.c.h.b16 %v89
  %v555 = vunpack.c.l.b16 %v90
  %v556 = vunpack.c.h.b16 %v90
  %v557 = vunpack.c.l.b16 %v91
  %v558 = vunpack.c.h.b16 %v91
  %v559 = vunpack.c.l.b16 %v92
  %v560 = vunpack.c.h.b16 %v92
  %v561 = vunpack.c.l.b16 %v93
  %v562 = vunpack.c.h.b16 %v93
  %v563 = vunpack.c.l.b16 %v94
  %v564 = vunpack.c.h.b16 %v94
  %v565 = vunpack.c.l.b16 %v95
  %v566 = vunpack.c.h.b16 %v95
  %v567 = vunpack.c.l.b16 %v96
  %v568 = vunpack.c.h.b16 %v96
  %v569 = vunpack.c.l.b16 %v97
  %v570 = vunpack.c.h.b16 %v97
  %v571 = vunpack.c.l.b16 %v98
  %v572 = vunpack.c.h.b16 %v98
  %v573 = vunpack.c.l.b16 %v99
  %v574 = vunpack.c.h.b16 %v99
  %v575 = vpack.c.b16 %v515, %v511
  %v576 = vpack.c.b16 %v516, %v512
  %v577 = vpack.c.b16 %v517, %v513
  %v578 = vpack.c.b16 %v518, %v514
  %v579 = vpack.c.b16 %v523, %v519
  %v580 = vpack.c.b16 %v524, %v520
  %v581 = vpack.c.b16 %v525, %v521
  %v582 = vpack.c.b16 %v526, %v522
  %v583 = vpack.c.b16 %v531, %v527
  %v584 = vpack.c.b16 %v532, %v528
  %v585 = vpack.c.b16 %v533, %v529
  %v586 = vpack.c.b16 %v534, %v530
  %v587 = vpack.c.b16 %v539, %v535
  %v588 = vpack.c.b16 %v540, %v536
  %v589 = vpack.c.b16 %v541, %v537
  %v590 = vpack.c.b16 %v542, %v538
  %v591 = vpack.c.b16 %v547, %v543
  %v592 = vpack.c.b16 %v548, %v544
  %v593 = vpack.c.b16 %v549, %v545
  %v594 = vpack.c.b16 %v550, %v546
  %v595 = vpack.c.b16 %v555, %v551
  %v596 = vpack.c.b16 %v556, %v552
  %v597 = vpack.c.b16 %v557, %v553
  %v598 = vpack.c.b16 %v558, %v554
  %v599 = vpack.c.b16 %v563, %v559
  %v600 = vpack.c.b16 %v564, %v560
  %v601 = vpack.c.b16 %v565, %v561
  %v602 = vpack.c.b16 %v566, %v562
  %v603 = vpack.c.b16 %v571, %v567
  %v604 = vpack.c.b16 %v572, %v568
  %v605 = vpack.c.b16 %v573, %v569
  %v606 = vpack.c.b16 %v574, %v570
  %639 = vmatprep.subr.bf16.mxu0 %v576
  %640 = vmatpush1.bf16.msra.mxu0 %v575
  %641 = vmatprep.subr.bf16.mxu0 %v580
  %642 = vmatpush1.bf16.msra.mxu0 %v579
  %643 = vmatprep.subr.bf16.mxu0 %v584
  %644 = vmatpush1.bf16.msra.mxu0 %v583
  %645 = vmatprep.subr.bf16.mxu0 %v588
  %646 = vmatpush1.bf16.msra.mxu0 %v587
  %647 = vmatprep.subr.bf16.mxu0 %v592
  %648 = vmatpush1.bf16.msra.mxu0 %v591
  %649 = vmatprep.subr.bf16.mxu0 %v596
  %650 = vmatpush1.bf16.msra.mxu0 %v595
  %651 = vmatprep.subr.bf16.mxu0 %v600
  %652 = vmatpush1.bf16.msra.mxu0 %v599
  %653 = vmatprep.subr.bf16.mxu0 %v604
  %654 = vmatpush1.bf16.msra.mxu0 %v603
  %655 = vmatprep.subr.bf16.mxu0 0
  %656 = vmatpush1.bf16.msra.mxu0 0
  %657 = vmatprep.subr.bf16.mxu0 0
  %658 = vmatpush1.bf16.msra.mxu0 0
  %659 = vmatprep.subr.bf16.mxu0 0
  %660 = vmatpush1.bf16.msra.mxu0 0
  %661 = vmatprep.subr.bf16.mxu0 0
  %662 = vmatpush1.bf16.msra.mxu0 0
  %663 = vmatprep.subr.bf16.mxu0 0
  %664 = vmatpush1.bf16.msra.mxu0 0
  %665 = vmatprep.subr.bf16.mxu0 0
  %666 = vmatpush1.bf16.msra.mxu0 0
  %667 = vmatprep.subr.bf16.mxu0 0
  %668 = vmatpush1.bf16.msra.mxu0 0
  %669 = vmatprep.subr.bf16.mxu0 0
  %670 = vmatpush1.bf16.msra.mxu0 0
  %671 = vmatprep.mubr.bf16.mxu0 0
  %672 = vmatmul.mubr.bf16.gmra.mrb[0].mxu0 0
  %v673 = vpop.f32.mrb[0].mxu0
  %v674 = vadd.f32 0.0, %v673
  %v675 = vpop.f32.mrb[0].mxu0
  %v676 = vadd.f32 0.0, %v675
  %v677 = vpop.f32.mrb[0].mxu0
  %v678 = vpop.f32.mrb[0].mxu0
  %679 = vdwg.mxu0
  %680 = vmatprep.subr.bf16.mxu0 %v578
  %681 = vmatpush1.bf16.msra.mxu0 %v577
  %682 = vmatprep.subr.bf16.mxu0 %v582
  %683 = vmatpush1.bf16.msra.mxu0 %v581
  %684 = vmatprep.subr.bf16.mxu0 %v586
  %685 = vmatpush1.bf16.msra.mxu0 %v585
  %686 = vmatprep.subr.bf16.mxu0 %v590
  %687 = vmatpush1.bf16.msra.mxu0 %v589
  %688 = vmatprep.subr.bf16.mxu0 %v594
  %689 = vmatpush1.bf16.msra.mxu0 %v593
  %690 = vmatprep.subr.bf16.mxu0 %v598
  %691 = vmatpush1.bf16.msra.mxu0 %v597
  %692 = vmatprep.subr.bf16.mxu0 %v602
  %693 = vmatpush1.bf16.msra.mxu0 %v601
  %694 = vmatprep.subr.bf16.mxu0 %v606
  %695 = vmatpush1.bf16.msra.mxu0 %v605
  %696 = vmatprep.subr.bf16.mxu0 0
  %697 = vmatpush1.bf16.msra.mxu0 0
  %698 = vmatprep.subr.bf16.mxu0 0
  %699 = vmatpush1.bf16.msra.mxu0 0
  %700 = vmatprep.subr.bf16.mxu0 0
  %701 = vmatpush1.bf16.msra.mxu0 0
  %702 = vmatprep.subr.bf16.mxu0 0
  %703 = vmatpush1.bf16.msra.mxu0 0
  %704 = vmatprep.subr.bf16.mxu0 0
  %705 = vmatpush1.bf16.msra.mxu0 0
  %706 = vmatprep.subr.bf16.mxu0 0
  %707 = vmatpush1.bf16.msra.mxu0 0
  %708 = vmatprep.subr.bf16.mxu0 0
  %709 = vmatpush1.bf16.msra.mxu0 0
  %710 = vmatprep.subr.bf16.mxu0 0
  %711 = vmatpush1.bf16.msra.mxu0 0
  %712 = vmatprep.mubr.bf16.mxu0 0
  %713 = vmatmul.mubr.bf16.gmra.mrb[0].mxu0 0
  %v714 = vpop.f32.mrb[0].mxu0
  %v715 = vadd.f32 0.0, %v714
  %v716 = vpop.f32.mrb[0].mxu0
  %v717 = vadd.f32 0.0, %v716
  %v718 = vpop.f32.mrb[0].mxu0
  %v719 = vpop.f32.mrb[0].mxu0
  %720 = vdwg.mxu0
  %v721 = vadd.f32 %v475, %v674
  %v722 = vadd.f32 %v476, %v676
  %v723 = vadd.f32 %v477, %v715
  %v724 = vadd.f32 %v478, %v717
  %v725 = vxor.u32 %v721, 2147483648
  %v726 = vxor.u32 %v722, 2147483648
  %v727 = vxor.u32 %v723, 2147483648
  %v728 = vmul.f32 %v725, 1.442695
  %v729 = vpow.pop %v728
  %v730 = vmul.f32 %v726, 1.442695
  %v731 = vpow.pop %v730
  %v732 = vmul.f32 %v727, 1.442695
  %v733 = vpow.pop %v732
  %v734 = vadd.f32 %v729, 1.0
  %v735 = vadd.f32 %v731, 1.0
  %v736 = vadd.f32 %v733, 1.0
  %v737 = vrcp.pop %v734
  %v738 = vmul.f32 1.0, %v737
  %v739 = vrcp.pop %v735
  %v740 = vmul.f32 1.0, %v739
  %v741 = vrcp.pop %v736
  %v742 = vmul.f32 1.0, %v741
  %v743 = vtanh.pop %v724
  %v744 = vmul.f32 %v740, 0.0
  %v745 = vmul.f32 %v738, %v743
  %v746 = vadd.f32 %v744, %v745
  %v747 = vtanh.pop %v746
  %v748 = vmul.f32 %v742, %v747
  %749 = vst [vmem:[#allocation2] sm:$0xff] %v748
  %s750 = smul.u32 1, 4
  %s751 = smul.addr %s750, 8
  %s752 = scalar_lea.vmem [#allocation4], %s751
  %v753 = vld [vmem:[%s752] sm:$0xff]
  %v754 = vld [vmem:[%s752 + $0x8] sm:$0xff]
  %v755 = vld [vmem:[%s752 + $0x10] sm:$0xff]
  %v756 = vld [vmem:[%s752 + $0x18] sm:$0xff]
  %v757 = vpack.c.bf16 %v748, %v748
  %758 = vmatprep.subr.bf16.mxu0 %v576
  %759 = vmatpush1.bf16.msra.mxu0 %v575
  %760 = vmatprep.subr.bf16.mxu0 %v580
  %761 = vmatpush1.bf16.msra.mxu0 %v579
  %762 = vmatprep.subr.bf16.mxu0 %v584
  %763 = vmatpush1.bf16.msra.mxu0 %v583
  %764 = vmatprep.subr.bf16.mxu0 %v588
  %765 = vmatpush1.bf16.msra.mxu0 %v587
  %766 = vmatprep.subr.bf16.mxu0 %v592
  %767 = vmatpush1.bf16.msra.mxu0 %v591
  %768 = vmatprep.subr.bf16.mxu0 %v596
  %769 = vmatpush1.bf16.msra.mxu0 %v595
  %770 = vmatprep.subr.bf16.mxu0 %v600
  %771 = vmatpush1.bf16.msra.mxu0 %v599
  %772 = vmatprep.subr.bf16.mxu0 %v604
  %773 = vmatpush1.bf16.msra.mxu0 %v603
  %774 = vmatprep.subr.bf16.mxu0 0
  %775 = vmatpush1.bf16.msra.mxu0 0
  %776 = vmatprep.subr.bf16.mxu0 0
  %777 = vmatpush1.bf16.msra.mxu0 0
  %778 = vmatprep.subr.bf16.mxu0 0
  %779 = vmatpush1.bf16.msra.mxu0 0
  %780 = vmatprep.subr.bf16.mxu0 0
  %781 = vmatpush1.bf16.msra.mxu0 0
  %782 = vmatprep.subr.bf16.mxu0 0
  %783 = vmatpush1.bf16.msra.mxu0 0
  %784 = vmatprep.subr.bf16.mxu0 0
  %785 = vmatpush1.bf16.msra.mxu0 0
  %786 = vmatprep.subr.bf16.mxu0 0
  %787 = vmatpush1.bf16.msra.mxu0 0
  %788 = vmatprep.subr.bf16.mxu0 0
  %789 = vmatpush1.bf16.msra.mxu0 0
  %790 = vmatprep.mubr.bf16.mxu0 0
  %791 = vmatmul.mubr.bf16.gmra.mrb[0].mxu0 %v757
  %v792 = vpop.f32.mrb[0].mxu0
  %v793 = vadd.f32 0.0, %v792
  %v794 = vpop.f32.mrb[0].mxu0
  %v795 = vadd.f32 0.0, %v794
  %v796 = vpop.f32.mrb[0].mxu0
  %v797 = vpop.f32.mrb[0].mxu0
  %798 = vdwg.mxu0
  %799 = vmatprep.subr.bf16.mxu0 %v578
  %800 = vmatpush1.bf16.msra.mxu0 %v577
  %801 = vmatprep.subr.bf16.mxu0 %v582
  %802 = vmatpush1.bf16.msra.mxu0 %v581
  %803 = vmatprep.subr.bf16.mxu0 %v586
  %804 = vmatpush1.bf16.msra.mxu0 %v585
  %805 = vmatprep.subr.bf16.mxu0 %v590
  %806 = vmatpush1.bf16.msra.mxu0 %v589
  %807 = vmatprep.subr.bf16.mxu0 %v594
  %808 = vmatpush1.bf16.msra.mxu0 %v593
  %809 = vmatprep.subr.bf16.mxu0 %v598
  %810 = vmatpush1.bf16.msra.mxu0 %v597
  %811 = vmatprep.subr.bf16.mxu0 %v602
  %812 = vmatpush1.bf16.msra.mxu0 %v601
  %813 = vmatprep.subr.bf16.mxu0 %v606
  %814 = vmatpush1.bf16.msra.mxu0 %v605
  %815 = vmatprep.subr.bf16.mxu0 0
  %816 = vmatpush1.bf16.msra.mxu0 0
  %817 = vmatprep.subr.bf16.mxu0 0
  %818 = vmatpush1.bf16.msra.mxu0 0
  %819 = vmatprep.subr.bf16.mxu0 0
  %820 = vmatpush1.bf16.msra.mxu0 0
  %821 = vmatprep.subr.bf16.mxu0 0
  %822 = vmatpush1.bf16.msra.mxu0 0
  %823 = vmatprep.subr.bf16.mxu0 0
  %824 = vmatpush1.bf16.msra.mxu0 0
  %825 = vmatprep.subr.bf16.mxu0 0
  %826 = vmatpush1.bf16.msra.mxu0 0
  %827 = vmatprep.subr.bf16.mxu0 0
  %828 = vmatpush1.bf16.msra.mxu0 0
  %829 = vmatprep.subr.bf16.mxu0 0
  %830 = vmatpush1.bf16.msra.mxu0 0
  %831 = vmatprep.mubr.bf16.mxu0 0
  %832 = vmatmul.mubr.bf16.gmra.mrb[0].mxu0 %v757
  %v833 = vpop.f32.mrb[0].mxu0
  %v834 = vadd.f32 0.0, %v833
  %v835 = vpop.f32.mrb[0].mxu0
  %v836 = vadd.f32 0.0, %v835
  %v837 = vpop.f32.mrb[0].mxu0
  %v838 = vpop.f32.mrb[0].mxu0
  %839 = vdwg.mxu0
  %v840 = vadd.f32 %v753, %v793
  %v841 = vadd.f32 %v754, %v795
  %v842 = vadd.f32 %v755, %v834
  %v843 = vadd.f32 %v756, %v836
  %v844 = vxor.u32 %v840, 2147483648
  %v845 = vxor.u32 %v841, 2147483648
  %v846 = vxor.u32 %v842, 2147483648
  %v847 = vmul.f32 %v844, 1.442695
  %v848 = vpow.pop %v847
  %v849 = vmul.f32 %v845, 1.442695
  %v850 = vpow.pop %v849
  %v851 = vmul.f32 %v846, 1.442695
  %v852 = vpow.pop %v851
  %v853 = vadd.f32 %v848, 1.0
  %v854 = vadd.f32 %v850, 1.0
  %v855 = vadd.f32 %v852, 1.0
  %v856 = vrcp.pop %v853
  %v857 = vmul.f32 1.0, %v856
  %v858 = vrcp.pop %v854
  %v859 = vmul.f32 1.0, %v858
  %v860 = vrcp.pop %v855
  %v861 = vmul.f32 1.0, %v860
  %v862 = vtanh.pop %v843
  %v863 = vmul.f32 %v859, %v746
  %v864 = vmul.f32 %v857, %v862
  %v865 = vadd.f32 %v863, %v864
  %v866 = vtanh.pop %v865
  %v867 = vmul.f32 %v861, %v866
  %s868 = scalar_lea.vmem [#allocation2], 8
  %869 = vst [vmem:[%s868] sm:$0xff] %v867
  %s870 = smul.u32 2, 4
  %s871 = smul.addr %s870, 8
  %s872 = scalar_lea.vmem [#allocation4], %s871
  %v873 = vld [vmem:[%s872] sm:$0xff]
  %v874 = vld [vmem:[%s872 + $0x8] sm:$0xff]
  %v875 = vld [vmem:[%s872 + $0x10] sm:$0xff]
  %v876 = vld [vmem:[%s872 + $0x18] sm:$0xff]
  %v877 = vpack.c.bf16 %v867, %v867
  %878 = vmatprep.subr.bf16.mxu0 %v576
  %879 = vmatpush1.bf16.msra.mxu0 %v575
  %880 = vmatprep.subr.bf16.mxu0 %v580
  %881 = vmatpush1.bf16.msra.mxu0 %v579
  %882 = vmatprep.subr.bf16.mxu0 %v584
  %883 = vmatpush1.bf16.msra.mxu0 %v583
  %884 = vmatprep.subr.bf16.mxu0 %v588
  %885 = vmatpush1.bf16.msra.mxu0 %v587
  %886 = vmatprep.subr.bf16.mxu0 %v592
  %887 = vmatpush1.bf16.msra.mxu0 %v591
  %888 = vmatprep.subr.bf16.mxu0 %v596
  %889 = vmatpush1.bf16.msra.mxu0 %v595
  %890 = vmatprep.subr.bf16.mxu0 %v600
  %891 = vmatpush1.bf16.msra.mxu0 %v599
  %892 = vmatprep.subr.bf16.mxu0 %v604
  %893 = vmatpush1.bf16.msra.mxu0 %v603
  %894 = vmatprep.subr.bf16.mxu0 0
  %895 = vmatpush1.bf16.msra.mxu0 0
  %896 = vmatprep.subr.bf16.mxu0 0
  %897 = vmatpush1.bf16.msra.mxu0 0
  %898 = vmatprep.subr.bf16.mxu0 0
  %899 = vmatpush1.bf16.msra.mxu0 0
  %900 = vmatprep.subr.bf16.mxu0 0
  %901 = vmatpush1.bf16.msra.mxu0 0
  %902 = vmatprep.subr.bf16.mxu0 0
  %903 = vmatpush1.bf16.msra.mxu0 0
  %904 = vmatprep.subr.bf16.mxu0 0
  %905 = vmatpush1.bf16.msra.mxu0 0
  %906 = vmatprep.subr.bf16.mxu0 0
  %907 = vmatpush1.bf16.msra.mxu0 0
  %908 = vmatprep.subr.bf16.mxu0 0
  %909 = vmatpush1.bf16.msra.mxu0 0
  %910 = vmatprep.mubr.bf16.mxu0 0
  %911 = vmatmul.mubr.bf16.gmra.mrb[0].mxu0 %v877
  %v912 = vpop.f32.mrb[0].mxu0
  %v913 = vadd.f32 0.0, %v912
  %v914 = vpop.f32.mrb[0].mxu0
  %v915 = vadd.f32 0.0, %v914
  %v916 = vpop.f32.mrb[0].mxu0
  %v917 = vpop.f32.mrb[0].mxu0
  %918 = vdwg.mxu0
  %919 = vmatprep.subr.bf16.mxu0 %v578
  %920 = vmatpush1.bf16.msra.mxu0 %v577
  %921 = vmatprep.subr.bf16.mxu0 %v582
  %922 = vmatpush1.bf16.msra.mxu0 %v581
  %923 = vmatprep.subr.bf16.mxu0 %v586
  %924 = vmatpush1.bf16.msra.mxu0 %v585
  %925 = vmatprep.subr.bf16.mxu0 %v590
  %926 = vmatpush1.bf16.msra.mxu0 %v589
  %927 = vmatprep.subr.bf16.mxu0 %v594
  %928 = vmatpush1.bf16.msra.mxu0 %v593
  %929 = vmatprep.subr.bf16.mxu0 %v598
  %930 = vmatpush1.bf16.msra.mxu0 %v597
  %931 = vmatprep.subr.bf16.mxu0 %v602
  %932 = vmatpush1.bf16.msra.mxu0 %v601
  %933 = vmatprep.subr.bf16.mxu0 %v606
  %934 = vmatpush1.bf16.msra.mxu0 %v605
  %935 = vmatprep.subr.bf16.mxu0 0
  %936 = vmatpush1.bf16.msra.mxu0 0
  %937 = vmatprep.subr.bf16.mxu0 0
  %938 = vmatpush1.bf16.msra.mxu0 0
  %939 = vmatprep.subr.bf16.mxu0 0
  %940 = vmatpush1.bf16.msra.mxu0 0
  %941 = vmatprep.subr.bf16.mxu0 0
  %942 = vmatpush1.bf16.msra.mxu0 0
  %943 = vmatprep.subr.bf16.mxu0 0
  %944 = vmatpush1.bf16.msra.mxu0 0
  %945 = vmatprep.subr.bf16.mxu0 0
  %946 = vmatpush1.bf16.msra.mxu0 0
  %947 = vmatprep.subr.bf16.mxu0 0
  %948 = vmatpush1.bf16.msra.mxu0 0
  %949 = vmatprep.subr.bf16.mxu0 0
  %950 = vmatpush1.bf16.msra.mxu0 0
  %951 = vmatprep.mubr.bf16.mxu0 0
  %952 = vmatmul.mubr.bf16.gmra.mrb[0].mxu0 %v877
  %v953 = vpop.f32.mrb[0].mxu0
  %v954 = vadd.f32 0.0, %v953
  %v955 = vpop.f32.mrb[0].mxu0
  %v956 = vadd.f32 0.0, %v955
  %v957 = vpop.f32.mrb[0].mxu0
  %v958 = vpop.f32.mrb[0].mxu0
  %959 = vdwg.mxu0
  %v960 = vadd.f32 %v873, %v913
  %v961 = vadd.f32 %v874, %v915
  %v962 = vadd.f32 %v875, %v954
  %v963 = vadd.f32 %v876, %v956
  %v964 = vxor.u32 %v960, 2147483648
  %v965 = vxor.u32 %v961, 2147483648
  %v966 = vxor.u32 %v962, 2147483648
  %v967 = vmul.f32 %v964, 1.442695
  %v968 = vpow.pop %v967
  %v969 = vmul.f32 %v965, 1.442695
  %v970 = vpow.pop %v969
  %v971 = vmul.f32 %v966, 1.442695
  %v972 = vpow.pop %v971
  %v973 = vadd.f32 %v968, 1.0
  %v974 = vadd.f32 %v970, 1.0
  %v975 = vadd.f32 %v972, 1.0
  %v976 = vrcp.pop %v973
  %v977 = vmul.f32 1.0, %v976
  %v978 = vrcp.pop %v974
  %v979 = vmul.f32 1.0, %v978
  %v980 = vrcp.pop %v975
  %v981 = vmul.f32 1.0, %v980
  %v982 = vtanh.pop %v963
  %v983 = vmul.f32 %v979, %v865
  %v984 = vmul.f32 %v977, %v982
  %v985 = vadd.f32 %v983, %v984
  %v986 = vtanh.pop %v985
  %v987 = vmul.f32 %v981, %v986
  %s988 = scalar_lea.vmem [#allocation2], 16
  %989 = vst [vmem:[%s988] sm:$0xff] %v987
  %s990 = smul.u32 3, 4
  %s991 = smul.addr %s990, 8
  %s992 = scalar_lea.vmem [#allocation4], %s991
  %v993 = vld [vmem:[%s992] sm:$0xff]
  %v994 = vld [vmem:[%s992 + $0x8] sm:$0xff]
  %v995 = vld [vmem:[%s992 + $0x10] sm:$0xff]
  %v996 = vld [vmem:[%s992 + $0x18] sm:$0xff]
  %v997 = vpack.c.bf16 %v987, %v987
  %998 = vmatprep.subr.bf16.mxu0 %v576
  %999 = vmatpush1.bf16.msra.mxu0 %v575
  %1000 = vmatprep.subr.bf16.mxu0 %v580
  %1001 = vmatpush1.bf16.msra.mxu0 %v579
  %1002 = vmatprep.subr.bf16.mxu0 %v584
  %1003 = vmatpush1.bf16.msra.mxu0 %v583
  %1004 = vmatprep.subr.bf16.mxu0 %v588
  %1005 = vmatpush1.bf16.msra.mxu0 %v587
  %1006 = vmatprep.subr.bf16.mxu0 %v592
  %1007 = vmatpush1.bf16.msra.mxu0 %v591
  %1008 = vmatprep.subr.bf16.mxu0 %v596
  %1009 = vmatpush1.bf16.msra.mxu0 %v595
  %1010 = vmatprep.subr.bf16.mxu0 %v600
  %1011 = vmatpush1.bf16.msra.mxu0 %v599
  %1012 = vmatprep.subr.bf16.mxu0 %v604
  %1013 = vmatpush1.bf16.msra.mxu0 %v603
  %1014 = vmatprep.subr.bf16.mxu0 0
  %1015 = vmatpush1.bf16.msra.mxu0 0
  %1016 = vmatprep.subr.bf16.mxu0 0
  %1017 = vmatpush1.bf16.msra.mxu0 0
  %1018 = vmatprep.subr.bf16.mxu0 0
  %1019 = vmatpush1.bf16.msra.mxu0 0
  %1020 = vmatprep.subr.bf16.mxu0 0
  %1021 = vmatpush1.bf16.msra.mxu0 0
  %1022 = vmatprep.subr.bf16.mxu0 0
  %1023 = vmatpush1.bf16.msra.mxu0 0
  %1024 = vmatprep.subr.bf16.mxu0 0
  %1025 = vmatpush1.bf16.msra.mxu0 0
  %1026 = vmatprep.subr.bf16.mxu0 0
  %1027 = vmatpush1.bf16.msra.mxu0 0
  %1028 = vmatprep.subr.bf16.mxu0 0
  %1029 = vmatpush1.bf16.msra.mxu0 0
  %1030 = vmatprep.mubr.bf16.mxu0 0
  %1031 = vmatmul.mubr.bf16.gmra.mrb[0].mxu0 %v997
  %v1032 = vpop.f32.mrb[0].mxu0
  %v1033 = vadd.f32 0.0, %v1032
  %v1034 = vpop.f32.mrb[0].mxu0
  %v1035 = vadd.f32 0.0, %v1034
  %v1036 = vpop.f32.mrb[0].mxu0
  %v1037 = vpop.f32.mrb[0].mxu0
  %1038 = vdwg.mxu0
  %1039 = vmatprep.subr.bf16.mxu0 %v578
  %1040 = vmatpush1.bf16.msra.mxu0 %v577
  %1041 = vmatprep.subr.bf16.mxu0 %v582
  %1042 = vmatpush1.bf16.msra.mxu0 %v581
  %1043 = vmatprep.subr.bf16.mxu0 %v586
  %1044 = vmatpush1.bf16.msra.mxu0 %v585
  %1045 = vmatprep.subr.bf16.mxu0 %v590
  %1046 = vmatpush1.bf16.msra.mxu0 %v589
  %1047 = vmatprep.subr.bf16.mxu0 %v594
  %1048 = vmatpush1.bf16.msra.mxu0 %v593
  %1049 = vmatprep.subr.bf16.mxu0 %v598
  %1050 = vmatpush1.bf16.msra.mxu0 %v597
  %1051 = vmatprep.subr.bf16.mxu0 %v602
  %1052 = vmatpush1.bf16.msra.mxu0 %v601
  %1053 = vmatprep.subr.bf16.mxu0 %v606
  %1054 = vmatpush1.bf16.msra.mxu0 %v605
  %1055 = vmatprep.subr.bf16.mxu0 0
  %1056 = vmatpush1.bf16.msra.mxu0 0
  %1057 = vmatprep.subr.bf16.mxu0 0
  %1058 = vmatpush1.bf16.msra.mxu0 0
  %1059 = vmatprep.subr.bf16.mxu0 0
  %1060 = vmatpush1.bf16.msra.mxu0 0
  %1061 = vmatprep.subr.bf16.mxu0 0
  %1062 = vmatpush1.bf16.msra.mxu0 0
  %1063 = vmatprep.subr.bf16.mxu0 0
  %1064 = vmatpush1.bf16.msra.mxu0 0
  %1065 = vmatprep.subr.bf16.mxu0 0
  %1066 = vmatpush1.bf16.msra.mxu0 0
  %1067 = vmatprep.subr.bf16.mxu0 0
  %1068 = vmatpush1.bf16.msra.mxu0 0
  %1069 = vmatprep.subr.bf16.mxu0 0
  %1070 = vmatpush1.bf16.msra.mxu0 0
  %1071 = vmatprep.mubr.bf16.mxu0 0
  %1072 = vmatmul.mubr.bf16.gmra.mrb[0].mxu0 %v997
  %v1073 = vpop.f32.mrb[0].mxu0
  %v1074 = vadd.f32 0.0, %v1073
  %v1075 = vpop.f32.mrb[0].mxu0
  %v1076 = vadd.f32 0.0, %v1075
  %v1077 = vpop.f32.mrb[0].mxu0
  %v1078 = vpop.f32.mrb[0].mxu0
  %1079 = vdwg.mxu0
  %v1080 = vadd.f32 %v993, %v1033
  %v1081 = vadd.f32 %v994, %v1035
  %v1082 = vadd.f32 %v995, %v1074
  %v1083 = vadd.f32 %v996, %v1076
  %v1084 = vxor.u32 %v1080, 2147483648
  %v1085 = vxor.u32 %v1081, 2147483648
  %v1086 = vxor.u32 %v1082, 2147483648
  %v1087 = vmul.f32 %v1084, 1.442695
  %v1088 = vpow.pop %v1087
  %v1089 = vmul.f32 %v1085, 1.442695
  %v1090 = vpow.pop %v1089
  %v1091 = vmul.f32 %v1086, 1.442695
  %v1092 = vpow.pop %v1091
  %v1093 = vadd.f32 %v1088, 1.0
  %v1094 = vadd.f32 %v1090, 1.0
  %v1095 = vadd.f32 %v1092, 1.0
  %v1096 = vrcp.pop %v1093
  %v1097 = vmul.f32 1.0, %v1096
  %v1098 = vrcp.pop %v1094
  %v1099 = vmul.f32 1.0, %v1098
  %v1100 = vrcp.pop %v1095
  %v1101 = vmul.f32 1.0, %v1100
  %v1102 = vtanh.pop %v1083
  %v1103 = vmul.f32 %v1099, %v985
  %v1104 = vmul.f32 %v1097, %v1102
  %v1105 = vadd.f32 %v1103, %v1104
  %v1106 = vtanh.pop %v1105
  %v1107 = vmul.f32 %v1101, %v1106
  %s1108 = scalar_lea.vmem [#allocation2], 24
  %1109 = vst [vmem:[%s1108] sm:$0xff] %v1107
  %s1110 = smul.u32 4, 4
  %s1111 = smul.addr %s1110, 8
  %s1112 = scalar_lea.vmem [#allocation4], %s1111
  %v1113 = vld [vmem:[%s1112] sm:$0xff]
  %v1114 = vld [vmem:[%s1112 + $0x8] sm:$0xff]
  %v1115 = vld [vmem:[%s1112 + $0x10] sm:$0xff]
  %v1116 = vld [vmem:[%s1112 + $0x18] sm:$0xff]
  %v1117 = vpack.c.bf16 %v1107, %v1107
  %1118 = vmatprep.subr.bf16.mxu0 %v576
  %1119 = vmatpush1.bf16.msra.mxu0 %v575
  %1120 = vmatprep.subr.bf16.mxu0 %v580
  %1121 = vmatpush1.bf16.msra.mxu0 %v579
  %1122 = vmatprep.subr.bf16.mxu0 %v584
  %1123 = vmatpush1.bf16.msra.mxu0 %v583
  %1124 = vmatprep.subr.bf16.mxu0 %v588
  %1125 = vmatpush1.bf16.msra.mxu0 %v587
  %1126 = vmatprep.subr.bf16.mxu0 %v592
  %1127 = vmatpush1.bf16.msra.mxu0 %v591
  %1128 = vmatprep.subr.bf16.mxu0 %v596
  %1129 = vmatpush1.bf16.msra.mxu0 %v595
  %1130 = vmatprep.subr.bf16.mxu0 %v600
  %1131 = vmatpush1.bf16.msra.mxu0 %v599
  %1132 = vmatprep.subr.bf16.mxu0 %v604
  %1133 = vmatpush1.bf16.msra.mxu0 %v603
  %1134 = vmatprep.subr.bf16.mxu0 0
  %1135 = vmatpush1.bf16.msra.mxu0 0
  %1136 = vmatprep.subr.bf16.mxu0 0
  %1137 = vmatpush1.bf16.msra.mxu0 0
  %1138 = vmatprep.subr.bf16.mxu0 0
  %1139 = vmatpush1.bf16.msra.mxu0 0
  %1140 = vmatprep.subr.bf16.mxu0 0
  %1141 = vmatpush1.bf16.msra.mxu0 0
  %1142 = vmatprep.subr.bf16.mxu0 0
  %1143 = vmatpush1.bf16.msra.mxu0 0
  %1144 = vmatprep.subr.bf16.mxu0 0
  %1145 = vmatpush1.bf16.msra.mxu0 0
  %1146 = vmatprep.subr.bf16.mxu0 0
  %1147 = vmatpush1.bf16.msra.mxu0 0
  %1148 = vmatprep.subr.bf16.mxu0 0
  %1149 = vmatpush1.bf16.msra.mxu0 0
  %1150 = vmatprep.mubr.bf16.mxu0 0
  %1151 = vmatmul.mubr.bf16.gmra.mrb[0].mxu0 %v1117
  %v1152 = vpop.f32.mrb[0].mxu0
  %v1153 = vadd.f32 0.0, %v1152
  %v1154 = vpop.f32.mrb[0].mxu0
  %v1155 = vadd.f32 0.0, %v1154
  %v1156 = vpop.f32.mrb[0].mxu0
  %v1157 = vpop.f32.mrb[0].mxu0
  %1158 = vdwg.mxu0
  %1159 = vmatprep.subr.bf16.mxu0 %v578
  %1160 = vmatpush1.bf16.msra.mxu0 %v577
  %1161 = vmatprep.subr.bf16.mxu0 %v582
  %1162 = vmatpush1.bf16.msra.mxu0 %v581
  %1163 = vmatprep.subr.bf16.mxu0 %v586
  %1164 = vmatpush1.bf16.msra.mxu0 %v585
  %1165 = vmatprep.subr.bf16.mxu0 %v590
  %1166 = vmatpush1.bf16.msra.mxu0 %v589
  %1167 = vmatprep.subr.bf16.mxu0 %v594
  %1168 = vmatpush1.bf16.msra.mxu0 %v593
  %1169 = vmatprep.subr.bf16.mxu0 %v598
  %1170 = vmatpush1.bf16.msra.mxu0 %v597
  %1171 = vmatprep.subr.bf16.mxu0 %v602
  %1172 = vmatpush1.bf16.msra.mxu0 %v601
  %1173 = vmatprep.subr.bf16.mxu0 %v606
  %1174 = vmatpush1.bf16.msra.mxu0 %v605
  %1175 = vmatprep.subr.bf16.mxu0 0
  %1176 = vmatpush1.bf16.msra.mxu0 0
  %1177 = vmatprep.subr.bf16.mxu0 0
  %1178 = vmatpush1.bf16.msra.mxu0 0
  %1179 = vmatprep.subr.bf16.mxu0 0
  %1180 = vmatpush1.bf16.msra.mxu0 0
  %1181 = vmatprep.subr.bf16.mxu0 0
  %1182 = vmatpush1.bf16.msra.mxu0 0
  %1183 = vmatprep.subr.bf16.mxu0 0
  %1184 = vmatpush1.bf16.msra.mxu0 0
  %1185 = vmatprep.subr.bf16.mxu0 0
  %1186 = vmatpush1.bf16.msra.mxu0 0
  %1187 = vmatprep.subr.bf16.mxu0 0
  %1188 = vmatpush1.bf16.msra.mxu0 0
  %1189 = vmatprep.subr.bf16.mxu0 0
  %1190 = vmatpush1.bf16.msra.mxu0 0
  %1191 = vmatprep.mubr.bf16.mxu0 0
  %1192 = vmatmul.mubr.bf16.gmra.mrb[0].mxu0 %v1117
  %v1193 = vpop.f32.mrb[0].mxu0
  %v1194 = vadd.f32 0.0, %v1193
  %v1195 = vpop.f32.mrb[0].mxu0
  %v1196 = vadd.f32 0.0, %v1195
  %v1197 = vpop.f32.mrb[0].mxu0
  %v1198 = vpop.f32.mrb[0].mxu0
  %1199 = vdwg.mxu0
  %v1200 = vadd.f32 %v1113, %v1153
  %v1201 = vadd.f32 %v1114, %v1155
  %v1202 = vadd.f32 %v1115, %v1194
  %v1203 = vadd.f32 %v1116, %v1196
  %v1204 = vxor.u32 %v1200, 2147483648
  %v1205 = vxor.u32 %v1201, 2147483648
  %v1206 = vxor.u32 %v1202, 2147483648
  %v1207 = vmul.f32 %v1204, 1.442695
  %v1208 = vpow.pop %v1207
  %v1209 = vmul.f32 %v1205, 1.442695
  %v1210 = vpow.pop %v1209
  %v1211 = vmul.f32 %v1206, 1.442695
  %v1212 = vpow.pop %v1211
  %v1213 = vadd.f32 %v1208, 1.0
  %v1214 = vadd.f32 %v1210, 1.0
  %v1215 = vadd.f32 %v1212, 1.0
  %v1216 = vrcp.pop %v1213
  %v1217 = vmul.f32 1.0, %v1216
  %v1218 = vrcp.pop %v1214
  %v1219 = vmul.f32 1.0, %v1218
  %v1220 = vrcp.pop %v1215
  %v1221 = vmul.f32 1.0, %v1220
  %v1222 = vtanh.pop %v1203
  %v1223 = vmul.f32 %v1219, %v1105
  %v1224 = vmul.f32 %v1217, %v1222
  %v1225 = vadd.f32 %v1223, %v1224
  %v1226 = vtanh.pop %v1225
  %v1227 = vmul.f32 %v1221, %v1226
  %s1228 = scalar_lea.vmem [#allocation2], 32
  %1229 = vst [vmem:[%s1228] sm:$0xff] %v1227
  %s1230 = smul.u32 5, 4
  %s1231 = smul.addr %s1230, 8
  %s1232 = scalar_lea.vmem [#allocation4], %s1231
  %v1233 = vld [vmem:[%s1232] sm:$0xff]
  %v1234 = vld [vmem:[%s1232 + $0x8] sm:$0xff]
  %v1235 = vld [vmem:[%s1232 + $0x10] sm:$0xff]
  %v1236 = vld [vmem:[%s1232 + $0x18] sm:$0xff]
  %v1237 = vpack.c.bf16 %v1227, %v1227
  %1238 = vmatprep.subr.bf16.mxu0 %v576
  %1239 = vmatpush1.bf16.msra.mxu0 %v575
  %1240 = vmatprep.subr.bf16.mxu0 %v580
  %1241 = vmatpush1.bf16.msra.mxu0 %v579
  %1242 = vmatprep.subr.bf16.mxu0 %v584
  %1243 = vmatpush1.bf16.msra.mxu0 %v583
  %1244 = vmatprep.subr.bf16.mxu0 %v588
  %1245 = vmatpush1.bf16.msra.mxu0 %v587
  %1246 = vmatprep.subr.bf16.mxu0 %v592
  %1247 = vmatpush1.bf16.msra.mxu0 %v591
  %1248 = vmatprep.subr.bf16.mxu0 %v596
  %1249 = vmatpush1.bf16.msra.mxu0 %v595
  %1250 = vmatprep.subr.bf16.mxu0 %v600
  %1251 = vmatpush1.bf16.msra.mxu0 %v599
  %1252 = vmatprep.subr.bf16.mxu0 %v604
  %1253 = vmatpush1.bf16.msra.mxu0 %v603
  %1254 = vmatprep.subr.bf16.mxu0 0
  %1255 = vmatpush1.bf16.msra.mxu0 0
  %1256 = vmatprep.subr.bf16.mxu0 0
  %1257 = vmatpush1.bf16.msra.mxu0 0
  %1258 = vmatprep.subr.bf16.mxu0 0
  %1259 = vmatpush1.bf16.msra.mxu0 0
  %1260 = vmatprep.subr.bf16.mxu0 0
  %1261 = vmatpush1.bf16.msra.mxu0 0
  %1262 = vmatprep.subr.bf16.mxu0 0
  %1263 = vmatpush1.bf16.msra.mxu0 0
  %1264 = vmatprep.subr.bf16.mxu0 0
  %1265 = vmatpush1.bf16.msra.mxu0 0
  %1266 = vmatprep.subr.bf16.mxu0 0
  %1267 = vmatpush1.bf16.msra.mxu0 0
  %1268 = vmatprep.subr.bf16.mxu0 0
  %1269 = vmatpush1.bf16.msra.mxu0 0
  %1270 = vmatprep.mubr.bf16.mxu0 0
  %1271 = vmatmul.mubr.bf16.gmra.mrb[0].mxu0 %v1237
  %v1272 = vpop.f32.mrb[0].mxu0
  %v1273 = vadd.f32 0.0, %v1272
  %v1274 = vpop.f32.mrb[0].mxu0
  %v1275 = vadd.f32 0.0, %v1274
  %v1276 = vpop.f32.mrb[0].mxu0
  %v1277 = vpop.f32.mrb[0].mxu0
  %1278 = vdwg.mxu0
  %1279 = vmatprep.subr.bf16.mxu0 %v578
  %1280 = vmatpush1.bf16.msra.mxu0 %v577
  %1281 = vmatprep.subr.bf16.mxu0 %v582
  %1282 = vmatpush1.bf16.msra.mxu0 %v581
  %1283 = vmatprep.subr.bf16.mxu0 %v586
  %1284 = vmatpush1.bf16.msra.mxu0 %v585
  %1285 = vmatprep.subr.bf16.mxu0 %v590
  %1286 = vmatpush1.bf16.msra.mxu0 %v589
  %1287 = vmatprep.subr.bf16.mxu0 %v594
  %1288 = vmatpush1.bf16.msra.mxu0 %v593
  %1289 = vmatprep.subr.bf16.mxu0 %v598
  %1290 = vmatpush1.bf16.msra.mxu0 %v597
  %1291 = vmatprep.subr.bf16.mxu0 %v602
  %1292 = vmatpush1.bf16.msra.mxu0 %v601
  %1293 = vmatprep.subr.bf16.mxu0 %v606
  %1294 = vmatpush1.bf16.msra.mxu0 %v605
  %1295 = vmatprep.subr.bf16.mxu0 0
  %1296 = vmatpush1.bf16.msra.mxu0 0
  %1297 = vmatprep.subr.bf16.mxu0 0
  %1298 = vmatpush1.bf16.msra.mxu0 0
  %1299 = vmatprep.subr.bf16.mxu0 0
  %1300 = vmatpush1.bf16.msra.mxu0 0
  %1301 = vmatprep.subr.bf16.mxu0 0
  %1302 = vmatpush1.bf16.msra.mxu0 0
  %1303 = vmatprep.subr.bf16.mxu0 0
  %1304 = vmatpush1.bf16.msra.mxu0 0
  %1305 = vmatprep.subr.bf16.mxu0 0
  %1306 = vmatpush1.bf16.msra.mxu0 0
  %1307 = vmatprep.subr.bf16.mxu0 0
  %1308 = vmatpush1.bf16.msra.mxu0 0
  %1309 = vmatprep.subr.bf16.mxu0 0
  %1310 = vmatpush1.bf16.msra.mxu0 0
  %1311 = vmatprep.mubr.bf16.mxu0 0
  %1312 = vmatmul.mubr.bf16.gmra.mrb[0].mxu0 %v1237
  %v1313 = vpop.f32.mrb[0].mxu0
  %v1314 = vadd.f32 0.0, %v1313
  %v1315 = vpop.f32.mrb[0].mxu0
  %v1316 = vadd.f32 0.0, %v1315
  %v1317 = vpop.f32.mrb[0].mxu0
  %v1318 = vpop.f32.mrb[0].mxu0
  %1319 = vdwg.mxu0
  %v1320 = vadd.f32 %v1233, %v1273
  %v1321 = vadd.f32 %v1234, %v1275
  %v1322 = vadd.f32 %v1235, %v1314
  %v1323 = vadd.f32 %v1236, %v1316
  %v1324 = vxor.u32 %v1320, 2147483648
  %v1325 = vxor.u32 %v1321, 2147483648
  %v1326 = vxor.u32 %v1322, 2147483648
  %v1327 = vmul.f32 %v1324, 1.442695
  %v1328 = vpow.pop %v1327
  %v1329 = vmul.f32 %v1325, 1.442695
  %v1330 = vpow.pop %v1329
  %v1331 = vmul.f32 %v1326, 1.442695
  %v1332 = vpow.pop %v1331
  %v1333 = vadd.f32 %v1328, 1.0
  %v1334 = vadd.f32 %v1330, 1.0
  %v1335 = vadd.f32 %v1332, 1.0
  %v1336 = vrcp.pop %v1333
  %v1337 = vmul.f32 1.0, %v1336
  %v1338 = vrcp.pop %v1334
  %v1339 = vmul.f32 1.0, %v1338
  %v1340 = vrcp.pop %v1335
  %v1341 = vmul.f32 1.0, %v1340
  %v1342 = vtanh.pop %v1323
  %v1343 = vmul.f32 %v1339, %v1225
  %v1344 = vmul.f32 %v1337, %v1342
  %v1345 = vadd.f32 %v1343, %v1344
  %v1346 = vtanh.pop %v1345
  %v1347 = vmul.f32 %v1341, %v1346
  %s1348 = scalar_lea.vmem [#allocation2], 40
  %1349 = vst [vmem:[%s1348] sm:$0xff] %v1347
  %s1350 = smul.u32 6, 4
  %s1351 = smul.addr %s1350, 8
  %s1352 = scalar_lea.vmem [#allocation4], %s1351
  %v1353 = vld [vmem:[%s1352] sm:$0xff]
  %v1354 = vld [vmem:[%s1352 + $0x8] sm:$0xff]
  %v1355 = vld [vmem:[%s1352 + $0x10] sm:$0xff]
  %v1356 = vld [vmem:[%s1352 + $0x18] sm:$0xff]
  %v1357 = vpack.c.bf16 %v1347, %v1347
  %1358 = vmatprep.subr.bf16.mxu0 %v576
  %1359 = vmatpush1.bf16.msra.mxu0 %v575
  %1360 = vmatprep.subr.bf16.mxu0 %v580
  %1361 = vmatpush1.bf16.msra.mxu0 %v579
  %1362 = vmatprep.subr.bf16.mxu0 %v584
  %1363 = vmatpush1.bf16.msra.mxu0 %v583
  %1364 = vmatprep.subr.bf16.mxu0 %v588
  %1365 = vmatpush1.bf16.msra.mxu0 %v587
  %1366 = vmatprep.subr.bf16.mxu0 %v592
  %1367 = vmatpush1.bf16.msra.mxu0 %v591
  %1368 = vmatprep.subr.bf16.mxu0 %v596
  %1369 = vmatpush1.bf16.msra.mxu0 %v595
  %1370 = vmatprep.subr.bf16.mxu0 %v600
  %1371 = vmatpush1.bf16.msra.mxu0 %v599
  %1372 = vmatprep.subr.bf16.mxu0 %v604
  %1373 = vmatpush1.bf16.msra.mxu0 %v603
  %1374 = vmatprep.subr.bf16.mxu0 0
  %1375 = vmatpush1.bf16.msra.mxu0 0
  %1376 = vmatprep.subr.bf16.mxu0 0
  %1377 = vmatpush1.bf16.msra.mxu0 0
  %1378 = vmatprep.subr.bf16.mxu0 0
  %1379 = vmatpush1.bf16.msra.mxu0 0
  %1380 = vmatprep.subr.bf16.mxu0 0
  %1381 = vmatpush1.bf16.msra.mxu0 0
  %1382 = vmatprep.subr.bf16.mxu0 0
  %1383 = vmatpush1.bf16.msra.mxu0 0
  %1384 = vmatprep.subr.bf16.mxu0 0
  %1385 = vmatpush1.bf16.msra.mxu0 0
  %1386 = vmatprep.subr.bf16.mxu0 0
  %1387 = vmatpush1.bf16.msra.mxu0 0
  %1388 = vmatprep.subr.bf16.mxu0 0
  %1389 = vmatpush1.bf16.msra.mxu0 0
  %1390 = vmatprep.mubr.bf16.mxu0 0
  %1391 = vmatmul.mubr.bf16.gmra.mrb[0].mxu0 %v1357
  %v1392 = vpop.f32.mrb[0].mxu0
  %v1393 = vadd.f32 0.0, %v1392
  %v1394 = vpop.f32.mrb[0].mxu0
  %v1395 = vadd.f32 0.0, %v1394
  %v1396 = vpop.f32.mrb[0].mxu0
  %v1397 = vpop.f32.mrb[0].mxu0
  %1398 = vdwg.mxu0
  %1399 = vmatprep.subr.bf16.mxu0 %v578
  %1400 = vmatpush1.bf16.msra.mxu0 %v577
  %1401 = vmatprep.subr.bf16.mxu0 %v582
  %1402 = vmatpush1.bf16.msra.mxu0 %v581
  %1403 = vmatprep.subr.bf16.mxu0 %v586
  %1404 = vmatpush1.bf16.msra.mxu0 %v585
  %1405 = vmatprep.subr.bf16.mxu0 %v590
  %1406 = vmatpush1.bf16.msra.mxu0 %v589
  %1407 = vmatprep.subr.bf16.mxu0 %v594
  %1408 = vmatpush1.bf16.msra.mxu0 %v593
  %1409 = vmatprep.subr.bf16.mxu0 %v598
  %1410 = vmatpush1.bf16.msra.mxu0 %v597
  %1411 = vmatprep.subr.bf16.mxu0 %v602
  %1412 = vmatpush1.bf16.msra.mxu0 %v601
  %1413 = vmatprep.subr.bf16.mxu0 %v606
  %1414 = vmatpush1.bf16.msra.mxu0 %v605
  %1415 = vmatprep.subr.bf16.mxu0 0
  %1416 = vmatpush1.bf16.msra.mxu0 0
  %1417 = vmatprep.subr.bf16.mxu0 0
  %1418 = vmatpush1.bf16.msra.mxu0 0
  %1419 = vmatprep.subr.bf16.mxu0 0
  %1420 = vmatpush1.bf16.msra.mxu0 0
  %1421 = vmatprep.subr.bf16.mxu0 0
  %1422 = vmatpush1.bf16.msra.mxu0 0
  %1423 = vmatprep.subr.bf16.mxu0 0
  %1424 = vmatpush1.bf16.msra.mxu0 0
  %1425 = vmatprep.subr.bf16.mxu0 0
  %1426 = vmatpush1.bf16.msra.mxu0 0
  %1427 = vmatprep.subr.bf16.mxu0 0
  %1428 = vmatpush1.bf16.msra.mxu0 0
  %1429 = vmatprep.subr.bf16.mxu0 0
  %1430 = vmatpush1.bf16.msra.mxu0 0
  %1431 = vmatprep.mubr.bf16.mxu0 0
  %1432 = vmatmul.mubr.bf16.gmra.mrb[0].mxu0 %v1357
  %v1433 = vpop.f32.mrb[0].mxu0
  %v1434 = vadd.f32 0.0, %v1433
  %v1435 = vpop.f32.mrb[0].mxu0
  %v1436 = vadd.f32 0.0, %v1435
  %v1437 = vpop.f32.mrb[0].mxu0
  %v1438 = vpop.f32.mrb[0].mxu0
  %1439 = vdwg.mxu0
  %v1440 = vadd.f32 %v1353, %v1393
  %v1441 = vadd.f32 %v1354, %v1395
  %v1442 = vadd.f32 %v1355, %v1434
  %v1443 = vadd.f32 %v1356, %v1436
  %v1444 = vxor.u32 %v1440, 2147483648
  %v1445 = vxor.u32 %v1441, 2147483648
  %v1446 = vxor.u32 %v1442, 2147483648
  %v1447 = vmul.f32 %v1444, 1.442695
  %v1448 = vpow.pop %v1447
  %v1449 = vmul.f32 %v1445, 1.442695
  %v1450 = vpow.pop %v1449
  %v1451 = vmul.f32 %v1446, 1.442695
  %v1452 = vpow.pop %v1451
  %v1453 = vadd.f32 %v1448, 1.0
  %v1454 = vadd.f32 %v1450, 1.0
  %v1455 = vadd.f32 %v1452, 1.0
  %v1456 = vrcp.pop %v1453
  %v1457 = vmul.f32 1.0, %v1456
  %v1458 = vrcp.pop %v1454
  %v1459 = vmul.f32 1.0, %v1458
  %v1460 = vrcp.pop %v1455
  %v1461 = vmul.f32 1.0, %v1460
  %v1462 = vtanh.pop %v1443
  %v1463 = vmul.f32 %v1459, %v1345
  %v1464 = vmul.f32 %v1457, %v1462
  %v1465 = vadd.f32 %v1463, %v1464
  %v1466 = vtanh.pop %v1465
  %v1467 = vmul.f32 %v1461, %v1466
  %s1468 = scalar_lea.vmem [#allocation2], 48
  %1469 = vst [vmem:[%s1468] sm:$0xff] %v1467
  %s1470 = smul.u32 7, 4
  %s1471 = smul.addr %s1470, 8
  %s1472 = scalar_lea.vmem [#allocation4], %s1471
  %v1473 = vld [vmem:[%s1472] sm:$0xff]
  %v1474 = vld [vmem:[%s1472 + $0x8] sm:$0xff]
  %v1475 = vld [vmem:[%s1472 + $0x10] sm:$0xff]
  %v1476 = vld [vmem:[%s1472 + $0x18] sm:$0xff]
  %v1477 = vpack.c.bf16 %v1467, %v1467
  %1478 = vmatprep.subr.bf16.mxu0 %v576
  %1479 = vmatpush1.bf16.msra.mxu0 %v575
  %1480 = vmatprep.subr.bf16.mxu0 %v580
  %1481 = vmatpush1.bf16.msra.mxu0 %v579
  %1482 = vmatprep.subr.bf16.mxu0 %v584
  %1483 = vmatpush1.bf16.msra.mxu0 %v583
  %1484 = vmatprep.subr.bf16.mxu0 %v588
  %1485 = vmatpush1.bf16.msra.mxu0 %v587
  %1486 = vmatprep.subr.bf16.mxu0 %v592
  %1487 = vmatpush1.bf16.msra.mxu0 %v591
  %1488 = vmatprep.subr.bf16.mxu0 %v596
  %1489 = vmatpush1.bf16.msra.mxu0 %v595
  %1490 = vmatprep.subr.bf16.mxu0 %v600
  %1491 = vmatpush1.bf16.msra.mxu0 %v599
  %1492 = vmatprep.subr.bf16.mxu0 %v604
  %1493 = vmatpush1.bf16.msra.mxu0 %v603
  %1494 = vmatprep.subr.bf16.mxu0 0
  %1495 = vmatpush1.bf16.msra.mxu0 0
  %1496 = vmatprep.subr.bf16.mxu0 0
  %1497 = vmatpush1.bf16.msra.mxu0 0
  %1498 = vmatprep.subr.bf16.mxu0 0
  %1499 = vmatpush1.bf16.msra.mxu0 0
  %1500 = vmatprep.subr.bf16.mxu0 0
  %1501 = vmatpush1.bf16.msra.mxu0 0
  %1502 = vmatprep.subr.bf16.mxu0 0
  %1503 = vmatpush1.bf16.msra.mxu0 0
  %1504 = vmatprep.subr.bf16.mxu0 0
  %1505 = vmatpush1.bf16.msra.mxu0 0
  %1506 = vmatprep.subr.bf16.mxu0 0
  %1507 = vmatpush1.bf16.msra.mxu0 0
  %1508 = vmatprep.subr.bf16.mxu0 0
  %1509 = vmatpush1.bf16.msra.mxu0 0
  %1510 = vmatprep.mubr.bf16.mxu0 0
  %1511 = vmatmul.mubr.bf16.gmra.mrb[0].mxu0 %v1477
  %v1512 = vpop.f32.mrb[0].mxu0
  %v1513 = vadd.f32 0.0, %v1512
  %v1514 = vpop.f32.mrb[0].mxu0
  %v1515 = vadd.f32 0.0, %v1514
  %v1516 = vpop.f32.mrb[0].mxu0
  %v1517 = vpop.f32.mrb[0].mxu0
  %1518 = vdwg.mxu0
  %1519 = vmatprep.subr.bf16.mxu0 %v578
  %1520 = vmatpush1.bf16.msra.mxu0 %v577
  %1521 = vmatprep.subr.bf16.mxu0 %v582
  %1522 = vmatpush1.bf16.msra.mxu0 %v581
  %1523 = vmatprep.subr.bf16.mxu0 %v586
  %1524 = vmatpush1.bf16.msra.mxu0 %v585
  %1525 = vmatprep.subr.bf16.mxu0 %v590
  %1526 = vmatpush1.bf16.msra.mxu0 %v589
  %1527 = vmatprep.subr.bf16.mxu0 %v594
  %1528 = vmatpush1.bf16.msra.mxu0 %v593
  %1529 = vmatprep.subr.bf16.mxu0 %v598
  %1530 = vmatpush1.bf16.msra.mxu0 %v597
  %1531 = vmatprep.subr.bf16.mxu0 %v602
  %1532 = vmatpush1.bf16.msra.mxu0 %v601
  %1533 = vmatprep.subr.bf16.mxu0 %v606
  %1534 = vmatpush1.bf16.msra.mxu0 %v605
  %1535 = vmatprep.subr.bf16.mxu0 0
  %1536 = vmatpush1.bf16.msra.mxu0 0
  %1537 = vmatprep.subr.bf16.mxu0 0
  %1538 = vmatpush1.bf16.msra.mxu0 0
  %1539 = vmatprep.subr.bf16.mxu0 0
  %1540 = vmatpush1.bf16.msra.mxu0 0
  %1541 = vmatprep.subr.bf16.mxu0 0
  %1542 = vmatpush1.bf16.msra.mxu0 0
  %1543 = vmatprep.subr.bf16.mxu0 0
  %1544 = vmatpush1.bf16.msra.mxu0 0
  %1545 = vmatprep.subr.bf16.mxu0 0
  %1546 = vmatpush1.bf16.msra.mxu0 0
  %1547 = vmatprep.subr.bf16.mxu0 0
  %1548 = vmatpush1.bf16.msra.mxu0 0
  %1549 = vmatprep.subr.bf16.mxu0 0
  %1550 = vmatpush1.bf16.msra.mxu0 0
  %1551 = vmatprep.mubr.bf16.mxu0 0
  %1552 = vmatmul.mubr.bf16.gmra.mrb[0].mxu0 %v1477
  %v1553 = vpop.f32.mrb[0].mxu0
  %v1554 = vadd.f32 0.0, %v1553
  %v1555 = vpop.f32.mrb[0].mxu0
  %v1556 = vadd.f32 0.0, %v1555
  %v1557 = vpop.f32.mrb[0].mxu0
  %v1558 = vpop.f32.mrb[0].mxu0
  %1559 = vdwg.mxu0
  %v1560 = vadd.f32 %v1473, %v1513
  %v1561 = vadd.f32 %v1474, %v1515
  %v1562 = vadd.f32 %v1475, %v1554
  %v1563 = vadd.f32 %v1476, %v1556
  %v1564 = vxor.u32 %v1560, 2147483648
  %v1565 = vxor.u32 %v1561, 2147483648
  %v1566 = vxor.u32 %v1562, 2147483648
  %v1567 = vmul.f32 %v1564, 1.442695
  %v1568 = vpow.pop %v1567
  %v1569 = vmul.f32 %v1565, 1.442695
  %v1570 = vpow.pop %v1569
  %v1571 = vmul.f32 %v1566, 1.442695
  %v1572 = vpow.pop %v1571
  %v1573 = vadd.f32 %v1568, 1.0
  %v1574 = vadd.f32 %v1570, 1.0
  %v1575 = vadd.f32 %v1572, 1.0
  %v1576 = vrcp.pop %v1573
  %v1577 = vmul.f32 1.0, %v1576
  %v1578 = vrcp.pop %v1574
  %v1579 = vmul.f32 1.0, %v1578
  %v1580 = vrcp.pop %v1575
  %v1581 = vmul.f32 1.0, %v1580
  %v1582 = vtanh.pop %v1563
  %v1583 = vmul.f32 %v1579, %v1465
  %v1584 = vmul.f32 %v1577, %v1582
  %v1585 = vadd.f32 %v1583, %v1584
  %v1586 = vtanh.pop %v1585
  %v1587 = vmul.f32 %v1581, %v1586
  %s1588 = scalar_lea.vmem [#allocation2], 56
  %1589 = vst [vmem:[%s1588] sm:$0xff] %v1587
  %1590 = vst [vmem:[#allocation5] sm:$0xff] %v1587
  %s1591 = scalar_lea.vmem [#allocation5], 8
  %1592 = vst [vmem:[%s1591] sm:$0xff] %v1585
  %s1593 = scalar_lea.vmem %s2, 256
  %v1594 = vld [vmem:[%s1593] sm:$0xff]
  %v1595 = vld [vmem:[%s1593 + $0x8] sm:$0xff]
  %v1596 = vld [vmem:[%s1593 + $0x10] sm:$0xff]
  %v1597 = vld [vmem:[%s1593 + $0x18] sm:$0xff]
  %v1598 = vld [vmem:[%s1593 + $0x20] sm:$0xff]
  %v1599 = vld [vmem:[%s1593 + $0x28] sm:$0xff]
  %v1600 = vld [vmem:[%s1593 + $0x30] sm:$0xff]
  %v1601 = vld [vmem:[%s1593 + $0x38] sm:$0xff]
  %v1602 = vld [vmem:[%s1593 + $0x40] sm:$0xff]
  %v1603 = vld [vmem:[%s1593 + $0x48] sm:$0xff]
  %v1604 = vld [vmem:[%s1593 + $0x50] sm:$0xff]
  %v1605 = vld [vmem:[%s1593 + $0x58] sm:$0xff]
  %v1606 = vld [vmem:[%s1593 + $0x60] sm:$0xff]
  %v1607 = vld [vmem:[%s1593 + $0x68] sm:$0xff]
  %v1608 = vld [vmem:[%s1593 + $0x70] sm:$0xff]
  %v1609 = vld [vmem:[%s1593 + $0x78] sm:$0xff]
  %v1610 = vld [vmem:[%s1593 + $0x80] sm:$0xff]
  %v1611 = vld [vmem:[%s1593 + $0x88] sm:$0xff]
  %v1612 = vld [vmem:[%s1593 + $0x90] sm:$0xff]
  %v1613 = vld [vmem:[%s1593 + $0x98] sm:$0xff]
  %v1614 = vld [vmem:[%s1593 + $0xa0] sm:$0xff]
  %v1615 = vld [vmem:[%s1593 + $0xa8] sm:$0xff]
  %v1616 = vld [vmem:[%s1593 + $0xb0] sm:$0xff]
  %v1617 = vld [vmem:[%s1593 + $0xb8] sm:$0xff]
  %v1618 = vld [vmem:[%s1593 + $0xc0] sm:$0xff]
  %v1619 = vld [vmem:[%s1593 + $0xc8] sm:$0xff]
  %v1620 = vld [vmem:[%s1593 + $0xd0] sm:$0xff]
  %v1621 = vld [vmem:[%s1593 + $0xd8] sm:$0xff]
  %v1622 = vld [vmem:[%s1593 + $0xe0] sm:$0xff]
  %v1623 = vld [vmem:[%s1593 + $0xe8] sm:$0xff]
  %v1624 = vld [vmem:[%s1593 + $0xf0] sm:$0xff]
  %v1625 = vld [vmem:[%s1593 + $0xf8] sm:$0xff]
  %s1626 = scalar_lea.vmem %s3, 256
  %v1627 = vld [vmem:[%s1626] sm:$0xff]
  %v1628 = vld [vmem:[%s1626 + $0x8] sm:$0xff]
  %v1629 = vld [vmem:[%s1626 + $0x10] sm:$0xff]
  %v1630 = vld [vmem:[%s1626 + $0x18] sm:$0xff]
  %v1631 = vld [vmem:[%s1626 + $0x20] sm:$0xff]
  %v1632 = vld [vmem:[%s1626 + $0x28] sm:$0xff]
  %v1633 = vld [vmem:[%s1626 + $0x30] sm:$0xff]
  %v1634 = vld [vmem:[%s1626 + $0x38] sm:$0xff]
  %v1635 = vld [vmem:[%s1626 + $0x40] sm:$0xff]
  %v1636 = vld [vmem:[%s1626 + $0x48] sm:$0xff]
  %v1637 = vld [vmem:[%s1626 + $0x50] sm:$0xff]
  %v1638 = vld [vmem:[%s1626 + $0x58] sm:$0xff]
  %v1639 = vld [vmem:[%s1626 + $0x60] sm:$0xff]
  %v1640 = vld [vmem:[%s1626 + $0x68] sm:$0xff]
  %v1641 = vld [vmem:[%s1626 + $0x70] sm:$0xff]
  %v1642 = vld [vmem:[%s1626 + $0x78] sm:$0xff]
  %v1643 = vld [vmem:[%s1626 + $0x80] sm:$0xff]
  %v1644 = vld [vmem:[%s1626 + $0x88] sm:$0xff]
  %v1645 = vld [vmem:[%s1626 + $0x90] sm:$0xff]
  %v1646 = vld [vmem:[%s1626 + $0x98] sm:$0xff]
  %v1647 = vld [vmem:[%s1626 + $0xa0] sm:$0xff]
  %v1648 = vld [vmem:[%s1626 + $0xa8] sm:$0xff]
  %v1649 = vld [vmem:[%s1626 + $0xb0] sm:$0xff]
  %v1650 = vld [vmem:[%s1626 + $0xb8] sm:$0xff]
  %v1651 = vld [vmem:[%s1626 + $0xc0] sm:$0xff]
  %v1652 = vld [vmem:[%s1626 + $0xc8] sm:$0xff]
  %v1653 = vld [vmem:[%s1626 + $0xd0] sm:$0xff]
  %v1654 = vld [vmem:[%s1626 + $0xd8] sm:$0xff]
  %v1655 = vld [vmem:[%s1626 + $0xe0] sm:$0xff]
  %v1656 = vld [vmem:[%s1626 + $0xe8] sm:$0xff]
  %v1657 = vld [vmem:[%s1626 + $0xf0] sm:$0xff]
  %v1658 = vld [vmem:[%s1626 + $0xf8] sm:$0xff]
  %s1659 = scalar_lea.vmem %s4, 4
  %v1660 = vld [vmem:[%s1659] sm:$0xf]
  %v1661 = vld [vmem:[#allocation2] sm:$0xff]
  %v1662 = vld [vmem:[#allocation2 + $0x8] sm:$0xff]
  %v1663 = vld [vmem:[#allocation2 + $0x10] sm:$0xff]
  %v1664 = vld [vmem:[#allocation2 + $0x18] sm:$0xff]
  %v1665 = vld [vmem:[#allocation2 + $0x20] sm:$0xff]
  %v1666 = vld [vmem:[#allocation2 + $0x28] sm:$0xff]
  %v1667 = vld [vmem:[#allocation2 + $0x30] sm:$0xff]
  %v1668 = vld [vmem:[#allocation2 + $0x38] sm:$0xff]
  %v1669 = vpack.c.bf16 %v1662, %v1661
  %v1670 = vpack.c.bf16 %v1664, %v1663
  %v1671 = vpack.c.bf16 %v1666, %v1665
  %v1672 = vpack.c.bf16 %v1668, %v1667
  %v1674 = vlaneseq
  %v1675 = vshrl.u32 %v1674, 7
  %v1676 = vsub.s32 0, %v1675
  %v1677 = vrot.slane %v1660, %v1676
  %v1678 = vlaneseq
  %v1679 = vshrl.u32 %v1678, 7
  %v1680 = vsub.s32 1, %v1679
  %v1681 = vrot.slane %v1660, %v1680
  %v1682 = vlaneseq
  %v1683 = vshrl.u32 %v1682, 7
  %v1684 = vsub.s32 2, %v1683
  %v1685 = vrot.slane %v1660, %v1684
  %v1686 = vlaneseq
  %v1687 = vshrl.u32 %v1686, 7
  %v1688 = vsub.s32 3, %v1687
  %v1689 = vrot.slane %v1660, %v1688
  %v1726 = vunpack.c.l.b16 %v1594
  %v1727 = vunpack.c.h.b16 %v1594
  %v1728 = vunpack.c.l.b16 %v1595
  %v1729 = vunpack.c.h.b16 %v1595
  %v1730 = vunpack.c.l.b16 %v1596
  %v1731 = vunpack.c.h.b16 %v1596
  %v1732 = vunpack.c.l.b16 %v1597
  %v1733 = vunpack.c.h.b16 %v1597
  %v1734 = vunpack.c.l.b16 %v1598
  %v1735 = vunpack.c.h.b16 %v1598
  %v1736 = vunpack.c.l.b16 %v1599
  %v1737 = vunpack.c.h.b16 %v1599
  %v1738 = vunpack.c.l.b16 %v1600
  %v1739 = vunpack.c.h.b16 %v1600
  %v1740 = vunpack.c.l.b16 %v1601
  %v1741 = vunpack.c.h.b16 %v1601
  %v1742 = vunpack.c.l.b16 %v1602
  %v1743 = vunpack.c.h.b16 %v1602
  %v1744 = vunpack.c.l.b16 %v1603
  %v1745 = vunpack.c.h.b16 %v1603
  %v1746 = vunpack.c.l.b16 %v1604
  %v1747 = vunpack.c.h.b16 %v1604
  %v1748 = vunpack.c.l.b16 %v1605
  %v1749 = vunpack.c.h.b16 %v1605
  %v1750 = vunpack.c.l.b16 %v1606
  %v1751 = vunpack.c.h.b16 %v1606
  %v1752 = vunpack.c.l.b16 %v1607
  %v1753 = vunpack.c.h.b16 %v1607
  %v1754 = vunpack.c.l.b16 %v1608
  %v1755 = vunpack.c.h.b16 %v1608
  %v1756 = vunpack.c.l.b16 %v1609
  %v1757 = vunpack.c.h.b16 %v1609
  %v1758 = vunpack.c.l.b16 %v1610
  %v1759 = vunpack.c.h.b16 %v1610
  %v1760 = vunpack.c.l.b16 %v1611
  %v1761 = vunpack.c.h.b16 %v1611
  %v1762 = vunpack.c.l.b16 %v1612
  %v1763 = vunpack.c.h.b16 %v1612
  %v1764 = vunpack.c.l.b16 %v1613
  %v1765 = vunpack.c.h.b16 %v1613
  %v1766 = vunpack.c.l.b16 %v1614
  %v1767 = vunpack.c.h.b16 %v1614
  %v1768 = vunpack.c.l.b16 %v1615
  %v1769 = vunpack.c.h.b16 %v1615
  %v1770 = vunpack.c.l.b16 %v1616
  %v1771 = vunpack.c.h.b16 %v1616
  %v1772 = vunpack.c.l.b16 %v1617
  %v1773 = vunpack.c.h.b16 %v1617
  %v1774 = vunpack.c.l.b16 %v1618
  %v1775 = vunpack.c.h.b16 %v1618
  %v1776 = vunpack.c.l.b16 %v1619
  %v1777 = vunpack.c.h.b16 %v1619
  %v1778 = vunpack.c.l.b16 %v1620
  %v1779 = vunpack.c.h.b16 %v1620
  %v1780 = vunpack.c.l.b16 %v1621
  %v1781 = vunpack.c.h.b16 %v1621
  %v1782 = vunpack.c.l.b16 %v1622
  %v1783 = vunpack.c.h.b16 %v1622
  %v1784 = vunpack.c.l.b16 %v1623
  %v1785 = vunpack.c.h.b16 %v1623
  %v1786 = vunpack.c.l.b16 %v1624
  %v1787 = vunpack.c.h.b16 %v1624
  %v1788 = vunpack.c.l.b16 %v1625
  %v1789 = vunpack.c.h.b16 %v1625
  %v1790 = vpack.c.b16 %v1730, %v1726
  %v1791 = vpack.c.b16 %v1731, %v1727
  %v1792 = vpack.c.b16 %v1732, %v1728
  %v1793 = vpack.c.b16 %v1733, %v1729
  %v1794 = vpack.c.b16 %v1738, %v1734
  %v1795 = vpack.c.b16 %v1739, %v1735
  %v1796 = vpack.c.b16 %v1740, %v1736
  %v1797 = vpack.c.b16 %v1741, %v1737
  %v1798 = vpack.c.b16 %v1746, %v1742
  %v1799 = vpack.c.b16 %v1747, %v1743
  %v1800 = vpack.c.b16 %v1748, %v1744
  %v1801 = vpack.c.b16 %v1749, %v1745
  %v1802 = vpack.c.b16 %v1754, %v1750
  %v1803 = vpack.c.b16 %v1755, %v1751
  %v1804 = vpack.c.b16 %v1756, %v1752
  %v1805 = vpack.c.b16 %v1757, %v1753
  %v1806 = vpack.c.b16 %v1762, %v1758
  %v1807 = vpack.c.b16 %v1763, %v1759
  %v1808 = vpack.c.b16 %v1764, %v1760
  %v1809 = vpack.c.b16 %v1765, %v1761
  %v1810 = vpack.c.b16 %v1770, %v1766
  %v1811 = vpack.c.b16 %v1771, %v1767
  %v1812 = vpack.c.b16 %v1772, %v1768
  %v1813 = vpack.c.b16 %v1773, %v1769
  %v1814 = vpack.c.b16 %v1778, %v1774
  %v1815 = vpack.c.b16 %v1779, %v1775
  %v1816 = vpack.c.b16 %v1780, %v1776
  %v1817 = vpack.c.b16 %v1781, %v1777
  %v1818 = vpack.c.b16 %v1786, %v1782
  %v1819 = vpack.c.b16 %v1787, %v1783
  %v1820 = vpack.c.b16 %v1788, %v1784
  %v1821 = vpack.c.b16 %v1789, %v1785
  %1854 = vmatprep.subr.bf16.mxu0 %v1791
  %1855 = vmatpush1.bf16.msra.mxu0 %v1790
  %1856 = vmatprep.subr.bf16.mxu0 %v1795
  %1857 = vmatpush1.bf16.msra.mxu0 %v1794
  %1858 = vmatprep.subr.bf16.mxu0 %v1799
  %1859 = vmatpush1.bf16.msra.mxu0 %v1798
  %1860 = vmatprep.subr.bf16.mxu0 %v1803
  %1861 = vmatpush1.bf16.msra.mxu0 %v1802
  %1862 = vmatprep.subr.bf16.mxu0 %v1807
  %1863 = vmatpush1.bf16.msra.mxu0 %v1806
  %1864 = vmatprep.subr.bf16.mxu0 %v1811
  %1865 = vmatpush1.bf16.msra.mxu0 %v1810
  %1866 = vmatprep.subr.bf16.mxu0 %v1815
  %1867 = vmatpush1.bf16.msra.mxu0 %v1814
  %1868 = vmatprep.subr.bf16.mxu0 %v1819
  %1869 = vmatpush1.bf16.msra.mxu0 %v1818
  %1870 = vmatprep.subr.bf16.mxu0 0
  %1871 = vmatpush1.bf16.msra.mxu0 0
  %1872 = vmatprep.subr.bf16.mxu0 0
  %1873 = vmatpush1.bf16.msra.mxu0 0
  %1874 = vmatprep.subr.bf16.mxu0 0
  %1875 = vmatpush1.bf16.msra.mxu0 0
  %1876 = vmatprep.subr.bf16.mxu0 0
  %1877 = vmatpush1.bf16.msra.mxu0 0
  %1878 = vmatprep.subr.bf16.mxu0 0
  %1879 = vmatpush1.bf16.msra.mxu0 0
  %1880 = vmatprep.subr.bf16.mxu0 0
  %1881 = vmatpush1.bf16.msra.mxu0 0
  %1882 = vmatprep.subr.bf16.mxu0 0
  %1883 = vmatpush1.bf16.msra.mxu0 0
  %1884 = vmatprep.subr.bf16.mxu0 0
  %1885 = vmatpush1.bf16.msra.mxu0 0
  %1886 = vmatprep.mubr.bf16.mxu0 0
  %1887 = vmatmul.mubr.bf16.gmra.mrb[0].mxu0 %v1669
  %v1888 = vpop.f32.mrb[0].mxu0
  %v1889 = vadd.f32 %v1677, %v1888
  %v1890 = vpop.f32.mrb[0].mxu0
  %v1891 = vadd.f32 %v1681, %v1890
  %v1892 = vpop.f32.mrb[0].mxu0
  %v1893 = vadd.f32 %v1677, %v1892
  %v1894 = vpop.f32.mrb[0].mxu0
  %v1895 = vadd.f32 %v1681, %v1894
  %1896 = vmatprep.mubr.bf16.mxu0 0
  %1897 = vmatmul.mubr.bf16.gmra.mrb[0].mxu0 %v1670
  %v1898 = vpop.f32.mrb[0].mxu0
  %v1899 = vadd.f32 %v1677, %v1898
  %v1900 = vpop.f32.mrb[0].mxu0
  %v1901 = vadd.f32 %v1681, %v1900
  %v1902 = vpop.f32.mrb[0].mxu0
  %v1903 = vadd.f32 %v1677, %v1902
  %v1904 = vpop.f32.mrb[0].mxu0
  %v1905 = vadd.f32 %v1681, %v1904
  %1906 = vmatprep.mubr.bf16.mxu0 0
  %1907 = vmatmul.mubr.bf16.gmra.mrb[0].mxu0 %v1671
  %v1908 = vpop.f32.mrb[0].mxu0
  %v1909 = vadd.f32 %v1677, %v1908
  %v1910 = vpop.f32.mrb[0].mxu0
  %v1911 = vadd.f32 %v1681, %v1910
  %v1912 = vpop.f32.mrb[0].mxu0
  %v1913 = vadd.f32 %v1677, %v1912
  %v1914 = vpop.f32.mrb[0].mxu0
  %v1915 = vadd.f32 %v1681, %v1914
  %1916 = vmatprep.mubr.bf16.mxu0 0
  %1917 = vmatmul.mubr.bf16.gmra.mrb[0].mxu0 %v1672
  %v1918 = vpop.f32.mrb[0].mxu0
  %v1919 = vadd.f32 %v1677, %v1918
  %v1920 = vpop.f32.mrb[0].mxu0
  %v1921 = vadd.f32 %v1681, %v1920
  %v1922 = vpop.f32.mrb[0].mxu0
  %v1923 = vadd.f32 %v1677, %v1922
  %v1924 = vpop.f32.mrb[0].mxu0
  %v1925 = vadd.f32 %v1681, %v1924
  %1926 = vdwg.mxu0
  %1927 = vmatprep.subr.bf16.mxu0 %v1793
  %1928 = vmatpush1.bf16.msra.mxu0 %v1792
  %1929 = vmatprep.subr.bf16.mxu0 %v1797
  %1930 = vmatpush1.bf16.msra.mxu0 %v1796
  %1931 = vmatprep.subr.bf16.mxu0 %v1801
  %1932 = vmatpush1.bf16.msra.mxu0 %v1800
  %1933 = vmatprep.subr.bf16.mxu0 %v1805
  %1934 = vmatpush1.bf16.msra.mxu0 %v1804
  %1935 = vmatprep.subr.bf16.mxu0 %v1809
  %1936 = vmatpush1.bf16.msra.mxu0 %v1808
  %1937 = vmatprep.subr.bf16.mxu0 %v1813
  %1938 = vmatpush1.bf16.msra.mxu0 %v1812
  %1939 = vmatprep.subr.bf16.mxu0 %v1817
  %1940 = vmatpush1.bf16.msra.mxu0 %v1816
  %1941 = vmatprep.subr.bf16.mxu0 %v1821
  %1942 = vmatpush1.bf16.msra.mxu0 %v1820
  %1943 = vmatprep.subr.bf16.mxu0 0
  %1944 = vmatpush1.bf16.msra.mxu0 0
  %1945 = vmatprep.subr.bf16.mxu0 0
  %1946 = vmatpush1.bf16.msra.mxu0 0
  %1947 = vmatprep.subr.bf16.mxu0 0
  %1948 = vmatpush1.bf16.msra.mxu0 0
  %1949 = vmatprep.subr.bf16.mxu0 0
  %1950 = vmatpush1.bf16.msra.mxu0 0
  %1951 = vmatprep.subr.bf16.mxu0 0
  %1952 = vmatpush1.bf16.msra.mxu0 0
  %1953 = vmatprep.subr.bf16.mxu0 0
  %1954 = vmatpush1.bf16.msra.mxu0 0
  %1955 = vmatprep.subr.bf16.mxu0 0
  %1956 = vmatpush1.bf16.msra.mxu0 0
  %1957 = vmatprep.subr.bf16.mxu0 0
  %1958 = vmatpush1.bf16.msra.mxu0 0
  %1959 = vmatprep.mubr.bf16.mxu0 0
  %1960 = vmatmul.mubr.bf16.gmra.mrb[0].mxu0 %v1669
  %v1961 = vpop.f32.mrb[0].mxu0
  %v1962 = vadd.f32 %v1685, %v1961
  %v1963 = vpop.f32.mrb[0].mxu0
  %v1964 = vadd.f32 %v1689, %v1963
  %v1965 = vpop.f32.mrb[0].mxu0
  %v1966 = vadd.f32 %v1685, %v1965
  %v1967 = vpop.f32.mrb[0].mxu0
  %v1968 = vadd.f32 %v1689, %v1967
  %1969 = vmatprep.mubr.bf16.mxu0 0
  %1970 = vmatmul.mubr.bf16.gmra.mrb[0].mxu0 %v1670
  %v1971 = vpop.f32.mrb[0].mxu0
  %v1972 = vadd.f32 %v1685, %v1971
  %v1973 = vpop.f32.mrb[0].mxu0
  %v1974 = vadd.f32 %v1689, %v1973
  %v1975 = vpop.f32.mrb[0].mxu0
  %v1976 = vadd.f32 %v1685, %v1975
  %v1977 = vpop.f32.mrb[0].mxu0
  %v1978 = vadd.f32 %v1689, %v1977
  %1979 = vmatprep.mubr.bf16.mxu0 0
  %1980 = vmatmul.mubr.bf16.gmra.mrb[0].mxu0 %v1671
  %v1981 = vpop.f32.mrb[0].mxu0
  %v1982 = vadd.f32 %v1685, %v1981
  %v1983 = vpop.f32.mrb[0].mxu0
  %v1984 = vadd.f32 %v1689, %v1983
  %v1985 = vpop.f32.mrb[0].mxu0
  %v1986 = vadd.f32 %v1685, %v1985
  %v1987 = vpop.f32.mrb[0].mxu0
  %v1988 = vadd.f32 %v1689, %v1987
  %1989 = vmatprep.mubr.bf16.mxu0 0
  %1990 = vmatmul.mubr.bf16.gmra.mrb[0].mxu0 %v1672
  %v1991 = vpop.f32.mrb[0].mxu0
  %v1992 = vadd.f32 %v1685, %v1991
  %v1993 = vpop.f32.mrb[0].mxu0
  %v1994 = vadd.f32 %v1689, %v1993
  %v1995 = vpop.f32.mrb[0].mxu0
  %v1996 = vadd.f32 %v1685, %v1995
  %v1997 = vpop.f32.mrb[0].mxu0
  %v1998 = vadd.f32 %v1689, %v1997
  %1999 = vdwg.mxu0
  %2000 = vst [vmem:[#allocation4] sm:$0xff] %v1889
  %2001 = vst [vmem:[#allocation4 + $0x8] sm:$0xff] %v1891
  %2002 = vst [vmem:[#allocation4 + $0x10] sm:$0xff] %v1962
  %2003 = vst [vmem:[#allocation4 + $0x18] sm:$0xff] %v1964
  %2004 = vst [vmem:[#allocation4 + $0x20] sm:$0xff] %v1893
  %2005 = vst [vmem:[#allocation4 + $0x28] sm:$0xff] %v1895
  %2006 = vst [vmem:[#allocation4 + $0x30] sm:$0xff] %v1966
  %2007 = vst [vmem:[#allocation4 + $0x38] sm:$0xff] %v1968
  %2008 = vst [vmem:[#allocation4 + $0x40] sm:$0xff] %v1899
  %2009 = vst [vmem:[#allocation4 + $0x48] sm:$0xff] %v1901
  %2010 = vst [vmem:[#allocation4 + $0x50] sm:$0xff] %v1972
  %2011 = vst [vmem:[#allocation4 + $0x58] sm:$0xff] %v1974
  %2012 = vst [vmem:[#allocation4 + $0x60] sm:$0xff] %v1903
  %2013 = vst [vmem:[#allocation4 + $0x68] sm:$0xff] %v1905
  %2014 = vst [vmem:[#allocation4 + $0x70] sm:$0xff] %v1976
  %2015 = vst [vmem:[#allocation4 + $0x78] sm:$0xff] %v1978
  %2016 = vst [vmem:[#allocation4 + $0x80] sm:$0xff] %v1909
  %2017 = vst [vmem:[#allocation4 + $0x88] sm:$0xff] %v1911
  %2018 = vst [vmem:[#allocation4 + $0x90] sm:$0xff] %v1982
  %2019 = vst [vmem:[#allocation4 + $0x98] sm:$0xff] %v1984
  %2020 = vst [vmem:[#allocation4 + $0xa0] sm:$0xff] %v1913
  %2021 = vst [vmem:[#allocation4 + $0xa8] sm:$0xff] %v1915
  %2022 = vst [vmem:[#allocation4 + $0xb0] sm:$0xff] %v1986
  %2023 = vst [vmem:[#allocation4 + $0xb8] sm:$0xff] %v1988
  %2024 = vst [vmem:[#allocation4 + $0xc0] sm:$0xff] %v1919
  %2025 = vst [vmem:[#allocation4 + $0xc8] sm:$0xff] %v1921
  %2026 = vst [vmem:[#allocation4 + $0xd0] sm:$0xff] %v1992
  %2027 = vst [vmem:[#allocation4 + $0xd8] sm:$0xff] %v1994
  %2028 = vst [vmem:[#allocation4 + $0xe0] sm:$0xff] %v1923
  %2029 = vst [vmem:[#allocation4 + $0xe8] sm:$0xff] %v1925
  %2030 = vst [vmem:[#allocation4 + $0xf0] sm:$0xff] %v1996
  %2031 = vst [vmem:[#allocation4 + $0xf8] sm:$0xff] %v1998
  %v2032 = vld [vmem:[%s474] sm:$0xff]
  %v2033 = vld [vmem:[%s474 + $0x8] sm:$0xff]
  %v2034 = vld [vmem:[%s474 + $0x10] sm:$0xff]
  %v2035 = vld [vmem:[%s474 + $0x18] sm:$0xff]
  %v2068 = vunpack.c.l.b16 %v1627
  %v2069 = vunpack.c.h.b16 %v1627
  %v2070 = vunpack.c.l.b16 %v1628
  %v2071 = vunpack.c.h.b16 %v1628
  %v2072 = vunpack.c.l.b16 %v1629
  %v2073 = vunpack.c.h.b16 %v1629
  %v2074 = vunpack.c.l.b16 %v1630
  %v2075 = vunpack.c.h.b16 %v1630
  %v2076 = vunpack.c.l.b16 %v1631
  %v2077 = vunpack.c.h.b16 %v1631
  %v2078 = vunpack.c.l.b16 %v1632
  %v2079 = vunpack.c.h.b16 %v1632
  %v2080 = vunpack.c.l.b16 %v1633
  %v2081 = vunpack.c.h.b16 %v1633
  %v2082 = vunpack.c.l.b16 %v1634
  %v2083 = vunpack.c.h.b16 %v1634
  %v2084 = vunpack.c.l.b16 %v1635
  %v2085 = vunpack.c.h.b16 %v1635
  %v2086 = vunpack.c.l.b16 %v1636
  %v2087 = vunpack.c.h.b16 %v1636
  %v2088 = vunpack.c.l.b16 %v1637
  %v2089 = vunpack.c.h.b16 %v1637
  %v2090 = vunpack.c.l.b16 %v1638
  %v2091 = vunpack.c.h.b16 %v1638
  %v2092 = vunpack.c.l.b16 %v1639
  %v2093 = vunpack.c.h.b16 %v1639
  %v2094 = vunpack.c.l.b16 %v1640
  %v2095 = vunpack.c.h.b16 %v1640
  %v2096 = vunpack.c.l.b16 %v1641
  %v2097 = vunpack.c.h.b16 %v1641
  %v2098 = vunpack.c.l.b16 %v1642
  %v2099 = vunpack.c.h.b16 %v1642
  %v2100 = vunpack.c.l.b16 %v1643
  %v2101 = vunpack.c.h.b16 %v1643
  %v2102 = vunpack.c.l.b16 %v1644
  %v2103 = vunpack.c.h.b16 %v1644
  %v2104 = vunpack.c.l.b16 %v1645
  %v2105 = vunpack.c.h.b16 %v1645
  %v2106 = vunpack.c.l.b16 %v1646
  %v2107 = vunpack.c.h.b16 %v1646
  %v2108 = vunpack.c.l.b16 %v1647
  %v2109 = vunpack.c.h.b16 %v1647
  %v2110 = vunpack.c.l.b16 %v1648
  %v2111 = vunpack.c.h.b16 %v1648
  %v2112 = vunpack.c.l.b16 %v1649
  %v2113 = vunpack.c.h.b16 %v1649
  %v2114 = vunpack.c.l.b16 %v1650
  %v2115 = vunpack.c.h.b16 %v1650
  %v2116 = vunpack.c.l.b16 %v1651
  %v2117 = vunpack.c.h.b16 %v1651
  %v2118 = vunpack.c.l.b16 %v1652
  %v2119 = vunpack.c.h.b16 %v1652
  %v2120 = vunpack.c.l.b16 %v1653
  %v2121 = vunpack.c.h.b16 %v1653
  %v2122 = vunpack.c.l.b16 %v1654
  %v2123 = vunpack.c.h.b16 %v1654
  %v2124 = vunpack.c.l.b16 %v1655
  %v2125 = vunpack.c.h.b16 %v1655
  %v2126 = vunpack.c.l.b16 %v1656
  %v2127 = vunpack.c.h.b16 %v1656
  %v2128 = vunpack.c.l.b16 %v1657
  %v2129 = vunpack.c.h.b16 %v1657
  %v2130 = vunpack.c.l.b16 %v1658
  %v2131 = vunpack.c.h.b16 %v1658
  %v2132 = vpack.c.b16 %v2072, %v2068
  %v2133 = vpack.c.b16 %v2073, %v2069
  %v2134 = vpack.c.b16 %v2074, %v2070
  %v2135 = vpack.c.b16 %v2075, %v2071
  %v2136 = vpack.c.b16 %v2080, %v2076
  %v2137 = vpack.c.b16 %v2081, %v2077
  %v2138 = vpack.c.b16 %v2082, %v2078
  %v2139 = vpack.c.b16 %v2083, %v2079
  %v2140 = vpack.c.b16 %v2088, %v2084
  %v2141 = vpack.c.b16 %v2089, %v2085
  %v2142 = vpack.c.b16 %v2090, %v2086
  %v2143 = vpack.c.b16 %v2091, %v2087
  %v2144 = vpack.c.b16 %v2096, %v2092
  %v2145 = vpack.c.b16 %v2097, %v2093
  %v2146 = vpack.c.b16 %v2098, %v2094
  %v2147 = vpack.c.b16 %v2099, %v2095
  %v2148 = vpack.c.b16 %v2104, %v2100
  %v2149 = vpack.c.b16 %v2105, %v2101
  %v2150 = vpack.c.b16 %v2106, %v2102
  %v2151 = vpack.c.b16 %v2107, %v2103
  %v2152 = vpack.c.b16 %v2112, %v2108
  %v2153 = vpack.c.b16 %v2113, %v2109
  %v2154 = vpack.c.b16 %v2114, %v2110
  %v2155 = vpack.c.b16 %v2115, %v2111
  %v2156 = vpack.c.b16 %v2120, %v2116
  %v2157 = vpack.c.b16 %v2121, %v2117
  %v2158 = vpack.c.b16 %v2122, %v2118
  %v2159 = vpack.c.b16 %v2123, %v2119
  %v2160 = vpack.c.b16 %v2128, %v2124
  %v2161 = vpack.c.b16 %v2129, %v2125
  %v2162 = vpack.c.b16 %v2130, %v2126
  %v2163 = vpack.c.b16 %v2131, %v2127
  %2196 = vmatprep.subr.bf16.mxu0 %v2133
  %2197 = vmatpush1.bf16.msra.mxu0 %v2132
  %2198 = vmatprep.subr.bf16.mxu0 %v2137
  %2199 = vmatpush1.bf16.msra.mxu0 %v2136
  %2200 = vmatprep.subr.bf16.mxu0 %v2141
  %2201 = vmatpush1.bf16.msra.mxu0 %v2140
  %2202 = vmatprep.subr.bf16.mxu0 %v2145
  %2203 = vmatpush1.bf16.msra.mxu0 %v2144
  %2204 = vmatprep.subr.bf16.mxu0 %v2149
  %2205 = vmatpush1.bf16.msra.mxu0 %v2148
  %2206 = vmatprep.subr.bf16.mxu0 %v2153
  %2207 = vmatpush1.bf16.msra.mxu0 %v2152
  %2208 = vmatprep.subr.bf16.mxu0 %v2157
  %2209 = vmatpush1.bf16.msra.mxu0 %v2156
  %2210 = vmatprep.subr.bf16.mxu0 %v2161
  %2211 = vmatpush1.bf16.msra.mxu0 %v2160
  %2212 = vmatprep.subr.bf16.mxu0 0
  %2213 = vmatpush1.bf16.msra.mxu0 0
  %2214 = vmatprep.subr.bf16.mxu0 0
  %2215 = vmatpush1.bf16.msra.mxu0 0
  %2216 = vmatprep.subr.bf16.mxu0 0
  %2217 = vmatpush1.bf16.msra.mxu0 0
  %2218 = vmatprep.subr.bf16.mxu0 0
  %2219 = vmatpush1.bf16.msra.mxu0 0
  %2220 = vmatprep.subr.bf16.mxu0 0
  %2221 = vmatpush1.bf16.msra.mxu0 0
  %2222 = vmatprep.subr.bf16.mxu0 0
  %2223 = vmatpush1.bf16.msra.mxu0 0
  %2224 = vmatprep.subr.bf16.mxu0 0
  %2225 = vmatpush1.bf16.msra.mxu0 0
  %2226 = vmatprep.subr.bf16.mxu0 0
  %2227 = vmatpush1.bf16.msra.mxu0 0
  %2228 = vmatprep.mubr.bf16.mxu0 0
  %2229 = vmatmul.mubr.bf16.gmra.mrb[0].mxu0 0
  %v2230 = vpop.f32.mrb[0].mxu0
  %v2231 = vadd.f32 0.0, %v2230
  %v2232 = vpop.f32.mrb[0].mxu0
  %v2233 = vadd.f32 0.0, %v2232
  %v2234 = vpop.f32.mrb[0].mxu0
  %v2235 = vpop.f32.mrb[0].mxu0
  %2236 = vdwg.mxu0
  %2237 = vmatprep.subr.bf16.mxu0 %v2135
  %2238 = vmatpush1.bf16.msra.mxu0 %v2134
  %2239 = vmatprep.subr.bf16.mxu0 %v2139
  %2240 = vmatpush1.bf16.msra.mxu0 %v2138
  %2241 = vmatprep.subr.bf16.mxu0 %v2143
  %2242 = vmatpush1.bf16.msra.mxu0 %v2142
  %2243 = vmatprep.subr.bf16.mxu0 %v2147
  %2244 = vmatpush1.bf16.msra.mxu0 %v2146
  %2245 = vmatprep.subr.bf16.mxu0 %v2151
  %2246 = vmatpush1.bf16.msra.mxu0 %v2150
  %2247 = vmatprep.subr.bf16.mxu0 %v2155
  %2248 = vmatpush1.bf16.msra.mxu0 %v2154
  %2249 = vmatprep.subr.bf16.mxu0 %v2159
  %2250 = vmatpush1.bf16.msra.mxu0 %v2158
  %2251 = vmatprep.subr.bf16.mxu0 %v2163
  %2252 = vmatpush1.bf16.msra.mxu0 %v2162
  %2253 = vmatprep.subr.bf16.mxu0 0
  %2254 = vmatpush1.bf16.msra.mxu0 0
  %2255 = vmatprep.subr.bf16.mxu0 0
  %2256 = vmatpush1.bf16.msra.mxu0 0
  %2257 = vmatprep.subr.bf16.mxu0 0
  %2258 = vmatpush1.bf16.msra.mxu0 0
  %2259 = vmatprep.subr.bf16.mxu0 0
  %2260 = vmatpush1.bf16.msra.mxu0 0
  %2261 = vmatprep.subr.bf16.mxu0 0
  %2262 = vmatpush1.bf16.msra.mxu0 0
  %2263 = vmatprep.subr.bf16.mxu0 0
  %2264 = vmatpush1.bf16.msra.mxu0 0
  %2265 = vmatprep.subr.bf16.mxu0 0
  %2266 = vmatpush1.bf16.msra.mxu0 0
  %2267 = vmatprep.subr.bf16.mxu0 0
  %2268 = vmatpush1.bf16.msra.mxu0 0
  %2269 = vmatprep.mubr.bf16.mxu0 0
  %2270 = vmatmul.mubr.bf16.gmra.mrb[0].mxu0 0
  %v2271 = vpop.f32.mrb[0].mxu0
  %v2272 = vadd.f32 0.0, %v2271
  %v2273 = vpop.f32.mrb[0].mxu0
  %v2274 = vadd.f32 0.0, %v2273
  %v2275 = vpop.f32.mrb[0].mxu0
  %v2276 = vpop.f32.mrb[0].mxu0
  %2277 = vdwg.mxu0
  %v2278 = vadd.f32 %v2032, %v2231
  %v2279 = vadd.f32 %v2033, %v2233
  %v2280 = vadd.f32 %v2034, %v2272
  %v2281 = vadd.f32 %v2035, %v2274
  %v2282 = vxor.u32 %v2278, 2147483648
  %v2283 = vxor.u32 %v2279, 2147483648
  %v2284 = vxor.u32 %v2280, 2147483648
  %v2285 = vmul.f32 %v2282, 1.442695
  %v2286 = vpow.pop %v2285
  %v2287 = vmul.f32 %v2283, 1.442695
  %v2288 = vpow.pop %v2287
  %v2289 = vmul.f32 %v2284, 1.442695
  %v2290 = vpow.pop %v2289
  %v2291 = vadd.f32 %v2286, 1.0
  %v2292 = vadd.f32 %v2288, 1.0
  %v2293 = vadd.f32 %v2290, 1.0
  %v2294 = vrcp.pop %v2291
  %v2295 = vmul.f32 1.0, %v2294
  %v2296 = vrcp.pop %v2292
  %v2297 = vmul.f32 1.0, %v2296
  %v2298 = vrcp.pop %v2293
  %v2299 = vmul.f32 1.0, %v2298
  %v2300 = vtanh.pop %v2281
  %v2301 = vmul.f32 %v2297, 0.0
  %v2302 = vmul.f32 %v2295, %v2300
  %v2303 = vadd.f32 %v2301, %v2302
  %v2304 = vtanh.pop %v2303
  %v2305 = vmul.f32 %v2299, %v2304
  %2306 = vst [vmem:[#allocation3] sm:$0xff] %v2305
  %v2307 = vld [vmem:[%s752] sm:$0xff]
  %v2308 = vld [vmem:[%s752 + $0x8] sm:$0xff]
  %v2309 = vld [vmem:[%s752 + $0x10] sm:$0xff]
  %v2310 = vld [vmem:[%s752 + $0x18] sm:$0xff]
  %v2311 = vpack.c.bf16 %v2305, %v2305
  %2312 = vmatprep.subr.bf16.mxu0 %v2133
  %2313 = vmatpush1.bf16.msra.mxu0 %v2132
  %2314 = vmatprep.subr.bf16.mxu0 %v2137
  %2315 = vmatpush1.bf16.msra.mxu0 %v2136
  %2316 = vmatprep.subr.bf16.mxu0 %v2141
  %2317 = vmatpush1.bf16.msra.mxu0 %v2140
  %2318 = vmatprep.subr.bf16.mxu0 %v2145
  %2319 = vmatpush1.bf16.msra.mxu0 %v2144
  %2320 = vmatprep.subr.bf16.mxu0 %v2149
  %2321 = vmatpush1.bf16.msra.mxu0 %v2148
  %2322 = vmatprep.subr.bf16.mxu0 %v2153
  %2323 = vmatpush1.bf16.msra.mxu0 %v2152
  %2324 = vmatprep.subr.bf16.mxu0 %v2157
  %2325 = vmatpush1.bf16.msra.mxu0 %v2156
  %2326 = vmatprep.subr.bf16.mxu0 %v2161
  %2327 = vmatpush1.bf16.msra.mxu0 %v2160
  %2328 = vmatprep.subr.bf16.mxu0 0
  %2329 = vmatpush1.bf16.msra.mxu0 0
  %2330 = vmatprep.subr.bf16.mxu0 0
  %2331 = vmatpush1.bf16.msra.mxu0 0
  %2332 = vmatprep.subr.bf16.mxu0 0
  %2333 = vmatpush1.bf16.msra.mxu0 0
  %2334 = vmatprep.subr.bf16.mxu0 0
  %2335 = vmatpush1.bf16.msra.mxu0 0
  %2336 = vmatprep.subr.bf16.mxu0 0
  %2337 = vmatpush1.bf16.msra.mxu0 0
  %2338 = vmatprep.subr.bf16.mxu0 0
  %2339 = vmatpush1.bf16.msra.mxu0 0
  %2340 = vmatprep.subr.bf16.mxu0 0
  %2341 = vmatpush1.bf16.msra.mxu0 0
  %2342 = vmatprep.subr.bf16.mxu0 0
  %2343 = vmatpush1.bf16.msra.mxu0 0
  %2344 = vmatprep.mubr.bf16.mxu0 0
  %2345 = vmatmul.mubr.bf16.gmra.mrb[0].mxu0 %v2311
  %v2346 = vpop.f32.mrb[0].mxu0
  %v2347 = vadd.f32 0.0, %v2346
  %v2348 = vpop.f32.mrb[0].mxu0
  %v2349 = vadd.f32 0.0, %v2348
  %v2350 = vpop.f32.mrb[0].mxu0
  %v2351 = vpop.f32.mrb[0].mxu0
  %2352 = vdwg.mxu0
  %2353 = vmatprep.subr.bf16.mxu0 %v2135
  %2354 = vmatpush1.bf16.msra.mxu0 %v2134
  %2355 = vmatprep.subr.bf16.mxu0 %v2139
  %2356 = vmatpush1.bf16.msra.mxu0 %v2138
  %2357 = vmatprep.subr.bf16.mxu0 %v2143
  %2358 = vmatpush1.bf16.msra.mxu0 %v2142
  %2359 = vmatprep.subr.bf16.mxu0 %v2147
  %2360 = vmatpush1.bf16.msra.mxu0 %v2146
  %2361 = vmatprep.subr.bf16.mxu0 %v2151
  %2362 = vmatpush1.bf16.msra.mxu0 %v2150
  %2363 = vmatprep.subr.bf16.mxu0 %v2155
  %2364 = vmatpush1.bf16.msra.mxu0 %v2154
  %2365 = vmatprep.subr.bf16.mxu0 %v2159
  %2366 = vmatpush1.bf16.msra.mxu0 %v2158
  %2367 = vmatprep.subr.bf16.mxu0 %v2163
  %2368 = vmatpush1.bf16.msra.mxu0 %v2162
  %2369 = vmatprep.subr.bf16.mxu0 0
  %2370 = vmatpush1.bf16.msra.mxu0 0
  %2371 = vmatprep.subr.bf16.mxu0 0
  %2372 = vmatpush1.bf16.msra.mxu0 0
  %2373 = vmatprep.subr.bf16.mxu0 0
  %2374 = vmatpush1.bf16.msra.mxu0 0
  %2375 = vmatprep.subr.bf16.mxu0 0
  %2376 = vmatpush1.bf16.msra.mxu0 0
  %2377 = vmatprep.subr.bf16.mxu0 0
  %2378 = vmatpush1.bf16.msra.mxu0 0
  %2379 = vmatprep.subr.bf16.mxu0 0
  %2380 = vmatpush1.bf16.msra.mxu0 0
  %2381 = vmatprep.subr.bf16.mxu0 0
  %2382 = vmatpush1.bf16.msra.mxu0 0
  %2383 = vmatprep.subr.bf16.mxu0 0
  %2384 = vmatpush1.bf16.msra.mxu0 0
  %2385 = vmatprep.mubr.bf16.mxu0 0
  %2386 = vmatmul.mubr.bf16.gmra.mrb[0].mxu0 %v2311
  %v2387 = vpop.f32.mrb[0].mxu0
  %v2388 = vadd.f32 0.0, %v2387
  %v2389 = vpop.f32.mrb[0].mxu0
  %v2390 = vadd.f32 0.0, %v2389
  %v2391 = vpop.f32.mrb[0].mxu0
  %v2392 = vpop.f32.mrb[0].mxu0
  %2393 = vdwg.mxu0
  %v2394 = vadd.f32 %v2307, %v2347
  %v2395 = vadd.f32 %v2308, %v2349
  %v2396 = vadd.f32 %v2309, %v2388
  %v2397 = vadd.f32 %v2310, %v2390
  %v2398 = vxor.u32 %v2394, 2147483648
  %v2399 = vxor.u32 %v2395, 2147483648
  %v2400 = vxor.u32 %v2396, 2147483648
  %v2401 = vmul.f32 %v2398, 1.442695
  %v2402 = vpow.pop %v2401
  %v2403 = vmul.f32 %v2399, 1.442695
  %v2404 = vpow.pop %v2403
  %v2405 = vmul.f32 %v2400, 1.442695
  %v2406 = vpow.pop %v2405
  %v2407 = vadd.f32 %v2402, 1.0
  %v2408 = vadd.f32 %v2404, 1.0
  %v2409 = vadd.f32 %v2406, 1.0
  %v2410 = vrcp.pop %v2407
  %v2411 = vmul.f32 1.0, %v2410
  %v2412 = vrcp.pop %v2408
  %v2413 = vmul.f32 1.0, %v2412
  %v2414 = vrcp.pop %v2409
  %v2415 = vmul.f32 1.0, %v2414
  %v2416 = vtanh.pop %v2397
  %v2417 = vmul.f32 %v2413, %v2303
  %v2418 = vmul.f32 %v2411, %v2416
  %v2419 = vadd.f32 %v2417, %v2418
  %v2420 = vtanh.pop %v2419
  %v2421 = vmul.f32 %v2415, %v2420
  %s2422 = scalar_lea.vmem [#allocation3], 8
  %2423 = vst [vmem:[%s2422] sm:$0xff] %v2421
  %v2424 = vld [vmem:[%s872] sm:$0xff]
  %v2425 = vld [vmem:[%s872 + $0x8] sm:$0xff]
  %v2426 = vld [vmem:[%s872 + $0x10] sm:$0xff]
  %v2427 = vld [vmem:[%s872 + $0x18] sm:$0xff]
  %v2428 = vpack.c.bf16 %v2421, %v2421
  %2429 = vmatprep.subr.bf16.mxu0 %v2133
  %2430 = vmatpush1.bf16.msra.mxu0 %v2132
  %2431 = vmatprep.subr.bf16.mxu0 %v2137
  %2432 = vmatpush1.bf16.msra.mxu0 %v2136
  %2433 = vmatprep.subr.bf16.mxu0 %v2141
  %2434 = vmatpush1.bf16.msra.mxu0 %v2140
  %2435 = vmatprep.subr.bf16.mxu0 %v2145
  %2436 = vmatpush1.bf16.msra.mxu0 %v2144
  %2437 = vmatprep.subr.bf16.mxu0 %v2149
  %2438 = vmatpush1.bf16.msra.mxu0 %v2148
  %2439 = vmatprep.subr.bf16.mxu0 %v2153
  %2440 = vmatpush1.bf16.msra.mxu0 %v2152
  %2441 = vmatprep.subr.bf16.mxu0 %v2157
  %2442 = vmatpush1.bf16.msra.mxu0 %v2156
  %2443 = vmatprep.subr.bf16.mxu0 %v2161
  %2444 = vmatpush1.bf16.msra.mxu0 %v2160
  %2445 = vmatprep.subr.bf16.mxu0 0
  %2446 = vmatpush1.bf16.msra.mxu0 0
  %2447 = vmatprep.subr.bf16.mxu0 0
  %2448 = vmatpush1.bf16.msra.mxu0 0
  %2449 = vmatprep.subr.bf16.mxu0 0
  %2450 = vmatpush1.bf16.msra.mxu0 0
  %2451 = vmatprep.subr.bf16.mxu0 0
  %2452 = vmatpush1.bf16.msra.mxu0 0
  %2453 = vmatprep.subr.bf16.mxu0 0
  %2454 = vmatpush1.bf16.msra.mxu0 0
  %2455 = vmatprep.subr.bf16.mxu0 0
  %2456 = vmatpush1.bf16.msra.mxu0 0
  %2457 = vmatprep.subr.bf16.mxu0 0
  %2458 = vmatpush1.bf16.msra.mxu0 0
  %2459 = vmatprep.subr.bf16.mxu0 0
  %2460 = vmatpush1.bf16.msra.mxu0 0
  %2461 = vmatprep.mubr.bf16.mxu0 0
  %2462 = vmatmul.mubr.bf16.gmra.mrb[0].mxu0 %v2428
  %v2463 = vpop.f32.mrb[0].mxu0
  %v2464 = vadd.f32 0.0, %v2463
  %v2465 = vpop.f32.mrb[0].mxu0
  %v2466 = vadd.f32 0.0, %v2465
  %v2467 = vpop.f32.mrb[0].mxu0
  %v2468 = vpop.f32.mrb[0].mxu0
  %2469 = vdwg.mxu0
  %2470 = vmatprep.subr.bf16.mxu0 %v2135
  %2471 = vmatpush1.bf16.msra.mxu0 %v2134
  %2472 = vmatprep.subr.bf16.mxu0 %v2139
  %2473 = vmatpush1.bf16.msra.mxu0 %v2138
  %2474 = vmatprep.subr.bf16.mxu0 %v2143
  %2475 = vmatpush1.bf16.msra.mxu0 %v2142
  %2476 = vmatprep.subr.bf16.mxu0 %v2147
  %2477 = vmatpush1.bf16.msra.mxu0 %v2146
  %2478 = vmatprep.subr.bf16.mxu0 %v2151
  %2479 = vmatpush1.bf16.msra.mxu0 %v2150
  %2480 = vmatprep.subr.bf16.mxu0 %v2155
  %2481 = vmatpush1.bf16.msra.mxu0 %v2154
  %2482 = vmatprep.subr.bf16.mxu0 %v2159
  %2483 = vmatpush1.bf16.msra.mxu0 %v2158
  %2484 = vmatprep.subr.bf16.mxu0 %v2163
  %2485 = vmatpush1.bf16.msra.mxu0 %v2162
  %2486 = vmatprep.subr.bf16.mxu0 0
  %2487 = vmatpush1.bf16.msra.mxu0 0
  %2488 = vmatprep.subr.bf16.mxu0 0
  %2489 = vmatpush1.bf16.msra.mxu0 0
  %2490 = vmatprep.subr.bf16.mxu0 0
  %2491 = vmatpush1.bf16.msra.mxu0 0
  %2492 = vmatprep.subr.bf16.mxu0 0
  %2493 = vmatpush1.bf16.msra.mxu0 0
  %2494 = vmatprep.subr.bf16.mxu0 0
  %2495 = vmatpush1.bf16.msra.mxu0 0
  %2496 = vmatprep.subr.bf16.mxu0 0
  %2497 = vmatpush1.bf16.msra.mxu0 0
  %2498 = vmatprep.subr.bf16.mxu0 0
  %2499 = vmatpush1.bf16.msra.mxu0 0
  %2500 = vmatprep.subr.bf16.mxu0 0
  %2501 = vmatpush1.bf16.msra.mxu0 0
  %2502 = vmatprep.mubr.bf16.mxu0 0
  %2503 = vmatmul.mubr.bf16.gmra.mrb[0].mxu0 %v2428
  %v2504 = vpop.f32.mrb[0].mxu0
  %v2505 = vadd.f32 0.0, %v2504
  %v2506 = vpop.f32.mrb[0].mxu0
  %v2507 = vadd.f32 0.0, %v2506
  %v2508 = vpop.f32.mrb[0].mxu0
  %v2509 = vpop.f32.mrb[0].mxu0
  %2510 = vdwg.mxu0
  %v2511 = vadd.f32 %v2424, %v2464
  %v2512 = vadd.f32 %v2425, %v2466
  %v2513 = vadd.f32 %v2426, %v2505
  %v2514 = vadd.f32 %v2427, %v2507
  %v2515 = vxor.u32 %v2511, 2147483648
  %v2516 = vxor.u32 %v2512, 2147483648
  %v2517 = vxor.u32 %v2513, 2147483648
  %v2518 = vmul.f32 %v2515, 1.442695
  %v2519 = vpow.pop %v2518
  %v2520 = vmul.f32 %v2516, 1.442695
  %v2521 = vpow.pop %v2520
  %v2522 = vmul.f32 %v2517, 1.442695
  %v2523 = vpow.pop %v2522
  %v2524 = vadd.f32 %v2519, 1.0
  %v2525 = vadd.f32 %v2521, 1.0
  %v2526 = vadd.f32 %v2523, 1.0
  %v2527 = vrcp.pop %v2524
  %v2528 = vmul.f32 1.0, %v2527
  %v2529 = vrcp.pop %v2525
  %v2530 = vmul.f32 1.0, %v2529
  %v2531 = vrcp.pop %v2526
  %v2532 = vmul.f32 1.0, %v2531
  %v2533 = vtanh.pop %v2514
  %v2534 = vmul.f32 %v2530, %v2419
  %v2535 = vmul.f32 %v2528, %v2533
  %v2536 = vadd.f32 %v2534, %v2535
  %v2537 = vtanh.pop %v2536
  %v2538 = vmul.f32 %v2532, %v2537
  %s2539 = scalar_lea.vmem [#allocation3], 16
  %2540 = vst [vmem:[%s2539] sm:$0xff] %v2538
  %v2541 = vld [vmem:[%s992] sm:$0xff]
  %v2542 = vld [vmem:[%s992 + $0x8] sm:$0xff]
  %v2543 = vld [vmem:[%s992 + $0x10] sm:$0xff]
  %v2544 = vld [vmem:[%s992 + $0x18] sm:$0xff]
  %v2545 = vpack.c.bf16 %v2538, %v2538
  %2546 = vmatprep.subr.bf16.mxu0 %v2133
  %2547 = vmatpush1.bf16.msra.mxu0 %v2132
  %2548 = vmatprep.subr.bf16.mxu0 %v2137
  %2549 = vmatpush1.bf16.msra.mxu0 %v2136
  %2550 = vmatprep.subr.bf16.mxu0 %v2141
  %2551 = vmatpush1.bf16.msra.mxu0 %v2140
  %2552 = vmatprep.subr.bf16.mxu0 %v2145
  %2553 = vmatpush1.bf16.msra.mxu0 %v2144
  %2554 = vmatprep.subr.bf16.mxu0 %v2149
  %2555 = vmatpush1.bf16.msra.mxu0 %v2148
  %2556 = vmatprep.subr.bf16.mxu0 %v2153
  %2557 = vmatpush1.bf16.msra.mxu0 %v2152
  %2558 = vmatprep.subr.bf16.mxu0 %v2157
  %2559 = vmatpush1.bf16.msra.mxu0 %v2156
  %2560 = vmatprep.subr.bf16.mxu0 %v2161
  %2561 = vmatpush1.bf16.msra.mxu0 %v2160
  %2562 = vmatprep.subr.bf16.mxu0 0
  %2563 = vmatpush1.bf16.msra.mxu0 0
  %2564 = vmatprep.subr.bf16.mxu0 0
  %2565 = vmatpush1.bf16.msra.mxu0 0
  %2566 = vmatprep.subr.bf16.mxu0 0
  %2567 = vmatpush1.bf16.msra.mxu0 0
  %2568 = vmatprep.subr.bf16.mxu0 0
  %2569 = vmatpush1.bf16.msra.mxu0 0
  %2570 = vmatprep.subr.bf16.mxu0 0
  %2571 = vmatpush1.bf16.msra.mxu0 0
  %2572 = vmatprep.subr.bf16.mxu0 0
  %2573 = vmatpush1.bf16.msra.mxu0 0
  %2574 = vmatprep.subr.bf16.mxu0 0
  %2575 = vmatpush1.bf16.msra.mxu0 0
  %2576 = vmatprep.subr.bf16.mxu0 0
  %2577 = vmatpush1.bf16.msra.mxu0 0
  %2578 = vmatprep.mubr.bf16.mxu0 0
  %2579 = vmatmul.mubr.bf16.gmra.mrb[0].mxu0 %v2545
  %v2580 = vpop.f32.mrb[0].mxu0
  %v2581 = vadd.f32 0.0, %v2580
  %v2582 = vpop.f32.mrb[0].mxu0
  %v2583 = vadd.f32 0.0, %v2582
  %v2584 = vpop.f32.mrb[0].mxu0
  %v2585 = vpop.f32.mrb[0].mxu0
  %2586 = vdwg.mxu0
  %2587 = vmatprep.subr.bf16.mxu0 %v2135
  %2588 = vmatpush1.bf16.msra.mxu0 %v2134
  %2589 = vmatprep.subr.bf16.mxu0 %v2139
  %2590 = vmatpush1.bf16.msra.mxu0 %v2138
  %2591 = vmatprep.subr.bf16.mxu0 %v2143
  %2592 = vmatpush1.bf16.msra.mxu0 %v2142
  %2593 = vmatprep.subr.bf16.mxu0 %v2147
  %2594 = vmatpush1.bf16.msra.mxu0 %v2146
  %2595 = vmatprep.subr.bf16.mxu0 %v2151
  %2596 = vmatpush1.bf16.msra.mxu0 %v2150
  %2597 = vmatprep.subr.bf16.mxu0 %v2155
  %2598 = vmatpush1.bf16.msra.mxu0 %v2154
  %2599 = vmatprep.subr.bf16.mxu0 %v2159
  %2600 = vmatpush1.bf16.msra.mxu0 %v2158
  %2601 = vmatprep.subr.bf16.mxu0 %v2163
  %2602 = vmatpush1.bf16.msra.mxu0 %v2162
  %2603 = vmatprep.subr.bf16.mxu0 0
  %2604 = vmatpush1.bf16.msra.mxu0 0
  %2605 = vmatprep.subr.bf16.mxu0 0
  %2606 = vmatpush1.bf16.msra.mxu0 0
  %2607 = vmatprep.subr.bf16.mxu0 0
  %2608 = vmatpush1.bf16.msra.mxu0 0
  %2609 = vmatprep.subr.bf16.mxu0 0
  %2610 = vmatpush1.bf16.msra.mxu0 0
  %2611 = vmatprep.subr.bf16.mxu0 0
  %2612 = vmatpush1.bf16.msra.mxu0 0
  %2613 = vmatprep.subr.bf16.mxu0 0
  %2614 = vmatpush1.bf16.msra.mxu0 0
  %2615 = vmatprep.subr.bf16.mxu0 0
  %2616 = vmatpush1.bf16.msra.mxu0 0
  %2617 = vmatprep.subr.bf16.mxu0 0
  %2618 = vmatpush1.bf16.msra.mxu0 0
  %2619 = vmatprep.mubr.bf16.mxu0 0
  %2620 = vmatmul.mubr.bf16.gmra.mrb[0].mxu0 %v2545
  %v2621 = vpop.f32.mrb[0].mxu0
  %v2622 = vadd.f32 0.0, %v2621
  %v2623 = vpop.f32.mrb[0].mxu0
  %v2624 = vadd.f32 0.0, %v2623
  %v2625 = vpop.f32.mrb[0].mxu0
  %v2626 = vpop.f32.mrb[0].mxu0
  %2627 = vdwg.mxu0
  %v2628 = vadd.f32 %v2541, %v2581
  %v2629 = vadd.f32 %v2542, %v2583
  %v2630 = vadd.f32 %v2543, %v2622
  %v2631 = vadd.f32 %v2544, %v2624
  %v2632 = vxor.u32 %v2628, 2147483648
  %v2633 = vxor.u32 %v2629, 2147483648
  %v2634 = vxor.u32 %v2630, 2147483648
  %v2635 = vmul.f32 %v2632, 1.442695
  %v2636 = vpow.pop %v2635
  %v2637 = vmul.f32 %v2633, 1.442695
  %v2638 = vpow.pop %v2637
  %v2639 = vmul.f32 %v2634, 1.442695
  %v2640 = vpow.pop %v2639
  %v2641 = vadd.f32 %v2636, 1.0
  %v2642 = vadd.f32 %v2638, 1.0
  %v2643 = vadd.f32 %v2640, 1.0
  %v2644 = vrcp.pop %v2641
  %v2645 = vmul.f32 1.0, %v2644
  %v2646 = vrcp.pop %v2642
  %v2647 = vmul.f32 1.0, %v2646
  %v2648 = vrcp.pop %v2643
  %v2649 = vmul.f32 1.0, %v2648
  %v2650 = vtanh.pop %v2631
  %v2651 = vmul.f32 %v2647, %v2536
  %v2652 = vmul.f32 %v2645, %v2650
  %v2653 = vadd.f32 %v2651, %v2652
  %v2654 = vtanh.pop %v2653
  %v2655 = vmul.f32 %v2649, %v2654
  %s2656 = scalar_lea.vmem [#allocation3], 24
  %2657 = vst [vmem:[%s2656] sm:$0xff] %v2655
  %v2658 = vld [vmem:[%s1112] sm:$0xff]
  %v2659 = vld [vmem:[%s1112 + $0x8] sm:$0xff]
  %v2660 = vld [vmem:[%s1112 + $0x10] sm:$0xff]
  %v2661 = vld [vmem:[%s1112 + $0x18] sm:$0xff]
  %v2662 = vpack.c.bf16 %v2655, %v2655
  %2663 = vmatprep.subr.bf16.mxu0 %v2133
  %2664 = vmatpush1.bf16.msra.mxu0 %v2132
  %2665 = vmatprep.subr.bf16.mxu0 %v2137
  %2666 = vmatpush1.bf16.msra.mxu0 %v2136
  %2667 = vmatprep.subr.bf16.mxu0 %v2141
  %2668 = vmatpush1.bf16.msra.mxu0 %v2140
  %2669 = vmatprep.subr.bf16.mxu0 %v2145
  %2670 = vmatpush1.bf16.msra.mxu0 %v2144
  %2671 = vmatprep.subr.bf16.mxu0 %v2149
  %2672 = vmatpush1.bf16.msra.mxu0 %v2148
  %2673 = vmatprep.subr.bf16.mxu0 %v2153
  %2674 = vmatpush1.bf16.msra.mxu0 %v2152
  %2675 = vmatprep.subr.bf16.mxu0 %v2157
  %2676 = vmatpush1.bf16.msra.mxu0 %v2156
  %2677 = vmatprep.subr.bf16.mxu0 %v2161
  %2678 = vmatpush1.bf16.msra.mxu0 %v2160
  %2679 = vmatprep.subr.bf16.mxu0 0
  %2680 = vmatpush1.bf16.msra.mxu0 0
  %2681 = vmatprep.subr.bf16.mxu0 0
  %2682 = vmatpush1.bf16.msra.mxu0 0
  %2683 = vmatprep.subr.bf16.mxu0 0
  %2684 = vmatpush1.bf16.msra.mxu0 0
  %2685 = vmatprep.subr.bf16.mxu0 0
  %2686 = vmatpush1.bf16.msra.mxu0 0
  %2687 = vmatprep.subr.bf16.mxu0 0
  %2688 = vmatpush1.bf16.msra.mxu0 0
  %2689 = vmatprep.subr.bf16.mxu0 0
  %2690 = vmatpush1.bf16.msra.mxu0 0
  %2691 = vmatprep.subr.bf16.mxu0 0
  %2692 = vmatpush1.bf16.msra.mxu0 0
  %2693 = vmatprep.subr.bf16.mxu0 0
  %2694 = vmatpush1.bf16.msra.mxu0 0
  %2695 = vmatprep.mubr.bf16.mxu0 0
  %2696 = vmatmul.mubr.bf16.gmra.mrb[0].mxu0 %v2662
  %v2697 = vpop.f32.mrb[0].mxu0
  %v2698 = vadd.f32 0.0, %v2697
  %v2699 = vpop.f32.mrb[0].mxu0
  %v2700 = vadd.f32 0.0, %v2699
  %v2701 = vpop.f32.mrb[0].mxu0
  %v2702 = vpop.f32.mrb[0].mxu0
  %2703 = vdwg.mxu0
  %2704 = vmatprep.subr.bf16.mxu0 %v2135
  %2705 = vmatpush1.bf16.msra.mxu0 %v2134
  %2706 = vmatprep.subr.bf16.mxu0 %v2139
  %2707 = vmatpush1.bf16.msra.mxu0 %v2138
  %2708 = vmatprep.subr.bf16.mxu0 %v2143
  %2709 = vmatpush1.bf16.msra.mxu0 %v2142
  %2710 = vmatprep.subr.bf16.mxu0 %v2147
  %2711 = vmatpush1.bf16.msra.mxu0 %v2146
  %2712 = vmatprep.subr.bf16.mxu0 %v2151
  %2713 = vmatpush1.bf16.msra.mxu0 %v2150
  %2714 = vmatprep.subr.bf16.mxu0 %v2155
  %2715 = vmatpush1.bf16.msra.mxu0 %v2154
  %2716 = vmatprep.subr.bf16.mxu0 %v2159
  %2717 = vmatpush1.bf16.msra.mxu0 %v2158
  %2718 = vmatprep.subr.bf16.mxu0 %v2163
  %2719 = vmatpush1.bf16.msra.mxu0 %v2162
  %2720 = vmatprep.subr.bf16.mxu0 0
  %2721 = vmatpush1.bf16.msra.mxu0 0
  %2722 = vmatprep.subr.bf16.mxu0 0
  %2723 = vmatpush1.bf16.msra.mxu0 0
  %2724 = vmatprep.subr.bf16.mxu0 0
  %2725 = vmatpush1.bf16.msra.mxu0 0
  %2726 = vmatprep.subr.bf16.mxu0 0
  %2727 = vmatpush1.bf16.msra.mxu0 0
  %2728 = vmatprep.subr.bf16.mxu0 0
  %2729 = vmatpush1.bf16.msra.mxu0 0
  %2730 = vmatprep.subr.bf16.mxu0 0
  %2731 = vmatpush1.bf16.msra.mxu0 0
  %2732 = vmatprep.subr.bf16.mxu0 0
  %2733 = vmatpush1.bf16.msra.mxu0 0
  %2734 = vmatprep.subr.bf16.mxu0 0
  %2735 = vmatpush1.bf16.msra.mxu0 0
  %2736 = vmatprep.mubr.bf16.mxu0 0
  %2737 = vmatmul.mubr.bf16.gmra.mrb[0].mxu0 %v2662
  %v2738 = vpop.f32.mrb[0].mxu0
  %v2739 = vadd.f32 0.0, %v2738
  %v2740 = vpop.f32.mrb[0].mxu0
  %v2741 = vadd.f32 0.0, %v2740
  %v2742 = vpop.f32.mrb[0].mxu0
  %v2743 = vpop.f32.mrb[0].mxu0
  %2744 = vdwg.mxu0
  %v2745 = vadd.f32 %v2658, %v2698
  %v2746 = vadd.f32 %v2659, %v2700
  %v2747 = vadd.f32 %v2660, %v2739
  %v2748 = vadd.f32 %v2661, %v2741
  %v2749 = vxor.u32 %v2745, 2147483648
  %v2750 = vxor.u32 %v2746, 2147483648
  %v2751 = vxor.u32 %v2747, 2147483648
  %v2752 = vmul.f32 %v2749, 1.442695
  %v2753 = vpow.pop %v2752
  %v2754 = vmul.f32 %v2750, 1.442695
  %v2755 = vpow.pop %v2754
  %v2756 = vmul.f32 %v2751, 1.442695
  %v2757 = vpow.pop %v2756
  %v2758 = vadd.f32 %v2753, 1.0
  %v2759 = vadd.f32 %v2755, 1.0
  %v2760 = vadd.f32 %v2757, 1.0
  %v2761 = vrcp.pop %v2758
  %v2762 = vmul.f32 1.0, %v2761
  %v2763 = vrcp.pop %v2759
  %v2764 = vmul.f32 1.0, %v2763
  %v2765 = vrcp.pop %v2760
  %v2766 = vmul.f32 1.0, %v2765
  %v2767 = vtanh.pop %v2748
  %v2768 = vmul.f32 %v2764, %v2653
  %v2769 = vmul.f32 %v2762, %v2767
  %v2770 = vadd.f32 %v2768, %v2769
  %v2771 = vtanh.pop %v2770
  %v2772 = vmul.f32 %v2766, %v2771
  %s2773 = scalar_lea.vmem [#allocation3], 32
  %2774 = vst [vmem:[%s2773] sm:$0xff] %v2772
  %v2775 = vld [vmem:[%s1232] sm:$0xff]
  %v2776 = vld [vmem:[%s1232 + $0x8] sm:$0xff]
  %v2777 = vld [vmem:[%s1232 + $0x10] sm:$0xff]
  %v2778 = vld [vmem:[%s1232 + $0x18] sm:$0xff]
  %v2779 = vpack.c.bf16 %v2772, %v2772
  %2780 = vmatprep.subr.bf16.mxu0 %v2133
  %2781 = vmatpush1.bf16.msra.mxu0 %v2132
  %2782 = vmatprep.subr.bf16.mxu0 %v2137
  %2783 = vmatpush1.bf16.msra.mxu0 %v2136
  %2784 = vmatprep.subr.bf16.mxu0 %v2141
  %2785 = vmatpush1.bf16.msra.mxu0 %v2140
  %2786 = vmatprep.subr.bf16.mxu0 %v2145
  %2787 = vmatpush1.bf16.msra.mxu0 %v2144
  %2788 = vmatprep.subr.bf16.mxu0 %v2149
  %2789 = vmatpush1.bf16.msra.mxu0 %v2148
  %2790 = vmatprep.subr.bf16.mxu0 %v2153
  %2791 = vmatpush1.bf16.msra.mxu0 %v2152
  %2792 = vmatprep.subr.bf16.mxu0 %v2157
  %2793 = vmatpush1.bf16.msra.mxu0 %v2156
  %2794 = vmatprep.subr.bf16.mxu0 %v2161
  %2795 = vmatpush1.bf16.msra.mxu0 %v2160
  %2796 = vmatprep.subr.bf16.mxu0 0
  %2797 = vmatpush1.bf16.msra.mxu0 0
  %2798 = vmatprep.subr.bf16.mxu0 0
  %2799 = vmatpush1.bf16.msra.mxu0 0
  %2800 = vmatprep.subr.bf16.mxu0 0
  %2801 = vmatpush1.bf16.msra.mxu0 0
  %2802 = vmatprep.subr.bf16.mxu0 0
  %2803 = vmatpush1.bf16.msra.mxu0 0
  %2804 = vmatprep.subr.bf16.mxu0 0
  %2805 = vmatpush1.bf16.msra.mxu0 0
  %2806 = vmatprep.subr.bf16.mxu0 0
  %2807 = vmatpush1.bf16.msra.mxu0 0
  %2808 = vmatprep.subr.bf16.mxu0 0
  %2809 = vmatpush1.bf16.msra.mxu0 0
  %2810 = vmatprep.subr.bf16.mxu0 0
  %2811 = vmatpush1.bf16.msra.mxu0 0
  %2812 = vmatprep.mubr.bf16.mxu0 0
  %2813 = vmatmul.mubr.bf16.gmra.mrb[0].mxu0 %v2779
  %v2814 = vpop.f32.mrb[0].mxu0
  %v2815 = vadd.f32 0.0, %v2814
  %v2816 = vpop.f32.mrb[0].mxu0
  %v2817 = vadd.f32 0.0, %v2816
  %v2818 = vpop.f32.mrb[0].mxu0
  %v2819 = vpop.f32.mrb[0].mxu0
  %2820 = vdwg.mxu0
  %2821 = vmatprep.subr.bf16.mxu0 %v2135
  %2822 = vmatpush1.bf16.msra.mxu0 %v2134
  %2823 = vmatprep.subr.bf16.mxu0 %v2139
  %2824 = vmatpush1.bf16.msra.mxu0 %v2138
  %2825 = vmatprep.subr.bf16.mxu0 %v2143
  %2826 = vmatpush1.bf16.msra.mxu0 %v2142
  %2827 = vmatprep.subr.bf16.mxu0 %v2147
  %2828 = vmatpush1.bf16.msra.mxu0 %v2146
  %2829 = vmatprep.subr.bf16.mxu0 %v2151
  %2830 = vmatpush1.bf16.msra.mxu0 %v2150
  %2831 = vmatprep.subr.bf16.mxu0 %v2155
  %2832 = vmatpush1.bf16.msra.mxu0 %v2154
  %2833 = vmatprep.subr.bf16.mxu0 %v2159
  %2834 = vmatpush1.bf16.msra.mxu0 %v2158
  %2835 = vmatprep.subr.bf16.mxu0 %v2163
  %2836 = vmatpush1.bf16.msra.mxu0 %v2162
  %2837 = vmatprep.subr.bf16.mxu0 0
  %2838 = vmatpush1.bf16.msra.mxu0 0
  %2839 = vmatprep.subr.bf16.mxu0 0
  %2840 = vmatpush1.bf16.msra.mxu0 0
  %2841 = vmatprep.subr.bf16.mxu0 0
  %2842 = vmatpush1.bf16.msra.mxu0 0
  %2843 = vmatprep.subr.bf16.mxu0 0
  %2844 = vmatpush1.bf16.msra.mxu0 0
  %2845 = vmatprep.subr.bf16.mxu0 0
  %2846 = vmatpush1.bf16.msra.mxu0 0
  %2847 = vmatprep.subr.bf16.mxu0 0
  %2848 = vmatpush1.bf16.msra.mxu0 0
  %2849 = vmatprep.subr.bf16.mxu0 0
  %2850 = vmatpush1.bf16.msra.mxu0 0
  %2851 = vmatprep.subr.bf16.mxu0 0
  %2852 = vmatpush1.bf16.msra.mxu0 0
  %2853 = vmatprep.mubr.bf16.mxu0 0
  %2854 = vmatmul.mubr.bf16.gmra.mrb[0].mxu0 %v2779
  %v2855 = vpop.f32.mrb[0].mxu0
  %v2856 = vadd.f32 0.0, %v2855
  %v2857 = vpop.f32.mrb[0].mxu0
  %v2858 = vadd.f32 0.0, %v2857
  %v2859 = vpop.f32.mrb[0].mxu0
  %v2860 = vpop.f32.mrb[0].mxu0
  %2861 = vdwg.mxu0
  %v2862 = vadd.f32 %v2775, %v2815
  %v2863 = vadd.f32 %v2776, %v2817
  %v2864 = vadd.f32 %v2777, %v2856
  %v2865 = vadd.f32 %v2778, %v2858
  %v2866 = vxor.u32 %v2862, 2147483648
  %v2867 = vxor.u32 %v2863, 2147483648
  %v2868 = vxor.u32 %v2864, 2147483648
  %v2869 = vmul.f32 %v2866, 1.442695
  %v2870 = vpow.pop %v2869
  %v2871 = vmul.f32 %v2867, 1.442695
  %v2872 = vpow.pop %v2871
  %v2873 = vmul.f32 %v2868, 1.442695
  %v2874 = vpow.pop %v2873
  %v2875 = vadd.f32 %v2870, 1.0
  %v2876 = vadd.f32 %v2872, 1.0
  %v2877 = vadd.f32 %v2874, 1.0
  %v2878 = vrcp.pop %v2875
  %v2879 = vmul.f32 1.0, %v2878
  %v2880 = vrcp.pop %v2876
  %v2881 = vmul.f32 1.0, %v2880
  %v2882 = vrcp.pop %v2877
  %v2883 = vmul.f32 1.0, %v2882
  %v2884 = vtanh.pop %v2865
  %v2885 = vmul.f32 %v2881, %v2770
  %v2886 = vmul.f32 %v2879, %v2884
  %v2887 = vadd.f32 %v2885, %v2886
  %v2888 = vtanh.pop %v2887
  %v2889 = vmul.f32 %v2883, %v2888
  %s2890 = scalar_lea.vmem [#allocation3], 40
  %2891 = vst [vmem:[%s2890] sm:$0xff] %v2889
  %v2892 = vld [vmem:[%s1352] sm:$0xff]
  %v2893 = vld [vmem:[%s1352 + $0x8] sm:$0xff]
  %v2894 = vld [vmem:[%s1352 + $0x10] sm:$0xff]
  %v2895 = vld [vmem:[%s1352 + $0x18] sm:$0xff]
  %v2896 = vpack.c.bf16 %v2889, %v2889
  %2897 = vmatprep.subr.bf16.mxu0 %v2133
  %2898 = vmatpush1.bf16.msra.mxu0 %v2132
  %2899 = vmatprep.subr.bf16.mxu0 %v2137
  %2900 = vmatpush1.bf16.msra.mxu0 %v2136
  %2901 = vmatprep.subr.bf16.mxu0 %v2141
  %2902 = vmatpush1.bf16.msra.mxu0 %v2140
  %2903 = vmatprep.subr.bf16.mxu0 %v2145
  %2904 = vmatpush1.bf16.msra.mxu0 %v2144
  %2905 = vmatprep.subr.bf16.mxu0 %v2149
  %2906 = vmatpush1.bf16.msra.mxu0 %v2148
  %2907 = vmatprep.subr.bf16.mxu0 %v2153
  %2908 = vmatpush1.bf16.msra.mxu0 %v2152
  %2909 = vmatprep.subr.bf16.mxu0 %v2157
  %2910 = vmatpush1.bf16.msra.mxu0 %v2156
  %2911 = vmatprep.subr.bf16.mxu0 %v2161
  %2912 = vmatpush1.bf16.msra.mxu0 %v2160
  %2913 = vmatprep.subr.bf16.mxu0 0
  %2914 = vmatpush1.bf16.msra.mxu0 0
  %2915 = vmatprep.subr.bf16.mxu0 0
  %2916 = vmatpush1.bf16.msra.mxu0 0
  %2917 = vmatprep.subr.bf16.mxu0 0
  %2918 = vmatpush1.bf16.msra.mxu0 0
  %2919 = vmatprep.subr.bf16.mxu0 0
  %2920 = vmatpush1.bf16.msra.mxu0 0
  %2921 = vmatprep.subr.bf16.mxu0 0
  %2922 = vmatpush1.bf16.msra.mxu0 0
  %2923 = vmatprep.subr.bf16.mxu0 0
  %2924 = vmatpush1.bf16.msra.mxu0 0
  %2925 = vmatprep.subr.bf16.mxu0 0
  %2926 = vmatpush1.bf16.msra.mxu0 0
  %2927 = vmatprep.subr.bf16.mxu0 0
  %2928 = vmatpush1.bf16.msra.mxu0 0
  %2929 = vmatprep.mubr.bf16.mxu0 0
  %2930 = vmatmul.mubr.bf16.gmra.mrb[0].mxu0 %v2896
  %v2931 = vpop.f32.mrb[0].mxu0
  %v2932 = vadd.f32 0.0, %v2931
  %v2933 = vpop.f32.mrb[0].mxu0
  %v2934 = vadd.f32 0.0, %v2933
  %v2935 = vpop.f32.mrb[0].mxu0
  %v2936 = vpop.f32.mrb[0].mxu0
  %2937 = vdwg.mxu0
  %2938 = vmatprep.subr.bf16.mxu0 %v2135
  %2939 = vmatpush1.bf16.msra.mxu0 %v2134
  %2940 = vmatprep.subr.bf16.mxu0 %v2139
  %2941 = vmatpush1.bf16.msra.mxu0 %v2138
  %2942 = vmatprep.subr.bf16.mxu0 %v2143
  %2943 = vmatpush1.bf16.msra.mxu0 %v2142
  %2944 = vmatprep.subr.bf16.mxu0 %v2147
  %2945 = vmatpush1.bf16.msra.mxu0 %v2146
  %2946 = vmatprep.subr.bf16.mxu0 %v2151
  %2947 = vmatpush1.bf16.msra.mxu0 %v2150
  %2948 = vmatprep.subr.bf16.mxu0 %v2155
  %2949 = vmatpush1.bf16.msra.mxu0 %v2154
  %2950 = vmatprep.subr.bf16.mxu0 %v2159
  %2951 = vmatpush1.bf16.msra.mxu0 %v2158
  %2952 = vmatprep.subr.bf16.mxu0 %v2163
  %2953 = vmatpush1.bf16.msra.mxu0 %v2162
  %2954 = vmatprep.subr.bf16.mxu0 0
  %2955 = vmatpush1.bf16.msra.mxu0 0
  %2956 = vmatprep.subr.bf16.mxu0 0
  %2957 = vmatpush1.bf16.msra.mxu0 0
  %2958 = vmatprep.subr.bf16.mxu0 0
  %2959 = vmatpush1.bf16.msra.mxu0 0
  %2960 = vmatprep.subr.bf16.mxu0 0
  %2961 = vmatpush1.bf16.msra.mxu0 0
  %2962 = vmatprep.subr.bf16.mxu0 0
  %2963 = vmatpush1.bf16.msra.mxu0 0
  %2964 = vmatprep.subr.bf16.mxu0 0
  %2965 = vmatpush1.bf16.msra.mxu0 0
  %2966 = vmatprep.subr.bf16.mxu0 0
  %2967 = vmatpush1.bf16.msra.mxu0 0
  %2968 = vmatprep.subr.bf16.mxu0 0
  %2969 = vmatpush1.bf16.msra.mxu0 0
  %2970 = vmatprep.mubr.bf16.mxu0 0
  %2971 = vmatmul.mubr.bf16.gmra.mrb[0].mxu0 %v2896
  %v2972 = vpop.f32.mrb[0].mxu0
  %v2973 = vadd.f32 0.0, %v2972
  %v2974 = vpop.f32.mrb[0].mxu0
  %v2975 = vadd.f32 0.0, %v2974
  %v2976 = vpop.f32.mrb[0].mxu0
  %v2977 = vpop.f32.mrb[0].mxu0
  %2978 = vdwg.mxu0
  %v2979 = vadd.f32 %v2892, %v2932
  %v2980 = vadd.f32 %v2893, %v2934
  %v2981 = vadd.f32 %v2894, %v2973
  %v2982 = vadd.f32 %v2895, %v2975
  %v2983 = vxor.u32 %v2979, 2147483648
  %v2984 = vxor.u32 %v2980, 2147483648
  %v2985 = vxor.u32 %v2981, 2147483648
  %v2986 = vmul.f32 %v2983, 1.442695
  %v2987 = vpow.pop %v2986
  %v2988 = vmul.f32 %v2984, 1.442695
  %v2989 = vpow.pop %v2988
  %v2990 = vmul.f32 %v2985, 1.442695
  %v2991 = vpow.pop %v2990
  %v2992 = vadd.f32 %v2987, 1.0
  %v2993 = vadd.f32 %v2989, 1.0
  %v2994 = vadd.f32 %v2991, 1.0
  %v2995 = vrcp.pop %v2992
  %v2996 = vmul.f32 1.0, %v2995
  %v2997 = vrcp.pop %v2993
  %v2998 = vmul.f32 1.0, %v2997
  %v2999 = vrcp.pop %v2994
  %v3000 = vmul.f32 1.0, %v2999
  %v3001 = vtanh.pop %v2982
  %v3002 = vmul.f32 %v2998, %v2887
  %v3003 = vmul.f32 %v2996, %v3001
  %v3004 = vadd.f32 %v3002, %v3003
  %v3005 = vtanh.pop %v3004
  %v3006 = vmul.f32 %v3000, %v3005
  %s3007 = scalar_lea.vmem [#allocation3], 48
  %3008 = vst [vmem:[%s3007] sm:$0xff] %v3006
  %v3009 = vld [vmem:[%s1472] sm:$0xff]
  %v3010 = vld [vmem:[%s1472 + $0x8] sm:$0xff]
  %v3011 = vld [vmem:[%s1472 + $0x10] sm:$0xff]
  %v3012 = vld [vmem:[%s1472 + $0x18] sm:$0xff]
  %v3013 = vpack.c.bf16 %v3006, %v3006
  %3014 = vmatprep.subr.bf16.mxu0 %v2133
  %3015 = vmatpush1.bf16.msra.mxu0 %v2132
  %3016 = vmatprep.subr.bf16.mxu0 %v2137
  %3017 = vmatpush1.bf16.msra.mxu0 %v2136
  %3018 = vmatprep.subr.bf16.mxu0 %v2141
  %3019 = vmatpush1.bf16.msra.mxu0 %v2140
  %3020 = vmatprep.subr.bf16.mxu0 %v2145
  %3021 = vmatpush1.bf16.msra.mxu0 %v2144
  %3022 = vmatprep.subr.bf16.mxu0 %v2149
  %3023 = vmatpush1.bf16.msra.mxu0 %v2148
  %3024 = vmatprep.subr.bf16.mxu0 %v2153
  %3025 = vmatpush1.bf16.msra.mxu0 %v2152
  %3026 = vmatprep.subr.bf16.mxu0 %v2157
  %3027 = vmatpush1.bf16.msra.mxu0 %v2156
  %3028 = vmatprep.subr.bf16.mxu0 %v2161
  %3029 = vmatpush1.bf16.msra.mxu0 %v2160
  %3030 = vmatprep.subr.bf16.mxu0 0
  %3031 = vmatpush1.bf16.msra.mxu0 0
  %3032 = vmatprep.subr.bf16.mxu0 0
  %3033 = vmatpush1.bf16.msra.mxu0 0
  %3034 = vmatprep.subr.bf16.mxu0 0
  %3035 = vmatpush1.bf16.msra.mxu0 0
  %3036 = vmatprep.subr.bf16.mxu0 0
  %3037 = vmatpush1.bf16.msra.mxu0 0
  %3038 = vmatprep.subr.bf16.mxu0 0
  %3039 = vmatpush1.bf16.msra.mxu0 0
  %3040 = vmatprep.subr.bf16.mxu0 0
  %3041 = vmatpush1.bf16.msra.mxu0 0
  %3042 = vmatprep.subr.bf16.mxu0 0
  %3043 = vmatpush1.bf16.msra.mxu0 0
  %3044 = vmatprep.subr.bf16.mxu0 0
  %3045 = vmatpush1.bf16.msra.mxu0 0
  %3046 = vmatprep.mubr.bf16.mxu0 0
  %3047 = vmatmul.mubr.bf16.gmra.mrb[0].mxu0 %v3013
  %v3048 = vpop.f32.mrb[0].mxu0
  %v3049 = vadd.f32 0.0, %v3048
  %v3050 = vpop.f32.mrb[0].mxu0
  %v3051 = vadd.f32 0.0, %v3050
  %v3052 = vpop.f32.mrb[0].mxu0
  %v3053 = vpop.f32.mrb[0].mxu0
  %3054 = vdwg.mxu0
  %3055 = vmatprep.subr.bf16.mxu0 %v2135
  %3056 = vmatpush1.bf16.msra.mxu0 %v2134
  %3057 = vmatprep.subr.bf16.mxu0 %v2139
  %3058 = vmatpush1.bf16.msra.mxu0 %v2138
  %3059 = vmatprep.subr.bf16.mxu0 %v2143
  %3060 = vmatpush1.bf16.msra.mxu0 %v2142
  %3061 = vmatprep.subr.bf16.mxu0 %v2147
  %3062 = vmatpush1.bf16.msra.mxu0 %v2146
  %3063 = vmatprep.subr.bf16.mxu0 %v2151
  %3064 = vmatpush1.bf16.msra.mxu0 %v2150
  %3065 = vmatprep.subr.bf16.mxu0 %v2155
  %3066 = vmatpush1.bf16.msra.mxu0 %v2154
  %3067 = vmatprep.subr.bf16.mxu0 %v2159
  %3068 = vmatpush1.bf16.msra.mxu0 %v2158
  %3069 = vmatprep.subr.bf16.mxu0 %v2163
  %3070 = vmatpush1.bf16.msra.mxu0 %v2162
  %3071 = vmatprep.subr.bf16.mxu0 0
  %3072 = vmatpush1.bf16.msra.mxu0 0
  %3073 = vmatprep.subr.bf16.mxu0 0
  %3074 = vmatpush1.bf16.msra.mxu0 0
  %3075 = vmatprep.subr.bf16.mxu0 0
  %3076 = vmatpush1.bf16.msra.mxu0 0
  %3077 = vmatprep.subr.bf16.mxu0 0
  %3078 = vmatpush1.bf16.msra.mxu0 0
  %3079 = vmatprep.subr.bf16.mxu0 0
  %3080 = vmatpush1.bf16.msra.mxu0 0
  %3081 = vmatprep.subr.bf16.mxu0 0
  %3082 = vmatpush1.bf16.msra.mxu0 0
  %3083 = vmatprep.subr.bf16.mxu0 0
  %3084 = vmatpush1.bf16.msra.mxu0 0
  %3085 = vmatprep.subr.bf16.mxu0 0
  %3086 = vmatpush1.bf16.msra.mxu0 0
  %3087 = vmatprep.mubr.bf16.mxu0 0
  %3088 = vmatmul.mubr.bf16.gmra.mrb[0].mxu0 %v3013
  %v3089 = vpop.f32.mrb[0].mxu0
  %v3090 = vadd.f32 0.0, %v3089
  %v3091 = vpop.f32.mrb[0].mxu0
  %v3092 = vadd.f32 0.0, %v3091
  %v3093 = vpop.f32.mrb[0].mxu0
  %v3094 = vpop.f32.mrb[0].mxu0
  %3095 = vdwg.mxu0
  %v3096 = vadd.f32 %v3009, %v3049
  %v3097 = vadd.f32 %v3010, %v3051
  %v3098 = vadd.f32 %v3011, %v3090
  %v3099 = vadd.f32 %v3012, %v3092
  %v3100 = vxor.u32 %v3096, 2147483648
  %v3101 = vxor.u32 %v3097, 2147483648
  %v3102 = vxor.u32 %v3098, 2147483648
  %v3103 = vmul.f32 %v3100, 1.442695
  %v3104 = vpow.pop %v3103
  %v3105 = vmul.f32 %v3101, 1.442695
  %v3106 = vpow.pop %v3105
  %v3107 = vmul.f32 %v3102, 1.442695
  %v3108 = vpow.pop %v3107
  %v3109 = vadd.f32 %v3104, 1.0
  %v3110 = vadd.f32 %v3106, 1.0
  %v3111 = vadd.f32 %v3108, 1.0
  %v3112 = vrcp.pop %v3109
  %v3113 = vmul.f32 1.0, %v3112
  %v3114 = vrcp.pop %v3110
  %v3115 = vmul.f32 1.0, %v3114
  %v3116 = vrcp.pop %v3111
  %v3117 = vmul.f32 1.0, %v3116
  %v3118 = vtanh.pop %v3099
  %v3119 = vmul.f32 %v3115, %v3004
  %v3120 = vmul.f32 %v3113, %v3118
  %v3121 = vadd.f32 %v3119, %v3120
  %v3122 = vtanh.pop %v3121
  %v3123 = vmul.f32 %v3117, %v3122
  %s3124 = scalar_lea.vmem [#allocation3], 56
  %3125 = vst [vmem:[%s3124] sm:$0xff] %v3123
  %s3126 = scalar_lea.vmem [#allocation5], 16
  %3127 = vst [vmem:[%s3126] sm:$0xff] %v3123
  %s3128 = scalar_lea.vmem [#allocation5], 24
  %3129 = vst [vmem:[%s3128] sm:$0xff] %v3121
  %v3130 = vld [vmem:[#allocation5] sm:$0xff]
  %v3131 = vld [vmem:[%s1591] sm:$0xff]
  %v3132 = vld [vmem:[%s5] sm:$0xff]
  %v3133 = vld [vmem:[%s5 + $0x8] sm:$0xff]
  %v3134 = vld [vmem:[%s5 + $0x10] sm:$0xff]
  %v3135 = vld [vmem:[%s5 + $0x18] sm:$0xff]
  %v3136 = vld [vmem:[%s5 + $0x20] sm:$0xff]
  %v3137 = vld [vmem:[%s5 + $0x28] sm:$0xff]
  %v3138 = vld [vmem:[%s5 + $0x30] sm:$0xff]
  %v3139 = vld [vmem:[%s5 + $0x38] sm:$0xff]
  %v3140 = vld [vmem:[%s5 + $0x40] sm:$0xff]
  %v3141 = vld [vmem:[%s5 + $0x48] sm:$0xff]
  %v3142 = vld [vmem:[%s5 + $0x50] sm:$0xff]
  %v3143 = vld [vmem:[%s5 + $0x58] sm:$0xff]
  %v3144 = vld [vmem:[%s5 + $0x60] sm:$0xff]
  %v3145 = vld [vmem:[%s5 + $0x68] sm:$0xff]
  %v3146 = vld [vmem:[%s5 + $0x70] sm:$0xff]
  %v3147 = vld [vmem:[%s5 + $0x78] sm:$0xff]
  %v3148 = vld [vmem:[%s5 + $0x80] sm:$0xff]
  %v3149 = vld [vmem:[%s5 + $0x88] sm:$0xff]
  %v3150 = vld [vmem:[%s5 + $0x90] sm:$0xff]
  %v3151 = vld [vmem:[%s5 + $0x98] sm:$0xff]
  %v3152 = vld [vmem:[%s5 + $0xa0] sm:$0xff]
  %v3153 = vld [vmem:[%s5 + $0xa8] sm:$0xff]
  %v3154 = vld [vmem:[%s5 + $0xb0] sm:$0xff]
  %v3155 = vld [vmem:[%s5 + $0xb8] sm:$0xff]
  %v3156 = vld [vmem:[%s5 + $0xc0] sm:$0xff]
  %v3157 = vld [vmem:[%s5 + $0xc8] sm:$0xff]
  %v3158 = vld [vmem:[%s5 + $0xd0] sm:$0xff]
  %v3159 = vld [vmem:[%s5 + $0xd8] sm:$0xff]
  %v3160 = vld [vmem:[%s5 + $0xe0] sm:$0xff]
  %v3161 = vld [vmem:[%s5 + $0xe8] sm:$0xff]
  %v3162 = vld [vmem:[%s5 + $0xf0] sm:$0xff]
  %v3163 = vld [vmem:[%s5 + $0xf8] sm:$0xff]
  %v3164 = vld [vmem:[%s6] sm:$0xff]
  %v3165 = vld [vmem:[%s6 + $0x8] sm:$0xff]
  %v3166 = vld [vmem:[%s6 + $0x10] sm:$0xff]
  %v3167 = vld [vmem:[%s6 + $0x18] sm:$0xff]
  %v3168 = vld [vmem:[%s6 + $0x20] sm:$0xff]
  %v3169 = vld [vmem:[%s6 + $0x28] sm:$0xff]
  %v3170 = vld [vmem:[%s6 + $0x30] sm:$0xff]
  %v3171 = vld [vmem:[%s6 + $0x38] sm:$0xff]
  %v3172 = vld [vmem:[%s6 + $0x40] sm:$0xff]
  %v3173 = vld [vmem:[%s6 + $0x48] sm:$0xff]
  %v3174 = vld [vmem:[%s6 + $0x50] sm:$0xff]
  %v3175 = vld [vmem:[%s6 + $0x58] sm:$0xff]
  %v3176 = vld [vmem:[%s6 + $0x60] sm:$0xff]
  %v3177 = vld [vmem:[%s6 + $0x68] sm:$0xff]
  %v3178 = vld [vmem:[%s6 + $0x70] sm:$0xff]
  %v3179 = vld [vmem:[%s6 + $0x78] sm:$0xff]
  %v3180 = vld [vmem:[%s6 + $0x80] sm:$0xff]
  %v3181 = vld [vmem:[%s6 + $0x88] sm:$0xff]
  %v3182 = vld [vmem:[%s6 + $0x90] sm:$0xff]
  %v3183 = vld [vmem:[%s6 + $0x98] sm:$0xff]
  %v3184 = vld [vmem:[%s6 + $0xa0] sm:$0xff]
  %v3185 = vld [vmem:[%s6 + $0xa8] sm:$0xff]
  %v3186 = vld [vmem:[%s6 + $0xb0] sm:$0xff]
  %v3187 = vld [vmem:[%s6 + $0xb8] sm:$0xff]
  %v3188 = vld [vmem:[%s6 + $0xc0] sm:$0xff]
  %v3189 = vld [vmem:[%s6 + $0xc8] sm:$0xff]
  %v3190 = vld [vmem:[%s6 + $0xd0] sm:$0xff]
  %v3191 = vld [vmem:[%s6 + $0xd8] sm:$0xff]
  %v3192 = vld [vmem:[%s6 + $0xe0] sm:$0xff]
  %v3193 = vld [vmem:[%s6 + $0xe8] sm:$0xff]
  %v3194 = vld [vmem:[%s6 + $0xf0] sm:$0xff]
  %v3195 = vld [vmem:[%s6 + $0xf8] sm:$0xff]
  %v3196 = vld [vmem:[%s7] sm:$0xf]
  %v3197 = vld [vmem:[%s1] sm:$0xff]
  %v3198 = vld [vmem:[%s1 + $0x8] sm:$0xff]
  %v3199 = vld [vmem:[%s1 + $0x10] sm:$0xff]
  %v3200 = vld [vmem:[%s1 + $0x18] sm:$0xff]
  %v3201 = vld [vmem:[%s1 + $0x20] sm:$0xff]
  %v3202 = vld [vmem:[%s1 + $0x28] sm:$0xff]
  %v3203 = vpack.c.bf16 %v3198, %v3197
  %v3204 = vpack.c.bf16 %v3200, %v3199
  %v3205 = vpack.c.bf16 %v3202, %v3201
  %v3207 = vlaneseq
  %v3208 = vshrl.u32 %v3207, 7
  %v3209 = vsub.s32 0, %v3208
  %v3210 = vrot.slane %v3196, %v3209
  %v3211 = vlaneseq
  %v3212 = vshrl.u32 %v3211, 7
  %v3213 = vsub.s32 1, %v3212
  %v3214 = vrot.slane %v3196, %v3213
  %v3215 = vlaneseq
  %v3216 = vshrl.u32 %v3215, 7
  %v3217 = vsub.s32 2, %v3216
  %v3218 = vrot.slane %v3196, %v3217
  %v3219 = vlaneseq
  %v3220 = vshrl.u32 %v3219, 7
  %v3221 = vsub.s32 3, %v3220
  %v3222 = vrot.slane %v3196, %v3221
  %v3259 = vunpack.c.l.b16 %v3132
  %v3260 = vunpack.c.h.b16 %v3132
  %v3261 = vunpack.c.l.b16 %v3133
  %v3262 = vunpack.c.h.b16 %v3133
  %v3263 = vunpack.c.l.b16 %v3134
  %v3264 = vunpack.c.h.b16 %v3134
  %v3265 = vunpack.c.l.b16 %v3135
  %v3266 = vunpack.c.h.b16 %v3135
  %v3267 = vunpack.c.l.b16 %v3136
  %v3268 = vunpack.c.h.b16 %v3136
  %v3269 = vunpack.c.l.b16 %v3137
  %v3270 = vunpack.c.h.b16 %v3137
  %v3271 = vunpack.c.l.b16 %v3138
  %v3272 = vunpack.c.h.b16 %v3138
  %v3273 = vunpack.c.l.b16 %v3139
  %v3274 = vunpack.c.h.b16 %v3139
  %v3275 = vunpack.c.l.b16 %v3140
  %v3276 = vunpack.c.h.b16 %v3140
  %v3277 = vunpack.c.l.b16 %v3141
  %v3278 = vunpack.c.h.b16 %v3141
  %v3279 = vunpack.c.l.b16 %v3142
  %v3280 = vunpack.c.h.b16 %v3142
  %v3281 = vunpack.c.l.b16 %v3143
  %v3282 = vunpack.c.h.b16 %v3143
  %v3283 = vunpack.c.l.b16 %v3144
  %v3284 = vunpack.c.h.b16 %v3144
  %v3285 = vunpack.c.l.b16 %v3145
  %v3286 = vunpack.c.h.b16 %v3145
  %v3287 = vunpack.c.l.b16 %v3146
  %v3288 = vunpack.c.h.b16 %v3146
  %v3289 = vunpack.c.l.b16 %v3147
  %v3290 = vunpack.c.h.b16 %v3147
  %v3291 = vunpack.c.l.b16 %v3148
  %v3292 = vunpack.c.h.b16 %v3148
  %v3293 = vunpack.c.l.b16 %v3149
  %v3294 = vunpack.c.h.b16 %v3149
  %v3295 = vunpack.c.l.b16 %v3150
  %v3296 = vunpack.c.h.b16 %v3150
  %v3297 = vunpack.c.l.b16 %v3151
  %v3298 = vunpack.c.h.b16 %v3151
  %v3299 = vunpack.c.l.b16 %v3152
  %v3300 = vunpack.c.h.b16 %v3152
  %v3301 = vunpack.c.l.b16 %v3153
  %v3302 = vunpack.c.h.b16 %v3153
  %v3303 = vunpack.c.l.b16 %v3154
  %v3304 = vunpack.c.h.b16 %v3154
  %v3305 = vunpack.c.l.b16 %v3155
  %v3306 = vunpack.c.h.b16 %v3155
  %v3307 = vunpack.c.l.b16 %v3156
  %v3308 = vunpack.c.h.b16 %v3156
  %v3309 = vunpack.c.l.b16 %v3157
  %v3310 = vunpack.c.h.b16 %v3157
  %v3311 = vunpack.c.l.b16 %v3158
  %v3312 = vunpack.c.h.b16 %v3158
  %v3313 = vunpack.c.l.b16 %v3159
  %v3314 = vunpack.c.h.b16 %v3159
  %v3315 = vunpack.c.l.b16 %v3160
  %v3316 = vunpack.c.h.b16 %v3160
  %v3317 = vunpack.c.l.b16 %v3161
  %v3318 = vunpack.c.h.b16 %v3161
  %v3319 = vunpack.c.l.b16 %v3162
  %v3320 = vunpack.c.h.b16 %v3162
  %v3321 = vunpack.c.l.b16 %v3163
  %v3322 = vunpack.c.h.b16 %v3163
  %v3323 = vpack.c.b16 %v3263, %v3259
  %v3324 = vpack.c.b16 %v3264, %v3260
  %v3325 = vpack.c.b16 %v3265, %v3261
  %v3326 = vpack.c.b16 %v3266, %v3262
  %v3327 = vpack.c.b16 %v3271, %v3267
  %v3328 = vpack.c.b16 %v3272, %v3268
  %v3329 = vpack.c.b16 %v3273, %v3269
  %v3330 = vpack.c.b16 %v3274, %v3270
  %v3331 = vpack.c.b16 %v3279, %v3275
  %v3332 = vpack.c.b16 %v3280, %v3276
  %v3333 = vpack.c.b16 %v3281, %v3277
  %v3334 = vpack.c.b16 %v3282, %v3278
  %v3335 = vpack.c.b16 %v3287, %v3283
  %v3336 = vpack.c.b16 %v3288, %v3284
  %v3337 = vpack.c.b16 %v3289, %v3285
  %v3338 = vpack.c.b16 %v3290, %v3286
  %v3339 = vpack.c.b16 %v3295, %v3291
  %v3340 = vpack.c.b16 %v3296, %v3292
  %v3341 = vpack.c.b16 %v3297, %v3293
  %v3342 = vpack.c.b16 %v3298, %v3294
  %v3343 = vpack.c.b16 %v3303, %v3299
  %v3344 = vpack.c.b16 %v3304, %v3300
  %v3345 = vpack.c.b16 %v3305, %v3301
  %v3346 = vpack.c.b16 %v3306, %v3302
  %v3347 = vpack.c.b16 %v3311, %v3307
  %v3348 = vpack.c.b16 %v3312, %v3308
  %v3349 = vpack.c.b16 %v3313, %v3309
  %v3350 = vpack.c.b16 %v3314, %v3310
  %v3351 = vpack.c.b16 %v3319, %v3315
  %v3352 = vpack.c.b16 %v3320, %v3316
  %v3353 = vpack.c.b16 %v3321, %v3317
  %v3354 = vpack.c.b16 %v3322, %v3318
  %3387 = vmatprep.subr.bf16.mxu0 %v3324
  %3388 = vmatpush1.bf16.msra.mxu0 %v3323
  %3389 = vmatprep.subr.bf16.mxu0 %v3328
  %3390 = vmatpush1.bf16.msra.mxu0 %v3327
  %3391 = vmatprep.subr.bf16.mxu0 %v3332
  %3392 = vmatpush1.bf16.msra.mxu0 %v3331
  %3393 = vmatprep.subr.bf16.mxu0 %v3336
  %3394 = vmatpush1.bf16.msra.mxu0 %v3335
  %3395 = vmatprep.subr.bf16.mxu0 %v3340
  %3396 = vmatpush1.bf16.msra.mxu0 %v3339
  %3397 = vmatprep.subr.bf16.mxu0 %v3344
  %3398 = vmatpush1.bf16.msra.mxu0 %v3343
  %3399 = vmatprep.subr.bf16.mxu0 %v3348
  %3400 = vmatpush1.bf16.msra.mxu0 %v3347
  %3401 = vmatprep.subr.bf16.mxu0 %v3352
  %3402 = vmatpush1.bf16.msra.mxu0 %v3351
  %3403 = vmatprep.subr.bf16.mxu0 0
  %3404 = vmatpush1.bf16.msra.mxu0 0
  %3405 = vmatprep.subr.bf16.mxu0 0
  %3406 = vmatpush1.bf16.msra.mxu0 0
  %3407 = vmatprep.subr.bf16.mxu0 0
  %3408 = vmatpush1.bf16.msra.mxu0 0
  %3409 = vmatprep.subr.bf16.mxu0 0
  %3410 = vmatpush1.bf16.msra.mxu0 0
  %3411 = vmatprep.subr.bf16.mxu0 0
  %3412 = vmatpush1.bf16.msra.mxu0 0
  %3413 = vmatprep.subr.bf16.mxu0 0
  %3414 = vmatpush1.bf16.msra.mxu0 0
  %3415 = vmatprep.subr.bf16.mxu0 0
  %3416 = vmatpush1.bf16.msra.mxu0 0
  %3417 = vmatprep.subr.bf16.mxu0 0
  %3418 = vmatpush1.bf16.msra.mxu0 0
  %3419 = vmatprep.mubr.bf16.mxu0 0
  %3420 = vmatmul.mubr.bf16.gmra.mrb[0].mxu0 %v3203
  %v3421 = vpop.f32.mrb[0].mxu0
  %v3422 = vadd.f32 %v3210, %v3421
  %v3423 = vpop.f32.mrb[0].mxu0
  %v3424 = vadd.f32 %v3214, %v3423
  %v3425 = vpop.f32.mrb[0].mxu0
  %v3426 = vadd.f32 %v3210, %v3425
  %v3427 = vpop.f32.mrb[0].mxu0
  %v3428 = vadd.f32 %v3214, %v3427
  %3429 = vmatprep.mubr.bf16.mxu0 0
  %3430 = vmatmul.mubr.bf16.gmra.mrb[0].mxu0 %v3204
  %v3431 = vpop.f32.mrb[0].mxu0
  %v3432 = vadd.f32 %v3210, %v3431
  %v3433 = vpop.f32.mrb[0].mxu0
  %v3434 = vadd.f32 %v3214, %v3433
  %v3435 = vpop.f32.mrb[0].mxu0
  %v3436 = vadd.f32 %v3210, %v3435
  %v3437 = vpop.f32.mrb[0].mxu0
  %v3438 = vadd.f32 %v3214, %v3437
  %3439 = vmatprep.mubr.bf16.mxu0 0
  %3440 = vmatmul.mubr.bf16.gmra.mrb[0].mxu0 %v3205
  %v3441 = vpop.f32.mrb[0].mxu0
  %v3442 = vadd.f32 %v3210, %v3441
  %v3443 = vpop.f32.mrb[0].mxu0
  %v3444 = vadd.f32 %v3214, %v3443
  %v3445 = vpop.f32.mrb[0].mxu0
  %v3446 = vadd.f32 %v3210, %v3445
  %v3447 = vpop.f32.mrb[0].mxu0
  %v3448 = vadd.f32 %v3214, %v3447
  %3449 = vdwg.mxu0
  %3450 = vmatprep.subr.bf16.mxu0 %v3326
  %3451 = vmatpush1.bf16.msra.mxu0 %v3325
  %3452 = vmatprep.subr.bf16.mxu0 %v3330
  %3453 = vmatpush1.bf16.msra.mxu0 %v3329
  %3454 = vmatprep.subr.bf16.mxu0 %v3334
  %3455 = vmatpush1.bf16.msra.mxu0 %v3333
  %3456 = vmatprep.subr.bf16.mxu0 %v3338
  %3457 = vmatpush1.bf16.msra.mxu0 %v3337
  %3458 = vmatprep.subr.bf16.mxu0 %v3342
  %3459 = vmatpush1.bf16.msra.mxu0 %v3341
  %3460 = vmatprep.subr.bf16.mxu0 %v3346
  %3461 = vmatpush1.bf16.msra.mxu0 %v3345
  %3462 = vmatprep.subr.bf16.mxu0 %v3350
  %3463 = vmatpush1.bf16.msra.mxu0 %v3349
  %3464 = vmatprep.subr.bf16.mxu0 %v3354
  %3465 = vmatpush1.bf16.msra.mxu0 %v3353
  %3466 = vmatprep.subr.bf16.mxu0 0
  %3467 = vmatpush1.bf16.msra.mxu0 0
  %3468 = vmatprep.subr.bf16.mxu0 0
  %3469 = vmatpush1.bf16.msra.mxu0 0
  %3470 = vmatprep.subr.bf16.mxu0 0
  %3471 = vmatpush1.bf16.msra.mxu0 0
  %3472 = vmatprep.subr.bf16.mxu0 0
  %3473 = vmatpush1.bf16.msra.mxu0 0
  %3474 = vmatprep.subr.bf16.mxu0 0
  %3475 = vmatpush1.bf16.msra.mxu0 0
  %3476 = vmatprep.subr.bf16.mxu0 0
  %3477 = vmatpush1.bf16.msra.mxu0 0
  %3478 = vmatprep.subr.bf16.mxu0 0
  %3479 = vmatpush1.bf16.msra.mxu0 0
  %3480 = vmatprep.subr.bf16.mxu0 0
  %3481 = vmatpush1.bf16.msra.mxu0 0
  %3482 = vmatprep.mubr.bf16.mxu0 0
  %3483 = vmatmul.mubr.bf16.gmra.mrb[0].mxu0 %v3203
  %v3484 = vpop.f32.mrb[0].mxu0
  %v3485 = vadd.f32 %v3218, %v3484
  %v3486 = vpop.f32.mrb[0].mxu0
  %v3487 = vadd.f32 %v3222, %v3486
  %v3488 = vpop.f32.mrb[0].mxu0
  %v3489 = vadd.f32 %v3218, %v3488
  %v3490 = vpop.f32.mrb[0].mxu0
  %v3491 = vadd.f32 %v3222, %v3490
  %3492 = vmatprep.mubr.bf16.mxu0 0
  %3493 = vmatmul.mubr.bf16.gmra.mrb[0].mxu0 %v3204
  %v3494 = vpop.f32.mrb[0].mxu0
  %v3495 = vadd.f32 %v3218, %v3494
  %v3496 = vpop.f32.mrb[0].mxu0
  %v3497 = vadd.f32 %v3222, %v3496
  %v3498 = vpop.f32.mrb[0].mxu0
  %v3499 = vadd.f32 %v3218, %v3498
  %v3500 = vpop.f32.mrb[0].mxu0
  %v3501 = vadd.f32 %v3222, %v3500
  %3502 = vmatprep.mubr.bf16.mxu0 0
  %3503 = vmatmul.mubr.bf16.gmra.mrb[0].mxu0 %v3205
  %v3504 = vpop.f32.mrb[0].mxu0
  %v3505 = vadd.f32 %v3218, %v3504
  %v3506 = vpop.f32.mrb[0].mxu0
  %v3507 = vadd.f32 %v3222, %v3506
  %v3508 = vpop.f32.mrb[0].mxu0
  %v3509 = vadd.f32 %v3218, %v3508
  %v3510 = vpop.f32.mrb[0].mxu0
  %v3511 = vadd.f32 %v3222, %v3510
  %3512 = vdwg.mxu0
  %3513 = vst [vmem:[#allocation4] sm:$0xff] %v3422
  %3514 = vst [vmem:[#allocation4 + $0x8] sm:$0xff] %v3424
  %3515 = vst [vmem:[#allocation4 + $0x10] sm:$0xff] %v3485
  %3516 = vst [vmem:[#allocation4 + $0x18] sm:$0xff] %v3487
  %3517 = vst [vmem:[#allocation4 + $0x20] sm:$0xff] %v3426
  %3518 = vst [vmem:[#allocation4 + $0x28] sm:$0xff] %v3428
  %3519 = vst [vmem:[#allocation4 + $0x30] sm:$0xff] %v3489
  %3520 = vst [vmem:[#allocation4 + $0x38] sm:$0xff] %v3491
  %3521 = vst [vmem:[#allocation4 + $0x40] sm:$0xff] %v3432
  %3522 = vst [vmem:[#allocation4 + $0x48] sm:$0xff] %v3434
  %3523 = vst [vmem:[#allocation4 + $0x50] sm:$0xff] %v3495
  %3524 = vst [vmem:[#allocation4 + $0x58] sm:$0xff] %v3497
  %3525 = vst [vmem:[#allocation4 + $0x60] sm:$0xff] %v3436
  %3526 = vst [vmem:[#allocation4 + $0x68] sm:$0xff] %v3438
  %3527 = vst [vmem:[#allocation4 + $0x70] sm:$0xff] %v3499
  %3528 = vst [vmem:[#allocation4 + $0x78] sm:$0xff] %v3501
  %3529 = vst [vmem:[#allocation4 + $0x80] sm:$0xff] %v3442
  %3530 = vst [vmem:[#allocation4 + $0x88] sm:$0xff] %v3444
  %3531 = vst [vmem:[#allocation4 + $0x90] sm:$0xff] %v3505
  %3532 = vst [vmem:[#allocation4 + $0x98] sm:$0xff] %v3507
  %3533 = vst [vmem:[#allocation4 + $0xa0] sm:$0xff] %v3446
  %3534 = vst [vmem:[#allocation4 + $0xa8] sm:$0xff] %v3448
  %3535 = vst [vmem:[#allocation4 + $0xb0] sm:$0xff] %v3509
  %3536 = vst [vmem:[#allocation4 + $0xb8] sm:$0xff] %v3511
  %v3537 = vld [vmem:[%s474] sm:$0xff]
  %v3538 = vld [vmem:[%s474 + $0x8] sm:$0xff]
  %v3539 = vld [vmem:[%s474 + $0x10] sm:$0xff]
  %v3540 = vld [vmem:[%s474 + $0x18] sm:$0xff]
  %v3541 = vpack.c.bf16 %v3130, %v3130
  %v3574 = vunpack.c.l.b16 %v3164
  %v3575 = vunpack.c.h.b16 %v3164
  %v3576 = vunpack.c.l.b16 %v3165
  %v3577 = vunpack.c.h.b16 %v3165
  %v3578 = vunpack.c.l.b16 %v3166
  %v3579 = vunpack.c.h.b16 %v3166
  %v3580 = vunpack.c.l.b16 %v3167
  %v3581 = vunpack.c.h.b16 %v3167
  %v3582 = vunpack.c.l.b16 %v3168
  %v3583 = vunpack.c.h.b16 %v3168
  %v3584 = vunpack.c.l.b16 %v3169
  %v3585 = vunpack.c.h.b16 %v3169
  %v3586 = vunpack.c.l.b16 %v3170
  %v3587 = vunpack.c.h.b16 %v3170
  %v3588 = vunpack.c.l.b16 %v3171
  %v3589 = vunpack.c.h.b16 %v3171
  %v3590 = vunpack.c.l.b16 %v3172
  %v3591 = vunpack.c.h.b16 %v3172
  %v3592 = vunpack.c.l.b16 %v3173
  %v3593 = vunpack.c.h.b16 %v3173
  %v3594 = vunpack.c.l.b16 %v3174
  %v3595 = vunpack.c.h.b16 %v3174
  %v3596 = vunpack.c.l.b16 %v3175
  %v3597 = vunpack.c.h.b16 %v3175
  %v3598 = vunpack.c.l.b16 %v3176
  %v3599 = vunpack.c.h.b16 %v3176
  %v3600 = vunpack.c.l.b16 %v3177
  %v3601 = vunpack.c.h.b16 %v3177
  %v3602 = vunpack.c.l.b16 %v3178
  %v3603 = vunpack.c.h.b16 %v3178
  %v3604 = vunpack.c.l.b16 %v3179
  %v3605 = vunpack.c.h.b16 %v3179
  %v3606 = vunpack.c.l.b16 %v3180
  %v3607 = vunpack.c.h.b16 %v3180
  %v3608 = vunpack.c.l.b16 %v3181
  %v3609 = vunpack.c.h.b16 %v3181
  %v3610 = vunpack.c.l.b16 %v3182
  %v3611 = vunpack.c.h.b16 %v3182
  %v3612 = vunpack.c.l.b16 %v3183
  %v3613 = vunpack.c.h.b16 %v3183
  %v3614 = vunpack.c.l.b16 %v3184
  %v3615 = vunpack.c.h.b16 %v3184
  %v3616 = vunpack.c.l.b16 %v3185
  %v3617 = vunpack.c.h.b16 %v3185
  %v3618 = vunpack.c.l.b16 %v3186
  %v3619 = vunpack.c.h.b16 %v3186
  %v3620 = vunpack.c.l.b16 %v3187
  %v3621 = vunpack.c.h.b16 %v3187
  %v3622 = vunpack.c.l.b16 %v3188
  %v3623 = vunpack.c.h.b16 %v3188
  %v3624 = vunpack.c.l.b16 %v3189
  %v3625 = vunpack.c.h.b16 %v3189
  %v3626 = vunpack.c.l.b16 %v3190
  %v3627 = vunpack.c.h.b16 %v3190
  %v3628 = vunpack.c.l.b16 %v3191
  %v3629 = vunpack.c.h.b16 %v3191
  %v3630 = vunpack.c.l.b16 %v3192
  %v3631 = vunpack.c.h.b16 %v3192
  %v3632 = vunpack.c.l.b16 %v3193
  %v3633 = vunpack.c.h.b16 %v3193
  %v3634 = vunpack.c.l.b16 %v3194
  %v3635 = vunpack.c.h.b16 %v3194
  %v3636 = vunpack.c.l.b16 %v3195
  %v3637 = vunpack.c.h.b16 %v3195
  %v3638 = vpack.c.b16 %v3578, %v3574
  %v3639 = vpack.c.b16 %v3579, %v3575
  %v3640 = vpack.c.b16 %v3580, %v3576
  %v3641 = vpack.c.b16 %v3581, %v3577
  %v3642 = vpack.c.b16 %v3586, %v3582
  %v3643 = vpack.c.b16 %v3587, %v3583
  %v3644 = vpack.c.b16 %v3588, %v3584
  %v3645 = vpack.c.b16 %v3589, %v3585
  %v3646 = vpack.c.b16 %v3594, %v3590
  %v3647 = vpack.c.b16 %v3595, %v3591
  %v3648 = vpack.c.b16 %v3596, %v3592
  %v3649 = vpack.c.b16 %v3597, %v3593
  %v3650 = vpack.c.b16 %v3602, %v3598
  %v3651 = vpack.c.b16 %v3603, %v3599
  %v3652 = vpack.c.b16 %v3604, %v3600
  %v3653 = vpack.c.b16 %v3605, %v3601
  %v3654 = vpack.c.b16 %v3610, %v3606
  %v3655 = vpack.c.b16 %v3611, %v3607
  %v3656 = vpack.c.b16 %v3612, %v3608
  %v3657 = vpack.c.b16 %v3613, %v3609
  %v3658 = vpack.c.b16 %v3618, %v3614
  %v3659 = vpack.c.b16 %v3619, %v3615
  %v3660 = vpack.c.b16 %v3620, %v3616
  %v3661 = vpack.c.b16 %v3621, %v3617
  %v3662 = vpack.c.b16 %v3626, %v3622
  %v3663 = vpack.c.b16 %v3627, %v3623
  %v3664 = vpack.c.b16 %v3628, %v3624
  %v3665 = vpack.c.b16 %v3629, %v3625
  %v3666 = vpack.c.b16 %v3634, %v3630
  %v3667 = vpack.c.b16 %v3635, %v3631
  %v3668 = vpack.c.b16 %v3636, %v3632
  %v3669 = vpack.c.b16 %v3637, %v3633
  %3702 = vmatprep.subr.bf16.mxu0 %v3639
  %3703 = vmatpush1.bf16.msra.mxu0 %v3638
  %3704 = vmatprep.subr.bf16.mxu0 %v3643
  %3705 = vmatpush1.bf16.msra.mxu0 %v3642
  %3706 = vmatprep.subr.bf16.mxu0 %v3647
  %3707 = vmatpush1.bf16.msra.mxu0 %v3646
  %3708 = vmatprep.subr.bf16.mxu0 %v3651
  %3709 = vmatpush1.bf16.msra.mxu0 %v3650
  %3710 = vmatprep.subr.bf16.mxu0 %v3655
  %3711 = vmatpush1.bf16.msra.mxu0 %v3654
  %3712 = vmatprep.subr.bf16.mxu0 %v3659
  %3713 = vmatpush1.bf16.msra.mxu0 %v3658
  %3714 = vmatprep.subr.bf16.mxu0 %v3663
  %3715 = vmatpush1.bf16.msra.mxu0 %v3662
  %3716 = vmatprep.subr.bf16.mxu0 %v3667
  %3717 = vmatpush1.bf16.msra.mxu0 %v3666
  %3718 = vmatprep.subr.bf16.mxu0 0
  %3719 = vmatpush1.bf16.msra.mxu0 0
  %3720 = vmatprep.subr.bf16.mxu0 0
  %3721 = vmatpush1.bf16.msra.mxu0 0
  %3722 = vmatprep.subr.bf16.mxu0 0
  %3723 = vmatpush1.bf16.msra.mxu0 0
  %3724 = vmatprep.subr.bf16.mxu0 0
  %3725 = vmatpush1.bf16.msra.mxu0 0
  %3726 = vmatprep.subr.bf16.mxu0 0
  %3727 = vmatpush1.bf16.msra.mxu0 0
  %3728 = vmatprep.subr.bf16.mxu0 0
  %3729 = vmatpush1.bf16.msra.mxu0 0
  %3730 = vmatprep.subr.bf16.mxu0 0
  %3731 = vmatpush1.bf16.msra.mxu0 0
  %3732 = vmatprep.subr.bf16.mxu0 0
  %3733 = vmatpush1.bf16.msra.mxu0 0
  %3734 = vmatprep.mubr.bf16.mxu0 0
  %3735 = vmatmul.mubr.bf16.gmra.mrb[0].mxu0 %v3541
  %v3736 = vpop.f32.mrb[0].mxu0
  %v3737 = vadd.f32 0.0, %v3736
  %v3738 = vpop.f32.mrb[0].mxu0
  %v3739 = vadd.f32 0.0, %v3738
  %v3740 = vpop.f32.mrb[0].mxu0
  %v3741 = vpop.f32.mrb[0].mxu0
  %3742 = vdwg.mxu0
  %3743 = vmatprep.subr.bf16.mxu0 %v3641
  %3744 = vmatpush1.bf16.msra.mxu0 %v3640
  %3745 = vmatprep.subr.bf16.mxu0 %v3645
  %3746 = vmatpush1.bf16.msra.mxu0 %v3644
  %3747 = vmatprep.subr.bf16.mxu0 %v3649
  %3748 = vmatpush1.bf16.msra.mxu0 %v3648
  %3749 = vmatprep.subr.bf16.mxu0 %v3653
  %3750 = vmatpush1.bf16.msra.mxu0 %v3652
  %3751 = vmatprep.subr.bf16.mxu0 %v3657
  %3752 = vmatpush1.bf16.msra.mxu0 %v3656
  %3753 = vmatprep.subr.bf16.mxu0 %v3661
  %3754 = vmatpush1.bf16.msra.mxu0 %v3660
  %3755 = vmatprep.subr.bf16.mxu0 %v3665
  %3756 = vmatpush1.bf16.msra.mxu0 %v3664
  %3757 = vmatprep.subr.bf16.mxu0 %v3669
  %3758 = vmatpush1.bf16.msra.mxu0 %v3668
  %3759 = vmatprep.subr.bf16.mxu0 0
  %3760 = vmatpush1.bf16.msra.mxu0 0
  %3761 = vmatprep.subr.bf16.mxu0 0
  %3762 = vmatpush1.bf16.msra.mxu0 0
  %3763 = vmatprep.subr.bf16.mxu0 0
  %3764 = vmatpush1.bf16.msra.mxu0 0
  %3765 = vmatprep.subr.bf16.mxu0 0
  %3766 = vmatpush1.bf16.msra.mxu0 0
  %3767 = vmatprep.subr.bf16.mxu0 0
  %3768 = vmatpush1.bf16.msra.mxu0 0
  %3769 = vmatprep.subr.bf16.mxu0 0
  %3770 = vmatpush1.bf16.msra.mxu0 0
  %3771 = vmatprep.subr.bf16.mxu0 0
  %3772 = vmatpush1.bf16.msra.mxu0 0
  %3773 = vmatprep.subr.bf16.mxu0 0
  %3774 = vmatpush1.bf16.msra.mxu0 0
  %3775 = vmatprep.mubr.bf16.mxu0 0
  %3776 = vmatmul.mubr.bf16.gmra.mrb[0].mxu0 %v3541
  %v3777 = vpop.f32.mrb[0].mxu0
  %v3778 = vadd.f32 0.0, %v3777
  %v3779 = vpop.f32.mrb[0].mxu0
  %v3780 = vadd.f32 0.0, %v3779
  %v3781 = vpop.f32.mrb[0].mxu0
  %v3782 = vpop.f32.mrb[0].mxu0
  %3783 = vdwg.mxu0
  %v3784 = vadd.f32 %v3537, %v3737
  %v3785 = vadd.f32 %v3538, %v3739
  %v3786 = vadd.f32 %v3539, %v3778
  %v3787 = vadd.f32 %v3540, %v3780
  %v3788 = vxor.u32 %v3784, 2147483648
  %v3789 = vxor.u32 %v3785, 2147483648
  %v3790 = vxor.u32 %v3786, 2147483648
  %v3791 = vmul.f32 %v3788, 1.442695
  %v3792 = vpow.pop %v3791
  %v3793 = vmul.f32 %v3789, 1.442695
  %v3794 = vpow.pop %v3793
  %v3795 = vmul.f32 %v3790, 1.442695
  %v3796 = vpow.pop %v3795
  %v3797 = vadd.f32 %v3792, 1.0
  %v3798 = vadd.f32 %v3794, 1.0
  %v3799 = vadd.f32 %v3796, 1.0
  %v3800 = vrcp.pop %v3797
  %v3801 = vmul.f32 1.0, %v3800
  %v3802 = vrcp.pop %v3798
  %v3803 = vmul.f32 1.0, %v3802
  %v3804 = vrcp.pop %v3799
  %v3805 = vmul.f32 1.0, %v3804
  %v3806 = vtanh.pop %v3787
  %v3807 = vmul.f32 %v3803, %v3131
  %v3808 = vmul.f32 %v3801, %v3806
  %v3809 = vadd.f32 %v3807, %v3808
  %v3810 = vtanh.pop %v3809
  %v3811 = vmul.f32 %v3805, %v3810
  %3812 = vst [vmem:[#allocation2] sm:$0xff] %v3811
  %v3813 = vld [vmem:[%s752] sm:$0xff]
  %v3814 = vld [vmem:[%s752 + $0x8] sm:$0xff]
  %v3815 = vld [vmem:[%s752 + $0x10] sm:$0xff]
  %v3816 = vld [vmem:[%s752 + $0x18] sm:$0xff]
  %v3817 = vpack.c.bf16 %v3811, %v3811
  %3818 = vmatprep.subr.bf16.mxu0 %v3639
  %3819 = vmatpush1.bf16.msra.mxu0 %v3638
  %3820 = vmatprep.subr.bf16.mxu0 %v3643
  %3821 = vmatpush1.bf16.msra.mxu0 %v3642
  %3822 = vmatprep.subr.bf16.mxu0 %v3647
  %3823 = vmatpush1.bf16.msra.mxu0 %v3646
  %3824 = vmatprep.subr.bf16.mxu0 %v3651
  %3825 = vmatpush1.bf16.msra.mxu0 %v3650
  %3826 = vmatprep.subr.bf16.mxu0 %v3655
  %3827 = vmatpush1.bf16.msra.mxu0 %v3654
  %3828 = vmatprep.subr.bf16.mxu0 %v3659
  %3829 = vmatpush1.bf16.msra.mxu0 %v3658
  %3830 = vmatprep.subr.bf16.mxu0 %v3663
  %3831 = vmatpush1.bf16.msra.mxu0 %v3662
  %3832 = vmatprep.subr.bf16.mxu0 %v3667
  %3833 = vmatpush1.bf16.msra.mxu0 %v3666
  %3834 = vmatprep.subr.bf16.mxu0 0
  %3835 = vmatpush1.bf16.msra.mxu0 0
  %3836 = vmatprep.subr.bf16.mxu0 0
  %3837 = vmatpush1.bf16.msra.mxu0 0
  %3838 = vmatprep.subr.bf16.mxu0 0
  %3839 = vmatpush1.bf16.msra.mxu0 0
  %3840 = vmatprep.subr.bf16.mxu0 0
  %3841 = vmatpush1.bf16.msra.mxu0 0
  %3842 = vmatprep.subr.bf16.mxu0 0
  %3843 = vmatpush1.bf16.msra.mxu0 0
  %3844 = vmatprep.subr.bf16.mxu0 0
  %3845 = vmatpush1.bf16.msra.mxu0 0
  %3846 = vmatprep.subr.bf16.mxu0 0
  %3847 = vmatpush1.bf16.msra.mxu0 0
  %3848 = vmatprep.subr.bf16.mxu0 0
  %3849 = vmatpush1.bf16.msra.mxu0 0
  %3850 = vmatprep.mubr.bf16.mxu0 0
  %3851 = vmatmul.mubr.bf16.gmra.mrb[0].mxu0 %v3817
  %v3852 = vpop.f32.mrb[0].mxu0
  %v3853 = vadd.f32 0.0, %v3852
  %v3854 = vpop.f32.mrb[0].mxu0
  %v3855 = vadd.f32 0.0, %v3854
  %v3856 = vpop.f32.mrb[0].mxu0
  %v3857 = vpop.f32.mrb[0].mxu0
  %3858 = vdwg.mxu0
  %3859 = vmatprep.subr.bf16.mxu0 %v3641
  %3860 = vmatpush1.bf16.msra.mxu0 %v3640
  %3861 = vmatprep.subr.bf16.mxu0 %v3645
  %3862 = vmatpush1.bf16.msra.mxu0 %v3644
  %3863 = vmatprep.subr.bf16.mxu0 %v3649
  %3864 = vmatpush1.bf16.msra.mxu0 %v3648
  %3865 = vmatprep.subr.bf16.mxu0 %v3653
  %3866 = vmatpush1.bf16.msra.mxu0 %v3652
  %3867 = vmatprep.subr.bf16.mxu0 %v3657
  %3868 = vmatpush1.bf16.msra.mxu0 %v3656
  %3869 = vmatprep.subr.bf16.mxu0 %v3661
  %3870 = vmatpush1.bf16.msra.mxu0 %v3660
  %3871 = vmatprep.subr.bf16.mxu0 %v3665
  %3872 = vmatpush1.bf16.msra.mxu0 %v3664
  %3873 = vmatprep.subr.bf16.mxu0 %v3669
  %3874 = vmatpush1.bf16.msra.mxu0 %v3668
  %3875 = vmatprep.subr.bf16.mxu0 0
  %3876 = vmatpush1.bf16.msra.mxu0 0
  %3877 = vmatprep.subr.bf16.mxu0 0
  %3878 = vmatpush1.bf16.msra.mxu0 0
  %3879 = vmatprep.subr.bf16.mxu0 0
  %3880 = vmatpush1.bf16.msra.mxu0 0
  %3881 = vmatprep.subr.bf16.mxu0 0
  %3882 = vmatpush1.bf16.msra.mxu0 0
  %3883 = vmatprep.subr.bf16.mxu0 0
  %3884 = vmatpush1.bf16.msra.mxu0 0
  %3885 = vmatprep.subr.bf16.mxu0 0
  %3886 = vmatpush1.bf16.msra.mxu0 0
  %3887 = vmatprep.subr.bf16.mxu0 0
  %3888 = vmatpush1.bf16.msra.mxu0 0
  %3889 = vmatprep.subr.bf16.mxu0 0
  %3890 = vmatpush1.bf16.msra.mxu0 0
  %3891 = vmatprep.mubr.bf16.mxu0 0
  %3892 = vmatmul.mubr.bf16.gmra.mrb[0].mxu0 %v3817
  %v3893 = vpop.f32.mrb[0].mxu0
  %v3894 = vadd.f32 0.0, %v3893
  %v3895 = vpop.f32.mrb[0].mxu0
  %v3896 = vadd.f32 0.0, %v3895
  %v3897 = vpop.f32.mrb[0].mxu0
  %v3898 = vpop.f32.mrb[0].mxu0
  %3899 = vdwg.mxu0
  %v3900 = vadd.f32 %v3813, %v3853
  %v3901 = vadd.f32 %v3814, %v3855
  %v3902 = vadd.f32 %v3815, %v3894
  %v3903 = vadd.f32 %v3816, %v3896
  %v3904 = vxor.u32 %v3900, 2147483648
  %v3905 = vxor.u32 %v3901, 2147483648
  %v3906 = vxor.u32 %v3902, 2147483648
  %v3907 = vmul.f32 %v3904, 1.442695
  %v3908 = vpow.pop %v3907
  %v3909 = vmul.f32 %v3905, 1.442695
  %v3910 = vpow.pop %v3909
  %v3911 = vmul.f32 %v3906, 1.442695
  %v3912 = vpow.pop %v3911
  %v3913 = vadd.f32 %v3908, 1.0
  %v3914 = vadd.f32 %v3910, 1.0
  %v3915 = vadd.f32 %v3912, 1.0
  %v3916 = vrcp.pop %v3913
  %v3917 = vmul.f32 1.0, %v3916
  %v3918 = vrcp.pop %v3914
  %v3919 = vmul.f32 1.0, %v3918
  %v3920 = vrcp.pop %v3915
  %v3921 = vmul.f32 1.0, %v3920
  %v3922 = vtanh.pop %v3903
  %v3923 = vmul.f32 %v3919, %v3809
  %v3924 = vmul.f32 %v3917, %v3922
  %v3925 = vadd.f32 %v3923, %v3924
  %v3926 = vtanh.pop %v3925
  %v3927 = vmul.f32 %v3921, %v3926
  %3928 = vst [vmem:[%s868] sm:$0xff] %v3927
  %v3929 = vld [vmem:[%s872] sm:$0xff]
  %v3930 = vld [vmem:[%s872 + $0x8] sm:$0xff]
  %v3931 = vld [vmem:[%s872 + $0x10] sm:$0xff]
  %v3932 = vld [vmem:[%s872 + $0x18] sm:$0xff]
  %v3933 = vpack.c.bf16 %v3927, %v3927
  %3934 = vmatprep.subr.bf16.mxu0 %v3639
  %3935 = vmatpush1.bf16.msra.mxu0 %v3638
  %3936 = vmatprep.subr.bf16.mxu0 %v3643
  %3937 = vmatpush1.bf16.msra.mxu0 %v3642
  %3938 = vmatprep.subr.bf16.mxu0 %v3647
  %3939 = vmatpush1.bf16.msra.mxu0 %v3646
  %3940 = vmatprep.subr.bf16.mxu0 %v3651
  %3941 = vmatpush1.bf16.msra.mxu0 %v3650
  %3942 = vmatprep.subr.bf16.mxu0 %v3655
  %3943 = vmatpush1.bf16.msra.mxu0 %v3654
  %3944 = vmatprep.subr.bf16.mxu0 %v3659
  %3945 = vmatpush1.bf16.msra.mxu0 %v3658
  %3946 = vmatprep.subr.bf16.mxu0 %v3663
  %3947 = vmatpush1.bf16.msra.mxu0 %v3662
  %3948 = vmatprep.subr.bf16.mxu0 %v3667
  %3949 = vmatpush1.bf16.msra.mxu0 %v3666
  %3950 = vmatprep.subr.bf16.mxu0 0
  %3951 = vmatpush1.bf16.msra.mxu0 0
  %3952 = vmatprep.subr.bf16.mxu0 0
  %3953 = vmatpush1.bf16.msra.mxu0 0
  %3954 = vmatprep.subr.bf16.mxu0 0
  %3955 = vmatpush1.bf16.msra.mxu0 0
  %3956 = vmatprep.subr.bf16.mxu0 0
  %3957 = vmatpush1.bf16.msra.mxu0 0
  %3958 = vmatprep.subr.bf16.mxu0 0
  %3959 = vmatpush1.bf16.msra.mxu0 0
  %3960 = vmatprep.subr.bf16.mxu0 0
  %3961 = vmatpush1.bf16.msra.mxu0 0
  %3962 = vmatprep.subr.bf16.mxu0 0
  %3963 = vmatpush1.bf16.msra.mxu0 0
  %3964 = vmatprep.subr.bf16.mxu0 0
  %3965 = vmatpush1.bf16.msra.mxu0 0
  %3966 = vmatprep.mubr.bf16.mxu0 0
  %3967 = vmatmul.mubr.bf16.gmra.mrb[0].mxu0 %v3933
  %v3968 = vpop.f32.mrb[0].mxu0
  %v3969 = vadd.f32 0.0, %v3968
  %v3970 = vpop.f32.mrb[0].mxu0
  %v3971 = vadd.f32 0.0, %v3970
  %v3972 = vpop.f32.mrb[0].mxu0
  %v3973 = vpop.f32.mrb[0].mxu0
  %3974 = vdwg.mxu0
  %3975 = vmatprep.subr.bf16.mxu0 %v3641
  %3976 = vmatpush1.bf16.msra.mxu0 %v3640
  %3977 = vmatprep.subr.bf16.mxu0 %v3645
  %3978 = vmatpush1.bf16.msra.mxu0 %v3644
  %3979 = vmatprep.subr.bf16.mxu0 %v3649
  %3980 = vmatpush1.bf16.msra.mxu0 %v3648
  %3981 = vmatprep.subr.bf16.mxu0 %v3653
  %3982 = vmatpush1.bf16.msra.mxu0 %v3652
  %3983 = vmatprep.subr.bf16.mxu0 %v3657
  %3984 = vmatpush1.bf16.msra.mxu0 %v3656
  %3985 = vmatprep.subr.bf16.mxu0 %v3661
  %3986 = vmatpush1.bf16.msra.mxu0 %v3660
  %3987 = vmatprep.subr.bf16.mxu0 %v3665
  %3988 = vmatpush1.bf16.msra.mxu0 %v3664
  %3989 = vmatprep.subr.bf16.mxu0 %v3669
  %3990 = vmatpush1.bf16.msra.mxu0 %v3668
  %3991 = vmatprep.subr.bf16.mxu0 0
  %3992 = vmatpush1.bf16.msra.mxu0 0
  %3993 = vmatprep.subr.bf16.mxu0 0
  %3994 = vmatpush1.bf16.msra.mxu0 0
  %3995 = vmatprep.subr.bf16.mxu0 0
  %3996 = vmatpush1.bf16.msra.mxu0 0
  %3997 = vmatprep.subr.bf16.mxu0 0
  %3998 = vmatpush1.bf16.msra.mxu0 0
  %3999 = vmatprep.subr.bf16.mxu0 0
  %4000 = vmatpush1.bf16.msra.mxu0 0
  %4001 = vmatprep.subr.bf16.mxu0 0
  %4002 = vmatpush1.bf16.msra.mxu0 0
  %4003 = vmatprep.subr.bf16.mxu0 0
  %4004 = vmatpush1.bf16.msra.mxu0 0
  %4005 = vmatprep.subr.bf16.mxu0 0
  %4006 = vmatpush1.bf16.msra.mxu0 0
  %4007 = vmatprep.mubr.bf16.mxu0 0
  %4008 = vmatmul.mubr.bf16.gmra.mrb[0].mxu0 %v3933
  %v4009 = vpop.f32.mrb[0].mxu0
  %v4010 = vadd.f32 0.0, %v4009
  %v4011 = vpop.f32.mrb[0].mxu0
  %v4012 = vadd.f32 0.0, %v4011
  %v4013 = vpop.f32.mrb[0].mxu0
  %v4014 = vpop.f32.mrb[0].mxu0
  %4015 = vdwg.mxu0
  %v4016 = vadd.f32 %v3929, %v3969
  %v4017 = vadd.f32 %v3930, %v3971
  %v4018 = vadd.f32 %v3931, %v4010
  %v4019 = vadd.f32 %v3932, %v4012
  %v4020 = vxor.u32 %v4016, 2147483648
  %v4021 = vxor.u32 %v4017, 2147483648
  %v4022 = vxor.u32 %v4018, 2147483648
  %v4023 = vmul.f32 %v4020, 1.442695
  %v4024 = vpow.pop %v4023
  %v4025 = vmul.f32 %v4021, 1.442695
  %v4026 = vpow.pop %v4025
  %v4027 = vmul.f32 %v4022, 1.442695
  %v4028 = vpow.pop %v4027
  %v4029 = vadd.f32 %v4024, 1.0
  %v4030 = vadd.f32 %v4026, 1.0
  %v4031 = vadd.f32 %v4028, 1.0
  %v4032 = vrcp.pop %v4029
  %v4033 = vmul.f32 1.0, %v4032
  %v4034 = vrcp.pop %v4030
  %v4035 = vmul.f32 1.0, %v4034
  %v4036 = vrcp.pop %v4031
  %v4037 = vmul.f32 1.0, %v4036
  %v4038 = vtanh.pop %v4019
  %v4039 = vmul.f32 %v4035, %v3925
  %v4040 = vmul.f32 %v4033, %v4038
  %v4041 = vadd.f32 %v4039, %v4040
  %v4042 = vtanh.pop %v4041
  %v4043 = vmul.f32 %v4037, %v4042
  %4044 = vst [vmem:[%s988] sm:$0xff] %v4043
  %v4045 = vld [vmem:[%s992] sm:$0xff]
  %v4046 = vld [vmem:[%s992 + $0x8] sm:$0xff]
  %v4047 = vld [vmem:[%s992 + $0x10] sm:$0xff]
  %v4048 = vld [vmem:[%s992 + $0x18] sm:$0xff]
  %v4049 = vpack.c.bf16 %v4043, %v4043
  %4050 = vmatprep.subr.bf16.mxu0 %v3639
  %4051 = vmatpush1.bf16.msra.mxu0 %v3638
  %4052 = vmatprep.subr.bf16.mxu0 %v3643
  %4053 = vmatpush1.bf16.msra.mxu0 %v3642
  %4054 = vmatprep.subr.bf16.mxu0 %v3647
  %4055 = vmatpush1.bf16.msra.mxu0 %v3646
  %4056 = vmatprep.subr.bf16.mxu0 %v3651
  %4057 = vmatpush1.bf16.msra.mxu0 %v3650
  %4058 = vmatprep.subr.bf16.mxu0 %v3655
  %4059 = vmatpush1.bf16.msra.mxu0 %v3654
  %4060 = vmatprep.subr.bf16.mxu0 %v3659
  %4061 = vmatpush1.bf16.msra.mxu0 %v3658
  %4062 = vmatprep.subr.bf16.mxu0 %v3663
  %4063 = vmatpush1.bf16.msra.mxu0 %v3662
  %4064 = vmatprep.subr.bf16.mxu0 %v3667
  %4065 = vmatpush1.bf16.msra.mxu0 %v3666
  %4066 = vmatprep.subr.bf16.mxu0 0
  %4067 = vmatpush1.bf16.msra.mxu0 0
  %4068 = vmatprep.subr.bf16.mxu0 0
  %4069 = vmatpush1.bf16.msra.mxu0 0
  %4070 = vmatprep.subr.bf16.mxu0 0
  %4071 = vmatpush1.bf16.msra.mxu0 0
  %4072 = vmatprep.subr.bf16.mxu0 0
  %4073 = vmatpush1.bf16.msra.mxu0 0
  %4074 = vmatprep.subr.bf16.mxu0 0
  %4075 = vmatpush1.bf16.msra.mxu0 0
  %4076 = vmatprep.subr.bf16.mxu0 0
  %4077 = vmatpush1.bf16.msra.mxu0 0
  %4078 = vmatprep.subr.bf16.mxu0 0
  %4079 = vmatpush1.bf16.msra.mxu0 0
  %4080 = vmatprep.subr.bf16.mxu0 0
  %4081 = vmatpush1.bf16.msra.mxu0 0
  %4082 = vmatprep.mubr.bf16.mxu0 0
  %4083 = vmatmul.mubr.bf16.gmra.mrb[0].mxu0 %v4049
  %v4084 = vpop.f32.mrb[0].mxu0
  %v4085 = vadd.f32 0.0, %v4084
  %v4086 = vpop.f32.mrb[0].mxu0
  %v4087 = vadd.f32 0.0, %v4086
  %v4088 = vpop.f32.mrb[0].mxu0
  %v4089 = vpop.f32.mrb[0].mxu0
  %4090 = vdwg.mxu0
  %4091 = vmatprep.subr.bf16.mxu0 %v3641
  %4092 = vmatpush1.bf16.msra.mxu0 %v3640
  %4093 = vmatprep.subr.bf16.mxu0 %v3645
  %4094 = vmatpush1.bf16.msra.mxu0 %v3644
  %4095 = vmatprep.subr.bf16.mxu0 %v3649
  %4096 = vmatpush1.bf16.msra.mxu0 %v3648
  %4097 = vmatprep.subr.bf16.mxu0 %v3653
  %4098 = vmatpush1.bf16.msra.mxu0 %v3652
  %4099 = vmatprep.subr.bf16.mxu0 %v3657
  %4100 = vmatpush1.bf16.msra.mxu0 %v3656
  %4101 = vmatprep.subr.bf16.mxu0 %v3661
  %4102 = vmatpush1.bf16.msra.mxu0 %v3660
  %4103 = vmatprep.subr.bf16.mxu0 %v3665
  %4104 = vmatpush1.bf16.msra.mxu0 %v3664
  %4105 = vmatprep.subr.bf16.mxu0 %v3669
  %4106 = vmatpush1.bf16.msra.mxu0 %v3668
  %4107 = vmatprep.subr.bf16.mxu0 0
  %4108 = vmatpush1.bf16.msra.mxu0 0
  %4109 = vmatprep.subr.bf16.mxu0 0
  %4110 = vmatpush1.bf16.msra.mxu0 0
  %4111 = vmatprep.subr.bf16.mxu0 0
  %4112 = vmatpush1.bf16.msra.mxu0 0
  %4113 = vmatprep.subr.bf16.mxu0 0
  %4114 = vmatpush1.bf16.msra.mxu0 0
  %4115 = vmatprep.subr.bf16.mxu0 0
  %4116 = vmatpush1.bf16.msra.mxu0 0
  %4117 = vmatprep.subr.bf16.mxu0 0
  %4118 = vmatpush1.bf16.msra.mxu0 0
  %4119 = vmatprep.subr.bf16.mxu0 0
  %4120 = vmatpush1.bf16.msra.mxu0 0
  %4121 = vmatprep.subr.bf16.mxu0 0
  %4122 = vmatpush1.bf16.msra.mxu0 0
  %4123 = vmatprep.mubr.bf16.mxu0 0
  %4124 = vmatmul.mubr.bf16.gmra.mrb[0].mxu0 %v4049
  %v4125 = vpop.f32.mrb[0].mxu0
  %v4126 = vadd.f32 0.0, %v4125
  %v4127 = vpop.f32.mrb[0].mxu0
  %v4128 = vadd.f32 0.0, %v4127
  %v4129 = vpop.f32.mrb[0].mxu0
  %v4130 = vpop.f32.mrb[0].mxu0
  %4131 = vdwg.mxu0
  %v4132 = vadd.f32 %v4045, %v4085
  %v4133 = vadd.f32 %v4046, %v4087
  %v4134 = vadd.f32 %v4047, %v4126
  %v4135 = vadd.f32 %v4048, %v4128
  %v4136 = vxor.u32 %v4132, 2147483648
  %v4137 = vxor.u32 %v4133, 2147483648
  %v4138 = vxor.u32 %v4134, 2147483648
  %v4139 = vmul.f32 %v4136, 1.442695
  %v4140 = vpow.pop %v4139
  %v4141 = vmul.f32 %v4137, 1.442695
  %v4142 = vpow.pop %v4141
  %v4143 = vmul.f32 %v4138, 1.442695
  %v4144 = vpow.pop %v4143
  %v4145 = vadd.f32 %v4140, 1.0
  %v4146 = vadd.f32 %v4142, 1.0
  %v4147 = vadd.f32 %v4144, 1.0
  %v4148 = vrcp.pop %v4145
  %v4149 = vmul.f32 1.0, %v4148
  %v4150 = vrcp.pop %v4146
  %v4151 = vmul.f32 1.0, %v4150
  %v4152 = vrcp.pop %v4147
  %v4153 = vmul.f32 1.0, %v4152
  %v4154 = vtanh.pop %v4135
  %v4155 = vmul.f32 %v4151, %v4041
  %v4156 = vmul.f32 %v4149, %v4154
  %v4157 = vadd.f32 %v4155, %v4156
  %v4158 = vtanh.pop %v4157
  %v4159 = vmul.f32 %v4153, %v4158
  %4160 = vst [vmem:[%s1108] sm:$0xff] %v4159
  %v4161 = vld [vmem:[%s1112] sm:$0xff]
  %v4162 = vld [vmem:[%s1112 + $0x8] sm:$0xff]
  %v4163 = vld [vmem:[%s1112 + $0x10] sm:$0xff]
  %v4164 = vld [vmem:[%s1112 + $0x18] sm:$0xff]
  %v4165 = vpack.c.bf16 %v4159, %v4159
  %4166 = vmatprep.subr.bf16.mxu0 %v3639
  %4167 = vmatpush1.bf16.msra.mxu0 %v3638
  %4168 = vmatprep.subr.bf16.mxu0 %v3643
  %4169 = vmatpush1.bf16.msra.mxu0 %v3642
  %4170 = vmatprep.subr.bf16.mxu0 %v3647
  %4171 = vmatpush1.bf16.msra.mxu0 %v3646
  %4172 = vmatprep.subr.bf16.mxu0 %v3651
  %4173 = vmatpush1.bf16.msra.mxu0 %v3650
  %4174 = vmatprep.subr.bf16.mxu0 %v3655
  %4175 = vmatpush1.bf16.msra.mxu0 %v3654
  %4176 = vmatprep.subr.bf16.mxu0 %v3659
  %4177 = vmatpush1.bf16.msra.mxu0 %v3658
  %4178 = vmatprep.subr.bf16.mxu0 %v3663
  %4179 = vmatpush1.bf16.msra.mxu0 %v3662
  %4180 = vmatprep.subr.bf16.mxu0 %v3667
  %4181 = vmatpush1.bf16.msra.mxu0 %v3666
  %4182 = vmatprep.subr.bf16.mxu0 0
  %4183 = vmatpush1.bf16.msra.mxu0 0
  %4184 = vmatprep.subr.bf16.mxu0 0
  %4185 = vmatpush1.bf16.msra.mxu0 0
  %4186 = vmatprep.subr.bf16.mxu0 0
  %4187 = vmatpush1.bf16.msra.mxu0 0
  %4188 = vmatprep.subr.bf16.mxu0 0
  %4189 = vmatpush1.bf16.msra.mxu0 0
  %4190 = vmatprep.subr.bf16.mxu0 0
  %4191 = vmatpush1.bf16.msra.mxu0 0
  %4192 = vmatprep.subr.bf16.mxu0 0
  %4193 = vmatpush1.bf16.msra.mxu0 0
  %4194 = vmatprep.subr.bf16.mxu0 0
  %4195 = vmatpush1.bf16.msra.mxu0 0
  %4196 = vmatprep.subr.bf16.mxu0 0
  %4197 = vmatpush1.bf16.msra.mxu0 0
  %4198 = vmatprep.mubr.bf16.mxu0 0
  %4199 = vmatmul.mubr.bf16.gmra.mrb[0].mxu0 %v4165
  %v4200 = vpop.f32.mrb[0].mxu0
  %v4201 = vadd.f32 0.0, %v4200
  %v4202 = vpop.f32.mrb[0].mxu0
  %v4203 = vadd.f32 0.0, %v4202
  %v4204 = vpop.f32.mrb[0].mxu0
  %v4205 = vpop.f32.mrb[0].mxu0
  %4206 = vdwg.mxu0
  %4207 = vmatprep.subr.bf16.mxu0 %v3641
  %4208 = vmatpush1.bf16.msra.mxu0 %v3640
  %4209 = vmatprep.subr.bf16.mxu0 %v3645
  %4210 = vmatpush1.bf16.msra.mxu0 %v3644
  %4211 = vmatprep.subr.bf16.mxu0 %v3649
  %4212 = vmatpush1.bf16.msra.mxu0 %v3648
  %4213 = vmatprep.subr.bf16.mxu0 %v3653
  %4214 = vmatpush1.bf16.msra.mxu0 %v3652
  %4215 = vmatprep.subr.bf16.mxu0 %v3657
  %4216 = vmatpush1.bf16.msra.mxu0 %v3656
  %4217 = vmatprep.subr.bf16.mxu0 %v3661
  %4218 = vmatpush1.bf16.msra.mxu0 %v3660
  %4219 = vmatprep.subr.bf16.mxu0 %v3665
  %4220 = vmatpush1.bf16.msra.mxu0 %v3664
  %4221 = vmatprep.subr.bf16.mxu0 %v3669
  %4222 = vmatpush1.bf16.msra.mxu0 %v3668
  %4223 = vmatprep.subr.bf16.mxu0 0
  %4224 = vmatpush1.bf16.msra.mxu0 0
  %4225 = vmatprep.subr.bf16.mxu0 0
  %4226 = vmatpush1.bf16.msra.mxu0 0
  %4227 = vmatprep.subr.bf16.mxu0 0
  %4228 = vmatpush1.bf16.msra.mxu0 0
  %4229 = vmatprep.subr.bf16.mxu0 0
  %4230 = vmatpush1.bf16.msra.mxu0 0
  %4231 = vmatprep.subr.bf16.mxu0 0
  %4232 = vmatpush1.bf16.msra.mxu0 0
  %4233 = vmatprep.subr.bf16.mxu0 0
  %4234 = vmatpush1.bf16.msra.mxu0 0
  %4235 = vmatprep.subr.bf16.mxu0 0
  %4236 = vmatpush1.bf16.msra.mxu0 0
  %4237 = vmatprep.subr.bf16.mxu0 0
  %4238 = vmatpush1.bf16.msra.mxu0 0
  %4239 = vmatprep.mubr.bf16.mxu0 0
  %4240 = vmatmul.mubr.bf16.gmra.mrb[0].mxu0 %v4165
  %v4241 = vpop.f32.mrb[0].mxu0
  %v4242 = vadd.f32 0.0, %v4241
  %v4243 = vpop.f32.mrb[0].mxu0
  %v4244 = vadd.f32 0.0, %v4243
  %v4245 = vpop.f32.mrb[0].mxu0
  %v4246 = vpop.f32.mrb[0].mxu0
  %4247 = vdwg.mxu0
  %v4248 = vadd.f32 %v4161, %v4201
  %v4249 = vadd.f32 %v4162, %v4203
  %v4250 = vadd.f32 %v4163, %v4242
  %v4251 = vadd.f32 %v4164, %v4244
  %v4252 = vxor.u32 %v4248, 2147483648
  %v4253 = vxor.u32 %v4249, 2147483648
  %v4254 = vxor.u32 %v4250, 2147483648
  %v4255 = vmul.f32 %v4252, 1.442695
  %v4256 = vpow.pop %v4255
  %v4257 = vmul.f32 %v4253, 1.442695
  %v4258 = vpow.pop %v4257
  %v4259 = vmul.f32 %v4254, 1.442695
  %v4260 = vpow.pop %v4259
  %v4261 = vadd.f32 %v4256, 1.0
  %v4262 = vadd.f32 %v4258, 1.0
  %v4263 = vadd.f32 %v4260, 1.0
  %v4264 = vrcp.pop %v4261
  %v4265 = vmul.f32 1.0, %v4264
  %v4266 = vrcp.pop %v4262
  %v4267 = vmul.f32 1.0, %v4266
  %v4268 = vrcp.pop %v4263
  %v4269 = vmul.f32 1.0, %v4268
  %v4270 = vtanh.pop %v4251
  %v4271 = vmul.f32 %v4267, %v4157
  %v4272 = vmul.f32 %v4265, %v4270
  %v4273 = vadd.f32 %v4271, %v4272
  %v4274 = vtanh.pop %v4273
  %v4275 = vmul.f32 %v4269, %v4274
  %4276 = vst [vmem:[%s1228] sm:$0xff] %v4275
  %v4277 = vld [vmem:[%s1232] sm:$0xff]
  %v4278 = vld [vmem:[%s1232 + $0x8] sm:$0xff]
  %v4279 = vld [vmem:[%s1232 + $0x10] sm:$0xff]
  %v4280 = vld [vmem:[%s1232 + $0x18] sm:$0xff]
  %v4281 = vpack.c.bf16 %v4275, %v4275
  %4282 = vmatprep.subr.bf16.mxu0 %v3639
  %4283 = vmatpush1.bf16.msra.mxu0 %v3638
  %4284 = vmatprep.subr.bf16.mxu0 %v3643
  %4285 = vmatpush1.bf16.msra.mxu0 %v3642
  %4286 = vmatprep.subr.bf16.mxu0 %v3647
  %4287 = vmatpush1.bf16.msra.mxu0 %v3646
  %4288 = vmatprep.subr.bf16.mxu0 %v3651
  %4289 = vmatpush1.bf16.msra.mxu0 %v3650
  %4290 = vmatprep.subr.bf16.mxu0 %v3655
  %4291 = vmatpush1.bf16.msra.mxu0 %v3654
  %4292 = vmatprep.subr.bf16.mxu0 %v3659
  %4293 = vmatpush1.bf16.msra.mxu0 %v3658
  %4294 = vmatprep.subr.bf16.mxu0 %v3663
  %4295 = vmatpush1.bf16.msra.mxu0 %v3662
  %4296 = vmatprep.subr.bf16.mxu0 %v3667
  %4297 = vmatpush1.bf16.msra.mxu0 %v3666
  %4298 = vmatprep.subr.bf16.mxu0 0
  %4299 = vmatpush1.bf16.msra.mxu0 0
  %4300 = vmatprep.subr.bf16.mxu0 0
  %4301 = vmatpush1.bf16.msra.mxu0 0
  %4302 = vmatprep.subr.bf16.mxu0 0
  %4303 = vmatpush1.bf16.msra.mxu0 0
  %4304 = vmatprep.subr.bf16.mxu0 0
  %4305 = vmatpush1.bf16.msra.mxu0 0
  %4306 = vmatprep.subr.bf16.mxu0 0
  %4307 = vmatpush1.bf16.msra.mxu0 0
  %4308 = vmatprep.subr.bf16.mxu0 0
  %4309 = vmatpush1.bf16.msra.mxu0 0
  %4310 = vmatprep.subr.bf16.mxu0 0
  %4311 = vmatpush1.bf16.msra.mxu0 0
  %4312 = vmatprep.subr.bf16.mxu0 0
  %4313 = vmatpush1.bf16.msra.mxu0 0
  %4314 = vmatprep.mubr.bf16.mxu0 0
  %4315 = vmatmul.mubr.bf16.gmra.mrb[0].mxu0 %v4281
  %v4316 = vpop.f32.mrb[0].mxu0
  %v4317 = vadd.f32 0.0, %v4316
  %v4318 = vpop.f32.mrb[0].mxu0
  %v4319 = vadd.f32 0.0, %v4318
  %v4320 = vpop.f32.mrb[0].mxu0
  %v4321 = vpop.f32.mrb[0].mxu0
  %4322 = vdwg.mxu0
  %4323 = vmatprep.subr.bf16.mxu0 %v3641
  %4324 = vmatpush1.bf16.msra.mxu0 %v3640
  %4325 = vmatprep.subr.bf16.mxu0 %v3645
  %4326 = vmatpush1.bf16.msra.mxu0 %v3644
  %4327 = vmatprep.subr.bf16.mxu0 %v3649
  %4328 = vmatpush1.bf16.msra.mxu0 %v3648
  %4329 = vmatprep.subr.bf16.mxu0 %v3653
  %4330 = vmatpush1.bf16.msra.mxu0 %v3652
  %4331 = vmatprep.subr.bf16.mxu0 %v3657
  %4332 = vmatpush1.bf16.msra.mxu0 %v3656
  %4333 = vmatprep.subr.bf16.mxu0 %v3661
  %4334 = vmatpush1.bf16.msra.mxu0 %v3660
  %4335 = vmatprep.subr.bf16.mxu0 %v3665
  %4336 = vmatpush1.bf16.msra.mxu0 %v3664
  %4337 = vmatprep.subr.bf16.mxu0 %v3669
  %4338 = vmatpush1.bf16.msra.mxu0 %v3668
  %4339 = vmatprep.subr.bf16.mxu0 0
  %4340 = vmatpush1.bf16.msra.mxu0 0
  %4341 = vmatprep.subr.bf16.mxu0 0
  %4342 = vmatpush1.bf16.msra.mxu0 0
  %4343 = vmatprep.subr.bf16.mxu0 0
  %4344 = vmatpush1.bf16.msra.mxu0 0
  %4345 = vmatprep.subr.bf16.mxu0 0
  %4346 = vmatpush1.bf16.msra.mxu0 0
  %4347 = vmatprep.subr.bf16.mxu0 0
  %4348 = vmatpush1.bf16.msra.mxu0 0
  %4349 = vmatprep.subr.bf16.mxu0 0
  %4350 = vmatpush1.bf16.msra.mxu0 0
  %4351 = vmatprep.subr.bf16.mxu0 0
  %4352 = vmatpush1.bf16.msra.mxu0 0
  %4353 = vmatprep.subr.bf16.mxu0 0
  %4354 = vmatpush1.bf16.msra.mxu0 0
  %4355 = vmatprep.mubr.bf16.mxu0 0
  %4356 = vmatmul.mubr.bf16.gmra.mrb[0].mxu0 %v4281
  %v4357 = vpop.f32.mrb[0].mxu0
  %v4358 = vadd.f32 0.0, %v4357
  %v4359 = vpop.f32.mrb[0].mxu0
  %v4360 = vadd.f32 0.0, %v4359
  %v4361 = vpop.f32.mrb[0].mxu0
  %v4362 = vpop.f32.mrb[0].mxu0
  %4363 = vdwg.mxu0
  %v4364 = vadd.f32 %v4277, %v4317
  %v4365 = vadd.f32 %v4278, %v4319
  %v4366 = vadd.f32 %v4279, %v4358
  %v4367 = vadd.f32 %v4280, %v4360
  %v4368 = vxor.u32 %v4364, 2147483648
  %v4369 = vxor.u32 %v4365, 2147483648
  %v4370 = vxor.u32 %v4366, 2147483648
  %v4371 = vmul.f32 %v4368, 1.442695
  %v4372 = vpow.pop %v4371
  %v4373 = vmul.f32 %v4369, 1.442695
  %v4374 = vpow.pop %v4373
  %v4375 = vmul.f32 %v4370, 1.442695
  %v4376 = vpow.pop %v4375
  %v4377 = vadd.f32 %v4372, 1.0
  %v4378 = vadd.f32 %v4374, 1.0
  %v4379 = vadd.f32 %v4376, 1.0
  %v4380 = vrcp.pop %v4377
  %v4381 = vmul.f32 1.0, %v4380
  %v4382 = vrcp.pop %v4378
  %v4383 = vmul.f32 1.0, %v4382
  %v4384 = vrcp.pop %v4379
  %v4385 = vmul.f32 1.0, %v4384
  %v4386 = vtanh.pop %v4367
  %v4387 = vmul.f32 %v4383, %v4273
  %v4388 = vmul.f32 %v4381, %v4386
  %v4389 = vadd.f32 %v4387, %v4388
  %v4390 = vtanh.pop %v4389
  %v4391 = vmul.f32 %v4385, %v4390
  %4392 = vst [vmem:[%s1348] sm:$0xff] %v4391
  %v4393 = vld [vmem:[%s3126] sm:$0xff]
  %v4394 = vld [vmem:[%s3128] sm:$0xff]
  %s4395 = scalar_lea.vmem %s5, 256
  %v4396 = vld [vmem:[%s4395] sm:$0xff]
  %v4397 = vld [vmem:[%s4395 + $0x8] sm:$0xff]
  %v4398 = vld [vmem:[%s4395 + $0x10] sm:$0xff]
  %v4399 = vld [vmem:[%s4395 + $0x18] sm:$0xff]
  %v4400 = vld [vmem:[%s4395 + $0x20] sm:$0xff]
  %v4401 = vld [vmem:[%s4395 + $0x28] sm:$0xff]
  %v4402 = vld [vmem:[%s4395 + $0x30] sm:$0xff]
  %v4403 = vld [vmem:[%s4395 + $0x38] sm:$0xff]
  %v4404 = vld [vmem:[%s4395 + $0x40] sm:$0xff]
  %v4405 = vld [vmem:[%s4395 + $0x48] sm:$0xff]
  %v4406 = vld [vmem:[%s4395 + $0x50] sm:$0xff]
  %v4407 = vld [vmem:[%s4395 + $0x58] sm:$0xff]
  %v4408 = vld [vmem:[%s4395 + $0x60] sm:$0xff]
  %v4409 = vld [vmem:[%s4395 + $0x68] sm:$0xff]
  %v4410 = vld [vmem:[%s4395 + $0x70] sm:$0xff]
  %v4411 = vld [vmem:[%s4395 + $0x78] sm:$0xff]
  %v4412 = vld [vmem:[%s4395 + $0x80] sm:$0xff]
  %v4413 = vld [vmem:[%s4395 + $0x88] sm:$0xff]
  %v4414 = vld [vmem:[%s4395 + $0x90] sm:$0xff]
  %v4415 = vld [vmem:[%s4395 + $0x98] sm:$0xff]
  %v4416 = vld [vmem:[%s4395 + $0xa0] sm:$0xff]
  %v4417 = vld [vmem:[%s4395 + $0xa8] sm:$0xff]
  %v4418 = vld [vmem:[%s4395 + $0xb0] sm:$0xff]
  %v4419 = vld [vmem:[%s4395 + $0xb8] sm:$0xff]
  %v4420 = vld [vmem:[%s4395 + $0xc0] sm:$0xff]
  %v4421 = vld [vmem:[%s4395 + $0xc8] sm:$0xff]
  %v4422 = vld [vmem:[%s4395 + $0xd0] sm:$0xff]
  %v4423 = vld [vmem:[%s4395 + $0xd8] sm:$0xff]
  %v4424 = vld [vmem:[%s4395 + $0xe0] sm:$0xff]
  %v4425 = vld [vmem:[%s4395 + $0xe8] sm:$0xff]
  %v4426 = vld [vmem:[%s4395 + $0xf0] sm:$0xff]
  %v4427 = vld [vmem:[%s4395 + $0xf8] sm:$0xff]
  %s4428 = scalar_lea.vmem %s6, 256
  %v4429 = vld [vmem:[%s4428] sm:$0xff]
  %v4430 = vld [vmem:[%s4428 + $0x8] sm:$0xff]
  %v4431 = vld [vmem:[%s4428 + $0x10] sm:$0xff]
  %v4432 = vld [vmem:[%s4428 + $0x18] sm:$0xff]
  %v4433 = vld [vmem:[%s4428 + $0x20] sm:$0xff]
  %v4434 = vld [vmem:[%s4428 + $0x28] sm:$0xff]
  %v4435 = vld [vmem:[%s4428 + $0x30] sm:$0xff]
  %v4436 = vld [vmem:[%s4428 + $0x38] sm:$0xff]
  %v4437 = vld [vmem:[%s4428 + $0x40] sm:$0xff]
  %v4438 = vld [vmem:[%s4428 + $0x48] sm:$0xff]
  %v4439 = vld [vmem:[%s4428 + $0x50] sm:$0xff]
  %v4440 = vld [vmem:[%s4428 + $0x58] sm:$0xff]
  %v4441 = vld [vmem:[%s4428 + $0x60] sm:$0xff]
  %v4442 = vld [vmem:[%s4428 + $0x68] sm:$0xff]
  %v4443 = vld [vmem:[%s4428 + $0x70] sm:$0xff]
  %v4444 = vld [vmem:[%s4428 + $0x78] sm:$0xff]
  %v4445 = vld [vmem:[%s4428 + $0x80] sm:$0xff]
  %v4446 = vld [vmem:[%s4428 + $0x88] sm:$0xff]
  %v4447 = vld [vmem:[%s4428 + $0x90] sm:$0xff]
  %v4448 = vld [vmem:[%s4428 + $0x98] sm:$0xff]
  %v4449 = vld [vmem:[%s4428 + $0xa0] sm:$0xff]
  %v4450 = vld [vmem:[%s4428 + $0xa8] sm:$0xff]
  %v4451 = vld [vmem:[%s4428 + $0xb0] sm:$0xff]
  %v4452 = vld [vmem:[%s4428 + $0xb8] sm:$0xff]
  %v4453 = vld [vmem:[%s4428 + $0xc0] sm:$0xff]
  %v4454 = vld [vmem:[%s4428 + $0xc8] sm:$0xff]
  %v4455 = vld [vmem:[%s4428 + $0xd0] sm:$0xff]
  %v4456 = vld [vmem:[%s4428 + $0xd8] sm:$0xff]
  %v4457 = vld [vmem:[%s4428 + $0xe0] sm:$0xff]
  %v4458 = vld [vmem:[%s4428 + $0xe8] sm:$0xff]
  %v4459 = vld [vmem:[%s4428 + $0xf0] sm:$0xff]
  %v4460 = vld [vmem:[%s4428 + $0xf8] sm:$0xff]
  %s4461 = scalar_lea.vmem %s7, 4
  %v4462 = vld [vmem:[%s4461] sm:$0xf]
  %v4463 = vld [vmem:[#allocation2] sm:$0xff]
  %v4464 = vld [vmem:[#allocation2 + $0x8] sm:$0xff]
  %v4465 = vld [vmem:[#allocation2 + $0x10] sm:$0xff]
  %v4466 = vld [vmem:[#allocation2 + $0x18] sm:$0xff]
  %v4467 = vld [vmem:[#allocation2 + $0x20] sm:$0xff]
  %v4468 = vld [vmem:[#allocation2 + $0x28] sm:$0xff]
  %v4469 = vpack.c.bf16 %v4464, %v4463
  %v4470 = vpack.c.bf16 %v4466, %v4465
  %v4471 = vpack.c.bf16 %v4468, %v4467
  %v4473 = vlaneseq
  %v4474 = vshrl.u32 %v4473, 7
  %v4475 = vsub.s32 0, %v4474
  %v4476 = vrot.slane %v4462, %v4475
  %v4477 = vlaneseq
  %v4478 = vshrl.u32 %v4477, 7
  %v4479 = vsub.s32 1, %v4478
  %v4480 = vrot.slane %v4462, %v4479
  %v4481 = vlaneseq
  %v4482 = vshrl.u32 %v4481, 7
  %v4483 = vsub.s32 2, %v4482
  %v4484 = vrot.slane %v4462, %v4483
  %v4485 = vlaneseq
  %v4486 = vshrl.u32 %v4485, 7
  %v4487 = vsub.s32 3, %v4486
  %v4488 = vrot.slane %v4462, %v4487
  %v4525 = vunpack.c.l.b16 %v4396
  %v4526 = vunpack.c.h.b16 %v4396
  %v4527 = vunpack.c.l.b16 %v4397
  %v4528 = vunpack.c.h.b16 %v4397
  %v4529 = vunpack.c.l.b16 %v4398
  %v4530 = vunpack.c.h.b16 %v4398
  %v4531 = vunpack.c.l.b16 %v4399
  %v4532 = vunpack.c.h.b16 %v4399
  %v4533 = vunpack.c.l.b16 %v4400
  %v4534 = vunpack.c.h.b16 %v4400
  %v4535 = vunpack.c.l.b16 %v4401
  %v4536 = vunpack.c.h.b16 %v4401
  %v4537 = vunpack.c.l.b16 %v4402
  %v4538 = vunpack.c.h.b16 %v4402
  %v4539 = vunpack.c.l.b16 %v4403
  %v4540 = vunpack.c.h.b16 %v4403
  %v4541 = vunpack.c.l.b16 %v4404
  %v4542 = vunpack.c.h.b16 %v4404
  %v4543 = vunpack.c.l.b16 %v4405
  %v4544 = vunpack.c.h.b16 %v4405
  %v4545 = vunpack.c.l.b16 %v4406
  %v4546 = vunpack.c.h.b16 %v4406
  %v4547 = vunpack.c.l.b16 %v4407
  %v4548 = vunpack.c.h.b16 %v4407
  %v4549 = vunpack.c.l.b16 %v4408
  %v4550 = vunpack.c.h.b16 %v4408
  %v4551 = vunpack.c.l.b16 %v4409
  %v4552 = vunpack.c.h.b16 %v4409
  %v4553 = vunpack.c.l.b16 %v4410
  %v4554 = vunpack.c.h.b16 %v4410
  %v4555 = vunpack.c.l.b16 %v4411
  %v4556 = vunpack.c.h.b16 %v4411
  %v4557 = vunpack.c.l.b16 %v4412
  %v4558 = vunpack.c.h.b16 %v4412
  %v4559 = vunpack.c.l.b16 %v4413
  %v4560 = vunpack.c.h.b16 %v4413
  %v4561 = vunpack.c.l.b16 %v4414
  %v4562 = vunpack.c.h.b16 %v4414
  %v4563 = vunpack.c.l.b16 %v4415
  %v4564 = vunpack.c.h.b16 %v4415
  %v4565 = vunpack.c.l.b16 %v4416
  %v4566 = vunpack.c.h.b16 %v4416
  %v4567 = vunpack.c.l.b16 %v4417
  %v4568 = vunpack.c.h.b16 %v4417
  %v4569 = vunpack.c.l.b16 %v4418
  %v4570 = vunpack.c.h.b16 %v4418
  %v4571 = vunpack.c.l.b16 %v4419
  %v4572 = vunpack.c.h.b16 %v4419
  %v4573 = vunpack.c.l.b16 %v4420
  %v4574 = vunpack.c.h.b16 %v4420
  %v4575 = vunpack.c.l.b16 %v4421
  %v4576 = vunpack.c.h.b16 %v4421
  %v4577 = vunpack.c.l.b16 %v4422
  %v4578 = vunpack.c.h.b16 %v4422
  %v4579 = vunpack.c.l.b16 %v4423
  %v4580 = vunpack.c.h.b16 %v4423
  %v4581 = vunpack.c.l.b16 %v4424
  %v4582 = vunpack.c.h.b16 %v4424
  %v4583 = vunpack.c.l.b16 %v4425
  %v4584 = vunpack.c.h.b16 %v4425
  %v4585 = vunpack.c.l.b16 %v4426
  %v4586 = vunpack.c.h.b16 %v4426
  %v4587 = vunpack.c.l.b16 %v4427
  %v4588 = vunpack.c.h.b16 %v4427
  %v4589 = vpack.c.b16 %v4529, %v4525
  %v4590 = vpack.c.b16 %v4530, %v4526
  %v4591 = vpack.c.b16 %v4531, %v4527
  %v4592 = vpack.c.b16 %v4532, %v4528
  %v4593 = vpack.c.b16 %v4537, %v4533
  %v4594 = vpack.c.b16 %v4538, %v4534
  %v4595 = vpack.c.b16 %v4539, %v4535
  %v4596 = vpack.c.b16 %v4540, %v4536
  %v4597 = vpack.c.b16 %v4545, %v4541
  %v4598 = vpack.c.b16 %v4546, %v4542
  %v4599 = vpack.c.b16 %v4547, %v4543
  %v4600 = vpack.c.b16 %v4548, %v4544
  %v4601 = vpack.c.b16 %v4553, %v4549
  %v4602 = vpack.c.b16 %v4554, %v4550
  %v4603 = vpack.c.b16 %v4555, %v4551
  %v4604 = vpack.c.b16 %v4556, %v4552
  %v4605 = vpack.c.b16 %v4561, %v4557
  %v4606 = vpack.c.b16 %v4562, %v4558
  %v4607 = vpack.c.b16 %v4563, %v4559
  %v4608 = vpack.c.b16 %v4564, %v4560
  %v4609 = vpack.c.b16 %v4569, %v4565
  %v4610 = vpack.c.b16 %v4570, %v4566
  %v4611 = vpack.c.b16 %v4571, %v4567
  %v4612 = vpack.c.b16 %v4572, %v4568
  %v4613 = vpack.c.b16 %v4577, %v4573
  %v4614 = vpack.c.b16 %v4578, %v4574
  %v4615 = vpack.c.b16 %v4579, %v4575
  %v4616 = vpack.c.b16 %v4580, %v4576
  %v4617 = vpack.c.b16 %v4585, %v4581
  %v4618 = vpack.c.b16 %v4586, %v4582
  %v4619 = vpack.c.b16 %v4587, %v4583
  %v4620 = vpack.c.b16 %v4588, %v4584
  %4653 = vmatprep.subr.bf16.mxu0 %v4590
  %4654 = vmatpush1.bf16.msra.mxu0 %v4589
  %4655 = vmatprep.subr.bf16.mxu0 %v4594
  %4656 = vmatpush1.bf16.msra.mxu0 %v4593
  %4657 = vmatprep.subr.bf16.mxu0 %v4598
  %4658 = vmatpush1.bf16.msra.mxu0 %v4597
  %4659 = vmatprep.subr.bf16.mxu0 %v4602
  %4660 = vmatpush1.bf16.msra.mxu0 %v4601
  %4661 = vmatprep.subr.bf16.mxu0 %v4606
  %4662 = vmatpush1.bf16.msra.mxu0 %v4605
  %4663 = vmatprep.subr.bf16.mxu0 %v4610
  %4664 = vmatpush1.bf16.msra.mxu0 %v4609
  %4665 = vmatprep.subr.bf16.mxu0 %v4614
  %4666 = vmatpush1.bf16.msra.mxu0 %v4613
  %4667 = vmatprep.subr.bf16.mxu0 %v4618
  %4668 = vmatpush1.bf16.msra.mxu0 %v4617
  %4669 = vmatprep.subr.bf16.mxu0 0
  %4670 = vmatpush1.bf16.msra.mxu0 0
  %4671 = vmatprep.subr.bf16.mxu0 0
  %4672 = vmatpush1.bf16.msra.mxu0 0
  %4673 = vmatprep.subr.bf16.mxu0 0
  %4674 = vmatpush1.bf16.msra.mxu0 0
  %4675 = vmatprep.subr.bf16.mxu0 0
  %4676 = vmatpush1.bf16.msra.mxu0 0
  %4677 = vmatprep.subr.bf16.mxu0 0
  %4678 = vmatpush1.bf16.msra.mxu0 0
  %4679 = vmatprep.subr.bf16.mxu0 0
  %4680 = vmatpush1.bf16.msra.mxu0 0
  %4681 = vmatprep.subr.bf16.mxu0 0
  %4682 = vmatpush1.bf16.msra.mxu0 0
  %4683 = vmatprep.subr.bf16.mxu0 0
  %4684 = vmatpush1.bf16.msra.mxu0 0
  %4685 = vmatprep.mubr.bf16.mxu0 0
  %4686 = vmatmul.mubr.bf16.gmra.mrb[0].mxu0 %v4469
  %v4687 = vpop.f32.mrb[0].mxu0
  %v4688 = vadd.f32 %v4476, %v4687
  %v4689 = vpop.f32.mrb[0].mxu0
  %v4690 = vadd.f32 %v4480, %v4689
  %v4691 = vpop.f32.mrb[0].mxu0
  %v4692 = vadd.f32 %v4476, %v4691
  %v4693 = vpop.f32.mrb[0].mxu0
  %v4694 = vadd.f32 %v4480, %v4693
  %4695 = vmatprep.mubr.bf16.mxu0 0
  %4696 = vmatmul.mubr.bf16.gmra.mrb[0].mxu0 %v4470
  %v4697 = vpop.f32.mrb[0].mxu0
  %v4698 = vadd.f32 %v4476, %v4697
  %v4699 = vpop.f32.mrb[0].mxu0
  %v4700 = vadd.f32 %v4480, %v4699
  %v4701 = vpop.f32.mrb[0].mxu0
  %v4702 = vadd.f32 %v4476, %v4701
  %v4703 = vpop.f32.mrb[0].mxu0
  %v4704 = vadd.f32 %v4480, %v4703
  %4705 = vmatprep.mubr.bf16.mxu0 0
  %4706 = vmatmul.mubr.bf16.gmra.mrb[0].mxu0 %v4471
  %v4707 = vpop.f32.mrb[0].mxu0
  %v4708 = vadd.f32 %v4476, %v4707
  %v4709 = vpop.f32.mrb[0].mxu0
  %v4710 = vadd.f32 %v4480, %v4709
  %v4711 = vpop.f32.mrb[0].mxu0
  %v4712 = vadd.f32 %v4476, %v4711
  %v4713 = vpop.f32.mrb[0].mxu0
  %v4714 = vadd.f32 %v4480, %v4713
  %4715 = vdwg.mxu0
  %4716 = vmatprep.subr.bf16.mxu0 %v4592
  %4717 = vmatpush1.bf16.msra.mxu0 %v4591
  %4718 = vmatprep.subr.bf16.mxu0 %v4596
  %4719 = vmatpush1.bf16.msra.mxu0 %v4595
  %4720 = vmatprep.subr.bf16.mxu0 %v4600
  %4721 = vmatpush1.bf16.msra.mxu0 %v4599
  %4722 = vmatprep.subr.bf16.mxu0 %v4604
  %4723 = vmatpush1.bf16.msra.mxu0 %v4603
  %4724 = vmatprep.subr.bf16.mxu0 %v4608
  %4725 = vmatpush1.bf16.msra.mxu0 %v4607
  %4726 = vmatprep.subr.bf16.mxu0 %v4612
  %4727 = vmatpush1.bf16.msra.mxu0 %v4611
  %4728 = vmatprep.subr.bf16.mxu0 %v4616
  %4729 = vmatpush1.bf16.msra.mxu0 %v4615
  %4730 = vmatprep.subr.bf16.mxu0 %v4620
  %4731 = vmatpush1.bf16.msra.mxu0 %v4619
  %4732 = vmatprep.subr.bf16.mxu0 0
  %4733 = vmatpush1.bf16.msra.mxu0 0
  %4734 = vmatprep.subr.bf16.mxu0 0
  %4735 = vmatpush1.bf16.msra.mxu0 0
  %4736 = vmatprep.subr.bf16.mxu0 0
  %4737 = vmatpush1.bf16.msra.mxu0 0
  %4738 = vmatprep.subr.bf16.mxu0 0
  %4739 = vmatpush1.bf16.msra.mxu0 0
  %4740 = vmatprep.subr.bf16.mxu0 0
  %4741 = vmatpush1.bf16.msra.mxu0 0
  %4742 = vmatprep.subr.bf16.mxu0 0
  %4743 = vmatpush1.bf16.msra.mxu0 0
  %4744 = vmatprep.subr.bf16.mxu0 0
  %4745 = vmatpush1.bf16.msra.mxu0 0
  %4746 = vmatprep.subr.bf16.mxu0 0
  %4747 = vmatpush1.bf16.msra.mxu0 0
  %4748 = vmatprep.mubr.bf16.mxu0 0
  %4749 = vmatmul.mubr.bf16.gmra.mrb[0].mxu0 %v4469
  %v4750 = vpop.f32.mrb[0].mxu0
  %v4751 = vadd.f32 %v4484, %v4750
  %v4752 = vpop.f32.mrb[0].mxu0
  %v4753 = vadd.f32 %v4488, %v4752
  %v4754 = vpop.f32.mrb[0].mxu0
  %v4755 = vadd.f32 %v4484, %v4754
  %v4756 = vpop.f32.mrb[0].mxu0
  %v4757 = vadd.f32 %v4488, %v4756
  %4758 = vmatprep.mubr.bf16.mxu0 0
  %4759 = vmatmul.mubr.bf16.gmra.mrb[0].mxu0 %v4470
  %v4760 = vpop.f32.mrb[0].mxu0
  %v4761 = vadd.f32 %v4484, %v4760
  %v4762 = vpop.f32.mrb[0].mxu0
  %v4763 = vadd.f32 %v4488, %v4762
  %v4764 = vpop.f32.mrb[0].mxu0
  %v4765 = vadd.f32 %v4484, %v4764
  %v4766 = vpop.f32.mrb[0].mxu0
  %v4767 = vadd.f32 %v4488, %v4766
  %4768 = vmatprep.mubr.bf16.mxu0 0
  %4769 = vmatmul.mubr.bf16.gmra.mrb[0].mxu0 %v4471
  %v4770 = vpop.f32.mrb[0].mxu0
  %v4771 = vadd.f32 %v4484, %v4770
  %v4772 = vpop.f32.mrb[0].mxu0
  %v4773 = vadd.f32 %v4488, %v4772
  %v4774 = vpop.f32.mrb[0].mxu0
  %v4775 = vadd.f32 %v4484, %v4774
  %v4776 = vpop.f32.mrb[0].mxu0
  %v4777 = vadd.f32 %v4488, %v4776
  %4778 = vdwg.mxu0
  %4779 = vst [vmem:[#allocation4] sm:$0xff] %v4688
  %4780 = vst [vmem:[#allocation4 + $0x8] sm:$0xff] %v4690
  %4781 = vst [vmem:[#allocation4 + $0x10] sm:$0xff] %v4751
  %4782 = vst [vmem:[#allocation4 + $0x18] sm:$0xff] %v4753
  %4783 = vst [vmem:[#allocation4 + $0x20] sm:$0xff] %v4692
  %4784 = vst [vmem:[#allocation4 + $0x28] sm:$0xff] %v4694
  %4785 = vst [vmem:[#allocation4 + $0x30] sm:$0xff] %v4755
  %4786 = vst [vmem:[#allocation4 + $0x38] sm:$0xff] %v4757
  %4787 = vst [vmem:[#allocation4 + $0x40] sm:$0xff] %v4698
  %4788 = vst [vmem:[#allocation4 + $0x48] sm:$0xff] %v4700
  %4789 = vst [vmem:[#allocation4 + $0x50] sm:$0xff] %v4761
  %4790 = vst [vmem:[#allocation4 + $0x58] sm:$0xff] %v4763
  %4791 = vst [vmem:[#allocation4 + $0x60] sm:$0xff] %v4702
  %4792 = vst [vmem:[#allocation4 + $0x68] sm:$0xff] %v4704
  %4793 = vst [vmem:[#allocation4 + $0x70] sm:$0xff] %v4765
  %4794 = vst [vmem:[#allocation4 + $0x78] sm:$0xff] %v4767
  %4795 = vst [vmem:[#allocation4 + $0x80] sm:$0xff] %v4708
  %4796 = vst [vmem:[#allocation4 + $0x88] sm:$0xff] %v4710
  %4797 = vst [vmem:[#allocation4 + $0x90] sm:$0xff] %v4771
  %4798 = vst [vmem:[#allocation4 + $0x98] sm:$0xff] %v4773
  %4799 = vst [vmem:[#allocation4 + $0xa0] sm:$0xff] %v4712
  %4800 = vst [vmem:[#allocation4 + $0xa8] sm:$0xff] %v4714
  %4801 = vst [vmem:[#allocation4 + $0xb0] sm:$0xff] %v4775
  %4802 = vst [vmem:[#allocation4 + $0xb8] sm:$0xff] %v4777
  %v4803 = vld [vmem:[%s474] sm:$0xff]
  %v4804 = vld [vmem:[%s474 + $0x8] sm:$0xff]
  %v4805 = vld [vmem:[%s474 + $0x10] sm:$0xff]
  %v4806 = vld [vmem:[%s474 + $0x18] sm:$0xff]
  %v4807 = vpack.c.bf16 %v4393, %v4393
  %v4840 = vunpack.c.l.b16 %v4429
  %v4841 = vunpack.c.h.b16 %v4429
  %v4842 = vunpack.c.l.b16 %v4430
  %v4843 = vunpack.c.h.b16 %v4430
  %v4844 = vunpack.c.l.b16 %v4431
  %v4845 = vunpack.c.h.b16 %v4431
  %v4846 = vunpack.c.l.b16 %v4432
  %v4847 = vunpack.c.h.b16 %v4432
  %v4848 = vunpack.c.l.b16 %v4433
  %v4849 = vunpack.c.h.b16 %v4433
  %v4850 = vunpack.c.l.b16 %v4434
  %v4851 = vunpack.c.h.b16 %v4434
  %v4852 = vunpack.c.l.b16 %v4435
  %v4853 = vunpack.c.h.b16 %v4435
  %v4854 = vunpack.c.l.b16 %v4436
  %v4855 = vunpack.c.h.b16 %v4436
  %v4856 = vunpack.c.l.b16 %v4437
  %v4857 = vunpack.c.h.b16 %v4437
  %v4858 = vunpack.c.l.b16 %v4438
  %v4859 = vunpack.c.h.b16 %v4438
  %v4860 = vunpack.c.l.b16 %v4439
  %v4861 = vunpack.c.h.b16 %v4439
  %v4862 = vunpack.c.l.b16 %v4440
  %v4863 = vunpack.c.h.b16 %v4440
  %v4864 = vunpack.c.l.b16 %v4441
  %v4865 = vunpack.c.h.b16 %v4441
  %v4866 = vunpack.c.l.b16 %v4442
  %v4867 = vunpack.c.h.b16 %v4442
  %v4868 = vunpack.c.l.b16 %v4443
  %v4869 = vunpack.c.h.b16 %v4443
  %v4870 = vunpack.c.l.b16 %v4444
  %v4871 = vunpack.c.h.b16 %v4444
  %v4872 = vunpack.c.l.b16 %v4445
  %v4873 = vunpack.c.h.b16 %v4445
  %v4874 = vunpack.c.l.b16 %v4446
  %v4875 = vunpack.c.h.b16 %v4446
  %v4876 = vunpack.c.l.b16 %v4447
  %v4877 = vunpack.c.h.b16 %v4447
  %v4878 = vunpack.c.l.b16 %v4448
  %v4879 = vunpack.c.h.b16 %v4448
  %v4880 = vunpack.c.l.b16 %v4449
  %v4881 = vunpack.c.h.b16 %v4449
  %v4882 = vunpack.c.l.b16 %v4450
  %v4883 = vunpack.c.h.b16 %v4450
  %v4884 = vunpack.c.l.b16 %v4451
  %v4885 = vunpack.c.h.b16 %v4451
  %v4886 = vunpack.c.l.b16 %v4452
  %v4887 = vunpack.c.h.b16 %v4452
  %v4888 = vunpack.c.l.b16 %v4453
  %v4889 = vunpack.c.h.b16 %v4453
  %v4890 = vunpack.c.l.b16 %v4454
  %v4891 = vunpack.c.h.b16 %v4454
  %v4892 = vunpack.c.l.b16 %v4455
  %v4893 = vunpack.c.h.b16 %v4455
  %v4894 = vunpack.c.l.b16 %v4456
  %v4895 = vunpack.c.h.b16 %v4456
  %v4896 = vunpack.c.l.b16 %v4457
  %v4897 = vunpack.c.h.b16 %v4457
  %v4898 = vunpack.c.l.b16 %v4458
  %v4899 = vunpack.c.h.b16 %v4458
  %v4900 = vunpack.c.l.b16 %v4459
  %v4901 = vunpack.c.h.b16 %v4459
  %v4902 = vunpack.c.l.b16 %v4460
  %v4903 = vunpack.c.h.b16 %v4460
  %v4904 = vpack.c.b16 %v4844, %v4840
  %v4905 = vpack.c.b16 %v4845, %v4841
  %v4906 = vpack.c.b16 %v4846, %v4842
  %v4907 = vpack.c.b16 %v4847, %v4843
  %v4908 = vpack.c.b16 %v4852, %v4848
  %v4909 = vpack.c.b16 %v4853, %v4849
  %v4910 = vpack.c.b16 %v4854, %v4850
  %v4911 = vpack.c.b16 %v4855, %v4851
  %v4912 = vpack.c.b16 %v4860, %v4856
  %v4913 = vpack.c.b16 %v4861, %v4857
  %v4914 = vpack.c.b16 %v4862, %v4858
  %v4915 = vpack.c.b16 %v4863, %v4859
  %v4916 = vpack.c.b16 %v4868, %v4864
  %v4917 = vpack.c.b16 %v4869, %v4865
  %v4918 = vpack.c.b16 %v4870, %v4866
  %v4919 = vpack.c.b16 %v4871, %v4867
  %v4920 = vpack.c.b16 %v4876, %v4872
  %v4921 = vpack.c.b16 %v4877, %v4873
  %v4922 = vpack.c.b16 %v4878, %v4874
  %v4923 = vpack.c.b16 %v4879, %v4875
  %v4924 = vpack.c.b16 %v4884, %v4880
  %v4925 = vpack.c.b16 %v4885, %v4881
  %v4926 = vpack.c.b16 %v4886, %v4882
  %v4927 = vpack.c.b16 %v4887, %v4883
  %v4928 = vpack.c.b16 %v4892, %v4888
  %v4929 = vpack.c.b16 %v4893, %v4889
  %v4930 = vpack.c.b16 %v4894, %v4890
  %v4931 = vpack.c.b16 %v4895, %v4891
  %v4932 = vpack.c.b16 %v4900, %v4896
  %v4933 = vpack.c.b16 %v4901, %v4897
  %v4934 = vpack.c.b16 %v4902, %v4898
  %v4935 = vpack.c.b16 %v4903, %v4899
  %4968 = vmatprep.subr.bf16.mxu0 %v4905
  %4969 = vmatpush1.bf16.msra.mxu0 %v4904
  %4970 = vmatprep.subr.bf16.mxu0 %v4909
  %4971 = vmatpush1.bf16.msra.mxu0 %v4908
  %4972 = vmatprep.subr.bf16.mxu0 %v4913
  %4973 = vmatpush1.bf16.msra.mxu0 %v4912
  %4974 = vmatprep.subr.bf16.mxu0 %v4917
  %4975 = vmatpush1.bf16.msra.mxu0 %v4916
  %4976 = vmatprep.subr.bf16.mxu0 %v4921
  %4977 = vmatpush1.bf16.msra.mxu0 %v4920
  %4978 = vmatprep.subr.bf16.mxu0 %v4925
  %4979 = vmatpush1.bf16.msra.mxu0 %v4924
  %4980 = vmatprep.subr.bf16.mxu0 %v4929
  %4981 = vmatpush1.bf16.msra.mxu0 %v4928
  %4982 = vmatprep.subr.bf16.mxu0 %v4933
  %4983 = vmatpush1.bf16.msra.mxu0 %v4932
  %4984 = vmatprep.subr.bf16.mxu0 0
  %4985 = vmatpush1.bf16.msra.mxu0 0
  %4986 = vmatprep.subr.bf16.mxu0 0
  %4987 = vmatpush1.bf16.msra.mxu0 0
  %4988 = vmatprep.subr.bf16.mxu0 0
  %4989 = vmatpush1.bf16.msra.mxu0 0
  %4990 = vmatprep.subr.bf16.mxu0 0
  %4991 = vmatpush1.bf16.msra.mxu0 0
  %4992 = vmatprep.subr.bf16.mxu0 0
  %4993 = vmatpush1.bf16.msra.mxu0 0
  %4994 = vmatprep.subr.bf16.mxu0 0
  %4995 = vmatpush1.bf16.msra.mxu0 0
  %4996 = vmatprep.subr.bf16.mxu0 0
  %4997 = vmatpush1.bf16.msra.mxu0 0
  %4998 = vmatprep.subr.bf16.mxu0 0
  %4999 = vmatpush1.bf16.msra.mxu0 0
  %5000 = vmatprep.mubr.bf16.mxu0 0
  %5001 = vmatmul.mubr.bf16.gmra.mrb[0].mxu0 %v4807
  %v5002 = vpop.f32.mrb[0].mxu0
  %v5003 = vadd.f32 0.0, %v5002
  %v5004 = vpop.f32.mrb[0].mxu0
  %v5005 = vadd.f32 0.0, %v5004
  %v5006 = vpop.f32.mrb[0].mxu0
  %v5007 = vpop.f32.mrb[0].mxu0
  %5008 = vdwg.mxu0
  %5009 = vmatprep.subr.bf16.mxu0 %v4907
  %5010 = vmatpush1.bf16.msra.mxu0 %v4906
  %5011 = vmatprep.subr.bf16.mxu0 %v4911
  %5012 = vmatpush1.bf16.msra.mxu0 %v4910
  %5013 = vmatprep.subr.bf16.mxu0 %v4915
  %5014 = vmatpush1.bf16.msra.mxu0 %v4914
  %5015 = vmatprep.subr.bf16.mxu0 %v4919
  %5016 = vmatpush1.bf16.msra.mxu0 %v4918
  %5017 = vmatprep.subr.bf16.mxu0 %v4923
  %5018 = vmatpush1.bf16.msra.mxu0 %v4922
  %5019 = vmatprep.subr.bf16.mxu0 %v4927
  %5020 = vmatpush1.bf16.msra.mxu0 %v4926
  %5021 = vmatprep.subr.bf16.mxu0 %v4931
  %5022 = vmatpush1.bf16.msra.mxu0 %v4930
  %5023 = vmatprep.subr.bf16.mxu0 %v4935
  %5024 = vmatpush1.bf16.msra.mxu0 %v4934
  %5025 = vmatprep.subr.bf16.mxu0 0
  %5026 = vmatpush1.bf16.msra.mxu0 0
  %5027 = vmatprep.subr.bf16.mxu0 0
  %5028 = vmatpush1.bf16.msra.mxu0 0
  %5029 = vmatprep.subr.bf16.mxu0 0
  %5030 = vmatpush1.bf16.msra.mxu0 0
  %5031 = vmatprep.subr.bf16.mxu0 0
  %5032 = vmatpush1.bf16.msra.mxu0 0
  %5033 = vmatprep.subr.bf16.mxu0 0
  %5034 = vmatpush1.bf16.msra.mxu0 0
  %5035 = vmatprep.subr.bf16.mxu0 0
  %5036 = vmatpush1.bf16.msra.mxu0 0
  %5037 = vmatprep.subr.bf16.mxu0 0
  %5038 = vmatpush1.bf16.msra.mxu0 0
  %5039 = vmatprep.subr.bf16.mxu0 0
  %5040 = vmatpush1.bf16.msra.mxu0 0
  %5041 = vmatprep.mubr.bf16.mxu0 0
  %5042 = vmatmul.mubr.bf16.gmra.mrb[0].mxu0 %v4807
  %v5043 = vpop.f32.mrb[0].mxu0
  %v5044 = vadd.f32 0.0, %v5043
  %v5045 = vpop.f32.mrb[0].mxu0
  %v5046 = vadd.f32 0.0, %v5045
  %v5047 = vpop.f32.mrb[0].mxu0
  %v5048 = vpop.f32.mrb[0].mxu0
  %5049 = vdwg.mxu0
  %v5050 = vadd.f32 %v4803, %v5003
  %v5051 = vadd.f32 %v4804, %v5005
  %v5052 = vadd.f32 %v4805, %v5044
  %v5053 = vadd.f32 %v4806, %v5046
  %v5054 = vxor.u32 %v5050, 2147483648
  %v5055 = vxor.u32 %v5051, 2147483648
  %v5056 = vxor.u32 %v5052, 2147483648
  %v5057 = vmul.f32 %v5054, 1.442695
  %v5058 = vpow.pop %v5057
  %v5059 = vmul.f32 %v5055, 1.442695
  %v5060 = vpow.pop %v5059
  %v5061 = vmul.f32 %v5056, 1.442695
  %v5062 = vpow.pop %v5061
  %v5063 = vadd.f32 %v5058, 1.0
  %v5064 = vadd.f32 %v5060, 1.0
  %v5065 = vadd.f32 %v5062, 1.0
  %v5066 = vrcp.pop %v5063
  %v5067 = vmul.f32 1.0, %v5066
  %v5068 = vrcp.pop %v5064
  %v5069 = vmul.f32 1.0, %v5068
  %v5070 = vrcp.pop %v5065
  %v5071 = vmul.f32 1.0, %v5070
  %v5072 = vtanh.pop %v5053
  %v5073 = vmul.f32 %v5069, %v4394
  %v5074 = vmul.f32 %v5067, %v5072
  %v5075 = vadd.f32 %v5073, %v5074
  %v5076 = vtanh.pop %v5075
  %v5077 = vmul.f32 %v5071, %v5076
  %5078 = vst [vmem:[#allocation3] sm:$0xff] %v5077
  %v5079 = vld [vmem:[%s752] sm:$0xff]
  %v5080 = vld [vmem:[%s752 + $0x8] sm:$0xff]
  %v5081 = vld [vmem:[%s752 + $0x10] sm:$0xff]
  %v5082 = vld [vmem:[%s752 + $0x18] sm:$0xff]
  %v5083 = vpack.c.bf16 %v5077, %v5077
  %5084 = vmatprep.subr.bf16.mxu0 %v4905
  %5085 = vmatpush1.bf16.msra.mxu0 %v4904
  %5086 = vmatprep.subr.bf16.mxu0 %v4909
  %5087 = vmatpush1.bf16.msra.mxu0 %v4908
  %5088 = vmatprep.subr.bf16.mxu0 %v4913
  %5089 = vmatpush1.bf16.msra.mxu0 %v4912
  %5090 = vmatprep.subr.bf16.mxu0 %v4917
  %5091 = vmatpush1.bf16.msra.mxu0 %v4916
  %5092 = vmatprep.subr.bf16.mxu0 %v4921
  %5093 = vmatpush1.bf16.msra.mxu0 %v4920
  %5094 = vmatprep.subr.bf16.mxu0 %v4925
  %5095 = vmatpush1.bf16.msra.mxu0 %v4924
  %5096 = vmatprep.subr.bf16.mxu0 %v4929
  %5097 = vmatpush1.bf16.msra.mxu0 %v4928
  %5098 = vmatprep.subr.bf16.mxu0 %v4933
  %5099 = vmatpush1.bf16.msra.mxu0 %v4932
  %5100 = vmatprep.subr.bf16.mxu0 0
  %5101 = vmatpush1.bf16.msra.mxu0 0
  %5102 = vmatprep.subr.bf16.mxu0 0
  %5103 = vmatpush1.bf16.msra.mxu0 0
  %5104 = vmatprep.subr.bf16.mxu0 0
  %5105 = vmatpush1.bf16.msra.mxu0 0
  %5106 = vmatprep.subr.bf16.mxu0 0
  %5107 = vmatpush1.bf16.msra.mxu0 0
  %5108 = vmatprep.subr.bf16.mxu0 0
  %5109 = vmatpush1.bf16.msra.mxu0 0
  %5110 = vmatprep.subr.bf16.mxu0 0
  %5111 = vmatpush1.bf16.msra.mxu0 0
  %5112 = vmatprep.subr.bf16.mxu0 0
  %5113 = vmatpush1.bf16.msra.mxu0 0
  %5114 = vmatprep.subr.bf16.mxu0 0
  %5115 = vmatpush1.bf16.msra.mxu0 0
  %5116 = vmatprep.mubr.bf16.mxu0 0
  %5117 = vmatmul.mubr.bf16.gmra.mrb[0].mxu0 %v5083
  %v5118 = vpop.f32.mrb[0].mxu0
  %v5119 = vadd.f32 0.0, %v5118
  %v5120 = vpop.f32.mrb[0].mxu0
  %v5121 = vadd.f32 0.0, %v5120
  %v5122 = vpop.f32.mrb[0].mxu0
  %v5123 = vpop.f32.mrb[0].mxu0
  %5124 = vdwg.mxu0
  %5125 = vmatprep.subr.bf16.mxu0 %v4907
  %5126 = vmatpush1.bf16.msra.mxu0 %v4906
  %5127 = vmatprep.subr.bf16.mxu0 %v4911
  %5128 = vmatpush1.bf16.msra.mxu0 %v4910
  %5129 = vmatprep.subr.bf16.mxu0 %v4915
  %5130 = vmatpush1.bf16.msra.mxu0 %v4914
  %5131 = vmatprep.subr.bf16.mxu0 %v4919
  %5132 = vmatpush1.bf16.msra.mxu0 %v4918
  %5133 = vmatprep.subr.bf16.mxu0 %v4923
  %5134 = vmatpush1.bf16.msra.mxu0 %v4922
  %5135 = vmatprep.subr.bf16.mxu0 %v4927
  %5136 = vmatpush1.bf16.msra.mxu0 %v4926
  %5137 = vmatprep.subr.bf16.mxu0 %v4931
  %5138 = vmatpush1.bf16.msra.mxu0 %v4930
  %5139 = vmatprep.subr.bf16.mxu0 %v4935
  %5140 = vmatpush1.bf16.msra.mxu0 %v4934
  %5141 = vmatprep.subr.bf16.mxu0 0
  %5142 = vmatpush1.bf16.msra.mxu0 0
  %5143 = vmatprep.subr.bf16.mxu0 0
  %5144 = vmatpush1.bf16.msra.mxu0 0
  %5145 = vmatprep.subr.bf16.mxu0 0
  %5146 = vmatpush1.bf16.msra.mxu0 0
  %5147 = vmatprep.subr.bf16.mxu0 0
  %5148 = vmatpush1.bf16.msra.mxu0 0
  %5149 = vmatprep.subr.bf16.mxu0 0
  %5150 = vmatpush1.bf16.msra.mxu0 0
  %5151 = vmatprep.subr.bf16.mxu0 0
  %5152 = vmatpush1.bf16.msra.mxu0 0
  %5153 = vmatprep.subr.bf16.mxu0 0
  %5154 = vmatpush1.bf16.msra.mxu0 0
  %5155 = vmatprep.subr.bf16.mxu0 0
  %5156 = vmatpush1.bf16.msra.mxu0 0
  %5157 = vmatprep.mubr.bf16.mxu0 0
  %5158 = vmatmul.mubr.bf16.gmra.mrb[0].mxu0 %v5083
  %v5159 = vpop.f32.mrb[0].mxu0
  %v5160 = vadd.f32 0.0, %v5159
  %v5161 = vpop.f32.mrb[0].mxu0
  %v5162 = vadd.f32 0.0, %v5161
  %v5163 = vpop.f32.mrb[0].mxu0
  %v5164 = vpop.f32.mrb[0].mxu0
  %5165 = vdwg.mxu0
  %v5166 = vadd.f32 %v5079, %v5119
  %v5167 = vadd.f32 %v5080, %v5121
  %v5168 = vadd.f32 %v5081, %v5160
  %v5169 = vadd.f32 %v5082, %v5162
  %v5170 = vxor.u32 %v5166, 2147483648
  %v5171 = vxor.u32 %v5167, 2147483648
  %v5172 = vxor.u32 %v5168, 2147483648
  %v5173 = vmul.f32 %v5170, 1.442695
  %v5174 = vpow.pop %v5173
  %v5175 = vmul.f32 %v5171, 1.442695
  %v5176 = vpow.pop %v5175
  %v5177 = vmul.f32 %v5172, 1.442695
  %v5178 = vpow.pop %v5177
  %v5179 = vadd.f32 %v5174, 1.0
  %v5180 = vadd.f32 %v5176, 1.0
  %v5181 = vadd.f32 %v5178, 1.0
  %v5182 = vrcp.pop %v5179
  %v5183 = vmul.f32 1.0, %v5182
  %v5184 = vrcp.pop %v5180
  %v5185 = vmul.f32 1.0, %v5184
  %v5186 = vrcp.pop %v5181
  %v5187 = vmul.f32 1.0, %v5186
  %v5188 = vtanh.pop %v5169
  %v5189 = vmul.f32 %v5185, %v5075
  %v5190 = vmul.f32 %v5183, %v5188
  %v5191 = vadd.f32 %v5189, %v5190
  %v5192 = vtanh.pop %v5191
  %v5193 = vmul.f32 %v5187, %v5192
  %5194 = vst [vmem:[%s2422] sm:$0xff] %v5193
  %v5195 = vld [vmem:[%s872] sm:$0xff]
  %v5196 = vld [vmem:[%s872 + $0x8] sm:$0xff]
  %v5197 = vld [vmem:[%s872 + $0x10] sm:$0xff]
  %v5198 = vld [vmem:[%s872 + $0x18] sm:$0xff]
  %v5199 = vpack.c.bf16 %v5193, %v5193
  %5200 = vmatprep.subr.bf16.mxu0 %v4905
  %5201 = vmatpush1.bf16.msra.mxu0 %v4904
  %5202 = vmatprep.subr.bf16.mxu0 %v4909
  %5203 = vmatpush1.bf16.msra.mxu0 %v4908
  %5204 = vmatprep.subr.bf16.mxu0 %v4913
  %5205 = vmatpush1.bf16.msra.mxu0 %v4912
  %5206 = vmatprep.subr.bf16.mxu0 %v4917
  %5207 = vmatpush1.bf16.msra.mxu0 %v4916
  %5208 = vmatprep.subr.bf16.mxu0 %v4921
  %5209 = vmatpush1.bf16.msra.mxu0 %v4920
  %5210 = vmatprep.subr.bf16.mxu0 %v4925
  %5211 = vmatpush1.bf16.msra.mxu0 %v4924
  %5212 = vmatprep.subr.bf16.mxu0 %v4929
  %5213 = vmatpush1.bf16.msra.mxu0 %v4928
  %5214 = vmatprep.subr.bf16.mxu0 %v4933
  %5215 = vmatpush1.bf16.msra.mxu0 %v4932
  %5216 = vmatprep.subr.bf16.mxu0 0
  %5217 = vmatpush1.bf16.msra.mxu0 0
  %5218 = vmatprep.subr.bf16.mxu0 0
  %5219 = vmatpush1.bf16.msra.mxu0 0
  %5220 = vmatprep.subr.bf16.mxu0 0
  %5221 = vmatpush1.bf16.msra.mxu0 0
  %5222 = vmatprep.subr.bf16.mxu0 0
  %5223 = vmatpush1.bf16.msra.mxu0 0
  %5224 = vmatprep.subr.bf16.mxu0 0
  %5225 = vmatpush1.bf16.msra.mxu0 0
  %5226 = vmatprep.subr.bf16.mxu0 0
  %5227 = vmatpush1.bf16.msra.mxu0 0
  %5228 = vmatprep.subr.bf16.mxu0 0
  %5229 = vmatpush1.bf16.msra.mxu0 0
  %5230 = vmatprep.subr.bf16.mxu0 0
  %5231 = vmatpush1.bf16.msra.mxu0 0
  %5232 = vmatprep.mubr.bf16.mxu0 0
  %5233 = vmatmul.mubr.bf16.gmra.mrb[0].mxu0 %v5199
  %v5234 = vpop.f32.mrb[0].mxu0
  %v5235 = vadd.f32 0.0, %v5234
  %v5236 = vpop.f32.mrb[0].mxu0
  %v5237 = vadd.f32 0.0, %v5236
  %v5238 = vpop.f32.mrb[0].mxu0
  %v5239 = vpop.f32.mrb[0].mxu0
  %5240 = vdwg.mxu0
  %5241 = vmatprep.subr.bf16.mxu0 %v4907
  %5242 = vmatpush1.bf16.msra.mxu0 %v4906
  %5243 = vmatprep.subr.bf16.mxu0 %v4911
  %5244 = vmatpush1.bf16.msra.mxu0 %v4910
  %5245 = vmatprep.subr.bf16.mxu0 %v4915
  %5246 = vmatpush1.bf16.msra.mxu0 %v4914
  %5247 = vmatprep.subr.bf16.mxu0 %v4919
  %5248 = vmatpush1.bf16.msra.mxu0 %v4918
  %5249 = vmatprep.subr.bf16.mxu0 %v4923
  %5250 = vmatpush1.bf16.msra.mxu0 %v4922
  %5251 = vmatprep.subr.bf16.mxu0 %v4927
  %5252 = vmatpush1.bf16.msra.mxu0 %v4926
  %5253 = vmatprep.subr.bf16.mxu0 %v4931
  %5254 = vmatpush1.bf16.msra.mxu0 %v4930
  %5255 = vmatprep.subr.bf16.mxu0 %v4935
  %5256 = vmatpush1.bf16.msra.mxu0 %v4934
  %5257 = vmatprep.subr.bf16.mxu0 0
  %5258 = vmatpush1.bf16.msra.mxu0 0
  %5259 = vmatprep.subr.bf16.mxu0 0
  %5260 = vmatpush1.bf16.msra.mxu0 0
  %5261 = vmatprep.subr.bf16.mxu0 0
  %5262 = vmatpush1.bf16.msra.mxu0 0
  %5263 = vmatprep.subr.bf16.mxu0 0
  %5264 = vmatpush1.bf16.msra.mxu0 0
  %5265 = vmatprep.subr.bf16.mxu0 0
  %5266 = vmatpush1.bf16.msra.mxu0 0
  %5267 = vmatprep.subr.bf16.mxu0 0
  %5268 = vmatpush1.bf16.msra.mxu0 0
  %5269 = vmatprep.subr.bf16.mxu0 0
  %5270 = vmatpush1.bf16.msra.mxu0 0
  %5271 = vmatprep.subr.bf16.mxu0 0
  %5272 = vmatpush1.bf16.msra.mxu0 0
  %5273 = vmatprep.mubr.bf16.mxu0 0
  %5274 = vmatmul.mubr.bf16.gmra.mrb[0].mxu0 %v5199
  %v5275 = vpop.f32.mrb[0].mxu0
  %v5276 = vadd.f32 0.0, %v5275
  %v5277 = vpop.f32.mrb[0].mxu0
  %v5278 = vadd.f32 0.0, %v5277
  %v5279 = vpop.f32.mrb[0].mxu0
  %v5280 = vpop.f32.mrb[0].mxu0
  %5281 = vdwg.mxu0
  %v5282 = vadd.f32 %v5195, %v5235
  %v5283 = vadd.f32 %v5196, %v5237
  %v5284 = vadd.f32 %v5197, %v5276
  %v5285 = vadd.f32 %v5198, %v5278
  %v5286 = vxor.u32 %v5282, 2147483648
  %v5287 = vxor.u32 %v5283, 2147483648
  %v5288 = vxor.u32 %v5284, 2147483648
  %v5289 = vmul.f32 %v5286, 1.442695
  %v5290 = vpow.pop %v5289
  %v5291 = vmul.f32 %v5287, 1.442695
  %v5292 = vpow.pop %v5291
  %v5293 = vmul.f32 %v5288, 1.442695
  %v5294 = vpow.pop %v5293
  %v5295 = vadd.f32 %v5290, 1.0
  %v5296 = vadd.f32 %v5292, 1.0
  %v5297 = vadd.f32 %v5294, 1.0
  %v5298 = vrcp.pop %v5295
  %v5299 = vmul.f32 1.0, %v5298
  %v5300 = vrcp.pop %v5296
  %v5301 = vmul.f32 1.0, %v5300
  %v5302 = vrcp.pop %v5297
  %v5303 = vmul.f32 1.0, %v5302
  %v5304 = vtanh.pop %v5285
  %v5305 = vmul.f32 %v5301, %v5191
  %v5306 = vmul.f32 %v5299, %v5304
  %v5307 = vadd.f32 %v5305, %v5306
  %v5308 = vtanh.pop %v5307
  %v5309 = vmul.f32 %v5303, %v5308
  %5310 = vst [vmem:[%s2539] sm:$0xff] %v5309
  %v5311 = vld [vmem:[%s992] sm:$0xff]
  %v5312 = vld [vmem:[%s992 + $0x8] sm:$0xff]
  %v5313 = vld [vmem:[%s992 + $0x10] sm:$0xff]
  %v5314 = vld [vmem:[%s992 + $0x18] sm:$0xff]
  %v5315 = vpack.c.bf16 %v5309, %v5309
  %5316 = vmatprep.subr.bf16.mxu0 %v4905
  %5317 = vmatpush1.bf16.msra.mxu0 %v4904
  %5318 = vmatprep.subr.bf16.mxu0 %v4909
  %5319 = vmatpush1.bf16.msra.mxu0 %v4908
  %5320 = vmatprep.subr.bf16.mxu0 %v4913
  %5321 = vmatpush1.bf16.msra.mxu0 %v4912
  %5322 = vmatprep.subr.bf16.mxu0 %v4917
  %5323 = vmatpush1.bf16.msra.mxu0 %v4916
  %5324 = vmatprep.subr.bf16.mxu0 %v4921
  %5325 = vmatpush1.bf16.msra.mxu0 %v4920
  %5326 = vmatprep.subr.bf16.mxu0 %v4925
  %5327 = vmatpush1.bf16.msra.mxu0 %v4924
  %5328 = vmatprep.subr.bf16.mxu0 %v4929
  %5329 = vmatpush1.bf16.msra.mxu0 %v4928
  %5330 = vmatprep.subr.bf16.mxu0 %v4933
  %5331 = vmatpush1.bf16.msra.mxu0 %v4932
  %5332 = vmatprep.subr.bf16.mxu0 0
  %5333 = vmatpush1.bf16.msra.mxu0 0
  %5334 = vmatprep.subr.bf16.mxu0 0
  %5335 = vmatpush1.bf16.msra.mxu0 0
  %5336 = vmatprep.subr.bf16.mxu0 0
  %5337 = vmatpush1.bf16.msra.mxu0 0
  %5338 = vmatprep.subr.bf16.mxu0 0
  %5339 = vmatpush1.bf16.msra.mxu0 0
  %5340 = vmatprep.subr.bf16.mxu0 0
  %5341 = vmatpush1.bf16.msra.mxu0 0
  %5342 = vmatprep.subr.bf16.mxu0 0
  %5343 = vmatpush1.bf16.msra.mxu0 0
  %5344 = vmatprep.subr.bf16.mxu0 0
  %5345 = vmatpush1.bf16.msra.mxu0 0
  %5346 = vmatprep.subr.bf16.mxu0 0
  %5347 = vmatpush1.bf16.msra.mxu0 0
  %5348 = vmatprep.mubr.bf16.mxu0 0
  %5349 = vmatmul.mubr.bf16.gmra.mrb[0].mxu0 %v5315
  %v5350 = vpop.f32.mrb[0].mxu0
  %v5351 = vadd.f32 0.0, %v5350
  %v5352 = vpop.f32.mrb[0].mxu0
  %v5353 = vadd.f32 0.0, %v5352
  %v5354 = vpop.f32.mrb[0].mxu0
  %v5355 = vpop.f32.mrb[0].mxu0
  %5356 = vdwg.mxu0
  %5357 = vmatprep.subr.bf16.mxu0 %v4907
  %5358 = vmatpush1.bf16.msra.mxu0 %v4906
  %5359 = vmatprep.subr.bf16.mxu0 %v4911
  %5360 = vmatpush1.bf16.msra.mxu0 %v4910
  %5361 = vmatprep.subr.bf16.mxu0 %v4915
  %5362 = vmatpush1.bf16.msra.mxu0 %v4914
  %5363 = vmatprep.subr.bf16.mxu0 %v4919
  %5364 = vmatpush1.bf16.msra.mxu0 %v4918
  %5365 = vmatprep.subr.bf16.mxu0 %v4923
  %5366 = vmatpush1.bf16.msra.mxu0 %v4922
  %5367 = vmatprep.subr.bf16.mxu0 %v4927
  %5368 = vmatpush1.bf16.msra.mxu0 %v4926
  %5369 = vmatprep.subr.bf16.mxu0 %v4931
  %5370 = vmatpush1.bf16.msra.mxu0 %v4930
  %5371 = vmatprep.subr.bf16.mxu0 %v4935
  %5372 = vmatpush1.bf16.msra.mxu0 %v4934
  %5373 = vmatprep.subr.bf16.mxu0 0
  %5374 = vmatpush1.bf16.msra.mxu0 0
  %5375 = vmatprep.subr.bf16.mxu0 0
  %5376 = vmatpush1.bf16.msra.mxu0 0
  %5377 = vmatprep.subr.bf16.mxu0 0
  %5378 = vmatpush1.bf16.msra.mxu0 0
  %5379 = vmatprep.subr.bf16.mxu0 0
  %5380 = vmatpush1.bf16.msra.mxu0 0
  %5381 = vmatprep.subr.bf16.mxu0 0
  %5382 = vmatpush1.bf16.msra.mxu0 0
  %5383 = vmatprep.subr.bf16.mxu0 0
  %5384 = vmatpush1.bf16.msra.mxu0 0
  %5385 = vmatprep.subr.bf16.mxu0 0
  %5386 = vmatpush1.bf16.msra.mxu0 0
  %5387 = vmatprep.subr.bf16.mxu0 0
  %5388 = vmatpush1.bf16.msra.mxu0 0
  %5389 = vmatprep.mubr.bf16.mxu0 0
  %5390 = vmatmul.mubr.bf16.gmra.mrb[0].mxu0 %v5315
  %v5391 = vpop.f32.mrb[0].mxu0
  %v5392 = vadd.f32 0.0, %v5391
  %v5393 = vpop.f32.mrb[0].mxu0
  %v5394 = vadd.f32 0.0, %v5393
  %v5395 = vpop.f32.mrb[0].mxu0
  %v5396 = vpop.f32.mrb[0].mxu0
  %5397 = vdwg.mxu0
  %v5398 = vadd.f32 %v5311, %v5351
  %v5399 = vadd.f32 %v5312, %v5353
  %v5400 = vadd.f32 %v5313, %v5392
  %v5401 = vadd.f32 %v5314, %v5394
  %v5402 = vxor.u32 %v5398, 2147483648
  %v5403 = vxor.u32 %v5399, 2147483648
  %v5404 = vxor.u32 %v5400, 2147483648
  %v5405 = vmul.f32 %v5402, 1.442695
  %v5406 = vpow.pop %v5405
  %v5407 = vmul.f32 %v5403, 1.442695
  %v5408 = vpow.pop %v5407
  %v5409 = vmul.f32 %v5404, 1.442695
  %v5410 = vpow.pop %v5409
  %v5411 = vadd.f32 %v5406, 1.0
  %v5412 = vadd.f32 %v5408, 1.0
  %v5413 = vadd.f32 %v5410, 1.0
  %v5414 = vrcp.pop %v5411
  %v5415 = vmul.f32 1.0, %v5414
  %v5416 = vrcp.pop %v5412
  %v5417 = vmul.f32 1.0, %v5416
  %v5418 = vrcp.pop %v5413
  %v5419 = vmul.f32 1.0, %v5418
  %v5420 = vtanh.pop %v5401
  %v5421 = vmul.f32 %v5417, %v5307
  %v5422 = vmul.f32 %v5415, %v5420
  %v5423 = vadd.f32 %v5421, %v5422
  %v5424 = vtanh.pop %v5423
  %v5425 = vmul.f32 %v5419, %v5424
  %5426 = vst [vmem:[%s2656] sm:$0xff] %v5425
  %v5427 = vld [vmem:[%s1112] sm:$0xff]
  %v5428 = vld [vmem:[%s1112 + $0x8] sm:$0xff]
  %v5429 = vld [vmem:[%s1112 + $0x10] sm:$0xff]
  %v5430 = vld [vmem:[%s1112 + $0x18] sm:$0xff]
  %v5431 = vpack.c.bf16 %v5425, %v5425
  %5432 = vmatprep.subr.bf16.mxu0 %v4905
  %5433 = vmatpush1.bf16.msra.mxu0 %v4904
  %5434 = vmatprep.subr.bf16.mxu0 %v4909
  %5435 = vmatpush1.bf16.msra.mxu0 %v4908
  %5436 = vmatprep.subr.bf16.mxu0 %v4913
  %5437 = vmatpush1.bf16.msra.mxu0 %v4912
  %5438 = vmatprep.subr.bf16.mxu0 %v4917
  %5439 = vmatpush1.bf16.msra.mxu0 %v4916
  %5440 = vmatprep.subr.bf16.mxu0 %v4921
  %5441 = vmatpush1.bf16.msra.mxu0 %v4920
  %5442 = vmatprep.subr.bf16.mxu0 %v4925
  %5443 = vmatpush1.bf16.msra.mxu0 %v4924
  %5444 = vmatprep.subr.bf16.mxu0 %v4929
  %5445 = vmatpush1.bf16.msra.mxu0 %v4928
  %5446 = vmatprep.subr.bf16.mxu0 %v4933
  %5447 = vmatpush1.bf16.msra.mxu0 %v4932
  %5448 = vmatprep.subr.bf16.mxu0 0
  %5449 = vmatpush1.bf16.msra.mxu0 0
  %5450 = vmatprep.subr.bf16.mxu0 0
  %5451 = vmatpush1.bf16.msra.mxu0 0
  %5452 = vmatprep.subr.bf16.mxu0 0
  %5453 = vmatpush1.bf16.msra.mxu0 0
  %5454 = vmatprep.subr.bf16.mxu0 0
  %5455 = vmatpush1.bf16.msra.mxu0 0
  %5456 = vmatprep.subr.bf16.mxu0 0
  %5457 = vmatpush1.bf16.msra.mxu0 0
  %5458 = vmatprep.subr.bf16.mxu0 0
  %5459 = vmatpush1.bf16.msra.mxu0 0
  %5460 = vmatprep.subr.bf16.mxu0 0
  %5461 = vmatpush1.bf16.msra.mxu0 0
  %5462 = vmatprep.subr.bf16.mxu0 0
  %5463 = vmatpush1.bf16.msra.mxu0 0
  %5464 = vmatprep.mubr.bf16.mxu0 0
  %5465 = vmatmul.mubr.bf16.gmra.mrb[0].mxu0 %v5431
  %v5466 = vpop.f32.mrb[0].mxu0
  %v5467 = vadd.f32 0.0, %v5466
  %v5468 = vpop.f32.mrb[0].mxu0
  %v5469 = vadd.f32 0.0, %v5468
  %v5470 = vpop.f32.mrb[0].mxu0
  %v5471 = vpop.f32.mrb[0].mxu0
  %5472 = vdwg.mxu0
  %5473 = vmatprep.subr.bf16.mxu0 %v4907
  %5474 = vmatpush1.bf16.msra.mxu0 %v4906
  %5475 = vmatprep.subr.bf16.mxu0 %v4911
  %5476 = vmatpush1.bf16.msra.mxu0 %v4910
  %5477 = vmatprep.subr.bf16.mxu0 %v4915
  %5478 = vmatpush1.bf16.msra.mxu0 %v4914
  %5479 = vmatprep.subr.bf16.mxu0 %v4919
  %5480 = vmatpush1.bf16.msra.mxu0 %v4918
  %5481 = vmatprep.subr.bf16.mxu0 %v4923
  %5482 = vmatpush1.bf16.msra.mxu0 %v4922
  %5483 = vmatprep.subr.bf16.mxu0 %v4927
  %5484 = vmatpush1.bf16.msra.mxu0 %v4926
  %5485 = vmatprep.subr.bf16.mxu0 %v4931
  %5486 = vmatpush1.bf16.msra.mxu0 %v4930
  %5487 = vmatprep.subr.bf16.mxu0 %v4935
  %5488 = vmatpush1.bf16.msra.mxu0 %v4934
  %5489 = vmatprep.subr.bf16.mxu0 0
  %5490 = vmatpush1.bf16.msra.mxu0 0
  %5491 = vmatprep.subr.bf16.mxu0 0
  %5492 = vmatpush1.bf16.msra.mxu0 0
  %5493 = vmatprep.subr.bf16.mxu0 0
  %5494 = vmatpush1.bf16.msra.mxu0 0
  %5495 = vmatprep.subr.bf16.mxu0 0
  %5496 = vmatpush1.bf16.msra.mxu0 0
  %5497 = vmatprep.subr.bf16.mxu0 0
  %5498 = vmatpush1.bf16.msra.mxu0 0
  %5499 = vmatprep.subr.bf16.mxu0 0
  %5500 = vmatpush1.bf16.msra.mxu0 0
  %5501 = vmatprep.subr.bf16.mxu0 0
  %5502 = vmatpush1.bf16.msra.mxu0 0
  %5503 = vmatprep.subr.bf16.mxu0 0
  %5504 = vmatpush1.bf16.msra.mxu0 0
  %5505 = vmatprep.mubr.bf16.mxu0 0
  %5506 = vmatmul.mubr.bf16.gmra.mrb[0].mxu0 %v5431
  %v5507 = vpop.f32.mrb[0].mxu0
  %v5508 = vadd.f32 0.0, %v5507
  %v5509 = vpop.f32.mrb[0].mxu0
  %v5510 = vadd.f32 0.0, %v5509
  %v5511 = vpop.f32.mrb[0].mxu0
  %v5512 = vpop.f32.mrb[0].mxu0
  %5513 = vdwg.mxu0
  %v5514 = vadd.f32 %v5427, %v5467
  %v5515 = vadd.f32 %v5428, %v5469
  %v5516 = vadd.f32 %v5429, %v5508
  %v5517 = vadd.f32 %v5430, %v5510
  %v5518 = vxor.u32 %v5514, 2147483648
  %v5519 = vxor.u32 %v5515, 2147483648
  %v5520 = vxor.u32 %v5516, 2147483648
  %v5521 = vmul.f32 %v5518, 1.442695
  %v5522 = vpow.pop %v5521
  %v5523 = vmul.f32 %v5519, 1.442695
  %v5524 = vpow.pop %v5523
  %v5525 = vmul.f32 %v5520, 1.442695
  %v5526 = vpow.pop %v5525
  %v5527 = vadd.f32 %v5522, 1.0
  %v5528 = vadd.f32 %v5524, 1.0
  %v5529 = vadd.f32 %v5526, 1.0
  %v5530 = vrcp.pop %v5527
  %v5531 = vmul.f32 1.0, %v5530
  %v5532 = vrcp.pop %v5528
  %v5533 = vmul.f32 1.0, %v5532
  %v5534 = vrcp.pop %v5529
  %v5535 = vmul.f32 1.0, %v5534
  %v5536 = vtanh.pop %v5517
  %v5537 = vmul.f32 %v5533, %v5423
  %v5538 = vmul.f32 %v5531, %v5536
  %v5539 = vadd.f32 %v5537, %v5538
  %v5540 = vtanh.pop %v5539
  %v5541 = vmul.f32 %v5535, %v5540
  %5542 = vst [vmem:[%s2773] sm:$0xff] %v5541
  %v5543 = vld [vmem:[%s1232] sm:$0xff]
  %v5544 = vld [vmem:[%s1232 + $0x8] sm:$0xff]
  %v5545 = vld [vmem:[%s1232 + $0x10] sm:$0xff]
  %v5546 = vld [vmem:[%s1232 + $0x18] sm:$0xff]
  %v5547 = vpack.c.bf16 %v5541, %v5541
  %5548 = vmatprep.subr.bf16.mxu0 %v4905
  %5549 = vmatpush1.bf16.msra.mxu0 %v4904
  %5550 = vmatprep.subr.bf16.mxu0 %v4909
  %5551 = vmatpush1.bf16.msra.mxu0 %v4908
  %5552 = vmatprep.subr.bf16.mxu0 %v4913
  %5553 = vmatpush1.bf16.msra.mxu0 %v4912
  %5554 = vmatprep.subr.bf16.mxu0 %v4917
  %5555 = vmatpush1.bf16.msra.mxu0 %v4916
  %5556 = vmatprep.subr.bf16.mxu0 %v4921
  %5557 = vmatpush1.bf16.msra.mxu0 %v4920
  %5558 = vmatprep.subr.bf16.mxu0 %v4925
  %5559 = vmatpush1.bf16.msra.mxu0 %v4924
  %5560 = vmatprep.subr.bf16.mxu0 %v4929
  %5561 = vmatpush1.bf16.msra.mxu0 %v4928
  %5562 = vmatprep.subr.bf16.mxu0 %v4933
  %5563 = vmatpush1.bf16.msra.mxu0 %v4932
  %5564 = vmatprep.subr.bf16.mxu0 0
  %5565 = vmatpush1.bf16.msra.mxu0 0
  %5566 = vmatprep.subr.bf16.mxu0 0
  %5567 = vmatpush1.bf16.msra.mxu0 0
  %5568 = vmatprep.subr.bf16.mxu0 0
  %5569 = vmatpush1.bf16.msra.mxu0 0
  %5570 = vmatprep.subr.bf16.mxu0 0
  %5571 = vmatpush1.bf16.msra.mxu0 0
  %5572 = vmatprep.subr.bf16.mxu0 0
  %5573 = vmatpush1.bf16.msra.mxu0 0
  %5574 = vmatprep.subr.bf16.mxu0 0
  %5575 = vmatpush1.bf16.msra.mxu0 0
  %5576 = vmatprep.subr.bf16.mxu0 0
  %5577 = vmatpush1.bf16.msra.mxu0 0
  %5578 = vmatprep.subr.bf16.mxu0 0
  %5579 = vmatpush1.bf16.msra.mxu0 0
  %5580 = vmatprep.mubr.bf16.mxu0 0
  %5581 = vmatmul.mubr.bf16.gmra.mrb[0].mxu0 %v5547
  %v5582 = vpop.f32.mrb[0].mxu0
  %v5583 = vadd.f32 0.0, %v5582
  %v5584 = vpop.f32.mrb[0].mxu0
  %v5585 = vadd.f32 0.0, %v5584
  %v5586 = vpop.f32.mrb[0].mxu0
  %v5587 = vpop.f32.mrb[0].mxu0
  %5588 = vdwg.mxu0
  %5589 = vmatprep.subr.bf16.mxu0 %v4907
  %5590 = vmatpush1.bf16.msra.mxu0 %v4906
  %5591 = vmatprep.subr.bf16.mxu0 %v4911
  %5592 = vmatpush1.bf16.msra.mxu0 %v4910
  %5593 = vmatprep.subr.bf16.mxu0 %v4915
  %5594 = vmatpush1.bf16.msra.mxu0 %v4914
  %5595 = vmatprep.subr.bf16.mxu0 %v4919
  %5596 = vmatpush1.bf16.msra.mxu0 %v4918
  %5597 = vmatprep.subr.bf16.mxu0 %v4923
  %5598 = vmatpush1.bf16.msra.mxu0 %v4922
  %5599 = vmatprep.subr.bf16.mxu0 %v4927
  %5600 = vmatpush1.bf16.msra.mxu0 %v4926
  %5601 = vmatprep.subr.bf16.mxu0 %v4931
  %5602 = vmatpush1.bf16.msra.mxu0 %v4930
  %5603 = vmatprep.subr.bf16.mxu0 %v4935
  %5604 = vmatpush1.bf16.msra.mxu0 %v4934
  %5605 = vmatprep.subr.bf16.mxu0 0
  %5606 = vmatpush1.bf16.msra.mxu0 0
  %5607 = vmatprep.subr.bf16.mxu0 0
  %5608 = vmatpush1.bf16.msra.mxu0 0
  %5609 = vmatprep.subr.bf16.mxu0 0
  %5610 = vmatpush1.bf16.msra.mxu0 0
  %5611 = vmatprep.subr.bf16.mxu0 0
  %5612 = vmatpush1.bf16.msra.mxu0 0
  %5613 = vmatprep.subr.bf16.mxu0 0
  %5614 = vmatpush1.bf16.msra.mxu0 0
  %5615 = vmatprep.subr.bf16.mxu0 0
  %5616 = vmatpush1.bf16.msra.mxu0 0
  %5617 = vmatprep.subr.bf16.mxu0 0
  %5618 = vmatpush1.bf16.msra.mxu0 0
  %5619 = vmatprep.subr.bf16.mxu0 0
  %5620 = vmatpush1.bf16.msra.mxu0 0
  %5621 = vmatprep.mubr.bf16.mxu0 0
  %5622 = vmatmul.mubr.bf16.gmra.mrb[0].mxu0 %v5547
  %v5623 = vpop.f32.mrb[0].mxu0
  %v5624 = vadd.f32 0.0, %v5623
  %v5625 = vpop.f32.mrb[0].mxu0
  %v5626 = vadd.f32 0.0, %v5625
  %v5627 = vpop.f32.mrb[0].mxu0
  %v5628 = vpop.f32.mrb[0].mxu0
  %5629 = vdwg.mxu0
  %v5630 = vadd.f32 %v5543, %v5583
  %v5631 = vadd.f32 %v5544, %v5585
  %v5632 = vadd.f32 %v5545, %v5624
  %v5633 = vadd.f32 %v5546, %v5626
  %v5634 = vxor.u32 %v5630, 2147483648
  %v5635 = vxor.u32 %v5631, 2147483648
  %v5636 = vxor.u32 %v5632, 2147483648
  %v5637 = vmul.f32 %v5634, 1.442695
  %v5638 = vpow.pop %v5637
  %v5639 = vmul.f32 %v5635, 1.442695
  %v5640 = vpow.pop %v5639
  %v5641 = vmul.f32 %v5636, 1.442695
  %v5642 = vpow.pop %v5641
  %v5643 = vadd.f32 %v5638, 1.0
  %v5644 = vadd.f32 %v5640, 1.0
  %v5645 = vadd.f32 %v5642, 1.0
  %v5646 = vrcp.pop %v5643
  %v5647 = vmul.f32 1.0, %v5646
  %v5648 = vrcp.pop %v5644
  %v5649 = vmul.f32 1.0, %v5648
  %v5650 = vrcp.pop %v5645
  %v5651 = vmul.f32 1.0, %v5650
  %v5652 = vtanh.pop %v5633
  %v5653 = vmul.f32 %v5649, %v5539
  %v5654 = vmul.f32 %v5647, %v5652
  %v5655 = vadd.f32 %v5653, %v5654
  %v5656 = vtanh.pop %v5655
  %v5657 = vmul.f32 %v5651, %v5656
  %5658 = vst [vmem:[%s2890] sm:$0xff] %v5657
  %v5659 = vld [vmem:[#allocation3] sm:$0xff]
  %v5660 = vld [vmem:[#allocation3 + $0x8] sm:$0xff]
  %v5661 = vld [vmem:[#allocation3 + $0x10] sm:$0xff]
  %v5662 = vld [vmem:[#allocation3 + $0x18] sm:$0xff]
  %v5663 = vld [vmem:[#allocation3 + $0x20] sm:$0xff]
  %v5664 = vld [vmem:[#allocation3 + $0x28] sm:$0xff]
  %v5665 = vpack.c.bf16 %v5660, %v5659
  %v5666 = vpack.c.bf16 %v5662, %v5661
  %v5667 = vpack.c.bf16 %v5664, %v5663
  %v5668 = vld [vmem:[%s8] sm:$0xf]
  %v5669 = vld [vmem:[%s8 + $0x4] sm:$0xf]
  %v5670 = vld [vmem:[%s8 + $0x8] sm:$0xf]
  %v5671 = vld [vmem:[%s8 + $0xc] sm:$0xf]
  %v5672 = vld [vmem:[%s8 + $0x10] sm:$0xf]
  %v5673 = vld [vmem:[%s8 + $0x14] sm:$0xf]
  %v5674 = vld [vmem:[%s8 + $0x18] sm:$0xf]
  %v5675 = vld [vmem:[%s8 + $0x1c] sm:$0xf]
  %v5676 = vld [vmem:[%s8 + $0x20] sm:$0xf]
  %v5677 = vld [vmem:[%s8 + $0x24] sm:$0xf]
  %v5678 = vld [vmem:[%s8 + $0x28] sm:$0xf]
  %v5679 = vld [vmem:[%s8 + $0x2c] sm:$0xf]
  %v5680 = vld [vmem:[%s8 + $0x30] sm:$0xf]
  %v5681 = vld [vmem:[%s8 + $0x34] sm:$0xf]
  %v5682 = vld [vmem:[%s8 + $0x38] sm:$0xf]
  %v5683 = vld [vmem:[%s8 + $0x3c] sm:$0xf]
  %v5684 = vld [vmem:[%s9] sm:$0x1]
  %v5686 = vlaneseq
  %v5687 = vshrl.u32 %v5686, 7
  %v5688 = vsub.s32 0, %v5687
  %v5689 = vrot.slane %v5684, %v5688
  %v5707 = vunpack.c.l.b16 %v5668
  %v5708 = vunpack.c.l.b16 %v5669
  %v5709 = vunpack.c.l.b16 %v5670
  %v5710 = vunpack.c.l.b16 %v5671
  %v5711 = vunpack.c.l.b16 %v5672
  %v5712 = vunpack.c.l.b16 %v5673
  %v5713 = vunpack.c.l.b16 %v5674
  %v5714 = vunpack.c.l.b16 %v5675
  %v5715 = vunpack.c.l.b16 %v5676
  %v5716 = vunpack.c.l.b16 %v5677
  %v5717 = vunpack.c.l.b16 %v5678
  %v5718 = vunpack.c.l.b16 %v5679
  %v5719 = vunpack.c.l.b16 %v5680
  %v5720 = vunpack.c.l.b16 %v5681
  %v5721 = vunpack.c.l.b16 %v5682
  %v5722 = vunpack.c.l.b16 %v5683
  %v5723 = vpack.c.b16 %v5708, %v5707
  %v5724 = vpack.c.b16 %v5710, %v5709
  %v5725 = vpack.c.b16 %v5712, %v5711
  %v5726 = vpack.c.b16 %v5714, %v5713
  %v5727 = vpack.c.b16 %v5716, %v5715
  %v5728 = vpack.c.b16 %v5718, %v5717
  %v5729 = vpack.c.b16 %v5720, %v5719
  %v5730 = vpack.c.b16 %v5722, %v5721
  %5739 = vmatprep.subr.bf16.mxu0 0
  %5740 = vmatpush1.bf16.msra.mxu0 %v5723
  %5741 = vmatprep.subr.bf16.mxu0 0
  %5742 = vmatpush1.bf16.msra.mxu0 %v5724
  %5743 = vmatprep.subr.bf16.mxu0 0
  %5744 = vmatpush1.bf16.msra.mxu0 %v5725
  %5745 = vmatprep.subr.bf16.mxu0 0
  %5746 = vmatpush1.bf16.msra.mxu0 %v5726
  %5747 = vmatprep.subr.bf16.mxu0 0
  %5748 = vmatpush1.bf16.msra.mxu0 %v5727
  %5749 = vmatprep.subr.bf16.mxu0 0
  %5750 = vmatpush1.bf16.msra.mxu0 %v5728
  %5751 = vmatprep.subr.bf16.mxu0 0
  %5752 = vmatpush1.bf16.msra.mxu0 %v5729
  %5753 = vmatprep.subr.bf16.mxu0 0
  %5754 = vmatpush1.bf16.msra.mxu0 %v5730
  %5755 = vmatprep.subr.bf16.mxu0 0
  %5756 = vmatpush1.bf16.msra.mxu0 0
  %5757 = vmatprep.subr.bf16.mxu0 0
  %5758 = vmatpush1.bf16.msra.mxu0 0
  %5759 = vmatprep.subr.bf16.mxu0 0
  %5760 = vmatpush1.bf16.msra.mxu0 0
  %5761 = vmatprep.subr.bf16.mxu0 0
  %5762 = vmatpush1.bf16.msra.mxu0 0
  %5763 = vmatprep.subr.bf16.mxu0 0
  %5764 = vmatpush1.bf16.msra.mxu0 0
  %5765 = vmatprep.subr.bf16.mxu0 0
  %5766 = vmatpush1.bf16.msra.mxu0 0
  %5767 = vmatprep.subr.bf16.mxu0 0
  %5768 = vmatpush1.bf16.msra.mxu0 0
  %5769 = vmatprep.subr.bf16.mxu0 0
  %5770 = vmatpush1.bf16.msra.mxu0 0
  %5771 = vmatprep.mubr.bf16.mxu0 0
  %5772 = vmatmul.mubr.bf16.gmra.mrb[0].mxu0 %v5665
  %v5773 = vpop.f32.mrb[0].mxu0
  %v5774 = vadd.f32 %v5689, %v5773
  %v5775 = vpop.f32.mrb[0].mxu0
  %v5776 = vpop.f32.mrb[0].mxu0
  %v5777 = vadd.f32 %v5689, %v5776
  %v5778 = vpop.f32.mrb[0].mxu0
  %5779 = vmatprep.mubr.bf16.mxu0 0
  %5780 = vmatmul.mubr.bf16.gmra.mrb[0].mxu0 %v5666
  %v5781 = vpop.f32.mrb[0].mxu0
  %v5782 = vadd.f32 %v5689, %v5781
  %v5783 = vpop.f32.mrb[0].mxu0
  %v5784 = vpop.f32.mrb[0].mxu0
  %v5785 = vadd.f32 %v5689, %v5784
  %v5786 = vpop.f32.mrb[0].mxu0
  %5787 = vmatprep.mubr.bf16.mxu0 0
  %5788 = vmatmul.mubr.bf16.gmra.mrb[0].mxu0 %v5667
  %v5789 = vpop.f32.mrb[0].mxu0
  %v5790 = vadd.f32 %v5689, %v5789
  %v5791 = vpop.f32.mrb[0].mxu0
  %v5792 = vpop.f32.mrb[0].mxu0
  %v5793 = vadd.f32 %v5689, %v5792
  %v5794 = vpop.f32.mrb[0].mxu0
  %5795 = vdwg.mxu0
  %5796 = vst [vmem:[%s10] sm:$0xff] %v5774
  %5797 = vst [vmem:[%s10 + $0x8] sm:$0xff] %v5777
  %5798 = vst [vmem:[%s10 + $0x10] sm:$0xff] %v5782
  %5799 = vst [vmem:[%s10 + $0x18] sm:$0xff] %v5785
  %5800 = vst [vmem:[%s10 + $0x20] sm:$0xff] %v5790
  %5801 = vst [vmem:[%s10 + $0x28] sm:$0xff] %v5793
  // Predicated region
  $region42: #{lstm_seq2seq_forward.1} parent=0 // pred_check
    _
  $region43: #{lstm_seq2seq_forward.1} parent=0 // pred_check_branch
    %5803 = sbr.rel (0) target = $region45
  $region44: #{lstm_seq2seq_forward.1} parent=0 // pred_region
    _
  $region45: #{lstm_seq2seq_forward.1} parent=0 // pred_fallthru
    _
  // Predicated region
  $region46: #{lstm_seq2seq_forward.1} parent=0 // pred_check
    _
  $region47: #{lstm_seq2seq_forward.1} parent=0 // pred_check_branch
    %5805 = sbr.rel (0) target = $region49
  $region48: #{lstm_seq2seq_forward.1} parent=0 // pred_region
    _
  $region49: #{lstm_seq2seq_forward.1} parent=0 // pred_fallthru
    _

</llo_original>
